<compile_context>
chip_gen: v7x
topology: tpu7x:2x2x1
jax: 0.10.0
libtpu: 0.0.40
codegen_flags: <defaults>
</compile_context>

<pallas_src>
import functools

import jax
import jax.numpy as jnp
from jax.experimental import pallas as pl
from jax.experimental.pallas import tpu as pltpu

IMG_SIZE = 28 * 28          # 784
IMG_PAD = 1024              # K padded to a multiple of 256 (full MXU passes)
HIDDEN3 = 1024
HIDDEN2 = 512
HIDDEN1 = 256
OUT = 1
OUT_PAD = 128               # lane-dense output tile; col 0 is the real output
NEG_SLOPE = 0.2
TB = 128                    # batch tile (rows per grid step)


def _leaky_relu(x):
    return jnp.where(x > 0, x, NEG_SLOPE * x)


def discriminator_kernel(x_ref,
                         w1_ref, b1_ref,
                         w2_ref, b2_ref,
                         w3_ref, b3_ref,
                         w4_ref, b4_ref,
                         o_ref):
    # x tile: (TB, IMG_PAD) bf16; weights bf16 (MXU-native); biases/acts f32.
    x = x_ref[...]

    h = jnp.dot(x, w1_ref[...], preferred_element_type=jnp.float32)   # (TB,1024)
    h = _leaky_relu(h + b1_ref[...])

    h = jnp.dot(h.astype(jnp.bfloat16), w2_ref[...],
                preferred_element_type=jnp.float32)                    # (TB,512)
    h = _leaky_relu(h + b2_ref[...])

    h = jnp.dot(h.astype(jnp.bfloat16), w3_ref[...],
                preferred_element_type=jnp.float32)                    # (TB,256)
    h = _leaky_relu(h + b3_ref[...])

    logits = jnp.dot(h.astype(jnp.bfloat16), w4_ref[...],
                     preferred_element_type=jnp.float32) + b4_ref[...]  # (TB,128)

    # sigmoid = 1 / (1 + exp(-x)): exp + approximate reciprocal both on the EUP.
    o_ref[...] = pl.reciprocal(1.0 + jnp.exp(-logits), approx=True)


@functools.partial(jax.jit, static_argnames=())
def discriminator_forward(x, params):
    """x: (B, 784) float32; params: dict of pre-transposed (in,out) weights and
    (1, out) biases in float32. Returns (B, 1) float32."""
    B = x.shape[0]
    Bp = pl.cdiv(B, TB) * TB

    # --- prepare kernel operands (padding + bf16 cast of matmul inputs) ------
    xp = jnp.zeros((Bp, IMG_PAD), jnp.float32).at[:B, :IMG_SIZE].set(x)
    xp = xp.astype(jnp.bfloat16)

    w1 = (jnp.zeros((IMG_PAD, HIDDEN3), jnp.float32)
          .at[:IMG_SIZE, :].set(params["w1"])).astype(jnp.bfloat16)
    w2 = params["w2"].astype(jnp.bfloat16)
    w3 = params["w3"].astype(jnp.bfloat16)
    w4 = (jnp.zeros((HIDDEN1, OUT_PAD), jnp.float32)
          .at[:, :OUT].set(params["w4"])).astype(jnp.bfloat16)
    b1, b2, b3 = params["b1"], params["b2"], params["b3"]
    b4 = jnp.zeros((1, OUT_PAD), jnp.float32).at[:, :OUT].set(params["b4"])

    const = lambda i: (0, 0)   # weights / biases stay VMEM-resident across steps

    out = pl.pallas_call(
        discriminator_kernel,
        out_shape=jax.ShapeDtypeStruct((Bp, OUT_PAD), jnp.float32),
        grid_spec=pltpu.PrefetchScalarGridSpec(
            num_scalar_prefetch=0,
            grid=(Bp // TB,),
            in_specs=[
                pl.BlockSpec((TB, IMG_PAD), lambda i: (i, 0)),     # x tile
                pl.BlockSpec((IMG_PAD, HIDDEN3), const),           # w1
                pl.BlockSpec((1, HIDDEN3), const),                 # b1
                pl.BlockSpec((HIDDEN3, HIDDEN2), const),           # w2
                pl.BlockSpec((1, HIDDEN2), const),                 # b2
                pl.BlockSpec((HIDDEN2, HIDDEN1), const),           # w3
                pl.BlockSpec((1, HIDDEN1), const),                 # b3
                pl.BlockSpec((HIDDEN1, OUT_PAD), const),           # w4 (padded)
                pl.BlockSpec((1, OUT_PAD), const),                 # b4 (padded)
            ],
            out_specs=pl.BlockSpec((TB, OUT_PAD), lambda i: (i, 0)),
        ),
        compiler_params=pltpu.CompilerParams(
            dimension_semantics=("parallel",),
            vmem_limit_bytes=32 * 1024 * 1024,
        ),
    )(xp, w1, b1, w2, b2, w3, b3, w4, b4)

    return out[:B, :OUT]


def init_params(key):
    """Deterministic init mimicking nn.Linear: U(-1/sqrt(fan_in), 1/sqrt(fan_in)).
    Weights stored pre-transposed as (in, out) so the kernel does x @ W."""
    dims = [(IMG_SIZE, HIDDEN3), (HIDDEN3, HIDDEN2),
            (HIDDEN2, HIDDEN1), (HIDDEN1, OUT)]
    params = {}
    for i, (fan_in, fan_out) in enumerate(dims, start=1):
        key, kw, kb = jax.random.split(key, 3)
        bound = 1.0 / jnp.sqrt(jnp.float32(fan_in))
        params[f"w{i}"] = jax.random.uniform(
            kw, (fan_in, fan_out), jnp.float32, -bound, bound)
        params[f"b{i}"] = jax.random.uniform(
            kb, (1, fan_out), jnp.float32, -bound, bound)
    return params


def reference_forward(x, params):
    """Pure-JAX f32 reference mirroring the PyTorch module semantics."""
    h = x
    for i in (1, 2, 3):
        h = h @ params[f"w{i}"] + params[f"b{i}"]
        h = jnp.where(h > 0, h, NEG_SLOPE * h)
    logits = h @ params["w4"] + params["b4"]
    return jax.nn.sigmoid(logits)


if __name__ == "__main__":
    key = jax.random.PRNGKey(0)
    key, kx = jax.random.split(key)

    B = 8
    x = jax.random.normal(kx, (B, IMG_SIZE), jnp.float32)
    params = init_params(key)

    out = discriminator_forward(x, params)
    out = jax.block_until_ready(out)

    ref = reference_forward(x, params)
    assert out.shape == (B, OUT)
    # bf16 matmul inputs (f32 accumulation) vs f32 reference: loose tolerance.
    assert jnp.allclose(out, ref, atol=3e-2, rtol=3e-2), "mismatch vs reference"

    print("KERNEL_OK")
</pallas_src>

<mosaic_0001>
module attributes {stable_mosaic.version = 11 : i64} {
  func.func @discriminator_kernel(%arg0: i32, %arg1: memref<128x1024xbf16, #tpu.memory_space<vmem>>, %arg2: memref<1024x1024xbf16, #tpu.memory_space<vmem>>, %arg3: memref<1x1024xf32, #tpu.memory_space<vmem>>, %arg4: memref<1024x512xbf16, #tpu.memory_space<vmem>>, %arg5: memref<1x512xf32, #tpu.memory_space<vmem>>, %arg6: memref<512x256xbf16, #tpu.memory_space<vmem>>, %arg7: memref<1x256xf32, #tpu.memory_space<vmem>>, %arg8: memref<256x128xbf16, #tpu.memory_space<vmem>>, %arg9: memref<1x128xf32, #tpu.memory_space<vmem>>, %arg10: memref<128x128xf32, #tpu.memory_space<vmem>>) attributes {dimension_semantics = [#tpu.dimension_semantics<parallel>], iteration_bounds = array<i64: 1>, scalar_prefetch = 0 : i64, scratch_operands = 0 : i64, tpu.core_type = #tpu.core_type<tc>, window_params = [{transform_indices = @transform_0, window_bounds = array<i64: 128, 1024>}, {pipeline_mode = #tpu.pipeline_mode<synchronous>, transform_indices = @transform_1, window_bounds = array<i64: 1024, 1024>}, {pipeline_mode = #tpu.pipeline_mode<synchronous>, transform_indices = @transform_2, window_bounds = array<i64: 1, 1024>}, {pipeline_mode = #tpu.pipeline_mode<synchronous>, transform_indices = @transform_3, window_bounds = array<i64: 1024, 512>}, {pipeline_mode = #tpu.pipeline_mode<synchronous>, transform_indices = @transform_4, window_bounds = array<i64: 1, 512>}, {pipeline_mode = #tpu.pipeline_mode<synchronous>, transform_indices = @transform_5, window_bounds = array<i64: 512, 256>}, {pipeline_mode = #tpu.pipeline_mode<synchronous>, transform_indices = @transform_6, window_bounds = array<i64: 1, 256>}, {pipeline_mode = #tpu.pipeline_mode<synchronous>, transform_indices = @transform_7, window_bounds = array<i64: 256, 128>}, {pipeline_mode = #tpu.pipeline_mode<synchronous>, transform_indices = @transform_8, window_bounds = array<i64: 1, 128>}, {transform_indices = @transform_9, window_bounds = array<i64: 128, 128>}]} {
    %c0 = arith.constant 0 : index
    %c0_0 = arith.constant 0 : index
    %0 = vector.load %arg1[%c0, %c0_0] : memref<128x1024xbf16, #tpu.memory_space<vmem>>, vector<128x1024xbf16>
    %c0_1 = arith.constant 0 : index
    %c0_2 = arith.constant 0 : index
    %1 = vector.load %arg2[%c0_1, %c0_2] : memref<1024x1024xbf16, #tpu.memory_space<vmem>>, vector<1024x1024xbf16>
    %cst = arith.constant dense<0.000000e+00> : vector<128x1024xf32>
    %2 = tpu.matmul %0, %1, %cst {dimension_numbers = #tpu.dot_dimension_numbers<[1], [0], [0], [1], [0, 0, 1, 1], [], []>} : vector<128x1024xbf16>, vector<1024x1024xbf16>, vector<128x1024xf32> -> vector<128x1024xf32>
    %c0_3 = arith.constant 0 : index
    %c0_4 = arith.constant 0 : index
    %3 = vector.load %arg3[%c0_3, %c0_4] : memref<1x1024xf32, #tpu.memory_space<vmem>>, vector<1x1024xf32>
    %4 = vector.broadcast %3 : vector<1x1024xf32> to vector<128x1024xf32>
    %5 = arith.addf %2, %4 : vector<128x1024xf32>
    %cst_5 = arith.constant 0.000000e+00 : f32
    %6 = vector.broadcast %cst_5 : f32 to vector<128x1024xf32>
    %7 = arith.cmpf ogt, %5, %6 : vector<128x1024xf32>
    %cst_6 = arith.constant 2.000000e-01 : f32
    %8 = vector.broadcast %cst_6 : f32 to vector<128x1024xf32>
    %9 = arith.mulf %8, %5 : vector<128x1024xf32>
    %10 = arith.select %7, %5, %9 : vector<128x1024xi1>, vector<128x1024xf32>
    %11 = arith.truncf %10 : vector<128x1024xf32> to vector<128x1024xbf16>
    %c0_7 = arith.constant 0 : index
    %c0_8 = arith.constant 0 : index
    %12 = vector.load %arg4[%c0_7, %c0_8] : memref<1024x512xbf16, #tpu.memory_space<vmem>>, vector<1024x512xbf16>
    %cst_9 = arith.constant dense<0.000000e+00> : vector<128x512xf32>
    %13 = tpu.matmul %11, %12, %cst_9 {dimension_numbers = #tpu.dot_dimension_numbers<[1], [0], [0], [1], [0, 0, 1, 1], [], []>} : vector<128x1024xbf16>, vector<1024x512xbf16>, vector<128x512xf32> -> vector<128x512xf32>
    %c0_10 = arith.constant 0 : index
    %c0_11 = arith.constant 0 : index
    %14 = vector.load %arg5[%c0_10, %c0_11] : memref<1x512xf32, #tpu.memory_space<vmem>>, vector<1x512xf32>
    %15 = vector.broadcast %14 : vector<1x512xf32> to vector<128x512xf32>
    %16 = arith.addf %13, %15 : vector<128x512xf32>
    %cst_12 = arith.constant 0.000000e+00 : f32
    %17 = vector.broadcast %cst_12 : f32 to vector<128x512xf32>
    %18 = arith.cmpf ogt, %16, %17 : vector<128x512xf32>
    %cst_13 = arith.constant 2.000000e-01 : f32
    %19 = vector.broadcast %cst_13 : f32 to vector<128x512xf32>
    %20 = arith.mulf %19, %16 : vector<128x512xf32>
    %21 = arith.select %18, %16, %20 : vector<128x512xi1>, vector<128x512xf32>
    %22 = arith.truncf %21 : vector<128x512xf32> to vector<128x512xbf16>
    %c0_14 = arith.constant 0 : index
    %c0_15 = arith.constant 0 : index
    %23 = vector.load %arg6[%c0_14, %c0_15] : memref<512x256xbf16, #tpu.memory_space<vmem>>, vector<512x256xbf16>
    %cst_16 = arith.constant dense<0.000000e+00> : vector<128x256xf32>
    %24 = tpu.matmul %22, %23, %cst_16 {dimension_numbers = #tpu.dot_dimension_numbers<[1], [0], [0], [1], [0, 0, 1, 1], [], []>} : vector<128x512xbf16>, vector<512x256xbf16>, vector<128x256xf32> -> vector<128x256xf32>
    %c0_17 = arith.constant 0 : index
    %c0_18 = arith.constant 0 : index
    %25 = vector.load %arg7[%c0_17, %c0_18] : memref<1x256xf32, #tpu.memory_space<vmem>>, vector<1x256xf32>
    %26 = vector.broadcast %25 : vector<1x256xf32> to vector<128x256xf32>
    %27 = arith.addf %24, %26 : vector<128x256xf32>
    %cst_19 = arith.constant 0.000000e+00 : f32
    %28 = vector.broadcast %cst_19 : f32 to vector<128x256xf32>
    %29 = arith.cmpf ogt, %27, %28 : vector<128x256xf32>
    %cst_20 = arith.constant 2.000000e-01 : f32
    %30 = vector.broadcast %cst_20 : f32 to vector<128x256xf32>
    %31 = arith.mulf %30, %27 : vector<128x256xf32>
    %32 = arith.select %29, %27, %31 : vector<128x256xi1>, vector<128x256xf32>
    %33 = arith.truncf %32 : vector<128x256xf32> to vector<128x256xbf16>
    %c0_21 = arith.constant 0 : index
    %c0_22 = arith.constant 0 : index
    %34 = vector.load %arg8[%c0_21, %c0_22] : memref<256x128xbf16, #tpu.memory_space<vmem>>, vector<256x128xbf16>
    %cst_23 = arith.constant dense<0.000000e+00> : vector<128x128xf32>
    %35 = tpu.matmul %33, %34, %cst_23 {dimension_numbers = #tpu.dot_dimension_numbers<[1], [0], [0], [1], [0, 0, 1, 1], [], []>} : vector<128x256xbf16>, vector<256x128xbf16>, vector<128x128xf32> -> vector<128x128xf32>
    %c0_24 = arith.constant 0 : index
    %c0_25 = arith.constant 0 : index
    %36 = vector.load %arg9[%c0_24, %c0_25] : memref<1x128xf32, #tpu.memory_space<vmem>>, vector<1x128xf32>
    %37 = vector.broadcast %36 : vector<1x128xf32> to vector<128x128xf32>
    %38 = arith.addf %35, %37 : vector<128x128xf32>
    %cst_26 = arith.constant 0.000000e+00 : f32
    %39 = vector.broadcast %cst_26 : f32 to vector<128x128xf32>
    %40 = arith.subf %39, %38 : vector<128x128xf32>
    %41 = math.exp %40 : vector<128x128xf32>
    %cst_27 = arith.constant 1.000000e+00 : f32
    %42 = vector.broadcast %cst_27 : f32 to vector<128x128xf32>
    %43 = arith.addf %42, %41 : vector<128x128xf32>
    %44 = tpu.reciprocal %43 {approx = true} : vector<128x128xf32> -> vector<128x128xf32>
    %c0_28 = arith.constant 0 : index
    %c0_29 = arith.constant 0 : index
    %45 = vector.load %arg10[%c0_28, %c0_29] : memref<128x128xf32, #tpu.memory_space<vmem>>, vector<128x128xf32>
    tpu.vector_store %arg10[%c0_28, %c0_29], %44 {strides = array<i32>} : memref<128x128xf32, #tpu.memory_space<vmem>>, vector<128x128xf32>,
    return
  }
  func.func @transform_0(%arg0: i32) -> (i32, i32) {
    %c0_i32 = arith.constant 0 : i32
    %c0_i32_0 = arith.constant 0 : i32
    return %arg0, %c0_i32 : i32, i32
  }
  func.func @transform_1(%arg0: i32) -> (i32, i32) {
    %c0_i32 = arith.constant 0 : i32
    %c0_i32_0 = arith.constant 0 : i32
    %c0_i32_1 = arith.constant 0 : i32
    return %c0_i32, %c0_i32_0 : i32, i32
  }
  func.func @transform_2(%arg0: i32) -> (i32, i32) {
    %c0_i32 = arith.constant 0 : i32
    %c0_i32_0 = arith.constant 0 : i32
    %c0_i32_1 = arith.constant 0 : i32
    return %c0_i32, %c0_i32_0 : i32, i32
  }
  func.func @transform_3(%arg0: i32) -> (i32, i32) {
    %c0_i32 = arith.constant 0 : i32
    %c0_i32_0 = arith.constant 0 : i32
    %c0_i32_1 = arith.constant 0 : i32
    return %c0_i32, %c0_i32_0 : i32, i32
  }
  func.func @transform_4(%arg0: i32) -> (i32, i32) {
    %c0_i32 = arith.constant 0 : i32
    %c0_i32_0 = arith.constant 0 : i32
    %c0_i32_1 = arith.constant 0 : i32
    return %c0_i32, %c0_i32_0 : i32, i32
  }
  func.func @transform_5(%arg0: i32) -> (i32, i32) {
    %c0_i32 = arith.constant 0 : i32
    %c0_i32_0 = arith.constant 0 : i32
    %c0_i32_1 = arith.constant 0 : i32
    return %c0_i32, %c0_i32_0 : i32, i32
  }
  func.func @transform_6(%arg0: i32) -> (i32, i32) {
    %c0_i32 = arith.constant 0 : i32
    %c0_i32_0 = arith.constant 0 : i32
    %c0_i32_1 = arith.constant 0 : i32
    return %c0_i32, %c0_i32_0 : i32, i32
  }
  func.func @transform_7(%arg0: i32) -> (i32, i32) {
    %c0_i32 = arith.constant 0 : i32
    %c0_i32_0 = arith.constant 0 : i32
    %c0_i32_1 = arith.constant 0 : i32
    return %c0_i32, %c0_i32_0 : i32, i32
  }
  func.func @transform_8(%arg0: i32) -> (i32, i32) {
    %c0_i32 = arith.constant 0 : i32
    %c0_i32_0 = arith.constant 0 : i32
    %c0_i32_1 = arith.constant 0 : i32
    return %c0_i32, %c0_i32_0 : i32, i32
  }
  func.func @transform_9(%arg0: i32) -> (i32, i32) {
    %c0_i32 = arith.constant 0 : i32
    %c0_i32_0 = arith.constant 0 : i32
    return %arg0, %c0_i32 : i32, i32
  }
}

</mosaic_0001>

<llo_original>
// kernel: discriminator_forward.1
$region0: #{discriminator_forward.1}
  #allocation0 [shape = 'u32[]', space=smem, size = 0x4, offset = 0x4, fixed_abs, tag = 'smem constant byte address 0x4 - core index']
  #allocation1 [shape = 'u32[144,128]{1,0:T(1,128)}', space=vmem, size = 0x12000, scoped, tag = 'internal scratch']
  %s0 = inlined_call_operand.vmem [shape: bf16[128,1024], index: 0, kind: input, shape index: {}]
  %s1 = inlined_call_operand.vmem [shape: bf16[1024,1024], index: 1, kind: input, shape index: {}]
  %s2 = inlined_call_operand.vmem [shape: f32[1,1024], index: 2, kind: input, shape index: {}]
  %s3 = inlined_call_operand.vmem [shape: bf16[1024,512], index: 3, kind: input, shape index: {}]
  %s4 = inlined_call_operand.vmem [shape: f32[1,512], index: 4, kind: input, shape index: {}]
  %s5 = inlined_call_operand.vmem [shape: bf16[512,256], index: 5, kind: input, shape index: {}]
  %s6 = inlined_call_operand.vmem [shape: f32[1,256], index: 6, kind: input, shape index: {}]
  %s7 = inlined_call_operand.vmem [shape: bf16[256,128], index: 7, kind: input, shape index: {}]
  %s8 = inlined_call_operand.vmem [shape: f32[1,128], index: 8, kind: input, shape index: {}]
  %s9 = inlined_call_operand.vmem [shape: f32[128,128], index: 9, kind: output, shape index: {}]
  %s10 = sld [smem:[#allocation0]]
  $region46: #{discriminator_forward.1} parent=0
    _
  %s12 = ssub.s32 1, %s10
  %s13 = scalar_select 0, %s12, %s10
  // Predicated region
  $region2: #{discriminator_forward.1} parent=0 // pred_check
    _
  $region3: #{discriminator_forward.1} parent=0 // pred_check_branch
    %15 = sbr.rel (0) target = $region5
  $region4: #{discriminator_forward.1} parent=0 // pred_region
    _
  $region5: #{discriminator_forward.1} parent=0 // pred_fallthru
    _
  // Predicated region
  $region6: #{discriminator_forward.1} parent=0 // pred_check
    _
  $region7: #{discriminator_forward.1} parent=0 // pred_check_branch
    %17 = sbr.rel (0) target = $region9
  $region8: #{discriminator_forward.1} parent=0 // pred_region
    _
  $region9: #{discriminator_forward.1} parent=0 // pred_fallthru
    _
  // Predicated region
  $region10: #{discriminator_forward.1} parent=0 // pred_check
    _
  $region11: #{discriminator_forward.1} parent=0 // pred_check_branch
    %19 = sbr.rel (0) target = $region13
  $region12: #{discriminator_forward.1} parent=0 // pred_region
    _
  $region13: #{discriminator_forward.1} parent=0 // pred_fallthru
    _
  // Predicated region
  $region14: #{discriminator_forward.1} parent=0 // pred_check
    _
  $region15: #{discriminator_forward.1} parent=0 // pred_check_branch
    %21 = sbr.rel (0) target = $region17
  $region16: #{discriminator_forward.1} parent=0 // pred_region
    _
  $region17: #{discriminator_forward.1} parent=0 // pred_fallthru
    _
  // Predicated region
  $region18: #{discriminator_forward.1} parent=0 // pred_check
    _
  $region19: #{discriminator_forward.1} parent=0 // pred_check_branch
    %23 = sbr.rel (0) target = $region21
  $region20: #{discriminator_forward.1} parent=0 // pred_region
    _
  $region21: #{discriminator_forward.1} parent=0 // pred_fallthru
    _
  // Predicated region
  $region22: #{discriminator_forward.1} parent=0 // pred_check
    _
  $region23: #{discriminator_forward.1} parent=0 // pred_check_branch
    %25 = sbr.rel (0) target = $region25
  $region24: #{discriminator_forward.1} parent=0 // pred_region
    _
  $region25: #{discriminator_forward.1} parent=0 // pred_fallthru
    _
  // Predicated region
  $region26: #{discriminator_forward.1} parent=0 // pred_check
    _
  $region27: #{discriminator_forward.1} parent=0 // pred_check_branch
    %27 = sbr.rel (0) target = $region29
  $region28: #{discriminator_forward.1} parent=0 // pred_region
    _
  $region29: #{discriminator_forward.1} parent=0 // pred_fallthru
    _
  // Predicated region
  $region30: #{discriminator_forward.1} parent=0 // pred_check
    _
  $region31: #{discriminator_forward.1} parent=0 // pred_check_branch
    %29 = sbr.rel (0) target = $region33
  $region32: #{discriminator_forward.1} parent=0 // pred_region
    _
  $region33: #{discriminator_forward.1} parent=0 // pred_fallthru
    _
  // Predicated region
  $region34: #{discriminator_forward.1} parent=0 // pred_check
    _
  $region35: #{discriminator_forward.1} parent=0 // pred_check_branch
    %31 = sbr.rel (0) target = $region37
  $region36: #{discriminator_forward.1} parent=0 // pred_region
    _
  $region37: #{discriminator_forward.1} parent=0 // pred_fallthru
    _
  %v33 = vld [vmem:[%s0] sm:$0xff]
  %v34 = vld [vmem:[%s0 + $0x8] sm:$0xff]
  %v35 = vld [vmem:[%s0 + $0x10] sm:$0xff]
  %v36 = vld [vmem:[%s0 + $0x18] sm:$0xff]
  %v37 = vld [vmem:[%s0 + $0x20] sm:$0xff]
  %v38 = vld [vmem:[%s0 + $0x28] sm:$0xff]
  %v39 = vld [vmem:[%s0 + $0x30] sm:$0xff]
  %v40 = vld [vmem:[%s0 + $0x38] sm:$0xff]
  %v41 = vld [vmem:[%s0 + $0x40] sm:$0xff]
  %v42 = vld [vmem:[%s0 + $0x48] sm:$0xff]
  %v43 = vld [vmem:[%s0 + $0x50] sm:$0xff]
  %v44 = vld [vmem:[%s0 + $0x58] sm:$0xff]
  %v45 = vld [vmem:[%s0 + $0x60] sm:$0xff]
  %v46 = vld [vmem:[%s0 + $0x68] sm:$0xff]
  %v47 = vld [vmem:[%s0 + $0x70] sm:$0xff]
  %v48 = vld [vmem:[%s0 + $0x78] sm:$0xff]
  %v49 = vld [vmem:[%s0 + $0x80] sm:$0xff]
  %v50 = vld [vmem:[%s0 + $0x88] sm:$0xff]
  %v51 = vld [vmem:[%s0 + $0x90] sm:$0xff]
  %v52 = vld [vmem:[%s0 + $0x98] sm:$0xff]
  %v53 = vld [vmem:[%s0 + $0xa0] sm:$0xff]
  %v54 = vld [vmem:[%s0 + $0xa8] sm:$0xff]
  %v55 = vld [vmem:[%s0 + $0xb0] sm:$0xff]
  %v56 = vld [vmem:[%s0 + $0xb8] sm:$0xff]
  %v57 = vld [vmem:[%s0 + $0xc0] sm:$0xff]
  %v58 = vld [vmem:[%s0 + $0xc8] sm:$0xff]
  %v59 = vld [vmem:[%s0 + $0xd0] sm:$0xff]
  %v60 = vld [vmem:[%s0 + $0xd8] sm:$0xff]
  %v61 = vld [vmem:[%s0 + $0xe0] sm:$0xff]
  %v62 = vld [vmem:[%s0 + $0xe8] sm:$0xff]
  %v63 = vld [vmem:[%s0 + $0xf0] sm:$0xff]
  %v64 = vld [vmem:[%s0 + $0xf8] sm:$0xff]
  %v65 = vld [vmem:[%s0 + $0x100] sm:$0xff]
  %v66 = vld [vmem:[%s0 + $0x108] sm:$0xff]
  %v67 = vld [vmem:[%s0 + $0x110] sm:$0xff]
  %v68 = vld [vmem:[%s0 + $0x118] sm:$0xff]
  %v69 = vld [vmem:[%s0 + $0x120] sm:$0xff]
  %v70 = vld [vmem:[%s0 + $0x128] sm:$0xff]
  %v71 = vld [vmem:[%s0 + $0x130] sm:$0xff]
  %v72 = vld [vmem:[%s0 + $0x138] sm:$0xff]
  %v73 = vld [vmem:[%s0 + $0x140] sm:$0xff]
  %v74 = vld [vmem:[%s0 + $0x148] sm:$0xff]
  %v75 = vld [vmem:[%s0 + $0x150] sm:$0xff]
  %v76 = vld [vmem:[%s0 + $0x158] sm:$0xff]
  %v77 = vld [vmem:[%s0 + $0x160] sm:$0xff]
  %v78 = vld [vmem:[%s0 + $0x168] sm:$0xff]
  %v79 = vld [vmem:[%s0 + $0x170] sm:$0xff]
  %v80 = vld [vmem:[%s0 + $0x178] sm:$0xff]
  %v81 = vld [vmem:[%s0 + $0x180] sm:$0xff]
  %v82 = vld [vmem:[%s0 + $0x188] sm:$0xff]
  %v83 = vld [vmem:[%s0 + $0x190] sm:$0xff]
  %v84 = vld [vmem:[%s0 + $0x198] sm:$0xff]
  %v85 = vld [vmem:[%s0 + $0x1a0] sm:$0xff]
  %v86 = vld [vmem:[%s0 + $0x1a8] sm:$0xff]
  %v87 = vld [vmem:[%s0 + $0x1b0] sm:$0xff]
  %v88 = vld [vmem:[%s0 + $0x1b8] sm:$0xff]
  %v89 = vld [vmem:[%s0 + $0x1c0] sm:$0xff]
  %v90 = vld [vmem:[%s0 + $0x1c8] sm:$0xff]
  %v91 = vld [vmem:[%s0 + $0x1d0] sm:$0xff]
  %v92 = vld [vmem:[%s0 + $0x1d8] sm:$0xff]
  %v93 = vld [vmem:[%s0 + $0x1e0] sm:$0xff]
  %v94 = vld [vmem:[%s0 + $0x1e8] sm:$0xff]
  %v95 = vld [vmem:[%s0 + $0x1f0] sm:$0xff]
  %v96 = vld [vmem:[%s0 + $0x1f8] sm:$0xff]
  %v97 = vld [vmem:[%s1] sm:$0xff]
  %v98 = vld [vmem:[%s1 + $0x8] sm:$0xff]
  %v99 = vld [vmem:[%s1 + $0x10] sm:$0xff]
  %v100 = vld [vmem:[%s1 + $0x18] sm:$0xff]
  %v101 = vld [vmem:[%s1 + $0x20] sm:$0xff]
  %v102 = vld [vmem:[%s1 + $0x28] sm:$0xff]
  %v103 = vld [vmem:[%s1 + $0x30] sm:$0xff]
  %v104 = vld [vmem:[%s1 + $0x38] sm:$0xff]
  %v105 = vld [vmem:[%s1 + $0x40] sm:$0xff]
  %v106 = vld [vmem:[%s1 + $0x48] sm:$0xff]
  %v107 = vld [vmem:[%s1 + $0x50] sm:$0xff]
  %v108 = vld [vmem:[%s1 + $0x58] sm:$0xff]
  %v109 = vld [vmem:[%s1 + $0x60] sm:$0xff]
  %v110 = vld [vmem:[%s1 + $0x68] sm:$0xff]
  %v111 = vld [vmem:[%s1 + $0x70] sm:$0xff]
  %v112 = vld [vmem:[%s1 + $0x78] sm:$0xff]
  %v113 = vld [vmem:[%s1 + $0x80] sm:$0xff]
  %v114 = vld [vmem:[%s1 + $0x88] sm:$0xff]
  %v115 = vld [vmem:[%s1 + $0x90] sm:$0xff]
  %v116 = vld [vmem:[%s1 + $0x98] sm:$0xff]
  %v117 = vld [vmem:[%s1 + $0xa0] sm:$0xff]
  %v118 = vld [vmem:[%s1 + $0xa8] sm:$0xff]
  %v119 = vld [vmem:[%s1 + $0xb0] sm:$0xff]
  %v120 = vld [vmem:[%s1 + $0xb8] sm:$0xff]
  %v121 = vld [vmem:[%s1 + $0xc0] sm:$0xff]
  %v122 = vld [vmem:[%s1 + $0xc8] sm:$0xff]
  %v123 = vld [vmem:[%s1 + $0xd0] sm:$0xff]
  %v124 = vld [vmem:[%s1 + $0xd8] sm:$0xff]
  %v125 = vld [vmem:[%s1 + $0xe0] sm:$0xff]
  %v126 = vld [vmem:[%s1 + $0xe8] sm:$0xff]
  %v127 = vld [vmem:[%s1 + $0xf0] sm:$0xff]
  %v128 = vld [vmem:[%s1 + $0xf8] sm:$0xff]
  %v129 = vld [vmem:[%s1 + $0x100] sm:$0xff]
  %v130 = vld [vmem:[%s1 + $0x108] sm:$0xff]
  %v131 = vld [vmem:[%s1 + $0x110] sm:$0xff]
  %v132 = vld [vmem:[%s1 + $0x118] sm:$0xff]
  %v133 = vld [vmem:[%s1 + $0x120] sm:$0xff]
  %v134 = vld [vmem:[%s1 + $0x128] sm:$0xff]
  %v135 = vld [vmem:[%s1 + $0x130] sm:$0xff]
  %v136 = vld [vmem:[%s1 + $0x138] sm:$0xff]
  %v137 = vld [vmem:[%s1 + $0x140] sm:$0xff]
  %v138 = vld [vmem:[%s1 + $0x148] sm:$0xff]
  %v139 = vld [vmem:[%s1 + $0x150] sm:$0xff]
  %v140 = vld [vmem:[%s1 + $0x158] sm:$0xff]
  %v141 = vld [vmem:[%s1 + $0x160] sm:$0xff]
  %v142 = vld [vmem:[%s1 + $0x168] sm:$0xff]
  %v143 = vld [vmem:[%s1 + $0x170] sm:$0xff]
  %v144 = vld [vmem:[%s1 + $0x178] sm:$0xff]
  %v145 = vld [vmem:[%s1 + $0x180] sm:$0xff]
  %v146 = vld [vmem:[%s1 + $0x188] sm:$0xff]
  %v147 = vld [vmem:[%s1 + $0x190] sm:$0xff]
  %v148 = vld [vmem:[%s1 + $0x198] sm:$0xff]
  %v149 = vld [vmem:[%s1 + $0x1a0] sm:$0xff]
  %v150 = vld [vmem:[%s1 + $0x1a8] sm:$0xff]
  %v151 = vld [vmem:[%s1 + $0x1b0] sm:$0xff]
  %v152 = vld [vmem:[%s1 + $0x1b8] sm:$0xff]
  %v153 = vld [vmem:[%s1 + $0x1c0] sm:$0xff]
  %v154 = vld [vmem:[%s1 + $0x1c8] sm:$0xff]
  %v155 = vld [vmem:[%s1 + $0x1d0] sm:$0xff]
  %v156 = vld [vmem:[%s1 + $0x1d8] sm:$0xff]
  %v157 = vld [vmem:[%s1 + $0x1e0] sm:$0xff]
  %v158 = vld [vmem:[%s1 + $0x1e8] sm:$0xff]
  %v159 = vld [vmem:[%s1 + $0x1f0] sm:$0xff]
  %v160 = vld [vmem:[%s1 + $0x1f8] sm:$0xff]
  %v161 = vld [vmem:[%s1 + $0x200] sm:$0xff]
  %v162 = vld [vmem:[%s1 + $0x208] sm:$0xff]
  %v163 = vld [vmem:[%s1 + $0x210] sm:$0xff]
  %v164 = vld [vmem:[%s1 + $0x218] sm:$0xff]
  %v165 = vld [vmem:[%s1 + $0x220] sm:$0xff]
  %v166 = vld [vmem:[%s1 + $0x228] sm:$0xff]
  %v167 = vld [vmem:[%s1 + $0x230] sm:$0xff]
  %v168 = vld [vmem:[%s1 + $0x238] sm:$0xff]
  %v169 = vld [vmem:[%s1 + $0x240] sm:$0xff]
  %v170 = vld [vmem:[%s1 + $0x248] sm:$0xff]
  %v171 = vld [vmem:[%s1 + $0x250] sm:$0xff]
  %v172 = vld [vmem:[%s1 + $0x258] sm:$0xff]
  %v173 = vld [vmem:[%s1 + $0x260] sm:$0xff]
  %v174 = vld [vmem:[%s1 + $0x268] sm:$0xff]
  %v175 = vld [vmem:[%s1 + $0x270] sm:$0xff]
  %v176 = vld [vmem:[%s1 + $0x278] sm:$0xff]
  %v177 = vld [vmem:[%s1 + $0x280] sm:$0xff]
  %v178 = vld [vmem:[%s1 + $0x288] sm:$0xff]
  %v179 = vld [vmem:[%s1 + $0x290] sm:$0xff]
  %v180 = vld [vmem:[%s1 + $0x298] sm:$0xff]
  %v181 = vld [vmem:[%s1 + $0x2a0] sm:$0xff]
  %v182 = vld [vmem:[%s1 + $0x2a8] sm:$0xff]
  %v183 = vld [vmem:[%s1 + $0x2b0] sm:$0xff]
  %v184 = vld [vmem:[%s1 + $0x2b8] sm:$0xff]
  %v185 = vld [vmem:[%s1 + $0x2c0] sm:$0xff]
  %v186 = vld [vmem:[%s1 + $0x2c8] sm:$0xff]
  %v187 = vld [vmem:[%s1 + $0x2d0] sm:$0xff]
  %v188 = vld [vmem:[%s1 + $0x2d8] sm:$0xff]
  %v189 = vld [vmem:[%s1 + $0x2e0] sm:$0xff]
  %v190 = vld [vmem:[%s1 + $0x2e8] sm:$0xff]
  %v191 = vld [vmem:[%s1 + $0x2f0] sm:$0xff]
  %v192 = vld [vmem:[%s1 + $0x2f8] sm:$0xff]
  %v193 = vld [vmem:[%s1 + $0x300] sm:$0xff]
  %v194 = vld [vmem:[%s1 + $0x308] sm:$0xff]
  %v195 = vld [vmem:[%s1 + $0x310] sm:$0xff]
  %v196 = vld [vmem:[%s1 + $0x318] sm:$0xff]
  %v197 = vld [vmem:[%s1 + $0x320] sm:$0xff]
  %v198 = vld [vmem:[%s1 + $0x328] sm:$0xff]
  %v199 = vld [vmem:[%s1 + $0x330] sm:$0xff]
  %v200 = vld [vmem:[%s1 + $0x338] sm:$0xff]
  %v201 = vld [vmem:[%s1 + $0x340] sm:$0xff]
  %v202 = vld [vmem:[%s1 + $0x348] sm:$0xff]
  %v203 = vld [vmem:[%s1 + $0x350] sm:$0xff]
  %v204 = vld [vmem:[%s1 + $0x358] sm:$0xff]
  %v205 = vld [vmem:[%s1 + $0x360] sm:$0xff]
  %v206 = vld [vmem:[%s1 + $0x368] sm:$0xff]
  %v207 = vld [vmem:[%s1 + $0x370] sm:$0xff]
  %v208 = vld [vmem:[%s1 + $0x378] sm:$0xff]
  %v209 = vld [vmem:[%s1 + $0x380] sm:$0xff]
  %v210 = vld [vmem:[%s1 + $0x388] sm:$0xff]
  %v211 = vld [vmem:[%s1 + $0x390] sm:$0xff]
  %v212 = vld [vmem:[%s1 + $0x398] sm:$0xff]
  %v213 = vld [vmem:[%s1 + $0x3a0] sm:$0xff]
  %v214 = vld [vmem:[%s1 + $0x3a8] sm:$0xff]
  %v215 = vld [vmem:[%s1 + $0x3b0] sm:$0xff]
  %v216 = vld [vmem:[%s1 + $0x3b8] sm:$0xff]
  %v217 = vld [vmem:[%s1 + $0x3c0] sm:$0xff]
  %v218 = vld [vmem:[%s1 + $0x3c8] sm:$0xff]
  %v219 = vld [vmem:[%s1 + $0x3d0] sm:$0xff]
  %v220 = vld [vmem:[%s1 + $0x3d8] sm:$0xff]
  %v221 = vld [vmem:[%s1 + $0x3e0] sm:$0xff]
  %v222 = vld [vmem:[%s1 + $0x3e8] sm:$0xff]
  %v223 = vld [vmem:[%s1 + $0x3f0] sm:$0xff]
  %v224 = vld [vmem:[%s1 + $0x3f8] sm:$0xff]
  %v225 = vld [vmem:[%s1 + $0x400] sm:$0xff]
  %v226 = vld [vmem:[%s1 + $0x408] sm:$0xff]
  %v227 = vld [vmem:[%s1 + $0x410] sm:$0xff]
  %v228 = vld [vmem:[%s1 + $0x418] sm:$0xff]
  %v229 = vld [vmem:[%s1 + $0x420] sm:$0xff]
  %v230 = vld [vmem:[%s1 + $0x428] sm:$0xff]
  %v231 = vld [vmem:[%s1 + $0x430] sm:$0xff]
  %v232 = vld [vmem:[%s1 + $0x438] sm:$0xff]
  %v233 = vld [vmem:[%s1 + $0x440] sm:$0xff]
  %v234 = vld [vmem:[%s1 + $0x448] sm:$0xff]
  %v235 = vld [vmem:[%s1 + $0x450] sm:$0xff]
  %v236 = vld [vmem:[%s1 + $0x458] sm:$0xff]
  %v237 = vld [vmem:[%s1 + $0x460] sm:$0xff]
  %v238 = vld [vmem:[%s1 + $0x468] sm:$0xff]
  %v239 = vld [vmem:[%s1 + $0x470] sm:$0xff]
  %v240 = vld [vmem:[%s1 + $0x478] sm:$0xff]
  %v241 = vld [vmem:[%s1 + $0x480] sm:$0xff]
  %v242 = vld [vmem:[%s1 + $0x488] sm:$0xff]
  %v243 = vld [vmem:[%s1 + $0x490] sm:$0xff]
  %v244 = vld [vmem:[%s1 + $0x498] sm:$0xff]
  %v245 = vld [vmem:[%s1 + $0x4a0] sm:$0xff]
  %v246 = vld [vmem:[%s1 + $0x4a8] sm:$0xff]
  %v247 = vld [vmem:[%s1 + $0x4b0] sm:$0xff]
  %v248 = vld [vmem:[%s1 + $0x4b8] sm:$0xff]
  %v249 = vld [vmem:[%s1 + $0x4c0] sm:$0xff]
  %v250 = vld [vmem:[%s1 + $0x4c8] sm:$0xff]
  %v251 = vld [vmem:[%s1 + $0x4d0] sm:$0xff]
  %v252 = vld [vmem:[%s1 + $0x4d8] sm:$0xff]
  %v253 = vld [vmem:[%s1 + $0x4e0] sm:$0xff]
  %v254 = vld [vmem:[%s1 + $0x4e8] sm:$0xff]
  %v255 = vld [vmem:[%s1 + $0x4f0] sm:$0xff]
  %v256 = vld [vmem:[%s1 + $0x4f8] sm:$0xff]
  %v257 = vld [vmem:[%s1 + $0x500] sm:$0xff]
  %v258 = vld [vmem:[%s1 + $0x508] sm:$0xff]
  %v259 = vld [vmem:[%s1 + $0x510] sm:$0xff]
  %v260 = vld [vmem:[%s1 + $0x518] sm:$0xff]
  %v261 = vld [vmem:[%s1 + $0x520] sm:$0xff]
  %v262 = vld [vmem:[%s1 + $0x528] sm:$0xff]
  %v263 = vld [vmem:[%s1 + $0x530] sm:$0xff]
  %v264 = vld [vmem:[%s1 + $0x538] sm:$0xff]
  %v265 = vld [vmem:[%s1 + $0x540] sm:$0xff]
  %v266 = vld [vmem:[%s1 + $0x548] sm:$0xff]
  %v267 = vld [vmem:[%s1 + $0x550] sm:$0xff]
  %v268 = vld [vmem:[%s1 + $0x558] sm:$0xff]
  %v269 = vld [vmem:[%s1 + $0x560] sm:$0xff]
  %v270 = vld [vmem:[%s1 + $0x568] sm:$0xff]
  %v271 = vld [vmem:[%s1 + $0x570] sm:$0xff]
  %v272 = vld [vmem:[%s1 + $0x578] sm:$0xff]
  %v273 = vld [vmem:[%s1 + $0x580] sm:$0xff]
  %v274 = vld [vmem:[%s1 + $0x588] sm:$0xff]
  %v275 = vld [vmem:[%s1 + $0x590] sm:$0xff]
  %v276 = vld [vmem:[%s1 + $0x598] sm:$0xff]
  %v277 = vld [vmem:[%s1 + $0x5a0] sm:$0xff]
  %v278 = vld [vmem:[%s1 + $0x5a8] sm:$0xff]
  %v279 = vld [vmem:[%s1 + $0x5b0] sm:$0xff]
  %v280 = vld [vmem:[%s1 + $0x5b8] sm:$0xff]
  %v281 = vld [vmem:[%s1 + $0x5c0] sm:$0xff]
  %v282 = vld [vmem:[%s1 + $0x5c8] sm:$0xff]
  %v283 = vld [vmem:[%s1 + $0x5d0] sm:$0xff]
  %v284 = vld [vmem:[%s1 + $0x5d8] sm:$0xff]
  %v285 = vld [vmem:[%s1 + $0x5e0] sm:$0xff]
  %v286 = vld [vmem:[%s1 + $0x5e8] sm:$0xff]
  %v287 = vld [vmem:[%s1 + $0x5f0] sm:$0xff]
  %v288 = vld [vmem:[%s1 + $0x5f8] sm:$0xff]
  %v289 = vld [vmem:[%s1 + $0x600] sm:$0xff]
  %v290 = vld [vmem:[%s1 + $0x608] sm:$0xff]
  %v291 = vld [vmem:[%s1 + $0x610] sm:$0xff]
  %v292 = vld [vmem:[%s1 + $0x618] sm:$0xff]
  %v293 = vld [vmem:[%s1 + $0x620] sm:$0xff]
  %v294 = vld [vmem:[%s1 + $0x628] sm:$0xff]
  %v295 = vld [vmem:[%s1 + $0x630] sm:$0xff]
  %v296 = vld [vmem:[%s1 + $0x638] sm:$0xff]
  %v297 = vld [vmem:[%s1 + $0x640] sm:$0xff]
  %v298 = vld [vmem:[%s1 + $0x648] sm:$0xff]
  %v299 = vld [vmem:[%s1 + $0x650] sm:$0xff]
  %v300 = vld [vmem:[%s1 + $0x658] sm:$0xff]
  %v301 = vld [vmem:[%s1 + $0x660] sm:$0xff]
  %v302 = vld [vmem:[%s1 + $0x668] sm:$0xff]
  %v303 = vld [vmem:[%s1 + $0x670] sm:$0xff]
  %v304 = vld [vmem:[%s1 + $0x678] sm:$0xff]
  %v305 = vld [vmem:[%s1 + $0x680] sm:$0xff]
  %v306 = vld [vmem:[%s1 + $0x688] sm:$0xff]
  %v307 = vld [vmem:[%s1 + $0x690] sm:$0xff]
  %v308 = vld [vmem:[%s1 + $0x698] sm:$0xff]
  %v309 = vld [vmem:[%s1 + $0x6a0] sm:$0xff]
  %v310 = vld [vmem:[%s1 + $0x6a8] sm:$0xff]
  %v311 = vld [vmem:[%s1 + $0x6b0] sm:$0xff]
  %v312 = vld [vmem:[%s1 + $0x6b8] sm:$0xff]
  %v313 = vld [vmem:[%s1 + $0x6c0] sm:$0xff]
  %v314 = vld [vmem:[%s1 + $0x6c8] sm:$0xff]
  %v315 = vld [vmem:[%s1 + $0x6d0] sm:$0xff]
  %v316 = vld [vmem:[%s1 + $0x6d8] sm:$0xff]
  %v317 = vld [vmem:[%s1 + $0x6e0] sm:$0xff]
  %v318 = vld [vmem:[%s1 + $0x6e8] sm:$0xff]
  %v319 = vld [vmem:[%s1 + $0x6f0] sm:$0xff]
  %v320 = vld [vmem:[%s1 + $0x6f8] sm:$0xff]
  %v321 = vld [vmem:[%s1 + $0x700] sm:$0xff]
  %v322 = vld [vmem:[%s1 + $0x708] sm:$0xff]
  %v323 = vld [vmem:[%s1 + $0x710] sm:$0xff]
  %v324 = vld [vmem:[%s1 + $0x718] sm:$0xff]
  %v325 = vld [vmem:[%s1 + $0x720] sm:$0xff]
  %v326 = vld [vmem:[%s1 + $0x728] sm:$0xff]
  %v327 = vld [vmem:[%s1 + $0x730] sm:$0xff]
  %v328 = vld [vmem:[%s1 + $0x738] sm:$0xff]
  %v329 = vld [vmem:[%s1 + $0x740] sm:$0xff]
  %v330 = vld [vmem:[%s1 + $0x748] sm:$0xff]
  %v331 = vld [vmem:[%s1 + $0x750] sm:$0xff]
  %v332 = vld [vmem:[%s1 + $0x758] sm:$0xff]
  %v333 = vld [vmem:[%s1 + $0x760] sm:$0xff]
  %v334 = vld [vmem:[%s1 + $0x768] sm:$0xff]
  %v335 = vld [vmem:[%s1 + $0x770] sm:$0xff]
  %v336 = vld [vmem:[%s1 + $0x778] sm:$0xff]
  %v337 = vld [vmem:[%s1 + $0x780] sm:$0xff]
  %v338 = vld [vmem:[%s1 + $0x788] sm:$0xff]
  %v339 = vld [vmem:[%s1 + $0x790] sm:$0xff]
  %v340 = vld [vmem:[%s1 + $0x798] sm:$0xff]
  %v341 = vld [vmem:[%s1 + $0x7a0] sm:$0xff]
  %v342 = vld [vmem:[%s1 + $0x7a8] sm:$0xff]
  %v343 = vld [vmem:[%s1 + $0x7b0] sm:$0xff]
  %v344 = vld [vmem:[%s1 + $0x7b8] sm:$0xff]
  %v345 = vld [vmem:[%s1 + $0x7c0] sm:$0xff]
  %v346 = vld [vmem:[%s1 + $0x7c8] sm:$0xff]
  %v347 = vld [vmem:[%s1 + $0x7d0] sm:$0xff]
  %v348 = vld [vmem:[%s1 + $0x7d8] sm:$0xff]
  %v349 = vld [vmem:[%s1 + $0x7e0] sm:$0xff]
  %v350 = vld [vmem:[%s1 + $0x7e8] sm:$0xff]
  %v351 = vld [vmem:[%s1 + $0x7f0] sm:$0xff]
  %v352 = vld [vmem:[%s1 + $0x7f8] sm:$0xff]
  %v353 = vld [vmem:[%s1 + $0x800] sm:$0xff]
  %v354 = vld [vmem:[%s1 + $0x808] sm:$0xff]
  %v355 = vld [vmem:[%s1 + $0x810] sm:$0xff]
  %v356 = vld [vmem:[%s1 + $0x818] sm:$0xff]
  %v357 = vld [vmem:[%s1 + $0x820] sm:$0xff]
  %v358 = vld [vmem:[%s1 + $0x828] sm:$0xff]
  %v359 = vld [vmem:[%s1 + $0x830] sm:$0xff]
  %v360 = vld [vmem:[%s1 + $0x838] sm:$0xff]
  %v361 = vld [vmem:[%s1 + $0x840] sm:$0xff]
  %v362 = vld [vmem:[%s1 + $0x848] sm:$0xff]
  %v363 = vld [vmem:[%s1 + $0x850] sm:$0xff]
  %v364 = vld [vmem:[%s1 + $0x858] sm:$0xff]
  %v365 = vld [vmem:[%s1 + $0x860] sm:$0xff]
  %v366 = vld [vmem:[%s1 + $0x868] sm:$0xff]
  %v367 = vld [vmem:[%s1 + $0x870] sm:$0xff]
  %v368 = vld [vmem:[%s1 + $0x878] sm:$0xff]
  %v369 = vld [vmem:[%s1 + $0x880] sm:$0xff]
  %v370 = vld [vmem:[%s1 + $0x888] sm:$0xff]
  %v371 = vld [vmem:[%s1 + $0x890] sm:$0xff]
  %v372 = vld [vmem:[%s1 + $0x898] sm:$0xff]
  %v373 = vld [vmem:[%s1 + $0x8a0] sm:$0xff]
  %v374 = vld [vmem:[%s1 + $0x8a8] sm:$0xff]
  %v375 = vld [vmem:[%s1 + $0x8b0] sm:$0xff]
  %v376 = vld [vmem:[%s1 + $0x8b8] sm:$0xff]
  %v377 = vld [vmem:[%s1 + $0x8c0] sm:$0xff]
  %v378 = vld [vmem:[%s1 + $0x8c8] sm:$0xff]
  %v379 = vld [vmem:[%s1 + $0x8d0] sm:$0xff]
  %v380 = vld [vmem:[%s1 + $0x8d8] sm:$0xff]
  %v381 = vld [vmem:[%s1 + $0x8e0] sm:$0xff]
  %v382 = vld [vmem:[%s1 + $0x8e8] sm:$0xff]
  %v383 = vld [vmem:[%s1 + $0x8f0] sm:$0xff]
  %v384 = vld [vmem:[%s1 + $0x8f8] sm:$0xff]
  %v385 = vld [vmem:[%s1 + $0x900] sm:$0xff]
  %v386 = vld [vmem:[%s1 + $0x908] sm:$0xff]
  %v387 = vld [vmem:[%s1 + $0x910] sm:$0xff]
  %v388 = vld [vmem:[%s1 + $0x918] sm:$0xff]
  %v389 = vld [vmem:[%s1 + $0x920] sm:$0xff]
  %v390 = vld [vmem:[%s1 + $0x928] sm:$0xff]
  %v391 = vld [vmem:[%s1 + $0x930] sm:$0xff]
  %v392 = vld [vmem:[%s1 + $0x938] sm:$0xff]
  %v393 = vld [vmem:[%s1 + $0x940] sm:$0xff]
  %v394 = vld [vmem:[%s1 + $0x948] sm:$0xff]
  %v395 = vld [vmem:[%s1 + $0x950] sm:$0xff]
  %v396 = vld [vmem:[%s1 + $0x958] sm:$0xff]
  %v397 = vld [vmem:[%s1 + $0x960] sm:$0xff]
  %v398 = vld [vmem:[%s1 + $0x968] sm:$0xff]
  %v399 = vld [vmem:[%s1 + $0x970] sm:$0xff]
  %v400 = vld [vmem:[%s1 + $0x978] sm:$0xff]
  %v401 = vld [vmem:[%s1 + $0x980] sm:$0xff]
  %v402 = vld [vmem:[%s1 + $0x988] sm:$0xff]
  %v403 = vld [vmem:[%s1 + $0x990] sm:$0xff]
  %v404 = vld [vmem:[%s1 + $0x998] sm:$0xff]
  %v405 = vld [vmem:[%s1 + $0x9a0] sm:$0xff]
  %v406 = vld [vmem:[%s1 + $0x9a8] sm:$0xff]
  %v407 = vld [vmem:[%s1 + $0x9b0] sm:$0xff]
  %v408 = vld [vmem:[%s1 + $0x9b8] sm:$0xff]
  %v409 = vld [vmem:[%s1 + $0x9c0] sm:$0xff]
  %v410 = vld [vmem:[%s1 + $0x9c8] sm:$0xff]
  %v411 = vld [vmem:[%s1 + $0x9d0] sm:$0xff]
  %v412 = vld [vmem:[%s1 + $0x9d8] sm:$0xff]
  %v413 = vld [vmem:[%s1 + $0x9e0] sm:$0xff]
  %v414 = vld [vmem:[%s1 + $0x9e8] sm:$0xff]
  %v415 = vld [vmem:[%s1 + $0x9f0] sm:$0xff]
  %v416 = vld [vmem:[%s1 + $0x9f8] sm:$0xff]
  %v417 = vld [vmem:[%s1 + $0xa00] sm:$0xff]
  %v418 = vld [vmem:[%s1 + $0xa08] sm:$0xff]
  %v419 = vld [vmem:[%s1 + $0xa10] sm:$0xff]
  %v420 = vld [vmem:[%s1 + $0xa18] sm:$0xff]
  %v421 = vld [vmem:[%s1 + $0xa20] sm:$0xff]
  %v422 = vld [vmem:[%s1 + $0xa28] sm:$0xff]
  %v423 = vld [vmem:[%s1 + $0xa30] sm:$0xff]
  %v424 = vld [vmem:[%s1 + $0xa38] sm:$0xff]
  %v425 = vld [vmem:[%s1 + $0xa40] sm:$0xff]
  %v426 = vld [vmem:[%s1 + $0xa48] sm:$0xff]
  %v427 = vld [vmem:[%s1 + $0xa50] sm:$0xff]
  %v428 = vld [vmem:[%s1 + $0xa58] sm:$0xff]
  %v429 = vld [vmem:[%s1 + $0xa60] sm:$0xff]
  %v430 = vld [vmem:[%s1 + $0xa68] sm:$0xff]
  %v431 = vld [vmem:[%s1 + $0xa70] sm:$0xff]
  %v432 = vld [vmem:[%s1 + $0xa78] sm:$0xff]
  %v433 = vld [vmem:[%s1 + $0xa80] sm:$0xff]
  %v434 = vld [vmem:[%s1 + $0xa88] sm:$0xff]
  %v435 = vld [vmem:[%s1 + $0xa90] sm:$0xff]
  %v436 = vld [vmem:[%s1 + $0xa98] sm:$0xff]
  %v437 = vld [vmem:[%s1 + $0xaa0] sm:$0xff]
  %v438 = vld [vmem:[%s1 + $0xaa8] sm:$0xff]
  %v439 = vld [vmem:[%s1 + $0xab0] sm:$0xff]
  %v440 = vld [vmem:[%s1 + $0xab8] sm:$0xff]
  %v441 = vld [vmem:[%s1 + $0xac0] sm:$0xff]
  %v442 = vld [vmem:[%s1 + $0xac8] sm:$0xff]
  %v443 = vld [vmem:[%s1 + $0xad0] sm:$0xff]
  %v444 = vld [vmem:[%s1 + $0xad8] sm:$0xff]
  %v445 = vld [vmem:[%s1 + $0xae0] sm:$0xff]
  %v446 = vld [vmem:[%s1 + $0xae8] sm:$0xff]
  %v447 = vld [vmem:[%s1 + $0xaf0] sm:$0xff]
  %v448 = vld [vmem:[%s1 + $0xaf8] sm:$0xff]
  %v449 = vld [vmem:[%s1 + $0xb00] sm:$0xff]
  %v450 = vld [vmem:[%s1 + $0xb08] sm:$0xff]
  %v451 = vld [vmem:[%s1 + $0xb10] sm:$0xff]
  %v452 = vld [vmem:[%s1 + $0xb18] sm:$0xff]
  %v453 = vld [vmem:[%s1 + $0xb20] sm:$0xff]
  %v454 = vld [vmem:[%s1 + $0xb28] sm:$0xff]
  %v455 = vld [vmem:[%s1 + $0xb30] sm:$0xff]
  %v456 = vld [vmem:[%s1 + $0xb38] sm:$0xff]
  %v457 = vld [vmem:[%s1 + $0xb40] sm:$0xff]
  %v458 = vld [vmem:[%s1 + $0xb48] sm:$0xff]
  %v459 = vld [vmem:[%s1 + $0xb50] sm:$0xff]
  %v460 = vld [vmem:[%s1 + $0xb58] sm:$0xff]
  %v461 = vld [vmem:[%s1 + $0xb60] sm:$0xff]
  %v462 = vld [vmem:[%s1 + $0xb68] sm:$0xff]
  %v463 = vld [vmem:[%s1 + $0xb70] sm:$0xff]
  %v464 = vld [vmem:[%s1 + $0xb78] sm:$0xff]
  %v465 = vld [vmem:[%s1 + $0xb80] sm:$0xff]
  %v466 = vld [vmem:[%s1 + $0xb88] sm:$0xff]
  %v467 = vld [vmem:[%s1 + $0xb90] sm:$0xff]
  %v468 = vld [vmem:[%s1 + $0xb98] sm:$0xff]
  %v469 = vld [vmem:[%s1 + $0xba0] sm:$0xff]
  %v470 = vld [vmem:[%s1 + $0xba8] sm:$0xff]
  %v471 = vld [vmem:[%s1 + $0xbb0] sm:$0xff]
  %v472 = vld [vmem:[%s1 + $0xbb8] sm:$0xff]
  %v473 = vld [vmem:[%s1 + $0xbc0] sm:$0xff]
  %v474 = vld [vmem:[%s1 + $0xbc8] sm:$0xff]
  %v475 = vld [vmem:[%s1 + $0xbd0] sm:$0xff]
  %v476 = vld [vmem:[%s1 + $0xbd8] sm:$0xff]
  %v477 = vld [vmem:[%s1 + $0xbe0] sm:$0xff]
  %v478 = vld [vmem:[%s1 + $0xbe8] sm:$0xff]
  %v479 = vld [vmem:[%s1 + $0xbf0] sm:$0xff]
  %v480 = vld [vmem:[%s1 + $0xbf8] sm:$0xff]
  %v481 = vld [vmem:[%s1 + $0xc00] sm:$0xff]
  %v482 = vld [vmem:[%s1 + $0xc08] sm:$0xff]
  %v483 = vld [vmem:[%s1 + $0xc10] sm:$0xff]
  %v484 = vld [vmem:[%s1 + $0xc18] sm:$0xff]
  %v485 = vld [vmem:[%s1 + $0xc20] sm:$0xff]
  %v486 = vld [vmem:[%s1 + $0xc28] sm:$0xff]
  %v487 = vld [vmem:[%s1 + $0xc30] sm:$0xff]
  %v488 = vld [vmem:[%s1 + $0xc38] sm:$0xff]
  %v489 = vld [vmem:[%s1 + $0xc40] sm:$0xff]
  %v490 = vld [vmem:[%s1 + $0xc48] sm:$0xff]
  %v491 = vld [vmem:[%s1 + $0xc50] sm:$0xff]
  %v492 = vld [vmem:[%s1 + $0xc58] sm:$0xff]
  %v493 = vld [vmem:[%s1 + $0xc60] sm:$0xff]
  %v494 = vld [vmem:[%s1 + $0xc68] sm:$0xff]
  %v495 = vld [vmem:[%s1 + $0xc70] sm:$0xff]
  %v496 = vld [vmem:[%s1 + $0xc78] sm:$0xff]
  %v497 = vld [vmem:[%s1 + $0xc80] sm:$0xff]
  %v498 = vld [vmem:[%s1 + $0xc88] sm:$0xff]
  %v499 = vld [vmem:[%s1 + $0xc90] sm:$0xff]
  %v500 = vld [vmem:[%s1 + $0xc98] sm:$0xff]
  %v501 = vld [vmem:[%s1 + $0xca0] sm:$0xff]
  %v502 = vld [vmem:[%s1 + $0xca8] sm:$0xff]
  %v503 = vld [vmem:[%s1 + $0xcb0] sm:$0xff]
  %v504 = vld [vmem:[%s1 + $0xcb8] sm:$0xff]
  %v505 = vld [vmem:[%s1 + $0xcc0] sm:$0xff]
  %v506 = vld [vmem:[%s1 + $0xcc8] sm:$0xff]
  %v507 = vld [vmem:[%s1 + $0xcd0] sm:$0xff]
  %v508 = vld [vmem:[%s1 + $0xcd8] sm:$0xff]
  %v509 = vld [vmem:[%s1 + $0xce0] sm:$0xff]
  %v510 = vld [vmem:[%s1 + $0xce8] sm:$0xff]
  %v511 = vld [vmem:[%s1 + $0xcf0] sm:$0xff]
  %v512 = vld [vmem:[%s1 + $0xcf8] sm:$0xff]
  %v513 = vld [vmem:[%s1 + $0xd00] sm:$0xff]
  %v514 = vld [vmem:[%s1 + $0xd08] sm:$0xff]
  %v515 = vld [vmem:[%s1 + $0xd10] sm:$0xff]
  %v516 = vld [vmem:[%s1 + $0xd18] sm:$0xff]
  %v517 = vld [vmem:[%s1 + $0xd20] sm:$0xff]
  %v518 = vld [vmem:[%s1 + $0xd28] sm:$0xff]
  %v519 = vld [vmem:[%s1 + $0xd30] sm:$0xff]
  %v520 = vld [vmem:[%s1 + $0xd38] sm:$0xff]
  %v521 = vld [vmem:[%s1 + $0xd40] sm:$0xff]
  %v522 = vld [vmem:[%s1 + $0xd48] sm:$0xff]
  %v523 = vld [vmem:[%s1 + $0xd50] sm:$0xff]
  %v524 = vld [vmem:[%s1 + $0xd58] sm:$0xff]
  %v525 = vld [vmem:[%s1 + $0xd60] sm:$0xff]
  %v526 = vld [vmem:[%s1 + $0xd68] sm:$0xff]
  %v527 = vld [vmem:[%s1 + $0xd70] sm:$0xff]
  %v528 = vld [vmem:[%s1 + $0xd78] sm:$0xff]
  %v529 = vld [vmem:[%s1 + $0xd80] sm:$0xff]
  %v530 = vld [vmem:[%s1 + $0xd88] sm:$0xff]
  %v531 = vld [vmem:[%s1 + $0xd90] sm:$0xff]
  %v532 = vld [vmem:[%s1 + $0xd98] sm:$0xff]
  %v533 = vld [vmem:[%s1 + $0xda0] sm:$0xff]
  %v534 = vld [vmem:[%s1 + $0xda8] sm:$0xff]
  %v535 = vld [vmem:[%s1 + $0xdb0] sm:$0xff]
  %v536 = vld [vmem:[%s1 + $0xdb8] sm:$0xff]
  %v537 = vld [vmem:[%s1 + $0xdc0] sm:$0xff]
  %v538 = vld [vmem:[%s1 + $0xdc8] sm:$0xff]
  %v539 = vld [vmem:[%s1 + $0xdd0] sm:$0xff]
  %v540 = vld [vmem:[%s1 + $0xdd8] sm:$0xff]
  %v541 = vld [vmem:[%s1 + $0xde0] sm:$0xff]
  %v542 = vld [vmem:[%s1 + $0xde8] sm:$0xff]
  %v543 = vld [vmem:[%s1 + $0xdf0] sm:$0xff]
  %v544 = vld [vmem:[%s1 + $0xdf8] sm:$0xff]
  %v545 = vld [vmem:[%s1 + $0xe00] sm:$0xff]
  %v546 = vld [vmem:[%s1 + $0xe08] sm:$0xff]
  %v547 = vld [vmem:[%s1 + $0xe10] sm:$0xff]
  %v548 = vld [vmem:[%s1 + $0xe18] sm:$0xff]
  %v549 = vld [vmem:[%s1 + $0xe20] sm:$0xff]
  %v550 = vld [vmem:[%s1 + $0xe28] sm:$0xff]
  %v551 = vld [vmem:[%s1 + $0xe30] sm:$0xff]
  %v552 = vld [vmem:[%s1 + $0xe38] sm:$0xff]
  %v553 = vld [vmem:[%s1 + $0xe40] sm:$0xff]
  %v554 = vld [vmem:[%s1 + $0xe48] sm:$0xff]
  %v555 = vld [vmem:[%s1 + $0xe50] sm:$0xff]
  %v556 = vld [vmem:[%s1 + $0xe58] sm:$0xff]
  %v557 = vld [vmem:[%s1 + $0xe60] sm:$0xff]
  %v558 = vld [vmem:[%s1 + $0xe68] sm:$0xff]
  %v559 = vld [vmem:[%s1 + $0xe70] sm:$0xff]
  %v560 = vld [vmem:[%s1 + $0xe78] sm:$0xff]
  %v561 = vld [vmem:[%s1 + $0xe80] sm:$0xff]
  %v562 = vld [vmem:[%s1 + $0xe88] sm:$0xff]
  %v563 = vld [vmem:[%s1 + $0xe90] sm:$0xff]
  %v564 = vld [vmem:[%s1 + $0xe98] sm:$0xff]
  %v565 = vld [vmem:[%s1 + $0xea0] sm:$0xff]
  %v566 = vld [vmem:[%s1 + $0xea8] sm:$0xff]
  %v567 = vld [vmem:[%s1 + $0xeb0] sm:$0xff]
  %v568 = vld [vmem:[%s1 + $0xeb8] sm:$0xff]
  %v569 = vld [vmem:[%s1 + $0xec0] sm:$0xff]
  %v570 = vld [vmem:[%s1 + $0xec8] sm:$0xff]
  %v571 = vld [vmem:[%s1 + $0xed0] sm:$0xff]
  %v572 = vld [vmem:[%s1 + $0xed8] sm:$0xff]
  %v573 = vld [vmem:[%s1 + $0xee0] sm:$0xff]
  %v574 = vld [vmem:[%s1 + $0xee8] sm:$0xff]
  %v575 = vld [vmem:[%s1 + $0xef0] sm:$0xff]
  %v576 = vld [vmem:[%s1 + $0xef8] sm:$0xff]
  %v577 = vld [vmem:[%s1 + $0xf00] sm:$0xff]
  %v578 = vld [vmem:[%s1 + $0xf08] sm:$0xff]
  %v579 = vld [vmem:[%s1 + $0xf10] sm:$0xff]
  %v580 = vld [vmem:[%s1 + $0xf18] sm:$0xff]
  %v581 = vld [vmem:[%s1 + $0xf20] sm:$0xff]
  %v582 = vld [vmem:[%s1 + $0xf28] sm:$0xff]
  %v583 = vld [vmem:[%s1 + $0xf30] sm:$0xff]
  %v584 = vld [vmem:[%s1 + $0xf38] sm:$0xff]
  %v585 = vld [vmem:[%s1 + $0xf40] sm:$0xff]
  %v586 = vld [vmem:[%s1 + $0xf48] sm:$0xff]
  %v587 = vld [vmem:[%s1 + $0xf50] sm:$0xff]
  %v588 = vld [vmem:[%s1 + $0xf58] sm:$0xff]
  %v589 = vld [vmem:[%s1 + $0xf60] sm:$0xff]
  %v590 = vld [vmem:[%s1 + $0xf68] sm:$0xff]
  %v591 = vld [vmem:[%s1 + $0xf70] sm:$0xff]
  %v592 = vld [vmem:[%s1 + $0xf78] sm:$0xff]
  %v593 = vld [vmem:[%s1 + $0xf80] sm:$0xff]
  %v594 = vld [vmem:[%s1 + $0xf88] sm:$0xff]
  %v595 = vld [vmem:[%s1 + $0xf90] sm:$0xff]
  %v596 = vld [vmem:[%s1 + $0xf98] sm:$0xff]
  %v597 = vld [vmem:[%s1 + $0xfa0] sm:$0xff]
  %v598 = vld [vmem:[%s1 + $0xfa8] sm:$0xff]
  %v599 = vld [vmem:[%s1 + $0xfb0] sm:$0xff]
  %v600 = vld [vmem:[%s1 + $0xfb8] sm:$0xff]
  %v601 = vld [vmem:[%s1 + $0xfc0] sm:$0xff]
  %v602 = vld [vmem:[%s1 + $0xfc8] sm:$0xff]
  %v603 = vld [vmem:[%s1 + $0xfd0] sm:$0xff]
  %v604 = vld [vmem:[%s1 + $0xfd8] sm:$0xff]
  %v605 = vld [vmem:[%s1 + $0xfe0] sm:$0xff]
  %v606 = vld [vmem:[%s1 + $0xfe8] sm:$0xff]
  %v607 = vld [vmem:[%s1 + $0xff0] sm:$0xff]
  %v608 = vld [vmem:[%s1 + $0xff8] sm:$0xff]
  %v609 = vld [vmem:[%s2] sm:$0xff]
  %v611 = vlaneseq
  %v612 = vshrl.u32 %v611, 7
  %v613 = vsub.s32 0, %v612
  %v614 = vrot.slane %v609, %v613
  %v615 = vlaneseq
  %v616 = vshrl.u32 %v615, 7
  %v617 = vsub.s32 1, %v616
  %v618 = vrot.slane %v609, %v617
  %v619 = vlaneseq
  %v620 = vshrl.u32 %v619, 7
  %v621 = vsub.s32 2, %v620
  %v622 = vrot.slane %v609, %v621
  %v623 = vlaneseq
  %v624 = vshrl.u32 %v623, 7
  %v625 = vsub.s32 3, %v624
  %v626 = vrot.slane %v609, %v625
  %v627 = vlaneseq
  %v628 = vshrl.u32 %v627, 7
  %v629 = vsub.s32 4, %v628
  %v630 = vrot.slane %v609, %v629
  %v631 = vlaneseq
  %v632 = vshrl.u32 %v631, 7
  %v633 = vsub.s32 5, %v632
  %v634 = vrot.slane %v609, %v633
  %v635 = vlaneseq
  %v636 = vshrl.u32 %v635, 7
  %v637 = vsub.s32 6, %v636
  %v638 = vrot.slane %v609, %v637
  %v639 = vlaneseq
  %v640 = vshrl.u32 %v639, 7
  %v641 = vsub.s32 7, %v640
  %v642 = vrot.slane %v609, %v641
  %v715 = vunpack.c.l.b16 %v33
  %v716 = vunpack.c.h.b16 %v33
  %v717 = vunpack.c.l.b16 %v34
  %v718 = vunpack.c.h.b16 %v34
  %v719 = vunpack.c.l.b16 %v35
  %v720 = vunpack.c.h.b16 %v35
  %v721 = vunpack.c.l.b16 %v36
  %v722 = vunpack.c.h.b16 %v36
  %v723 = vunpack.c.l.b16 %v37
  %v724 = vunpack.c.h.b16 %v37
  %v725 = vunpack.c.l.b16 %v38
  %v726 = vunpack.c.h.b16 %v38
  %v727 = vunpack.c.l.b16 %v39
  %v728 = vunpack.c.h.b16 %v39
  %v729 = vunpack.c.l.b16 %v40
  %v730 = vunpack.c.h.b16 %v40
  %v731 = vunpack.c.l.b16 %v41
  %v732 = vunpack.c.h.b16 %v41
  %v733 = vunpack.c.l.b16 %v42
  %v734 = vunpack.c.h.b16 %v42
  %v735 = vunpack.c.l.b16 %v43
  %v736 = vunpack.c.h.b16 %v43
  %v737 = vunpack.c.l.b16 %v44
  %v738 = vunpack.c.h.b16 %v44
  %v739 = vunpack.c.l.b16 %v45
  %v740 = vunpack.c.h.b16 %v45
  %v741 = vunpack.c.l.b16 %v46
  %v742 = vunpack.c.h.b16 %v46
  %v743 = vunpack.c.l.b16 %v47
  %v744 = vunpack.c.h.b16 %v47
  %v745 = vunpack.c.l.b16 %v48
  %v746 = vunpack.c.h.b16 %v48
  %v747 = vunpack.c.l.b16 %v49
  %v748 = vunpack.c.h.b16 %v49
  %v749 = vunpack.c.l.b16 %v50
  %v750 = vunpack.c.h.b16 %v50
  %v751 = vunpack.c.l.b16 %v51
  %v752 = vunpack.c.h.b16 %v51
  %v753 = vunpack.c.l.b16 %v52
  %v754 = vunpack.c.h.b16 %v52
  %v755 = vunpack.c.l.b16 %v53
  %v756 = vunpack.c.h.b16 %v53
  %v757 = vunpack.c.l.b16 %v54
  %v758 = vunpack.c.h.b16 %v54
  %v759 = vunpack.c.l.b16 %v55
  %v760 = vunpack.c.h.b16 %v55
  %v761 = vunpack.c.l.b16 %v56
  %v762 = vunpack.c.h.b16 %v56
  %v763 = vunpack.c.l.b16 %v57
  %v764 = vunpack.c.h.b16 %v57
  %v765 = vunpack.c.l.b16 %v58
  %v766 = vunpack.c.h.b16 %v58
  %v767 = vunpack.c.l.b16 %v59
  %v768 = vunpack.c.h.b16 %v59
  %v769 = vunpack.c.l.b16 %v60
  %v770 = vunpack.c.h.b16 %v60
  %v771 = vunpack.c.l.b16 %v61
  %v772 = vunpack.c.h.b16 %v61
  %v773 = vunpack.c.l.b16 %v62
  %v774 = vunpack.c.h.b16 %v62
  %v775 = vunpack.c.l.b16 %v63
  %v776 = vunpack.c.h.b16 %v63
  %v777 = vunpack.c.l.b16 %v64
  %v778 = vunpack.c.h.b16 %v64
  %v779 = vunpack.c.l.b16 %v65
  %v780 = vunpack.c.h.b16 %v65
  %v781 = vunpack.c.l.b16 %v66
  %v782 = vunpack.c.h.b16 %v66
  %v783 = vunpack.c.l.b16 %v67
  %v784 = vunpack.c.h.b16 %v67
  %v785 = vunpack.c.l.b16 %v68
  %v786 = vunpack.c.h.b16 %v68
  %v787 = vunpack.c.l.b16 %v69
  %v788 = vunpack.c.h.b16 %v69
  %v789 = vunpack.c.l.b16 %v70
  %v790 = vunpack.c.h.b16 %v70
  %v791 = vunpack.c.l.b16 %v71
  %v792 = vunpack.c.h.b16 %v71
  %v793 = vunpack.c.l.b16 %v72
  %v794 = vunpack.c.h.b16 %v72
  %v795 = vunpack.c.l.b16 %v73
  %v796 = vunpack.c.h.b16 %v73
  %v797 = vunpack.c.l.b16 %v74
  %v798 = vunpack.c.h.b16 %v74
  %v799 = vunpack.c.l.b16 %v75
  %v800 = vunpack.c.h.b16 %v75
  %v801 = vunpack.c.l.b16 %v76
  %v802 = vunpack.c.h.b16 %v76
  %v803 = vunpack.c.l.b16 %v77
  %v804 = vunpack.c.h.b16 %v77
  %v805 = vunpack.c.l.b16 %v78
  %v806 = vunpack.c.h.b16 %v78
  %v807 = vunpack.c.l.b16 %v79
  %v808 = vunpack.c.h.b16 %v79
  %v809 = vunpack.c.l.b16 %v80
  %v810 = vunpack.c.h.b16 %v80
  %v811 = vunpack.c.l.b16 %v81
  %v812 = vunpack.c.h.b16 %v81
  %v813 = vunpack.c.l.b16 %v82
  %v814 = vunpack.c.h.b16 %v82
  %v815 = vunpack.c.l.b16 %v83
  %v816 = vunpack.c.h.b16 %v83
  %v817 = vunpack.c.l.b16 %v84
  %v818 = vunpack.c.h.b16 %v84
  %v819 = vunpack.c.l.b16 %v85
  %v820 = vunpack.c.h.b16 %v85
  %v821 = vunpack.c.l.b16 %v86
  %v822 = vunpack.c.h.b16 %v86
  %v823 = vunpack.c.l.b16 %v87
  %v824 = vunpack.c.h.b16 %v87
  %v825 = vunpack.c.l.b16 %v88
  %v826 = vunpack.c.h.b16 %v88
  %v827 = vunpack.c.l.b16 %v89
  %v828 = vunpack.c.h.b16 %v89
  %v829 = vunpack.c.l.b16 %v90
  %v830 = vunpack.c.h.b16 %v90
  %v831 = vunpack.c.l.b16 %v91
  %v832 = vunpack.c.h.b16 %v91
  %v833 = vunpack.c.l.b16 %v92
  %v834 = vunpack.c.h.b16 %v92
  %v835 = vunpack.c.l.b16 %v93
  %v836 = vunpack.c.h.b16 %v93
  %v837 = vunpack.c.l.b16 %v94
  %v838 = vunpack.c.h.b16 %v94
  %v839 = vunpack.c.l.b16 %v95
  %v840 = vunpack.c.h.b16 %v95
  %v841 = vunpack.c.l.b16 %v96
  %v842 = vunpack.c.h.b16 %v96
  %v843 = vpack.c.b16 %v723, %v715
  %v844 = vpack.c.b16 %v724, %v716
  %v845 = vpack.c.b16 %v725, %v717
  %v846 = vpack.c.b16 %v726, %v718
  %v847 = vpack.c.b16 %v727, %v719
  %v848 = vpack.c.b16 %v728, %v720
  %v849 = vpack.c.b16 %v729, %v721
  %v850 = vpack.c.b16 %v730, %v722
  %v851 = vpack.c.b16 %v739, %v731
  %v852 = vpack.c.b16 %v740, %v732
  %v853 = vpack.c.b16 %v741, %v733
  %v854 = vpack.c.b16 %v742, %v734
  %v855 = vpack.c.b16 %v743, %v735
  %v856 = vpack.c.b16 %v744, %v736
  %v857 = vpack.c.b16 %v745, %v737
  %v858 = vpack.c.b16 %v746, %v738
  %v859 = vpack.c.b16 %v755, %v747
  %v860 = vpack.c.b16 %v756, %v748
  %v861 = vpack.c.b16 %v757, %v749
  %v862 = vpack.c.b16 %v758, %v750
  %v863 = vpack.c.b16 %v759, %v751
  %v864 = vpack.c.b16 %v760, %v752
  %v865 = vpack.c.b16 %v761, %v753
  %v866 = vpack.c.b16 %v762, %v754
  %v867 = vpack.c.b16 %v771, %v763
  %v868 = vpack.c.b16 %v772, %v764
  %v869 = vpack.c.b16 %v773, %v765
  %v870 = vpack.c.b16 %v774, %v766
  %v871 = vpack.c.b16 %v775, %v767
  %v872 = vpack.c.b16 %v776, %v768
  %v873 = vpack.c.b16 %v777, %v769
  %v874 = vpack.c.b16 %v778, %v770
  %v875 = vpack.c.b16 %v787, %v779
  %v876 = vpack.c.b16 %v788, %v780
  %v877 = vpack.c.b16 %v789, %v781
  %v878 = vpack.c.b16 %v790, %v782
  %v879 = vpack.c.b16 %v791, %v783
  %v880 = vpack.c.b16 %v792, %v784
  %v881 = vpack.c.b16 %v793, %v785
  %v882 = vpack.c.b16 %v794, %v786
  %v883 = vpack.c.b16 %v803, %v795
  %v884 = vpack.c.b16 %v804, %v796
  %v885 = vpack.c.b16 %v805, %v797
  %v886 = vpack.c.b16 %v806, %v798
  %v887 = vpack.c.b16 %v807, %v799
  %v888 = vpack.c.b16 %v808, %v800
  %v889 = vpack.c.b16 %v809, %v801
  %v890 = vpack.c.b16 %v810, %v802
  %v891 = vpack.c.b16 %v819, %v811
  %v892 = vpack.c.b16 %v820, %v812
  %v893 = vpack.c.b16 %v821, %v813
  %v894 = vpack.c.b16 %v822, %v814
  %v895 = vpack.c.b16 %v823, %v815
  %v896 = vpack.c.b16 %v824, %v816
  %v897 = vpack.c.b16 %v825, %v817
  %v898 = vpack.c.b16 %v826, %v818
  %v899 = vpack.c.b16 %v835, %v827
  %v900 = vpack.c.b16 %v836, %v828
  %v901 = vpack.c.b16 %v837, %v829
  %v902 = vpack.c.b16 %v838, %v830
  %v903 = vpack.c.b16 %v839, %v831
  %v904 = vpack.c.b16 %v840, %v832
  %v905 = vpack.c.b16 %v841, %v833
  %v906 = vpack.c.b16 %v842, %v834
  %v1483 = vunpack.c.l.b16 %v97
  %v1484 = vunpack.c.h.b16 %v97
  %v1485 = vunpack.c.l.b16 %v98
  %v1486 = vunpack.c.h.b16 %v98
  %v1487 = vunpack.c.l.b16 %v99
  %v1488 = vunpack.c.h.b16 %v99
  %v1489 = vunpack.c.l.b16 %v100
  %v1490 = vunpack.c.h.b16 %v100
  %v1491 = vunpack.c.l.b16 %v101
  %v1492 = vunpack.c.h.b16 %v101
  %v1493 = vunpack.c.l.b16 %v102
  %v1494 = vunpack.c.h.b16 %v102
  %v1495 = vunpack.c.l.b16 %v103
  %v1496 = vunpack.c.h.b16 %v103
  %v1497 = vunpack.c.l.b16 %v104
  %v1498 = vunpack.c.h.b16 %v104
  %v1499 = vunpack.c.l.b16 %v105
  %v1500 = vunpack.c.h.b16 %v105
  %v1501 = vunpack.c.l.b16 %v106
  %v1502 = vunpack.c.h.b16 %v106
  %v1503 = vunpack.c.l.b16 %v107
  %v1504 = vunpack.c.h.b16 %v107
  %v1505 = vunpack.c.l.b16 %v108
  %v1506 = vunpack.c.h.b16 %v108
  %v1507 = vunpack.c.l.b16 %v109
  %v1508 = vunpack.c.h.b16 %v109
  %v1509 = vunpack.c.l.b16 %v110
  %v1510 = vunpack.c.h.b16 %v110
  %v1511 = vunpack.c.l.b16 %v111
  %v1512 = vunpack.c.h.b16 %v111
  %v1513 = vunpack.c.l.b16 %v112
  %v1514 = vunpack.c.h.b16 %v112
  %v1515 = vunpack.c.l.b16 %v113
  %v1516 = vunpack.c.h.b16 %v113
  %v1517 = vunpack.c.l.b16 %v114
  %v1518 = vunpack.c.h.b16 %v114
  %v1519 = vunpack.c.l.b16 %v115
  %v1520 = vunpack.c.h.b16 %v115
  %v1521 = vunpack.c.l.b16 %v116
  %v1522 = vunpack.c.h.b16 %v116
  %v1523 = vunpack.c.l.b16 %v117
  %v1524 = vunpack.c.h.b16 %v117
  %v1525 = vunpack.c.l.b16 %v118
  %v1526 = vunpack.c.h.b16 %v118
  %v1527 = vunpack.c.l.b16 %v119
  %v1528 = vunpack.c.h.b16 %v119
  %v1529 = vunpack.c.l.b16 %v120
  %v1530 = vunpack.c.h.b16 %v120
  %v1531 = vunpack.c.l.b16 %v121
  %v1532 = vunpack.c.h.b16 %v121
  %v1533 = vunpack.c.l.b16 %v122
  %v1534 = vunpack.c.h.b16 %v122
  %v1535 = vunpack.c.l.b16 %v123
  %v1536 = vunpack.c.h.b16 %v123
  %v1537 = vunpack.c.l.b16 %v124
  %v1538 = vunpack.c.h.b16 %v124
  %v1539 = vunpack.c.l.b16 %v125
  %v1540 = vunpack.c.h.b16 %v125
  %v1541 = vunpack.c.l.b16 %v126
  %v1542 = vunpack.c.h.b16 %v126
  %v1543 = vunpack.c.l.b16 %v127
  %v1544 = vunpack.c.h.b16 %v127
  %v1545 = vunpack.c.l.b16 %v128
  %v1546 = vunpack.c.h.b16 %v128
  %v1547 = vunpack.c.l.b16 %v129
  %v1548 = vunpack.c.h.b16 %v129
  %v1549 = vunpack.c.l.b16 %v130
  %v1550 = vunpack.c.h.b16 %v130
  %v1551 = vunpack.c.l.b16 %v131
  %v1552 = vunpack.c.h.b16 %v131
  %v1553 = vunpack.c.l.b16 %v132
  %v1554 = vunpack.c.h.b16 %v132
  %v1555 = vunpack.c.l.b16 %v133
  %v1556 = vunpack.c.h.b16 %v133
  %v1557 = vunpack.c.l.b16 %v134
  %v1558 = vunpack.c.h.b16 %v134
  %v1559 = vunpack.c.l.b16 %v135
  %v1560 = vunpack.c.h.b16 %v135
  %v1561 = vunpack.c.l.b16 %v136
  %v1562 = vunpack.c.h.b16 %v136
  %v1563 = vunpack.c.l.b16 %v137
  %v1564 = vunpack.c.h.b16 %v137
  %v1565 = vunpack.c.l.b16 %v138
  %v1566 = vunpack.c.h.b16 %v138
  %v1567 = vunpack.c.l.b16 %v139
  %v1568 = vunpack.c.h.b16 %v139
  %v1569 = vunpack.c.l.b16 %v140
  %v1570 = vunpack.c.h.b16 %v140
  %v1571 = vunpack.c.l.b16 %v141
  %v1572 = vunpack.c.h.b16 %v141
  %v1573 = vunpack.c.l.b16 %v142
  %v1574 = vunpack.c.h.b16 %v142
  %v1575 = vunpack.c.l.b16 %v143
  %v1576 = vunpack.c.h.b16 %v143
  %v1577 = vunpack.c.l.b16 %v144
  %v1578 = vunpack.c.h.b16 %v144
  %v1579 = vunpack.c.l.b16 %v145
  %v1580 = vunpack.c.h.b16 %v145
  %v1581 = vunpack.c.l.b16 %v146
  %v1582 = vunpack.c.h.b16 %v146
  %v1583 = vunpack.c.l.b16 %v147
  %v1584 = vunpack.c.h.b16 %v147
  %v1585 = vunpack.c.l.b16 %v148
  %v1586 = vunpack.c.h.b16 %v148
  %v1587 = vunpack.c.l.b16 %v149
  %v1588 = vunpack.c.h.b16 %v149
  %v1589 = vunpack.c.l.b16 %v150
  %v1590 = vunpack.c.h.b16 %v150
  %v1591 = vunpack.c.l.b16 %v151
  %v1592 = vunpack.c.h.b16 %v151
  %v1593 = vunpack.c.l.b16 %v152
  %v1594 = vunpack.c.h.b16 %v152
  %v1595 = vunpack.c.l.b16 %v153
  %v1596 = vunpack.c.h.b16 %v153
  %v1597 = vunpack.c.l.b16 %v154
  %v1598 = vunpack.c.h.b16 %v154
  %v1599 = vunpack.c.l.b16 %v155
  %v1600 = vunpack.c.h.b16 %v155
  %v1601 = vunpack.c.l.b16 %v156
  %v1602 = vunpack.c.h.b16 %v156
  %v1603 = vunpack.c.l.b16 %v157
  %v1604 = vunpack.c.h.b16 %v157
  %v1605 = vunpack.c.l.b16 %v158
  %v1606 = vunpack.c.h.b16 %v158
  %v1607 = vunpack.c.l.b16 %v159
  %v1608 = vunpack.c.h.b16 %v159
  %v1609 = vunpack.c.l.b16 %v160
  %v1610 = vunpack.c.h.b16 %v160
  %v1611 = vunpack.c.l.b16 %v161
  %v1612 = vunpack.c.h.b16 %v161
  %v1613 = vunpack.c.l.b16 %v162
  %v1614 = vunpack.c.h.b16 %v162
  %v1615 = vunpack.c.l.b16 %v163
  %v1616 = vunpack.c.h.b16 %v163
  %v1617 = vunpack.c.l.b16 %v164
  %v1618 = vunpack.c.h.b16 %v164
  %v1619 = vunpack.c.l.b16 %v165
  %v1620 = vunpack.c.h.b16 %v165
  %v1621 = vunpack.c.l.b16 %v166
  %v1622 = vunpack.c.h.b16 %v166
  %v1623 = vunpack.c.l.b16 %v167
  %v1624 = vunpack.c.h.b16 %v167
  %v1625 = vunpack.c.l.b16 %v168
  %v1626 = vunpack.c.h.b16 %v168
  %v1627 = vunpack.c.l.b16 %v169
  %v1628 = vunpack.c.h.b16 %v169
  %v1629 = vunpack.c.l.b16 %v170
  %v1630 = vunpack.c.h.b16 %v170
  %v1631 = vunpack.c.l.b16 %v171
  %v1632 = vunpack.c.h.b16 %v171
  %v1633 = vunpack.c.l.b16 %v172
  %v1634 = vunpack.c.h.b16 %v172
  %v1635 = vunpack.c.l.b16 %v173
  %v1636 = vunpack.c.h.b16 %v173
  %v1637 = vunpack.c.l.b16 %v174
  %v1638 = vunpack.c.h.b16 %v174
  %v1639 = vunpack.c.l.b16 %v175
  %v1640 = vunpack.c.h.b16 %v175
  %v1641 = vunpack.c.l.b16 %v176
  %v1642 = vunpack.c.h.b16 %v176
  %v1643 = vunpack.c.l.b16 %v177
  %v1644 = vunpack.c.h.b16 %v177
  %v1645 = vunpack.c.l.b16 %v178
  %v1646 = vunpack.c.h.b16 %v178
  %v1647 = vunpack.c.l.b16 %v179
  %v1648 = vunpack.c.h.b16 %v179
  %v1649 = vunpack.c.l.b16 %v180
  %v1650 = vunpack.c.h.b16 %v180
  %v1651 = vunpack.c.l.b16 %v181
  %v1652 = vunpack.c.h.b16 %v181
  %v1653 = vunpack.c.l.b16 %v182
  %v1654 = vunpack.c.h.b16 %v182
  %v1655 = vunpack.c.l.b16 %v183
  %v1656 = vunpack.c.h.b16 %v183
  %v1657 = vunpack.c.l.b16 %v184
  %v1658 = vunpack.c.h.b16 %v184
  %v1659 = vunpack.c.l.b16 %v185
  %v1660 = vunpack.c.h.b16 %v185
  %v1661 = vunpack.c.l.b16 %v186
  %v1662 = vunpack.c.h.b16 %v186
  %v1663 = vunpack.c.l.b16 %v187
  %v1664 = vunpack.c.h.b16 %v187
  %v1665 = vunpack.c.l.b16 %v188
  %v1666 = vunpack.c.h.b16 %v188
  %v1667 = vunpack.c.l.b16 %v189
  %v1668 = vunpack.c.h.b16 %v189
  %v1669 = vunpack.c.l.b16 %v190
  %v1670 = vunpack.c.h.b16 %v190
  %v1671 = vunpack.c.l.b16 %v191
  %v1672 = vunpack.c.h.b16 %v191
  %v1673 = vunpack.c.l.b16 %v192
  %v1674 = vunpack.c.h.b16 %v192
  %v1675 = vunpack.c.l.b16 %v193
  %v1676 = vunpack.c.h.b16 %v193
  %v1677 = vunpack.c.l.b16 %v194
  %v1678 = vunpack.c.h.b16 %v194
  %v1679 = vunpack.c.l.b16 %v195
  %v1680 = vunpack.c.h.b16 %v195
  %v1681 = vunpack.c.l.b16 %v196
  %v1682 = vunpack.c.h.b16 %v196
  %v1683 = vunpack.c.l.b16 %v197
  %v1684 = vunpack.c.h.b16 %v197
  %v1685 = vunpack.c.l.b16 %v198
  %v1686 = vunpack.c.h.b16 %v198
  %v1687 = vunpack.c.l.b16 %v199
  %v1688 = vunpack.c.h.b16 %v199
  %v1689 = vunpack.c.l.b16 %v200
  %v1690 = vunpack.c.h.b16 %v200
  %v1691 = vunpack.c.l.b16 %v201
  %v1692 = vunpack.c.h.b16 %v201
  %v1693 = vunpack.c.l.b16 %v202
  %v1694 = vunpack.c.h.b16 %v202
  %v1695 = vunpack.c.l.b16 %v203
  %v1696 = vunpack.c.h.b16 %v203
  %v1697 = vunpack.c.l.b16 %v204
  %v1698 = vunpack.c.h.b16 %v204
  %v1699 = vunpack.c.l.b16 %v205
  %v1700 = vunpack.c.h.b16 %v205
  %v1701 = vunpack.c.l.b16 %v206
  %v1702 = vunpack.c.h.b16 %v206
  %v1703 = vunpack.c.l.b16 %v207
  %v1704 = vunpack.c.h.b16 %v207
  %v1705 = vunpack.c.l.b16 %v208
  %v1706 = vunpack.c.h.b16 %v208
  %v1707 = vunpack.c.l.b16 %v209
  %v1708 = vunpack.c.h.b16 %v209
  %v1709 = vunpack.c.l.b16 %v210
  %v1710 = vunpack.c.h.b16 %v210
  %v1711 = vunpack.c.l.b16 %v211
  %v1712 = vunpack.c.h.b16 %v211
  %v1713 = vunpack.c.l.b16 %v212
  %v1714 = vunpack.c.h.b16 %v212
  %v1715 = vunpack.c.l.b16 %v213
  %v1716 = vunpack.c.h.b16 %v213
  %v1717 = vunpack.c.l.b16 %v214
  %v1718 = vunpack.c.h.b16 %v214
  %v1719 = vunpack.c.l.b16 %v215
  %v1720 = vunpack.c.h.b16 %v215
  %v1721 = vunpack.c.l.b16 %v216
  %v1722 = vunpack.c.h.b16 %v216
  %v1723 = vunpack.c.l.b16 %v217
  %v1724 = vunpack.c.h.b16 %v217
  %v1725 = vunpack.c.l.b16 %v218
  %v1726 = vunpack.c.h.b16 %v218
  %v1727 = vunpack.c.l.b16 %v219
  %v1728 = vunpack.c.h.b16 %v219
  %v1729 = vunpack.c.l.b16 %v220
  %v1730 = vunpack.c.h.b16 %v220
  %v1731 = vunpack.c.l.b16 %v221
  %v1732 = vunpack.c.h.b16 %v221
  %v1733 = vunpack.c.l.b16 %v222
  %v1734 = vunpack.c.h.b16 %v222
  %v1735 = vunpack.c.l.b16 %v223
  %v1736 = vunpack.c.h.b16 %v223
  %v1737 = vunpack.c.l.b16 %v224
  %v1738 = vunpack.c.h.b16 %v224
  %v1739 = vunpack.c.l.b16 %v225
  %v1740 = vunpack.c.h.b16 %v225
  %v1741 = vunpack.c.l.b16 %v226
  %v1742 = vunpack.c.h.b16 %v226
  %v1743 = vunpack.c.l.b16 %v227
  %v1744 = vunpack.c.h.b16 %v227
  %v1745 = vunpack.c.l.b16 %v228
  %v1746 = vunpack.c.h.b16 %v228
  %v1747 = vunpack.c.l.b16 %v229
  %v1748 = vunpack.c.h.b16 %v229
  %v1749 = vunpack.c.l.b16 %v230
  %v1750 = vunpack.c.h.b16 %v230
  %v1751 = vunpack.c.l.b16 %v231
  %v1752 = vunpack.c.h.b16 %v231
  %v1753 = vunpack.c.l.b16 %v232
  %v1754 = vunpack.c.h.b16 %v232
  %v1755 = vunpack.c.l.b16 %v233
  %v1756 = vunpack.c.h.b16 %v233
  %v1757 = vunpack.c.l.b16 %v234
  %v1758 = vunpack.c.h.b16 %v234
  %v1759 = vunpack.c.l.b16 %v235
  %v1760 = vunpack.c.h.b16 %v235
  %v1761 = vunpack.c.l.b16 %v236
  %v1762 = vunpack.c.h.b16 %v236
  %v1763 = vunpack.c.l.b16 %v237
  %v1764 = vunpack.c.h.b16 %v237
  %v1765 = vunpack.c.l.b16 %v238
  %v1766 = vunpack.c.h.b16 %v238
  %v1767 = vunpack.c.l.b16 %v239
  %v1768 = vunpack.c.h.b16 %v239
  %v1769 = vunpack.c.l.b16 %v240
  %v1770 = vunpack.c.h.b16 %v240
  %v1771 = vunpack.c.l.b16 %v241
  %v1772 = vunpack.c.h.b16 %v241
  %v1773 = vunpack.c.l.b16 %v242
  %v1774 = vunpack.c.h.b16 %v242
  %v1775 = vunpack.c.l.b16 %v243
  %v1776 = vunpack.c.h.b16 %v243
  %v1777 = vunpack.c.l.b16 %v244
  %v1778 = vunpack.c.h.b16 %v244
  %v1779 = vunpack.c.l.b16 %v245
  %v1780 = vunpack.c.h.b16 %v245
  %v1781 = vunpack.c.l.b16 %v246
  %v1782 = vunpack.c.h.b16 %v246
  %v1783 = vunpack.c.l.b16 %v247
  %v1784 = vunpack.c.h.b16 %v247
  %v1785 = vunpack.c.l.b16 %v248
  %v1786 = vunpack.c.h.b16 %v248
  %v1787 = vunpack.c.l.b16 %v249
  %v1788 = vunpack.c.h.b16 %v249
  %v1789 = vunpack.c.l.b16 %v250
  %v1790 = vunpack.c.h.b16 %v250
  %v1791 = vunpack.c.l.b16 %v251
  %v1792 = vunpack.c.h.b16 %v251
  %v1793 = vunpack.c.l.b16 %v252
  %v1794 = vunpack.c.h.b16 %v252
  %v1795 = vunpack.c.l.b16 %v253
  %v1796 = vunpack.c.h.b16 %v253
  %v1797 = vunpack.c.l.b16 %v254
  %v1798 = vunpack.c.h.b16 %v254
  %v1799 = vunpack.c.l.b16 %v255
  %v1800 = vunpack.c.h.b16 %v255
  %v1801 = vunpack.c.l.b16 %v256
  %v1802 = vunpack.c.h.b16 %v256
  %v1803 = vunpack.c.l.b16 %v257
  %v1804 = vunpack.c.h.b16 %v257
  %v1805 = vunpack.c.l.b16 %v258
  %v1806 = vunpack.c.h.b16 %v258
  %v1807 = vunpack.c.l.b16 %v259
  %v1808 = vunpack.c.h.b16 %v259
  %v1809 = vunpack.c.l.b16 %v260
  %v1810 = vunpack.c.h.b16 %v260
  %v1811 = vunpack.c.l.b16 %v261
  %v1812 = vunpack.c.h.b16 %v261
  %v1813 = vunpack.c.l.b16 %v262
  %v1814 = vunpack.c.h.b16 %v262
  %v1815 = vunpack.c.l.b16 %v263
  %v1816 = vunpack.c.h.b16 %v263
  %v1817 = vunpack.c.l.b16 %v264
  %v1818 = vunpack.c.h.b16 %v264
  %v1819 = vunpack.c.l.b16 %v265
  %v1820 = vunpack.c.h.b16 %v265
  %v1821 = vunpack.c.l.b16 %v266
  %v1822 = vunpack.c.h.b16 %v266
  %v1823 = vunpack.c.l.b16 %v267
  %v1824 = vunpack.c.h.b16 %v267
  %v1825 = vunpack.c.l.b16 %v268
  %v1826 = vunpack.c.h.b16 %v268
  %v1827 = vunpack.c.l.b16 %v269
  %v1828 = vunpack.c.h.b16 %v269
  %v1829 = vunpack.c.l.b16 %v270
  %v1830 = vunpack.c.h.b16 %v270
  %v1831 = vunpack.c.l.b16 %v271
  %v1832 = vunpack.c.h.b16 %v271
  %v1833 = vunpack.c.l.b16 %v272
  %v1834 = vunpack.c.h.b16 %v272
  %v1835 = vunpack.c.l.b16 %v273
  %v1836 = vunpack.c.h.b16 %v273
  %v1837 = vunpack.c.l.b16 %v274
  %v1838 = vunpack.c.h.b16 %v274
  %v1839 = vunpack.c.l.b16 %v275
  %v1840 = vunpack.c.h.b16 %v275
  %v1841 = vunpack.c.l.b16 %v276
  %v1842 = vunpack.c.h.b16 %v276
  %v1843 = vunpack.c.l.b16 %v277
  %v1844 = vunpack.c.h.b16 %v277
  %v1845 = vunpack.c.l.b16 %v278
  %v1846 = vunpack.c.h.b16 %v278
  %v1847 = vunpack.c.l.b16 %v279
  %v1848 = vunpack.c.h.b16 %v279
  %v1849 = vunpack.c.l.b16 %v280
  %v1850 = vunpack.c.h.b16 %v280
  %v1851 = vunpack.c.l.b16 %v281
  %v1852 = vunpack.c.h.b16 %v281
  %v1853 = vunpack.c.l.b16 %v282
  %v1854 = vunpack.c.h.b16 %v282
  %v1855 = vunpack.c.l.b16 %v283
  %v1856 = vunpack.c.h.b16 %v283
  %v1857 = vunpack.c.l.b16 %v284
  %v1858 = vunpack.c.h.b16 %v284
  %v1859 = vunpack.c.l.b16 %v285
  %v1860 = vunpack.c.h.b16 %v285
  %v1861 = vunpack.c.l.b16 %v286
  %v1862 = vunpack.c.h.b16 %v286
  %v1863 = vunpack.c.l.b16 %v287
  %v1864 = vunpack.c.h.b16 %v287
  %v1865 = vunpack.c.l.b16 %v288
  %v1866 = vunpack.c.h.b16 %v288
  %v1867 = vunpack.c.l.b16 %v289
  %v1868 = vunpack.c.h.b16 %v289
  %v1869 = vunpack.c.l.b16 %v290
  %v1870 = vunpack.c.h.b16 %v290
  %v1871 = vunpack.c.l.b16 %v291
  %v1872 = vunpack.c.h.b16 %v291
  %v1873 = vunpack.c.l.b16 %v292
  %v1874 = vunpack.c.h.b16 %v292
  %v1875 = vunpack.c.l.b16 %v293
  %v1876 = vunpack.c.h.b16 %v293
  %v1877 = vunpack.c.l.b16 %v294
  %v1878 = vunpack.c.h.b16 %v294
  %v1879 = vunpack.c.l.b16 %v295
  %v1880 = vunpack.c.h.b16 %v295
  %v1881 = vunpack.c.l.b16 %v296
  %v1882 = vunpack.c.h.b16 %v296
  %v1883 = vunpack.c.l.b16 %v297
  %v1884 = vunpack.c.h.b16 %v297
  %v1885 = vunpack.c.l.b16 %v298
  %v1886 = vunpack.c.h.b16 %v298
  %v1887 = vunpack.c.l.b16 %v299
  %v1888 = vunpack.c.h.b16 %v299
  %v1889 = vunpack.c.l.b16 %v300
  %v1890 = vunpack.c.h.b16 %v300
  %v1891 = vunpack.c.l.b16 %v301
  %v1892 = vunpack.c.h.b16 %v301
  %v1893 = vunpack.c.l.b16 %v302
  %v1894 = vunpack.c.h.b16 %v302
  %v1895 = vunpack.c.l.b16 %v303
  %v1896 = vunpack.c.h.b16 %v303
  %v1897 = vunpack.c.l.b16 %v304
  %v1898 = vunpack.c.h.b16 %v304
  %v1899 = vunpack.c.l.b16 %v305
  %v1900 = vunpack.c.h.b16 %v305
  %v1901 = vunpack.c.l.b16 %v306
  %v1902 = vunpack.c.h.b16 %v306
  %v1903 = vunpack.c.l.b16 %v307
  %v1904 = vunpack.c.h.b16 %v307
  %v1905 = vunpack.c.l.b16 %v308
  %v1906 = vunpack.c.h.b16 %v308
  %v1907 = vunpack.c.l.b16 %v309
  %v1908 = vunpack.c.h.b16 %v309
  %v1909 = vunpack.c.l.b16 %v310
  %v1910 = vunpack.c.h.b16 %v310
  %v1911 = vunpack.c.l.b16 %v311
  %v1912 = vunpack.c.h.b16 %v311
  %v1913 = vunpack.c.l.b16 %v312
  %v1914 = vunpack.c.h.b16 %v312
  %v1915 = vunpack.c.l.b16 %v313
  %v1916 = vunpack.c.h.b16 %v313
  %v1917 = vunpack.c.l.b16 %v314
  %v1918 = vunpack.c.h.b16 %v314
  %v1919 = vunpack.c.l.b16 %v315
  %v1920 = vunpack.c.h.b16 %v315
  %v1921 = vunpack.c.l.b16 %v316
  %v1922 = vunpack.c.h.b16 %v316
  %v1923 = vunpack.c.l.b16 %v317
  %v1924 = vunpack.c.h.b16 %v317
  %v1925 = vunpack.c.l.b16 %v318
  %v1926 = vunpack.c.h.b16 %v318
  %v1927 = vunpack.c.l.b16 %v319
  %v1928 = vunpack.c.h.b16 %v319
  %v1929 = vunpack.c.l.b16 %v320
  %v1930 = vunpack.c.h.b16 %v320
  %v1931 = vunpack.c.l.b16 %v321
  %v1932 = vunpack.c.h.b16 %v321
  %v1933 = vunpack.c.l.b16 %v322
  %v1934 = vunpack.c.h.b16 %v322
  %v1935 = vunpack.c.l.b16 %v323
  %v1936 = vunpack.c.h.b16 %v323
  %v1937 = vunpack.c.l.b16 %v324
  %v1938 = vunpack.c.h.b16 %v324
  %v1939 = vunpack.c.l.b16 %v325
  %v1940 = vunpack.c.h.b16 %v325
  %v1941 = vunpack.c.l.b16 %v326
  %v1942 = vunpack.c.h.b16 %v326
  %v1943 = vunpack.c.l.b16 %v327
  %v1944 = vunpack.c.h.b16 %v327
  %v1945 = vunpack.c.l.b16 %v328
  %v1946 = vunpack.c.h.b16 %v328
  %v1947 = vunpack.c.l.b16 %v329
  %v1948 = vunpack.c.h.b16 %v329
  %v1949 = vunpack.c.l.b16 %v330
  %v1950 = vunpack.c.h.b16 %v330
  %v1951 = vunpack.c.l.b16 %v331
  %v1952 = vunpack.c.h.b16 %v331
  %v1953 = vunpack.c.l.b16 %v332
  %v1954 = vunpack.c.h.b16 %v332
  %v1955 = vunpack.c.l.b16 %v333
  %v1956 = vunpack.c.h.b16 %v333
  %v1957 = vunpack.c.l.b16 %v334
  %v1958 = vunpack.c.h.b16 %v334
  %v1959 = vunpack.c.l.b16 %v335
  %v1960 = vunpack.c.h.b16 %v335
  %v1961 = vunpack.c.l.b16 %v336
  %v1962 = vunpack.c.h.b16 %v336
  %v1963 = vunpack.c.l.b16 %v337
  %v1964 = vunpack.c.h.b16 %v337
  %v1965 = vunpack.c.l.b16 %v338
  %v1966 = vunpack.c.h.b16 %v338
  %v1967 = vunpack.c.l.b16 %v339
  %v1968 = vunpack.c.h.b16 %v339
  %v1969 = vunpack.c.l.b16 %v340
  %v1970 = vunpack.c.h.b16 %v340
  %v1971 = vunpack.c.l.b16 %v341
  %v1972 = vunpack.c.h.b16 %v341
  %v1973 = vunpack.c.l.b16 %v342
  %v1974 = vunpack.c.h.b16 %v342
  %v1975 = vunpack.c.l.b16 %v343
  %v1976 = vunpack.c.h.b16 %v343
  %v1977 = vunpack.c.l.b16 %v344
  %v1978 = vunpack.c.h.b16 %v344
  %v1979 = vunpack.c.l.b16 %v345
  %v1980 = vunpack.c.h.b16 %v345
  %v1981 = vunpack.c.l.b16 %v346
  %v1982 = vunpack.c.h.b16 %v346
  %v1983 = vunpack.c.l.b16 %v347
  %v1984 = vunpack.c.h.b16 %v347
  %v1985 = vunpack.c.l.b16 %v348
  %v1986 = vunpack.c.h.b16 %v348
  %v1987 = vunpack.c.l.b16 %v349
  %v1988 = vunpack.c.h.b16 %v349
  %v1989 = vunpack.c.l.b16 %v350
  %v1990 = vunpack.c.h.b16 %v350
  %v1991 = vunpack.c.l.b16 %v351
  %v1992 = vunpack.c.h.b16 %v351
  %v1993 = vunpack.c.l.b16 %v352
  %v1994 = vunpack.c.h.b16 %v352
  %v1995 = vunpack.c.l.b16 %v353
  %v1996 = vunpack.c.h.b16 %v353
  %v1997 = vunpack.c.l.b16 %v354
  %v1998 = vunpack.c.h.b16 %v354
  %v1999 = vunpack.c.l.b16 %v355
  %v2000 = vunpack.c.h.b16 %v355
  %v2001 = vunpack.c.l.b16 %v356
  %v2002 = vunpack.c.h.b16 %v356
  %v2003 = vunpack.c.l.b16 %v357
  %v2004 = vunpack.c.h.b16 %v357
  %v2005 = vunpack.c.l.b16 %v358
  %v2006 = vunpack.c.h.b16 %v358
  %v2007 = vunpack.c.l.b16 %v359
  %v2008 = vunpack.c.h.b16 %v359
  %v2009 = vunpack.c.l.b16 %v360
  %v2010 = vunpack.c.h.b16 %v360
  %v2011 = vunpack.c.l.b16 %v361
  %v2012 = vunpack.c.h.b16 %v361
  %v2013 = vunpack.c.l.b16 %v362
  %v2014 = vunpack.c.h.b16 %v362
  %v2015 = vunpack.c.l.b16 %v363
  %v2016 = vunpack.c.h.b16 %v363
  %v2017 = vunpack.c.l.b16 %v364
  %v2018 = vunpack.c.h.b16 %v364
  %v2019 = vunpack.c.l.b16 %v365
  %v2020 = vunpack.c.h.b16 %v365
  %v2021 = vunpack.c.l.b16 %v366
  %v2022 = vunpack.c.h.b16 %v366
  %v2023 = vunpack.c.l.b16 %v367
  %v2024 = vunpack.c.h.b16 %v367
  %v2025 = vunpack.c.l.b16 %v368
  %v2026 = vunpack.c.h.b16 %v368
  %v2027 = vunpack.c.l.b16 %v369
  %v2028 = vunpack.c.h.b16 %v369
  %v2029 = vunpack.c.l.b16 %v370
  %v2030 = vunpack.c.h.b16 %v370
  %v2031 = vunpack.c.l.b16 %v371
  %v2032 = vunpack.c.h.b16 %v371
  %v2033 = vunpack.c.l.b16 %v372
  %v2034 = vunpack.c.h.b16 %v372
  %v2035 = vunpack.c.l.b16 %v373
  %v2036 = vunpack.c.h.b16 %v373
  %v2037 = vunpack.c.l.b16 %v374
  %v2038 = vunpack.c.h.b16 %v374
  %v2039 = vunpack.c.l.b16 %v375
  %v2040 = vunpack.c.h.b16 %v375
  %v2041 = vunpack.c.l.b16 %v376
  %v2042 = vunpack.c.h.b16 %v376
  %v2043 = vunpack.c.l.b16 %v377
  %v2044 = vunpack.c.h.b16 %v377
  %v2045 = vunpack.c.l.b16 %v378
  %v2046 = vunpack.c.h.b16 %v378
  %v2047 = vunpack.c.l.b16 %v379
  %v2048 = vunpack.c.h.b16 %v379
  %v2049 = vunpack.c.l.b16 %v380
  %v2050 = vunpack.c.h.b16 %v380
  %v2051 = vunpack.c.l.b16 %v381
  %v2052 = vunpack.c.h.b16 %v381
  %v2053 = vunpack.c.l.b16 %v382
  %v2054 = vunpack.c.h.b16 %v382
  %v2055 = vunpack.c.l.b16 %v383
  %v2056 = vunpack.c.h.b16 %v383
  %v2057 = vunpack.c.l.b16 %v384
  %v2058 = vunpack.c.h.b16 %v384
  %v2059 = vunpack.c.l.b16 %v385
  %v2060 = vunpack.c.h.b16 %v385
  %v2061 = vunpack.c.l.b16 %v386
  %v2062 = vunpack.c.h.b16 %v386
  %v2063 = vunpack.c.l.b16 %v387
  %v2064 = vunpack.c.h.b16 %v387
  %v2065 = vunpack.c.l.b16 %v388
  %v2066 = vunpack.c.h.b16 %v388
  %v2067 = vunpack.c.l.b16 %v389
  %v2068 = vunpack.c.h.b16 %v389
  %v2069 = vunpack.c.l.b16 %v390
  %v2070 = vunpack.c.h.b16 %v390
  %v2071 = vunpack.c.l.b16 %v391
  %v2072 = vunpack.c.h.b16 %v391
  %v2073 = vunpack.c.l.b16 %v392
  %v2074 = vunpack.c.h.b16 %v392
  %v2075 = vunpack.c.l.b16 %v393
  %v2076 = vunpack.c.h.b16 %v393
  %v2077 = vunpack.c.l.b16 %v394
  %v2078 = vunpack.c.h.b16 %v394
  %v2079 = vunpack.c.l.b16 %v395
  %v2080 = vunpack.c.h.b16 %v395
  %v2081 = vunpack.c.l.b16 %v396
  %v2082 = vunpack.c.h.b16 %v396
  %v2083 = vunpack.c.l.b16 %v397
  %v2084 = vunpack.c.h.b16 %v397
  %v2085 = vunpack.c.l.b16 %v398
  %v2086 = vunpack.c.h.b16 %v398
  %v2087 = vunpack.c.l.b16 %v399
  %v2088 = vunpack.c.h.b16 %v399
  %v2089 = vunpack.c.l.b16 %v400
  %v2090 = vunpack.c.h.b16 %v400
  %v2091 = vunpack.c.l.b16 %v401
  %v2092 = vunpack.c.h.b16 %v401
  %v2093 = vunpack.c.l.b16 %v402
  %v2094 = vunpack.c.h.b16 %v402
  %v2095 = vunpack.c.l.b16 %v403
  %v2096 = vunpack.c.h.b16 %v403
  %v2097 = vunpack.c.l.b16 %v404
  %v2098 = vunpack.c.h.b16 %v404
  %v2099 = vunpack.c.l.b16 %v405
  %v2100 = vunpack.c.h.b16 %v405
  %v2101 = vunpack.c.l.b16 %v406
  %v2102 = vunpack.c.h.b16 %v406
  %v2103 = vunpack.c.l.b16 %v407
  %v2104 = vunpack.c.h.b16 %v407
  %v2105 = vunpack.c.l.b16 %v408
  %v2106 = vunpack.c.h.b16 %v408
  %v2107 = vunpack.c.l.b16 %v409
  %v2108 = vunpack.c.h.b16 %v409
  %v2109 = vunpack.c.l.b16 %v410
  %v2110 = vunpack.c.h.b16 %v410
  %v2111 = vunpack.c.l.b16 %v411
  %v2112 = vunpack.c.h.b16 %v411
  %v2113 = vunpack.c.l.b16 %v412
  %v2114 = vunpack.c.h.b16 %v412
  %v2115 = vunpack.c.l.b16 %v413
  %v2116 = vunpack.c.h.b16 %v413
  %v2117 = vunpack.c.l.b16 %v414
  %v2118 = vunpack.c.h.b16 %v414
  %v2119 = vunpack.c.l.b16 %v415
  %v2120 = vunpack.c.h.b16 %v415
  %v2121 = vunpack.c.l.b16 %v416
  %v2122 = vunpack.c.h.b16 %v416
  %v2123 = vunpack.c.l.b16 %v417
  %v2124 = vunpack.c.h.b16 %v417
  %v2125 = vunpack.c.l.b16 %v418
  %v2126 = vunpack.c.h.b16 %v418
  %v2127 = vunpack.c.l.b16 %v419
  %v2128 = vunpack.c.h.b16 %v419
  %v2129 = vunpack.c.l.b16 %v420
  %v2130 = vunpack.c.h.b16 %v420
  %v2131 = vunpack.c.l.b16 %v421
  %v2132 = vunpack.c.h.b16 %v421
  %v2133 = vunpack.c.l.b16 %v422
  %v2134 = vunpack.c.h.b16 %v422
  %v2135 = vunpack.c.l.b16 %v423
  %v2136 = vunpack.c.h.b16 %v423
  %v2137 = vunpack.c.l.b16 %v424
  %v2138 = vunpack.c.h.b16 %v424
  %v2139 = vunpack.c.l.b16 %v425
  %v2140 = vunpack.c.h.b16 %v425
  %v2141 = vunpack.c.l.b16 %v426
  %v2142 = vunpack.c.h.b16 %v426
  %v2143 = vunpack.c.l.b16 %v427
  %v2144 = vunpack.c.h.b16 %v427
  %v2145 = vunpack.c.l.b16 %v428
  %v2146 = vunpack.c.h.b16 %v428
  %v2147 = vunpack.c.l.b16 %v429
  %v2148 = vunpack.c.h.b16 %v429
  %v2149 = vunpack.c.l.b16 %v430
  %v2150 = vunpack.c.h.b16 %v430
  %v2151 = vunpack.c.l.b16 %v431
  %v2152 = vunpack.c.h.b16 %v431
  %v2153 = vunpack.c.l.b16 %v432
  %v2154 = vunpack.c.h.b16 %v432
  %v2155 = vunpack.c.l.b16 %v433
  %v2156 = vunpack.c.h.b16 %v433
  %v2157 = vunpack.c.l.b16 %v434
  %v2158 = vunpack.c.h.b16 %v434
  %v2159 = vunpack.c.l.b16 %v435
  %v2160 = vunpack.c.h.b16 %v435
  %v2161 = vunpack.c.l.b16 %v436
  %v2162 = vunpack.c.h.b16 %v436
  %v2163 = vunpack.c.l.b16 %v437
  %v2164 = vunpack.c.h.b16 %v437
  %v2165 = vunpack.c.l.b16 %v438
  %v2166 = vunpack.c.h.b16 %v438
  %v2167 = vunpack.c.l.b16 %v439
  %v2168 = vunpack.c.h.b16 %v439
  %v2169 = vunpack.c.l.b16 %v440
  %v2170 = vunpack.c.h.b16 %v440
  %v2171 = vunpack.c.l.b16 %v441
  %v2172 = vunpack.c.h.b16 %v441
  %v2173 = vunpack.c.l.b16 %v442
  %v2174 = vunpack.c.h.b16 %v442
  %v2175 = vunpack.c.l.b16 %v443
  %v2176 = vunpack.c.h.b16 %v443
  %v2177 = vunpack.c.l.b16 %v444
  %v2178 = vunpack.c.h.b16 %v444
  %v2179 = vunpack.c.l.b16 %v445
  %v2180 = vunpack.c.h.b16 %v445
  %v2181 = vunpack.c.l.b16 %v446
  %v2182 = vunpack.c.h.b16 %v446
  %v2183 = vunpack.c.l.b16 %v447
  %v2184 = vunpack.c.h.b16 %v447
  %v2185 = vunpack.c.l.b16 %v448
  %v2186 = vunpack.c.h.b16 %v448
  %v2187 = vunpack.c.l.b16 %v449
  %v2188 = vunpack.c.h.b16 %v449
  %v2189 = vunpack.c.l.b16 %v450
  %v2190 = vunpack.c.h.b16 %v450
  %v2191 = vunpack.c.l.b16 %v451
  %v2192 = vunpack.c.h.b16 %v451
  %v2193 = vunpack.c.l.b16 %v452
  %v2194 = vunpack.c.h.b16 %v452
  %v2195 = vunpack.c.l.b16 %v453
  %v2196 = vunpack.c.h.b16 %v453
  %v2197 = vunpack.c.l.b16 %v454
  %v2198 = vunpack.c.h.b16 %v454
  %v2199 = vunpack.c.l.b16 %v455
  %v2200 = vunpack.c.h.b16 %v455
  %v2201 = vunpack.c.l.b16 %v456
  %v2202 = vunpack.c.h.b16 %v456
  %v2203 = vunpack.c.l.b16 %v457
  %v2204 = vunpack.c.h.b16 %v457
  %v2205 = vunpack.c.l.b16 %v458
  %v2206 = vunpack.c.h.b16 %v458
  %v2207 = vunpack.c.l.b16 %v459
  %v2208 = vunpack.c.h.b16 %v459
  %v2209 = vunpack.c.l.b16 %v460
  %v2210 = vunpack.c.h.b16 %v460
  %v2211 = vunpack.c.l.b16 %v461
  %v2212 = vunpack.c.h.b16 %v461
  %v2213 = vunpack.c.l.b16 %v462
  %v2214 = vunpack.c.h.b16 %v462
  %v2215 = vunpack.c.l.b16 %v463
  %v2216 = vunpack.c.h.b16 %v463
  %v2217 = vunpack.c.l.b16 %v464
  %v2218 = vunpack.c.h.b16 %v464
  %v2219 = vunpack.c.l.b16 %v465
  %v2220 = vunpack.c.h.b16 %v465
  %v2221 = vunpack.c.l.b16 %v466
  %v2222 = vunpack.c.h.b16 %v466
  %v2223 = vunpack.c.l.b16 %v467
  %v2224 = vunpack.c.h.b16 %v467
  %v2225 = vunpack.c.l.b16 %v468
  %v2226 = vunpack.c.h.b16 %v468
  %v2227 = vunpack.c.l.b16 %v469
  %v2228 = vunpack.c.h.b16 %v469
  %v2229 = vunpack.c.l.b16 %v470
  %v2230 = vunpack.c.h.b16 %v470
  %v2231 = vunpack.c.l.b16 %v471
  %v2232 = vunpack.c.h.b16 %v471
  %v2233 = vunpack.c.l.b16 %v472
  %v2234 = vunpack.c.h.b16 %v472
  %v2235 = vunpack.c.l.b16 %v473
  %v2236 = vunpack.c.h.b16 %v473
  %v2237 = vunpack.c.l.b16 %v474
  %v2238 = vunpack.c.h.b16 %v474
  %v2239 = vunpack.c.l.b16 %v475
  %v2240 = vunpack.c.h.b16 %v475
  %v2241 = vunpack.c.l.b16 %v476
  %v2242 = vunpack.c.h.b16 %v476
  %v2243 = vunpack.c.l.b16 %v477
  %v2244 = vunpack.c.h.b16 %v477
  %v2245 = vunpack.c.l.b16 %v478
  %v2246 = vunpack.c.h.b16 %v478
  %v2247 = vunpack.c.l.b16 %v479
  %v2248 = vunpack.c.h.b16 %v479
  %v2249 = vunpack.c.l.b16 %v480
  %v2250 = vunpack.c.h.b16 %v480
  %v2251 = vunpack.c.l.b16 %v481
  %v2252 = vunpack.c.h.b16 %v481
  %v2253 = vunpack.c.l.b16 %v482
  %v2254 = vunpack.c.h.b16 %v482
  %v2255 = vunpack.c.l.b16 %v483
  %v2256 = vunpack.c.h.b16 %v483
  %v2257 = vunpack.c.l.b16 %v484
  %v2258 = vunpack.c.h.b16 %v484
  %v2259 = vunpack.c.l.b16 %v485
  %v2260 = vunpack.c.h.b16 %v485
  %v2261 = vunpack.c.l.b16 %v486
  %v2262 = vunpack.c.h.b16 %v486
  %v2263 = vunpack.c.l.b16 %v487
  %v2264 = vunpack.c.h.b16 %v487
  %v2265 = vunpack.c.l.b16 %v488
  %v2266 = vunpack.c.h.b16 %v488
  %v2267 = vunpack.c.l.b16 %v489
  %v2268 = vunpack.c.h.b16 %v489
  %v2269 = vunpack.c.l.b16 %v490
  %v2270 = vunpack.c.h.b16 %v490
  %v2271 = vunpack.c.l.b16 %v491
  %v2272 = vunpack.c.h.b16 %v491
  %v2273 = vunpack.c.l.b16 %v492
  %v2274 = vunpack.c.h.b16 %v492
  %v2275 = vunpack.c.l.b16 %v493
  %v2276 = vunpack.c.h.b16 %v493
  %v2277 = vunpack.c.l.b16 %v494
  %v2278 = vunpack.c.h.b16 %v494
  %v2279 = vunpack.c.l.b16 %v495
  %v2280 = vunpack.c.h.b16 %v495
  %v2281 = vunpack.c.l.b16 %v496
  %v2282 = vunpack.c.h.b16 %v496
  %v2283 = vunpack.c.l.b16 %v497
  %v2284 = vunpack.c.h.b16 %v497
  %v2285 = vunpack.c.l.b16 %v498
  %v2286 = vunpack.c.h.b16 %v498
  %v2287 = vunpack.c.l.b16 %v499
  %v2288 = vunpack.c.h.b16 %v499
  %v2289 = vunpack.c.l.b16 %v500
  %v2290 = vunpack.c.h.b16 %v500
  %v2291 = vunpack.c.l.b16 %v501
  %v2292 = vunpack.c.h.b16 %v501
  %v2293 = vunpack.c.l.b16 %v502
  %v2294 = vunpack.c.h.b16 %v502
  %v2295 = vunpack.c.l.b16 %v503
  %v2296 = vunpack.c.h.b16 %v503
  %v2297 = vunpack.c.l.b16 %v504
  %v2298 = vunpack.c.h.b16 %v504
  %v2299 = vunpack.c.l.b16 %v505
  %v2300 = vunpack.c.h.b16 %v505
  %v2301 = vunpack.c.l.b16 %v506
  %v2302 = vunpack.c.h.b16 %v506
  %v2303 = vunpack.c.l.b16 %v507
  %v2304 = vunpack.c.h.b16 %v507
  %v2305 = vunpack.c.l.b16 %v508
  %v2306 = vunpack.c.h.b16 %v508
  %v2307 = vunpack.c.l.b16 %v509
  %v2308 = vunpack.c.h.b16 %v509
  %v2309 = vunpack.c.l.b16 %v510
  %v2310 = vunpack.c.h.b16 %v510
  %v2311 = vunpack.c.l.b16 %v511
  %v2312 = vunpack.c.h.b16 %v511
  %v2313 = vunpack.c.l.b16 %v512
  %v2314 = vunpack.c.h.b16 %v512
  %v2315 = vunpack.c.l.b16 %v513
  %v2316 = vunpack.c.h.b16 %v513
  %v2317 = vunpack.c.l.b16 %v514
  %v2318 = vunpack.c.h.b16 %v514
  %v2319 = vunpack.c.l.b16 %v515
  %v2320 = vunpack.c.h.b16 %v515
  %v2321 = vunpack.c.l.b16 %v516
  %v2322 = vunpack.c.h.b16 %v516
  %v2323 = vunpack.c.l.b16 %v517
  %v2324 = vunpack.c.h.b16 %v517
  %v2325 = vunpack.c.l.b16 %v518
  %v2326 = vunpack.c.h.b16 %v518
  %v2327 = vunpack.c.l.b16 %v519
  %v2328 = vunpack.c.h.b16 %v519
  %v2329 = vunpack.c.l.b16 %v520
  %v2330 = vunpack.c.h.b16 %v520
  %v2331 = vunpack.c.l.b16 %v521
  %v2332 = vunpack.c.h.b16 %v521
  %v2333 = vunpack.c.l.b16 %v522
  %v2334 = vunpack.c.h.b16 %v522
  %v2335 = vunpack.c.l.b16 %v523
  %v2336 = vunpack.c.h.b16 %v523
  %v2337 = vunpack.c.l.b16 %v524
  %v2338 = vunpack.c.h.b16 %v524
  %v2339 = vunpack.c.l.b16 %v525
  %v2340 = vunpack.c.h.b16 %v525
  %v2341 = vunpack.c.l.b16 %v526
  %v2342 = vunpack.c.h.b16 %v526
  %v2343 = vunpack.c.l.b16 %v527
  %v2344 = vunpack.c.h.b16 %v527
  %v2345 = vunpack.c.l.b16 %v528
  %v2346 = vunpack.c.h.b16 %v528
  %v2347 = vunpack.c.l.b16 %v529
  %v2348 = vunpack.c.h.b16 %v529
  %v2349 = vunpack.c.l.b16 %v530
  %v2350 = vunpack.c.h.b16 %v530
  %v2351 = vunpack.c.l.b16 %v531
  %v2352 = vunpack.c.h.b16 %v531
  %v2353 = vunpack.c.l.b16 %v532
  %v2354 = vunpack.c.h.b16 %v532
  %v2355 = vunpack.c.l.b16 %v533
  %v2356 = vunpack.c.h.b16 %v533
  %v2357 = vunpack.c.l.b16 %v534
  %v2358 = vunpack.c.h.b16 %v534
  %v2359 = vunpack.c.l.b16 %v535
  %v2360 = vunpack.c.h.b16 %v535
  %v2361 = vunpack.c.l.b16 %v536
  %v2362 = vunpack.c.h.b16 %v536
  %v2363 = vunpack.c.l.b16 %v537
  %v2364 = vunpack.c.h.b16 %v537
  %v2365 = vunpack.c.l.b16 %v538
  %v2366 = vunpack.c.h.b16 %v538
  %v2367 = vunpack.c.l.b16 %v539
  %v2368 = vunpack.c.h.b16 %v539
  %v2369 = vunpack.c.l.b16 %v540
  %v2370 = vunpack.c.h.b16 %v540
  %v2371 = vunpack.c.l.b16 %v541
  %v2372 = vunpack.c.h.b16 %v541
  %v2373 = vunpack.c.l.b16 %v542
  %v2374 = vunpack.c.h.b16 %v542
  %v2375 = vunpack.c.l.b16 %v543
  %v2376 = vunpack.c.h.b16 %v543
  %v2377 = vunpack.c.l.b16 %v544
  %v2378 = vunpack.c.h.b16 %v544
  %v2379 = vunpack.c.l.b16 %v545
  %v2380 = vunpack.c.h.b16 %v545
  %v2381 = vunpack.c.l.b16 %v546
  %v2382 = vunpack.c.h.b16 %v546
  %v2383 = vunpack.c.l.b16 %v547
  %v2384 = vunpack.c.h.b16 %v547
  %v2385 = vunpack.c.l.b16 %v548
  %v2386 = vunpack.c.h.b16 %v548
  %v2387 = vunpack.c.l.b16 %v549
  %v2388 = vunpack.c.h.b16 %v549
  %v2389 = vunpack.c.l.b16 %v550
  %v2390 = vunpack.c.h.b16 %v550
  %v2391 = vunpack.c.l.b16 %v551
  %v2392 = vunpack.c.h.b16 %v551
  %v2393 = vunpack.c.l.b16 %v552
  %v2394 = vunpack.c.h.b16 %v552
  %v2395 = vunpack.c.l.b16 %v553
  %v2396 = vunpack.c.h.b16 %v553
  %v2397 = vunpack.c.l.b16 %v554
  %v2398 = vunpack.c.h.b16 %v554
  %v2399 = vunpack.c.l.b16 %v555
  %v2400 = vunpack.c.h.b16 %v555
  %v2401 = vunpack.c.l.b16 %v556
  %v2402 = vunpack.c.h.b16 %v556
  %v2403 = vunpack.c.l.b16 %v557
  %v2404 = vunpack.c.h.b16 %v557
  %v2405 = vunpack.c.l.b16 %v558
  %v2406 = vunpack.c.h.b16 %v558
  %v2407 = vunpack.c.l.b16 %v559
  %v2408 = vunpack.c.h.b16 %v559
  %v2409 = vunpack.c.l.b16 %v560
  %v2410 = vunpack.c.h.b16 %v560
  %v2411 = vunpack.c.l.b16 %v561
  %v2412 = vunpack.c.h.b16 %v561
  %v2413 = vunpack.c.l.b16 %v562
  %v2414 = vunpack.c.h.b16 %v562
  %v2415 = vunpack.c.l.b16 %v563
  %v2416 = vunpack.c.h.b16 %v563
  %v2417 = vunpack.c.l.b16 %v564
  %v2418 = vunpack.c.h.b16 %v564
  %v2419 = vunpack.c.l.b16 %v565
  %v2420 = vunpack.c.h.b16 %v565
  %v2421 = vunpack.c.l.b16 %v566
  %v2422 = vunpack.c.h.b16 %v566
  %v2423 = vunpack.c.l.b16 %v567
  %v2424 = vunpack.c.h.b16 %v567
  %v2425 = vunpack.c.l.b16 %v568
  %v2426 = vunpack.c.h.b16 %v568
  %v2427 = vunpack.c.l.b16 %v569
  %v2428 = vunpack.c.h.b16 %v569
  %v2429 = vunpack.c.l.b16 %v570
  %v2430 = vunpack.c.h.b16 %v570
  %v2431 = vunpack.c.l.b16 %v571
  %v2432 = vunpack.c.h.b16 %v571
  %v2433 = vunpack.c.l.b16 %v572
  %v2434 = vunpack.c.h.b16 %v572
  %v2435 = vunpack.c.l.b16 %v573
  %v2436 = vunpack.c.h.b16 %v573
  %v2437 = vunpack.c.l.b16 %v574
  %v2438 = vunpack.c.h.b16 %v574
  %v2439 = vunpack.c.l.b16 %v575
  %v2440 = vunpack.c.h.b16 %v575
  %v2441 = vunpack.c.l.b16 %v576
  %v2442 = vunpack.c.h.b16 %v576
  %v2443 = vunpack.c.l.b16 %v577
  %v2444 = vunpack.c.h.b16 %v577
  %v2445 = vunpack.c.l.b16 %v578
  %v2446 = vunpack.c.h.b16 %v578
  %v2447 = vunpack.c.l.b16 %v579
  %v2448 = vunpack.c.h.b16 %v579
  %v2449 = vunpack.c.l.b16 %v580
  %v2450 = vunpack.c.h.b16 %v580
  %v2451 = vunpack.c.l.b16 %v581
  %v2452 = vunpack.c.h.b16 %v581
  %v2453 = vunpack.c.l.b16 %v582
  %v2454 = vunpack.c.h.b16 %v582
  %v2455 = vunpack.c.l.b16 %v583
  %v2456 = vunpack.c.h.b16 %v583
  %v2457 = vunpack.c.l.b16 %v584
  %v2458 = vunpack.c.h.b16 %v584
  %v2459 = vunpack.c.l.b16 %v585
  %v2460 = vunpack.c.h.b16 %v585
  %v2461 = vunpack.c.l.b16 %v586
  %v2462 = vunpack.c.h.b16 %v586
  %v2463 = vunpack.c.l.b16 %v587
  %v2464 = vunpack.c.h.b16 %v587
  %v2465 = vunpack.c.l.b16 %v588
  %v2466 = vunpack.c.h.b16 %v588
  %v2467 = vunpack.c.l.b16 %v589
  %v2468 = vunpack.c.h.b16 %v589
  %v2469 = vunpack.c.l.b16 %v590
  %v2470 = vunpack.c.h.b16 %v590
  %v2471 = vunpack.c.l.b16 %v591
  %v2472 = vunpack.c.h.b16 %v591
  %v2473 = vunpack.c.l.b16 %v592
  %v2474 = vunpack.c.h.b16 %v592
  %v2475 = vunpack.c.l.b16 %v593
  %v2476 = vunpack.c.h.b16 %v593
  %v2477 = vunpack.c.l.b16 %v594
  %v2478 = vunpack.c.h.b16 %v594
  %v2479 = vunpack.c.l.b16 %v595
  %v2480 = vunpack.c.h.b16 %v595
  %v2481 = vunpack.c.l.b16 %v596
  %v2482 = vunpack.c.h.b16 %v596
  %v2483 = vunpack.c.l.b16 %v597
  %v2484 = vunpack.c.h.b16 %v597
  %v2485 = vunpack.c.l.b16 %v598
  %v2486 = vunpack.c.h.b16 %v598
  %v2487 = vunpack.c.l.b16 %v599
  %v2488 = vunpack.c.h.b16 %v599
  %v2489 = vunpack.c.l.b16 %v600
  %v2490 = vunpack.c.h.b16 %v600
  %v2491 = vunpack.c.l.b16 %v601
  %v2492 = vunpack.c.h.b16 %v601
  %v2493 = vunpack.c.l.b16 %v602
  %v2494 = vunpack.c.h.b16 %v602
  %v2495 = vunpack.c.l.b16 %v603
  %v2496 = vunpack.c.h.b16 %v603
  %v2497 = vunpack.c.l.b16 %v604
  %v2498 = vunpack.c.h.b16 %v604
  %v2499 = vunpack.c.l.b16 %v605
  %v2500 = vunpack.c.h.b16 %v605
  %v2501 = vunpack.c.l.b16 %v606
  %v2502 = vunpack.c.h.b16 %v606
  %v2503 = vunpack.c.l.b16 %v607
  %v2504 = vunpack.c.h.b16 %v607
  %v2505 = vunpack.c.l.b16 %v608
  %v2506 = vunpack.c.h.b16 %v608
  %v2507 = vpack.c.b16 %v1491, %v1483
  %v2508 = vpack.c.b16 %v1492, %v1484
  %v2509 = vpack.c.b16 %v1493, %v1485
  %v2510 = vpack.c.b16 %v1494, %v1486
  %v2511 = vpack.c.b16 %v1495, %v1487
  %v2512 = vpack.c.b16 %v1496, %v1488
  %v2513 = vpack.c.b16 %v1497, %v1489
  %v2514 = vpack.c.b16 %v1498, %v1490
  %v2515 = vpack.c.b16 %v1507, %v1499
  %v2516 = vpack.c.b16 %v1508, %v1500
  %v2517 = vpack.c.b16 %v1509, %v1501
  %v2518 = vpack.c.b16 %v1510, %v1502
  %v2519 = vpack.c.b16 %v1511, %v1503
  %v2520 = vpack.c.b16 %v1512, %v1504
  %v2521 = vpack.c.b16 %v1513, %v1505
  %v2522 = vpack.c.b16 %v1514, %v1506
  %v2523 = vpack.c.b16 %v1523, %v1515
  %v2524 = vpack.c.b16 %v1524, %v1516
  %v2525 = vpack.c.b16 %v1525, %v1517
  %v2526 = vpack.c.b16 %v1526, %v1518
  %v2527 = vpack.c.b16 %v1527, %v1519
  %v2528 = vpack.c.b16 %v1528, %v1520
  %v2529 = vpack.c.b16 %v1529, %v1521
  %v2530 = vpack.c.b16 %v1530, %v1522
  %v2531 = vpack.c.b16 %v1539, %v1531
  %v2532 = vpack.c.b16 %v1540, %v1532
  %v2533 = vpack.c.b16 %v1541, %v1533
  %v2534 = vpack.c.b16 %v1542, %v1534
  %v2535 = vpack.c.b16 %v1543, %v1535
  %v2536 = vpack.c.b16 %v1544, %v1536
  %v2537 = vpack.c.b16 %v1545, %v1537
  %v2538 = vpack.c.b16 %v1546, %v1538
  %v2539 = vpack.c.b16 %v1555, %v1547
  %v2540 = vpack.c.b16 %v1556, %v1548
  %v2541 = vpack.c.b16 %v1557, %v1549
  %v2542 = vpack.c.b16 %v1558, %v1550
  %v2543 = vpack.c.b16 %v1559, %v1551
  %v2544 = vpack.c.b16 %v1560, %v1552
  %v2545 = vpack.c.b16 %v1561, %v1553
  %v2546 = vpack.c.b16 %v1562, %v1554
  %v2547 = vpack.c.b16 %v1571, %v1563
  %v2548 = vpack.c.b16 %v1572, %v1564
  %v2549 = vpack.c.b16 %v1573, %v1565
  %v2550 = vpack.c.b16 %v1574, %v1566
  %v2551 = vpack.c.b16 %v1575, %v1567
  %v2552 = vpack.c.b16 %v1576, %v1568
  %v2553 = vpack.c.b16 %v1577, %v1569
  %v2554 = vpack.c.b16 %v1578, %v1570
  %v2555 = vpack.c.b16 %v1587, %v1579
  %v2556 = vpack.c.b16 %v1588, %v1580
  %v2557 = vpack.c.b16 %v1589, %v1581
  %v2558 = vpack.c.b16 %v1590, %v1582
  %v2559 = vpack.c.b16 %v1591, %v1583
  %v2560 = vpack.c.b16 %v1592, %v1584
  %v2561 = vpack.c.b16 %v1593, %v1585
  %v2562 = vpack.c.b16 %v1594, %v1586
  %v2563 = vpack.c.b16 %v1603, %v1595
  %v2564 = vpack.c.b16 %v1604, %v1596
  %v2565 = vpack.c.b16 %v1605, %v1597
  %v2566 = vpack.c.b16 %v1606, %v1598
  %v2567 = vpack.c.b16 %v1607, %v1599
  %v2568 = vpack.c.b16 %v1608, %v1600
  %v2569 = vpack.c.b16 %v1609, %v1601
  %v2570 = vpack.c.b16 %v1610, %v1602
  %v2571 = vpack.c.b16 %v1619, %v1611
  %v2572 = vpack.c.b16 %v1620, %v1612
  %v2573 = vpack.c.b16 %v1621, %v1613
  %v2574 = vpack.c.b16 %v1622, %v1614
  %v2575 = vpack.c.b16 %v1623, %v1615
  %v2576 = vpack.c.b16 %v1624, %v1616
  %v2577 = vpack.c.b16 %v1625, %v1617
  %v2578 = vpack.c.b16 %v1626, %v1618
  %v2579 = vpack.c.b16 %v1635, %v1627
  %v2580 = vpack.c.b16 %v1636, %v1628
  %v2581 = vpack.c.b16 %v1637, %v1629
  %v2582 = vpack.c.b16 %v1638, %v1630
  %v2583 = vpack.c.b16 %v1639, %v1631
  %v2584 = vpack.c.b16 %v1640, %v1632
  %v2585 = vpack.c.b16 %v1641, %v1633
  %v2586 = vpack.c.b16 %v1642, %v1634
  %v2587 = vpack.c.b16 %v1651, %v1643
  %v2588 = vpack.c.b16 %v1652, %v1644
  %v2589 = vpack.c.b16 %v1653, %v1645
  %v2590 = vpack.c.b16 %v1654, %v1646
  %v2591 = vpack.c.b16 %v1655, %v1647
  %v2592 = vpack.c.b16 %v1656, %v1648
  %v2593 = vpack.c.b16 %v1657, %v1649
  %v2594 = vpack.c.b16 %v1658, %v1650
  %v2595 = vpack.c.b16 %v1667, %v1659
  %v2596 = vpack.c.b16 %v1668, %v1660
  %v2597 = vpack.c.b16 %v1669, %v1661
  %v2598 = vpack.c.b16 %v1670, %v1662
  %v2599 = vpack.c.b16 %v1671, %v1663
  %v2600 = vpack.c.b16 %v1672, %v1664
  %v2601 = vpack.c.b16 %v1673, %v1665
  %v2602 = vpack.c.b16 %v1674, %v1666
  %v2603 = vpack.c.b16 %v1683, %v1675
  %v2604 = vpack.c.b16 %v1684, %v1676
  %v2605 = vpack.c.b16 %v1685, %v1677
  %v2606 = vpack.c.b16 %v1686, %v1678
  %v2607 = vpack.c.b16 %v1687, %v1679
  %v2608 = vpack.c.b16 %v1688, %v1680
  %v2609 = vpack.c.b16 %v1689, %v1681
  %v2610 = vpack.c.b16 %v1690, %v1682
  %v2611 = vpack.c.b16 %v1699, %v1691
  %v2612 = vpack.c.b16 %v1700, %v1692
  %v2613 = vpack.c.b16 %v1701, %v1693
  %v2614 = vpack.c.b16 %v1702, %v1694
  %v2615 = vpack.c.b16 %v1703, %v1695
  %v2616 = vpack.c.b16 %v1704, %v1696
  %v2617 = vpack.c.b16 %v1705, %v1697
  %v2618 = vpack.c.b16 %v1706, %v1698
  %v2619 = vpack.c.b16 %v1715, %v1707
  %v2620 = vpack.c.b16 %v1716, %v1708
  %v2621 = vpack.c.b16 %v1717, %v1709
  %v2622 = vpack.c.b16 %v1718, %v1710
  %v2623 = vpack.c.b16 %v1719, %v1711
  %v2624 = vpack.c.b16 %v1720, %v1712
  %v2625 = vpack.c.b16 %v1721, %v1713
  %v2626 = vpack.c.b16 %v1722, %v1714
  %v2627 = vpack.c.b16 %v1731, %v1723
  %v2628 = vpack.c.b16 %v1732, %v1724
  %v2629 = vpack.c.b16 %v1733, %v1725
  %v2630 = vpack.c.b16 %v1734, %v1726
  %v2631 = vpack.c.b16 %v1735, %v1727
  %v2632 = vpack.c.b16 %v1736, %v1728
  %v2633 = vpack.c.b16 %v1737, %v1729
  %v2634 = vpack.c.b16 %v1738, %v1730
  %v2635 = vpack.c.b16 %v1747, %v1739
  %v2636 = vpack.c.b16 %v1748, %v1740
  %v2637 = vpack.c.b16 %v1749, %v1741
  %v2638 = vpack.c.b16 %v1750, %v1742
  %v2639 = vpack.c.b16 %v1751, %v1743
  %v2640 = vpack.c.b16 %v1752, %v1744
  %v2641 = vpack.c.b16 %v1753, %v1745
  %v2642 = vpack.c.b16 %v1754, %v1746
  %v2643 = vpack.c.b16 %v1763, %v1755
  %v2644 = vpack.c.b16 %v1764, %v1756
  %v2645 = vpack.c.b16 %v1765, %v1757
  %v2646 = vpack.c.b16 %v1766, %v1758
  %v2647 = vpack.c.b16 %v1767, %v1759
  %v2648 = vpack.c.b16 %v1768, %v1760
  %v2649 = vpack.c.b16 %v1769, %v1761
  %v2650 = vpack.c.b16 %v1770, %v1762
  %v2651 = vpack.c.b16 %v1779, %v1771
  %v2652 = vpack.c.b16 %v1780, %v1772
  %v2653 = vpack.c.b16 %v1781, %v1773
  %v2654 = vpack.c.b16 %v1782, %v1774
  %v2655 = vpack.c.b16 %v1783, %v1775
  %v2656 = vpack.c.b16 %v1784, %v1776
  %v2657 = vpack.c.b16 %v1785, %v1777
  %v2658 = vpack.c.b16 %v1786, %v1778
  %v2659 = vpack.c.b16 %v1795, %v1787
  %v2660 = vpack.c.b16 %v1796, %v1788
  %v2661 = vpack.c.b16 %v1797, %v1789
  %v2662 = vpack.c.b16 %v1798, %v1790
  %v2663 = vpack.c.b16 %v1799, %v1791
  %v2664 = vpack.c.b16 %v1800, %v1792
  %v2665 = vpack.c.b16 %v1801, %v1793
  %v2666 = vpack.c.b16 %v1802, %v1794
  %v2667 = vpack.c.b16 %v1811, %v1803
  %v2668 = vpack.c.b16 %v1812, %v1804
  %v2669 = vpack.c.b16 %v1813, %v1805
  %v2670 = vpack.c.b16 %v1814, %v1806
  %v2671 = vpack.c.b16 %v1815, %v1807
  %v2672 = vpack.c.b16 %v1816, %v1808
  %v2673 = vpack.c.b16 %v1817, %v1809
  %v2674 = vpack.c.b16 %v1818, %v1810
  %v2675 = vpack.c.b16 %v1827, %v1819
  %v2676 = vpack.c.b16 %v1828, %v1820
  %v2677 = vpack.c.b16 %v1829, %v1821
  %v2678 = vpack.c.b16 %v1830, %v1822
  %v2679 = vpack.c.b16 %v1831, %v1823
  %v2680 = vpack.c.b16 %v1832, %v1824
  %v2681 = vpack.c.b16 %v1833, %v1825
  %v2682 = vpack.c.b16 %v1834, %v1826
  %v2683 = vpack.c.b16 %v1843, %v1835
  %v2684 = vpack.c.b16 %v1844, %v1836
  %v2685 = vpack.c.b16 %v1845, %v1837
  %v2686 = vpack.c.b16 %v1846, %v1838
  %v2687 = vpack.c.b16 %v1847, %v1839
  %v2688 = vpack.c.b16 %v1848, %v1840
  %v2689 = vpack.c.b16 %v1849, %v1841
  %v2690 = vpack.c.b16 %v1850, %v1842
  %v2691 = vpack.c.b16 %v1859, %v1851
  %v2692 = vpack.c.b16 %v1860, %v1852
  %v2693 = vpack.c.b16 %v1861, %v1853
  %v2694 = vpack.c.b16 %v1862, %v1854
  %v2695 = vpack.c.b16 %v1863, %v1855
  %v2696 = vpack.c.b16 %v1864, %v1856
  %v2697 = vpack.c.b16 %v1865, %v1857
  %v2698 = vpack.c.b16 %v1866, %v1858
  %v2699 = vpack.c.b16 %v1875, %v1867
  %v2700 = vpack.c.b16 %v1876, %v1868
  %v2701 = vpack.c.b16 %v1877, %v1869
  %v2702 = vpack.c.b16 %v1878, %v1870
  %v2703 = vpack.c.b16 %v1879, %v1871
  %v2704 = vpack.c.b16 %v1880, %v1872
  %v2705 = vpack.c.b16 %v1881, %v1873
  %v2706 = vpack.c.b16 %v1882, %v1874
  %v2707 = vpack.c.b16 %v1891, %v1883
  %v2708 = vpack.c.b16 %v1892, %v1884
  %v2709 = vpack.c.b16 %v1893, %v1885
  %v2710 = vpack.c.b16 %v1894, %v1886
  %v2711 = vpack.c.b16 %v1895, %v1887
  %v2712 = vpack.c.b16 %v1896, %v1888
  %v2713 = vpack.c.b16 %v1897, %v1889
  %v2714 = vpack.c.b16 %v1898, %v1890
  %v2715 = vpack.c.b16 %v1907, %v1899
  %v2716 = vpack.c.b16 %v1908, %v1900
  %v2717 = vpack.c.b16 %v1909, %v1901
  %v2718 = vpack.c.b16 %v1910, %v1902
  %v2719 = vpack.c.b16 %v1911, %v1903
  %v2720 = vpack.c.b16 %v1912, %v1904
  %v2721 = vpack.c.b16 %v1913, %v1905
  %v2722 = vpack.c.b16 %v1914, %v1906
  %v2723 = vpack.c.b16 %v1923, %v1915
  %v2724 = vpack.c.b16 %v1924, %v1916
  %v2725 = vpack.c.b16 %v1925, %v1917
  %v2726 = vpack.c.b16 %v1926, %v1918
  %v2727 = vpack.c.b16 %v1927, %v1919
  %v2728 = vpack.c.b16 %v1928, %v1920
  %v2729 = vpack.c.b16 %v1929, %v1921
  %v2730 = vpack.c.b16 %v1930, %v1922
  %v2731 = vpack.c.b16 %v1939, %v1931
  %v2732 = vpack.c.b16 %v1940, %v1932
  %v2733 = vpack.c.b16 %v1941, %v1933
  %v2734 = vpack.c.b16 %v1942, %v1934
  %v2735 = vpack.c.b16 %v1943, %v1935
  %v2736 = vpack.c.b16 %v1944, %v1936
  %v2737 = vpack.c.b16 %v1945, %v1937
  %v2738 = vpack.c.b16 %v1946, %v1938
  %v2739 = vpack.c.b16 %v1955, %v1947
  %v2740 = vpack.c.b16 %v1956, %v1948
  %v2741 = vpack.c.b16 %v1957, %v1949
  %v2742 = vpack.c.b16 %v1958, %v1950
  %v2743 = vpack.c.b16 %v1959, %v1951
  %v2744 = vpack.c.b16 %v1960, %v1952
  %v2745 = vpack.c.b16 %v1961, %v1953
  %v2746 = vpack.c.b16 %v1962, %v1954
  %v2747 = vpack.c.b16 %v1971, %v1963
  %v2748 = vpack.c.b16 %v1972, %v1964
  %v2749 = vpack.c.b16 %v1973, %v1965
  %v2750 = vpack.c.b16 %v1974, %v1966
  %v2751 = vpack.c.b16 %v1975, %v1967
  %v2752 = vpack.c.b16 %v1976, %v1968
  %v2753 = vpack.c.b16 %v1977, %v1969
  %v2754 = vpack.c.b16 %v1978, %v1970
  %v2755 = vpack.c.b16 %v1987, %v1979
  %v2756 = vpack.c.b16 %v1988, %v1980
  %v2757 = vpack.c.b16 %v1989, %v1981
  %v2758 = vpack.c.b16 %v1990, %v1982
  %v2759 = vpack.c.b16 %v1991, %v1983
  %v2760 = vpack.c.b16 %v1992, %v1984
  %v2761 = vpack.c.b16 %v1993, %v1985
  %v2762 = vpack.c.b16 %v1994, %v1986
  %v2763 = vpack.c.b16 %v2003, %v1995
  %v2764 = vpack.c.b16 %v2004, %v1996
  %v2765 = vpack.c.b16 %v2005, %v1997
  %v2766 = vpack.c.b16 %v2006, %v1998
  %v2767 = vpack.c.b16 %v2007, %v1999
  %v2768 = vpack.c.b16 %v2008, %v2000
  %v2769 = vpack.c.b16 %v2009, %v2001
  %v2770 = vpack.c.b16 %v2010, %v2002
  %v2771 = vpack.c.b16 %v2019, %v2011
  %v2772 = vpack.c.b16 %v2020, %v2012
  %v2773 = vpack.c.b16 %v2021, %v2013
  %v2774 = vpack.c.b16 %v2022, %v2014
  %v2775 = vpack.c.b16 %v2023, %v2015
  %v2776 = vpack.c.b16 %v2024, %v2016
  %v2777 = vpack.c.b16 %v2025, %v2017
  %v2778 = vpack.c.b16 %v2026, %v2018
  %v2779 = vpack.c.b16 %v2035, %v2027
  %v2780 = vpack.c.b16 %v2036, %v2028
  %v2781 = vpack.c.b16 %v2037, %v2029
  %v2782 = vpack.c.b16 %v2038, %v2030
  %v2783 = vpack.c.b16 %v2039, %v2031
  %v2784 = vpack.c.b16 %v2040, %v2032
  %v2785 = vpack.c.b16 %v2041, %v2033
  %v2786 = vpack.c.b16 %v2042, %v2034
  %v2787 = vpack.c.b16 %v2051, %v2043
  %v2788 = vpack.c.b16 %v2052, %v2044
  %v2789 = vpack.c.b16 %v2053, %v2045
  %v2790 = vpack.c.b16 %v2054, %v2046
  %v2791 = vpack.c.b16 %v2055, %v2047
  %v2792 = vpack.c.b16 %v2056, %v2048
  %v2793 = vpack.c.b16 %v2057, %v2049
  %v2794 = vpack.c.b16 %v2058, %v2050
  %v2795 = vpack.c.b16 %v2067, %v2059
  %v2796 = vpack.c.b16 %v2068, %v2060
  %v2797 = vpack.c.b16 %v2069, %v2061
  %v2798 = vpack.c.b16 %v2070, %v2062
  %v2799 = vpack.c.b16 %v2071, %v2063
  %v2800 = vpack.c.b16 %v2072, %v2064
  %v2801 = vpack.c.b16 %v2073, %v2065
  %v2802 = vpack.c.b16 %v2074, %v2066
  %v2803 = vpack.c.b16 %v2083, %v2075
  %v2804 = vpack.c.b16 %v2084, %v2076
  %v2805 = vpack.c.b16 %v2085, %v2077
  %v2806 = vpack.c.b16 %v2086, %v2078
  %v2807 = vpack.c.b16 %v2087, %v2079
  %v2808 = vpack.c.b16 %v2088, %v2080
  %v2809 = vpack.c.b16 %v2089, %v2081
  %v2810 = vpack.c.b16 %v2090, %v2082
  %v2811 = vpack.c.b16 %v2099, %v2091
  %v2812 = vpack.c.b16 %v2100, %v2092
  %v2813 = vpack.c.b16 %v2101, %v2093
  %v2814 = vpack.c.b16 %v2102, %v2094
  %v2815 = vpack.c.b16 %v2103, %v2095
  %v2816 = vpack.c.b16 %v2104, %v2096
  %v2817 = vpack.c.b16 %v2105, %v2097
  %v2818 = vpack.c.b16 %v2106, %v2098
  %v2819 = vpack.c.b16 %v2115, %v2107
  %v2820 = vpack.c.b16 %v2116, %v2108
  %v2821 = vpack.c.b16 %v2117, %v2109
  %v2822 = vpack.c.b16 %v2118, %v2110
  %v2823 = vpack.c.b16 %v2119, %v2111
  %v2824 = vpack.c.b16 %v2120, %v2112
  %v2825 = vpack.c.b16 %v2121, %v2113
  %v2826 = vpack.c.b16 %v2122, %v2114
  %v2827 = vpack.c.b16 %v2131, %v2123
  %v2828 = vpack.c.b16 %v2132, %v2124
  %v2829 = vpack.c.b16 %v2133, %v2125
  %v2830 = vpack.c.b16 %v2134, %v2126
  %v2831 = vpack.c.b16 %v2135, %v2127
  %v2832 = vpack.c.b16 %v2136, %v2128
  %v2833 = vpack.c.b16 %v2137, %v2129
  %v2834 = vpack.c.b16 %v2138, %v2130
  %v2835 = vpack.c.b16 %v2147, %v2139
  %v2836 = vpack.c.b16 %v2148, %v2140
  %v2837 = vpack.c.b16 %v2149, %v2141
  %v2838 = vpack.c.b16 %v2150, %v2142
  %v2839 = vpack.c.b16 %v2151, %v2143
  %v2840 = vpack.c.b16 %v2152, %v2144
  %v2841 = vpack.c.b16 %v2153, %v2145
  %v2842 = vpack.c.b16 %v2154, %v2146
  %v2843 = vpack.c.b16 %v2163, %v2155
  %v2844 = vpack.c.b16 %v2164, %v2156
  %v2845 = vpack.c.b16 %v2165, %v2157
  %v2846 = vpack.c.b16 %v2166, %v2158
  %v2847 = vpack.c.b16 %v2167, %v2159
  %v2848 = vpack.c.b16 %v2168, %v2160
  %v2849 = vpack.c.b16 %v2169, %v2161
  %v2850 = vpack.c.b16 %v2170, %v2162
  %v2851 = vpack.c.b16 %v2179, %v2171
  %v2852 = vpack.c.b16 %v2180, %v2172
  %v2853 = vpack.c.b16 %v2181, %v2173
  %v2854 = vpack.c.b16 %v2182, %v2174
  %v2855 = vpack.c.b16 %v2183, %v2175
  %v2856 = vpack.c.b16 %v2184, %v2176
  %v2857 = vpack.c.b16 %v2185, %v2177
  %v2858 = vpack.c.b16 %v2186, %v2178
  %v2859 = vpack.c.b16 %v2195, %v2187
  %v2860 = vpack.c.b16 %v2196, %v2188
  %v2861 = vpack.c.b16 %v2197, %v2189
  %v2862 = vpack.c.b16 %v2198, %v2190
  %v2863 = vpack.c.b16 %v2199, %v2191
  %v2864 = vpack.c.b16 %v2200, %v2192
  %v2865 = vpack.c.b16 %v2201, %v2193
  %v2866 = vpack.c.b16 %v2202, %v2194
  %v2867 = vpack.c.b16 %v2211, %v2203
  %v2868 = vpack.c.b16 %v2212, %v2204
  %v2869 = vpack.c.b16 %v2213, %v2205
  %v2870 = vpack.c.b16 %v2214, %v2206
  %v2871 = vpack.c.b16 %v2215, %v2207
  %v2872 = vpack.c.b16 %v2216, %v2208
  %v2873 = vpack.c.b16 %v2217, %v2209
  %v2874 = vpack.c.b16 %v2218, %v2210
  %v2875 = vpack.c.b16 %v2227, %v2219
  %v2876 = vpack.c.b16 %v2228, %v2220
  %v2877 = vpack.c.b16 %v2229, %v2221
  %v2878 = vpack.c.b16 %v2230, %v2222
  %v2879 = vpack.c.b16 %v2231, %v2223
  %v2880 = vpack.c.b16 %v2232, %v2224
  %v2881 = vpack.c.b16 %v2233, %v2225
  %v2882 = vpack.c.b16 %v2234, %v2226
  %v2883 = vpack.c.b16 %v2243, %v2235
  %v2884 = vpack.c.b16 %v2244, %v2236
  %v2885 = vpack.c.b16 %v2245, %v2237
  %v2886 = vpack.c.b16 %v2246, %v2238
  %v2887 = vpack.c.b16 %v2247, %v2239
  %v2888 = vpack.c.b16 %v2248, %v2240
  %v2889 = vpack.c.b16 %v2249, %v2241
  %v2890 = vpack.c.b16 %v2250, %v2242
  %v2891 = vpack.c.b16 %v2259, %v2251
  %v2892 = vpack.c.b16 %v2260, %v2252
  %v2893 = vpack.c.b16 %v2261, %v2253
  %v2894 = vpack.c.b16 %v2262, %v2254
  %v2895 = vpack.c.b16 %v2263, %v2255
  %v2896 = vpack.c.b16 %v2264, %v2256
  %v2897 = vpack.c.b16 %v2265, %v2257
  %v2898 = vpack.c.b16 %v2266, %v2258
  %v2899 = vpack.c.b16 %v2275, %v2267
  %v2900 = vpack.c.b16 %v2276, %v2268
  %v2901 = vpack.c.b16 %v2277, %v2269
  %v2902 = vpack.c.b16 %v2278, %v2270
  %v2903 = vpack.c.b16 %v2279, %v2271
  %v2904 = vpack.c.b16 %v2280, %v2272
  %v2905 = vpack.c.b16 %v2281, %v2273
  %v2906 = vpack.c.b16 %v2282, %v2274
  %v2907 = vpack.c.b16 %v2291, %v2283
  %v2908 = vpack.c.b16 %v2292, %v2284
  %v2909 = vpack.c.b16 %v2293, %v2285
  %v2910 = vpack.c.b16 %v2294, %v2286
  %v2911 = vpack.c.b16 %v2295, %v2287
  %v2912 = vpack.c.b16 %v2296, %v2288
  %v2913 = vpack.c.b16 %v2297, %v2289
  %v2914 = vpack.c.b16 %v2298, %v2290
  %v2915 = vpack.c.b16 %v2307, %v2299
  %v2916 = vpack.c.b16 %v2308, %v2300
  %v2917 = vpack.c.b16 %v2309, %v2301
  %v2918 = vpack.c.b16 %v2310, %v2302
  %v2919 = vpack.c.b16 %v2311, %v2303
  %v2920 = vpack.c.b16 %v2312, %v2304
  %v2921 = vpack.c.b16 %v2313, %v2305
  %v2922 = vpack.c.b16 %v2314, %v2306
  %v2923 = vpack.c.b16 %v2323, %v2315
  %v2924 = vpack.c.b16 %v2324, %v2316
  %v2925 = vpack.c.b16 %v2325, %v2317
  %v2926 = vpack.c.b16 %v2326, %v2318
  %v2927 = vpack.c.b16 %v2327, %v2319
  %v2928 = vpack.c.b16 %v2328, %v2320
  %v2929 = vpack.c.b16 %v2329, %v2321
  %v2930 = vpack.c.b16 %v2330, %v2322
  %v2931 = vpack.c.b16 %v2339, %v2331
  %v2932 = vpack.c.b16 %v2340, %v2332
  %v2933 = vpack.c.b16 %v2341, %v2333
  %v2934 = vpack.c.b16 %v2342, %v2334
  %v2935 = vpack.c.b16 %v2343, %v2335
  %v2936 = vpack.c.b16 %v2344, %v2336
  %v2937 = vpack.c.b16 %v2345, %v2337
  %v2938 = vpack.c.b16 %v2346, %v2338
  %v2939 = vpack.c.b16 %v2355, %v2347
  %v2940 = vpack.c.b16 %v2356, %v2348
  %v2941 = vpack.c.b16 %v2357, %v2349
  %v2942 = vpack.c.b16 %v2358, %v2350
  %v2943 = vpack.c.b16 %v2359, %v2351
  %v2944 = vpack.c.b16 %v2360, %v2352
  %v2945 = vpack.c.b16 %v2361, %v2353
  %v2946 = vpack.c.b16 %v2362, %v2354
  %v2947 = vpack.c.b16 %v2371, %v2363
  %v2948 = vpack.c.b16 %v2372, %v2364
  %v2949 = vpack.c.b16 %v2373, %v2365
  %v2950 = vpack.c.b16 %v2374, %v2366
  %v2951 = vpack.c.b16 %v2375, %v2367
  %v2952 = vpack.c.b16 %v2376, %v2368
  %v2953 = vpack.c.b16 %v2377, %v2369
  %v2954 = vpack.c.b16 %v2378, %v2370
  %v2955 = vpack.c.b16 %v2387, %v2379
  %v2956 = vpack.c.b16 %v2388, %v2380
  %v2957 = vpack.c.b16 %v2389, %v2381
  %v2958 = vpack.c.b16 %v2390, %v2382
  %v2959 = vpack.c.b16 %v2391, %v2383
  %v2960 = vpack.c.b16 %v2392, %v2384
  %v2961 = vpack.c.b16 %v2393, %v2385
  %v2962 = vpack.c.b16 %v2394, %v2386
  %v2963 = vpack.c.b16 %v2403, %v2395
  %v2964 = vpack.c.b16 %v2404, %v2396
  %v2965 = vpack.c.b16 %v2405, %v2397
  %v2966 = vpack.c.b16 %v2406, %v2398
  %v2967 = vpack.c.b16 %v2407, %v2399
  %v2968 = vpack.c.b16 %v2408, %v2400
  %v2969 = vpack.c.b16 %v2409, %v2401
  %v2970 = vpack.c.b16 %v2410, %v2402
  %v2971 = vpack.c.b16 %v2419, %v2411
  %v2972 = vpack.c.b16 %v2420, %v2412
  %v2973 = vpack.c.b16 %v2421, %v2413
  %v2974 = vpack.c.b16 %v2422, %v2414
  %v2975 = vpack.c.b16 %v2423, %v2415
  %v2976 = vpack.c.b16 %v2424, %v2416
  %v2977 = vpack.c.b16 %v2425, %v2417
  %v2978 = vpack.c.b16 %v2426, %v2418
  %v2979 = vpack.c.b16 %v2435, %v2427
  %v2980 = vpack.c.b16 %v2436, %v2428
  %v2981 = vpack.c.b16 %v2437, %v2429
  %v2982 = vpack.c.b16 %v2438, %v2430
  %v2983 = vpack.c.b16 %v2439, %v2431
  %v2984 = vpack.c.b16 %v2440, %v2432
  %v2985 = vpack.c.b16 %v2441, %v2433
  %v2986 = vpack.c.b16 %v2442, %v2434
  %v2987 = vpack.c.b16 %v2451, %v2443
  %v2988 = vpack.c.b16 %v2452, %v2444
  %v2989 = vpack.c.b16 %v2453, %v2445
  %v2990 = vpack.c.b16 %v2454, %v2446
  %v2991 = vpack.c.b16 %v2455, %v2447
  %v2992 = vpack.c.b16 %v2456, %v2448
  %v2993 = vpack.c.b16 %v2457, %v2449
  %v2994 = vpack.c.b16 %v2458, %v2450
  %v2995 = vpack.c.b16 %v2467, %v2459
  %v2996 = vpack.c.b16 %v2468, %v2460
  %v2997 = vpack.c.b16 %v2469, %v2461
  %v2998 = vpack.c.b16 %v2470, %v2462
  %v2999 = vpack.c.b16 %v2471, %v2463
  %v3000 = vpack.c.b16 %v2472, %v2464
  %v3001 = vpack.c.b16 %v2473, %v2465
  %v3002 = vpack.c.b16 %v2474, %v2466
  %v3003 = vpack.c.b16 %v2483, %v2475
  %v3004 = vpack.c.b16 %v2484, %v2476
  %v3005 = vpack.c.b16 %v2485, %v2477
  %v3006 = vpack.c.b16 %v2486, %v2478
  %v3007 = vpack.c.b16 %v2487, %v2479
  %v3008 = vpack.c.b16 %v2488, %v2480
  %v3009 = vpack.c.b16 %v2489, %v2481
  %v3010 = vpack.c.b16 %v2490, %v2482
  %v3011 = vpack.c.b16 %v2499, %v2491
  %v3012 = vpack.c.b16 %v2500, %v2492
  %v3013 = vpack.c.b16 %v2501, %v2493
  %v3014 = vpack.c.b16 %v2502, %v2494
  %v3015 = vpack.c.b16 %v2503, %v2495
  %v3016 = vpack.c.b16 %v2504, %v2496
  %v3017 = vpack.c.b16 %v2505, %v2497
  %v3018 = vpack.c.b16 %v2506, %v2498
  %3531 = vmatprep.subr.bf16.mxu0 %v2508
  %3532 = vmatpush1.bf16.msra.mxu0 %v2507
  %3533 = vmatprep.subr.bf16.mxu0 %v2516
  %3534 = vmatpush1.bf16.msra.mxu0 %v2515
  %3535 = vmatprep.subr.bf16.mxu0 %v2524
  %3536 = vmatpush1.bf16.msra.mxu0 %v2523
  %3537 = vmatprep.subr.bf16.mxu0 %v2532
  %3538 = vmatpush1.bf16.msra.mxu0 %v2531
  %3539 = vmatprep.subr.bf16.mxu0 %v2540
  %3540 = vmatpush1.bf16.msra.mxu0 %v2539
  %3541 = vmatprep.subr.bf16.mxu0 %v2548
  %3542 = vmatpush1.bf16.msra.mxu0 %v2547
  %3543 = vmatprep.subr.bf16.mxu0 %v2556
  %3544 = vmatpush1.bf16.msra.mxu0 %v2555
  %3545 = vmatprep.subr.bf16.mxu0 %v2564
  %3546 = vmatpush1.bf16.msra.mxu0 %v2563
  %3547 = vmatprep.subr.bf16.mxu0 %v2572
  %3548 = vmatpush1.bf16.msra.mxu0 %v2571
  %3549 = vmatprep.subr.bf16.mxu0 %v2580
  %3550 = vmatpush1.bf16.msra.mxu0 %v2579
  %3551 = vmatprep.subr.bf16.mxu0 %v2588
  %3552 = vmatpush1.bf16.msra.mxu0 %v2587
  %3553 = vmatprep.subr.bf16.mxu0 %v2596
  %3554 = vmatpush1.bf16.msra.mxu0 %v2595
  %3555 = vmatprep.subr.bf16.mxu0 %v2604
  %3556 = vmatpush1.bf16.msra.mxu0 %v2603
  %3557 = vmatprep.subr.bf16.mxu0 %v2612
  %3558 = vmatpush1.bf16.msra.mxu0 %v2611
  %3559 = vmatprep.subr.bf16.mxu0 %v2620
  %3560 = vmatpush1.bf16.msra.mxu0 %v2619
  %3561 = vmatprep.subr.bf16.mxu0 %v2628
  %3562 = vmatpush1.bf16.msra.mxu0 %v2627
  %3563 = vmatprep.mubr.bf16.mxu0 %v844
  %3564 = vmatmul.mubr.bf16.gmra.mrb[0].mxu0 %v843
  %v3565 = vpop.f32.mrb[0].mxu0
  %v3566 = vadd.f32 %v614, %v3565
  %v3567 = vpop.f32.mrb[0].mxu0
  %v3568 = vadd.f32 %v618, %v3567
  %v3569 = vpop.f32.mrb[0].mxu0
  %v3570 = vadd.f32 %v614, %v3569
  %v3571 = vpop.f32.mrb[0].mxu0
  %v3572 = vadd.f32 %v618, %v3571
  %3573 = vmatprep.mubr.bf16.mxu0 %v852
  %3574 = vmatmul.mubr.bf16.gmra.mrb[0].mxu0 %v851
  %v3575 = vpop.f32.mrb[0].mxu0
  %v3576 = vadd.f32 %v614, %v3575
  %v3577 = vpop.f32.mrb[0].mxu0
  %v3578 = vadd.f32 %v618, %v3577
  %v3579 = vpop.f32.mrb[0].mxu0
  %v3580 = vadd.f32 %v614, %v3579
  %v3581 = vpop.f32.mrb[0].mxu0
  %v3582 = vadd.f32 %v618, %v3581
  %3583 = vmatprep.mubr.bf16.mxu0 %v860
  %3584 = vmatmul.mubr.bf16.gmra.mrb[0].mxu0 %v859
  %v3585 = vpop.f32.mrb[0].mxu0
  %v3586 = vadd.f32 %v614, %v3585
  %v3587 = vpop.f32.mrb[0].mxu0
  %v3588 = vadd.f32 %v618, %v3587
  %v3589 = vpop.f32.mrb[0].mxu0
  %v3590 = vadd.f32 %v614, %v3589
  %v3591 = vpop.f32.mrb[0].mxu0
  %v3592 = vadd.f32 %v618, %v3591
  %3593 = vmatprep.mubr.bf16.mxu0 %v868
  %3594 = vmatmul.mubr.bf16.gmra.mrb[0].mxu0 %v867
  %v3595 = vpop.f32.mrb[0].mxu0
  %v3596 = vadd.f32 %v614, %v3595
  %v3597 = vpop.f32.mrb[0].mxu0
  %v3598 = vadd.f32 %v618, %v3597
  %v3599 = vpop.f32.mrb[0].mxu0
  %v3600 = vadd.f32 %v614, %v3599
  %v3601 = vpop.f32.mrb[0].mxu0
  %v3602 = vadd.f32 %v618, %v3601
  %3603 = vmatprep.mubr.bf16.mxu0 %v876
  %3604 = vmatmul.mubr.bf16.gmra.mrb[0].mxu0 %v875
  %v3605 = vpop.f32.mrb[0].mxu0
  %v3606 = vadd.f32 %v614, %v3605
  %v3607 = vpop.f32.mrb[0].mxu0
  %v3608 = vadd.f32 %v618, %v3607
  %v3609 = vpop.f32.mrb[0].mxu0
  %v3610 = vadd.f32 %v614, %v3609
  %v3611 = vpop.f32.mrb[0].mxu0
  %v3612 = vadd.f32 %v618, %v3611
  %3613 = vmatprep.mubr.bf16.mxu0 %v884
  %3614 = vmatmul.mubr.bf16.gmra.mrb[0].mxu0 %v883
  %v3615 = vpop.f32.mrb[0].mxu0
  %v3616 = vadd.f32 %v614, %v3615
  %v3617 = vpop.f32.mrb[0].mxu0
  %v3618 = vadd.f32 %v618, %v3617
  %v3619 = vpop.f32.mrb[0].mxu0
  %v3620 = vadd.f32 %v614, %v3619
  %v3621 = vpop.f32.mrb[0].mxu0
  %v3622 = vadd.f32 %v618, %v3621
  %3623 = vmatprep.mubr.bf16.mxu0 %v892
  %3624 = vmatmul.mubr.bf16.gmra.mrb[0].mxu0 %v891
  %v3625 = vpop.f32.mrb[0].mxu0
  %v3626 = vadd.f32 %v614, %v3625
  %v3627 = vpop.f32.mrb[0].mxu0
  %v3628 = vadd.f32 %v618, %v3627
  %v3629 = vpop.f32.mrb[0].mxu0
  %v3630 = vadd.f32 %v614, %v3629
  %v3631 = vpop.f32.mrb[0].mxu0
  %v3632 = vadd.f32 %v618, %v3631
  %3633 = vmatprep.mubr.bf16.mxu0 %v900
  %3634 = vmatmul.mubr.bf16.gmra.mrb[0].mxu0 %v899
  %v3635 = vpop.f32.mrb[0].mxu0
  %v3636 = vadd.f32 %v614, %v3635
  %v3637 = vpop.f32.mrb[0].mxu0
  %v3638 = vadd.f32 %v618, %v3637
  %v3639 = vpop.f32.mrb[0].mxu0
  %v3640 = vadd.f32 %v614, %v3639
  %v3641 = vpop.f32.mrb[0].mxu0
  %v3642 = vadd.f32 %v618, %v3641
  %3643 = vdwg.mxu0
  %3644 = vmatprep.subr.bf16.mxu0 %v2636
  %3645 = vmatpush1.bf16.msra.mxu0 %v2635
  %3646 = vmatprep.subr.bf16.mxu0 %v2644
  %3647 = vmatpush1.bf16.msra.mxu0 %v2643
  %3648 = vmatprep.subr.bf16.mxu0 %v2652
  %3649 = vmatpush1.bf16.msra.mxu0 %v2651
  %3650 = vmatprep.subr.bf16.mxu0 %v2660
  %3651 = vmatpush1.bf16.msra.mxu0 %v2659
  %3652 = vmatprep.subr.bf16.mxu0 %v2668
  %3653 = vmatpush1.bf16.msra.mxu0 %v2667
  %3654 = vmatprep.subr.bf16.mxu0 %v2676
  %3655 = vmatpush1.bf16.msra.mxu0 %v2675
  %3656 = vmatprep.subr.bf16.mxu0 %v2684
  %3657 = vmatpush1.bf16.msra.mxu0 %v2683
  %3658 = vmatprep.subr.bf16.mxu0 %v2692
  %3659 = vmatpush1.bf16.msra.mxu0 %v2691
  %3660 = vmatprep.subr.bf16.mxu0 %v2700
  %3661 = vmatpush1.bf16.msra.mxu0 %v2699
  %3662 = vmatprep.subr.bf16.mxu0 %v2708
  %3663 = vmatpush1.bf16.msra.mxu0 %v2707
  %3664 = vmatprep.subr.bf16.mxu0 %v2716
  %3665 = vmatpush1.bf16.msra.mxu0 %v2715
  %3666 = vmatprep.subr.bf16.mxu0 %v2724
  %3667 = vmatpush1.bf16.msra.mxu0 %v2723
  %3668 = vmatprep.subr.bf16.mxu0 %v2732
  %3669 = vmatpush1.bf16.msra.mxu0 %v2731
  %3670 = vmatprep.subr.bf16.mxu0 %v2740
  %3671 = vmatpush1.bf16.msra.mxu0 %v2739
  %3672 = vmatprep.subr.bf16.mxu0 %v2748
  %3673 = vmatpush1.bf16.msra.mxu0 %v2747
  %3674 = vmatprep.subr.bf16.mxu0 %v2756
  %3675 = vmatpush1.bf16.msra.mxu0 %v2755
  %3676 = vmatprep.mubr.bf16.mxu0 %v846
  %3677 = vmatmul.mubr.bf16.gmra.mrb[0].mxu0 %v845
  %v3678 = vpop.f32.mrb[0].mxu0
  %v3679 = vadd.f32 %v3566, %v3678
  %v3680 = vpop.f32.mrb[0].mxu0
  %v3681 = vadd.f32 %v3568, %v3680
  %v3682 = vpop.f32.mrb[0].mxu0
  %v3683 = vadd.f32 %v3570, %v3682
  %v3684 = vpop.f32.mrb[0].mxu0
  %v3685 = vadd.f32 %v3572, %v3684
  %3686 = vmatprep.mubr.bf16.mxu0 %v854
  %3687 = vmatmul.mubr.bf16.gmra.mrb[0].mxu0 %v853
  %v3688 = vpop.f32.mrb[0].mxu0
  %v3689 = vadd.f32 %v3576, %v3688
  %v3690 = vpop.f32.mrb[0].mxu0
  %v3691 = vadd.f32 %v3578, %v3690
  %v3692 = vpop.f32.mrb[0].mxu0
  %v3693 = vadd.f32 %v3580, %v3692
  %v3694 = vpop.f32.mrb[0].mxu0
  %v3695 = vadd.f32 %v3582, %v3694
  %3696 = vmatprep.mubr.bf16.mxu0 %v862
  %3697 = vmatmul.mubr.bf16.gmra.mrb[0].mxu0 %v861
  %v3698 = vpop.f32.mrb[0].mxu0
  %v3699 = vadd.f32 %v3586, %v3698
  %v3700 = vpop.f32.mrb[0].mxu0
  %v3701 = vadd.f32 %v3588, %v3700
  %v3702 = vpop.f32.mrb[0].mxu0
  %v3703 = vadd.f32 %v3590, %v3702
  %v3704 = vpop.f32.mrb[0].mxu0
  %v3705 = vadd.f32 %v3592, %v3704
  %3706 = vmatprep.mubr.bf16.mxu0 %v870
  %3707 = vmatmul.mubr.bf16.gmra.mrb[0].mxu0 %v869
  %v3708 = vpop.f32.mrb[0].mxu0
  %v3709 = vadd.f32 %v3596, %v3708
  %v3710 = vpop.f32.mrb[0].mxu0
  %v3711 = vadd.f32 %v3598, %v3710
  %v3712 = vpop.f32.mrb[0].mxu0
  %v3713 = vadd.f32 %v3600, %v3712
  %v3714 = vpop.f32.mrb[0].mxu0
  %v3715 = vadd.f32 %v3602, %v3714
  %3716 = vmatprep.mubr.bf16.mxu0 %v878
  %3717 = vmatmul.mubr.bf16.gmra.mrb[0].mxu0 %v877
  %v3718 = vpop.f32.mrb[0].mxu0
  %v3719 = vadd.f32 %v3606, %v3718
  %v3720 = vpop.f32.mrb[0].mxu0
  %v3721 = vadd.f32 %v3608, %v3720
  %v3722 = vpop.f32.mrb[0].mxu0
  %v3723 = vadd.f32 %v3610, %v3722
  %v3724 = vpop.f32.mrb[0].mxu0
  %v3725 = vadd.f32 %v3612, %v3724
  %3726 = vmatprep.mubr.bf16.mxu0 %v886
  %3727 = vmatmul.mubr.bf16.gmra.mrb[0].mxu0 %v885
  %v3728 = vpop.f32.mrb[0].mxu0
  %v3729 = vadd.f32 %v3616, %v3728
  %v3730 = vpop.f32.mrb[0].mxu0
  %v3731 = vadd.f32 %v3618, %v3730
  %v3732 = vpop.f32.mrb[0].mxu0
  %v3733 = vadd.f32 %v3620, %v3732
  %v3734 = vpop.f32.mrb[0].mxu0
  %v3735 = vadd.f32 %v3622, %v3734
  %3736 = vmatprep.mubr.bf16.mxu0 %v894
  %3737 = vmatmul.mubr.bf16.gmra.mrb[0].mxu0 %v893
  %v3738 = vpop.f32.mrb[0].mxu0
  %v3739 = vadd.f32 %v3626, %v3738
  %v3740 = vpop.f32.mrb[0].mxu0
  %v3741 = vadd.f32 %v3628, %v3740
  %v3742 = vpop.f32.mrb[0].mxu0
  %v3743 = vadd.f32 %v3630, %v3742
  %v3744 = vpop.f32.mrb[0].mxu0
  %v3745 = vadd.f32 %v3632, %v3744
  %3746 = vmatprep.mubr.bf16.mxu0 %v902
  %3747 = vmatmul.mubr.bf16.gmra.mrb[0].mxu0 %v901
  %v3748 = vpop.f32.mrb[0].mxu0
  %v3749 = vadd.f32 %v3636, %v3748
  %v3750 = vpop.f32.mrb[0].mxu0
  %v3751 = vadd.f32 %v3638, %v3750
  %v3752 = vpop.f32.mrb[0].mxu0
  %v3753 = vadd.f32 %v3640, %v3752
  %v3754 = vpop.f32.mrb[0].mxu0
  %v3755 = vadd.f32 %v3642, %v3754
  %3756 = vdwg.mxu0
  %3757 = vmatprep.subr.bf16.mxu0 %v2764
  %3758 = vmatpush1.bf16.msra.mxu0 %v2763
  %3759 = vmatprep.subr.bf16.mxu0 %v2772
  %3760 = vmatpush1.bf16.msra.mxu0 %v2771
  %3761 = vmatprep.subr.bf16.mxu0 %v2780
  %3762 = vmatpush1.bf16.msra.mxu0 %v2779
  %3763 = vmatprep.subr.bf16.mxu0 %v2788
  %3764 = vmatpush1.bf16.msra.mxu0 %v2787
  %3765 = vmatprep.subr.bf16.mxu0 %v2796
  %3766 = vmatpush1.bf16.msra.mxu0 %v2795
  %3767 = vmatprep.subr.bf16.mxu0 %v2804
  %3768 = vmatpush1.bf16.msra.mxu0 %v2803
  %3769 = vmatprep.subr.bf16.mxu0 %v2812
  %3770 = vmatpush1.bf16.msra.mxu0 %v2811
  %3771 = vmatprep.subr.bf16.mxu0 %v2820
  %3772 = vmatpush1.bf16.msra.mxu0 %v2819
  %3773 = vmatprep.subr.bf16.mxu0 %v2828
  %3774 = vmatpush1.bf16.msra.mxu0 %v2827
  %3775 = vmatprep.subr.bf16.mxu0 %v2836
  %3776 = vmatpush1.bf16.msra.mxu0 %v2835
  %3777 = vmatprep.subr.bf16.mxu0 %v2844
  %3778 = vmatpush1.bf16.msra.mxu0 %v2843
  %3779 = vmatprep.subr.bf16.mxu0 %v2852
  %3780 = vmatpush1.bf16.msra.mxu0 %v2851
  %3781 = vmatprep.subr.bf16.mxu0 %v2860
  %3782 = vmatpush1.bf16.msra.mxu0 %v2859
  %3783 = vmatprep.subr.bf16.mxu0 %v2868
  %3784 = vmatpush1.bf16.msra.mxu0 %v2867
  %3785 = vmatprep.subr.bf16.mxu0 %v2876
  %3786 = vmatpush1.bf16.msra.mxu0 %v2875
  %3787 = vmatprep.subr.bf16.mxu0 %v2884
  %3788 = vmatpush1.bf16.msra.mxu0 %v2883
  %3789 = vmatprep.mubr.bf16.mxu0 %v848
  %3790 = vmatmul.mubr.bf16.gmra.mrb[0].mxu0 %v847
  %v3791 = vpop.f32.mrb[0].mxu0
  %v3792 = vadd.f32 %v3679, %v3791
  %v3793 = vpop.f32.mrb[0].mxu0
  %v3794 = vadd.f32 %v3681, %v3793
  %v3795 = vpop.f32.mrb[0].mxu0
  %v3796 = vadd.f32 %v3683, %v3795
  %v3797 = vpop.f32.mrb[0].mxu0
  %v3798 = vadd.f32 %v3685, %v3797
  %3799 = vmatprep.mubr.bf16.mxu0 %v856
  %3800 = vmatmul.mubr.bf16.gmra.mrb[0].mxu0 %v855
  %v3801 = vpop.f32.mrb[0].mxu0
  %v3802 = vadd.f32 %v3689, %v3801
  %v3803 = vpop.f32.mrb[0].mxu0
  %v3804 = vadd.f32 %v3691, %v3803
  %v3805 = vpop.f32.mrb[0].mxu0
  %v3806 = vadd.f32 %v3693, %v3805
  %v3807 = vpop.f32.mrb[0].mxu0
  %v3808 = vadd.f32 %v3695, %v3807
  %3809 = vmatprep.mubr.bf16.mxu0 %v864
  %3810 = vmatmul.mubr.bf16.gmra.mrb[0].mxu0 %v863
  %v3811 = vpop.f32.mrb[0].mxu0
  %v3812 = vadd.f32 %v3699, %v3811
  %v3813 = vpop.f32.mrb[0].mxu0
  %v3814 = vadd.f32 %v3701, %v3813
  %v3815 = vpop.f32.mrb[0].mxu0
  %v3816 = vadd.f32 %v3703, %v3815
  %v3817 = vpop.f32.mrb[0].mxu0
  %v3818 = vadd.f32 %v3705, %v3817
  %3819 = vmatprep.mubr.bf16.mxu0 %v872
  %3820 = vmatmul.mubr.bf16.gmra.mrb[0].mxu0 %v871
  %v3821 = vpop.f32.mrb[0].mxu0
  %v3822 = vadd.f32 %v3709, %v3821
  %v3823 = vpop.f32.mrb[0].mxu0
  %v3824 = vadd.f32 %v3711, %v3823
  %v3825 = vpop.f32.mrb[0].mxu0
  %v3826 = vadd.f32 %v3713, %v3825
  %v3827 = vpop.f32.mrb[0].mxu0
  %v3828 = vadd.f32 %v3715, %v3827
  %3829 = vmatprep.mubr.bf16.mxu0 %v880
  %3830 = vmatmul.mubr.bf16.gmra.mrb[0].mxu0 %v879
  %v3831 = vpop.f32.mrb[0].mxu0
  %v3832 = vadd.f32 %v3719, %v3831
  %v3833 = vpop.f32.mrb[0].mxu0
  %v3834 = vadd.f32 %v3721, %v3833
  %v3835 = vpop.f32.mrb[0].mxu0
  %v3836 = vadd.f32 %v3723, %v3835
  %v3837 = vpop.f32.mrb[0].mxu0
  %v3838 = vadd.f32 %v3725, %v3837
  %3839 = vmatprep.mubr.bf16.mxu0 %v888
  %3840 = vmatmul.mubr.bf16.gmra.mrb[0].mxu0 %v887
  %v3841 = vpop.f32.mrb[0].mxu0
  %v3842 = vadd.f32 %v3729, %v3841
  %v3843 = vpop.f32.mrb[0].mxu0
  %v3844 = vadd.f32 %v3731, %v3843
  %v3845 = vpop.f32.mrb[0].mxu0
  %v3846 = vadd.f32 %v3733, %v3845
  %v3847 = vpop.f32.mrb[0].mxu0
  %v3848 = vadd.f32 %v3735, %v3847
  %3849 = vmatprep.mubr.bf16.mxu0 %v896
  %3850 = vmatmul.mubr.bf16.gmra.mrb[0].mxu0 %v895
  %v3851 = vpop.f32.mrb[0].mxu0
  %v3852 = vadd.f32 %v3739, %v3851
  %v3853 = vpop.f32.mrb[0].mxu0
  %v3854 = vadd.f32 %v3741, %v3853
  %v3855 = vpop.f32.mrb[0].mxu0
  %v3856 = vadd.f32 %v3743, %v3855
  %v3857 = vpop.f32.mrb[0].mxu0
  %v3858 = vadd.f32 %v3745, %v3857
  %3859 = vmatprep.mubr.bf16.mxu0 %v904
  %3860 = vmatmul.mubr.bf16.gmra.mrb[0].mxu0 %v903
  %v3861 = vpop.f32.mrb[0].mxu0
  %v3862 = vadd.f32 %v3749, %v3861
  %v3863 = vpop.f32.mrb[0].mxu0
  %v3864 = vadd.f32 %v3751, %v3863
  %v3865 = vpop.f32.mrb[0].mxu0
  %v3866 = vadd.f32 %v3753, %v3865
  %v3867 = vpop.f32.mrb[0].mxu0
  %v3868 = vadd.f32 %v3755, %v3867
  %3869 = vdwg.mxu0
  %3870 = vmatprep.subr.bf16.mxu0 %v2892
  %3871 = vmatpush1.bf16.msra.mxu0 %v2891
  %3872 = vmatprep.subr.bf16.mxu0 %v2900
  %3873 = vmatpush1.bf16.msra.mxu0 %v2899
  %3874 = vmatprep.subr.bf16.mxu0 %v2908
  %3875 = vmatpush1.bf16.msra.mxu0 %v2907
  %3876 = vmatprep.subr.bf16.mxu0 %v2916
  %3877 = vmatpush1.bf16.msra.mxu0 %v2915
  %3878 = vmatprep.subr.bf16.mxu0 %v2924
  %3879 = vmatpush1.bf16.msra.mxu0 %v2923
  %3880 = vmatprep.subr.bf16.mxu0 %v2932
  %3881 = vmatpush1.bf16.msra.mxu0 %v2931
  %3882 = vmatprep.subr.bf16.mxu0 %v2940
  %3883 = vmatpush1.bf16.msra.mxu0 %v2939
  %3884 = vmatprep.subr.bf16.mxu0 %v2948
  %3885 = vmatpush1.bf16.msra.mxu0 %v2947
  %3886 = vmatprep.subr.bf16.mxu0 %v2956
  %3887 = vmatpush1.bf16.msra.mxu0 %v2955
  %3888 = vmatprep.subr.bf16.mxu0 %v2964
  %3889 = vmatpush1.bf16.msra.mxu0 %v2963
  %3890 = vmatprep.subr.bf16.mxu0 %v2972
  %3891 = vmatpush1.bf16.msra.mxu0 %v2971
  %3892 = vmatprep.subr.bf16.mxu0 %v2980
  %3893 = vmatpush1.bf16.msra.mxu0 %v2979
  %3894 = vmatprep.subr.bf16.mxu0 %v2988
  %3895 = vmatpush1.bf16.msra.mxu0 %v2987
  %3896 = vmatprep.subr.bf16.mxu0 %v2996
  %3897 = vmatpush1.bf16.msra.mxu0 %v2995
  %3898 = vmatprep.subr.bf16.mxu0 %v3004
  %3899 = vmatpush1.bf16.msra.mxu0 %v3003
  %3900 = vmatprep.subr.bf16.mxu0 %v3012
  %3901 = vmatpush1.bf16.msra.mxu0 %v3011
  %3902 = vmatprep.mubr.bf16.mxu0 %v850
  %3903 = vmatmul.mubr.bf16.gmra.mrb[0].mxu0 %v849
  %v3904 = vpop.f32.mrb[0].mxu0
  %v3905 = vadd.f32 %v3792, %v3904
  %v3906 = vpop.f32.mrb[0].mxu0
  %v3907 = vadd.f32 %v3794, %v3906
  %v3908 = vpop.f32.mrb[0].mxu0
  %v3909 = vadd.f32 %v3796, %v3908
  %v3910 = vpop.f32.mrb[0].mxu0
  %v3911 = vadd.f32 %v3798, %v3910
  %3912 = vmatprep.mubr.bf16.mxu0 %v858
  %3913 = vmatmul.mubr.bf16.gmra.mrb[0].mxu0 %v857
  %v3914 = vpop.f32.mrb[0].mxu0
  %v3915 = vadd.f32 %v3802, %v3914
  %v3916 = vpop.f32.mrb[0].mxu0
  %v3917 = vadd.f32 %v3804, %v3916
  %v3918 = vpop.f32.mrb[0].mxu0
  %v3919 = vadd.f32 %v3806, %v3918
  %v3920 = vpop.f32.mrb[0].mxu0
  %v3921 = vadd.f32 %v3808, %v3920
  %3922 = vmatprep.mubr.bf16.mxu0 %v866
  %3923 = vmatmul.mubr.bf16.gmra.mrb[0].mxu0 %v865
  %v3924 = vpop.f32.mrb[0].mxu0
  %v3925 = vadd.f32 %v3812, %v3924
  %v3926 = vpop.f32.mrb[0].mxu0
  %v3927 = vadd.f32 %v3814, %v3926
  %v3928 = vpop.f32.mrb[0].mxu0
  %v3929 = vadd.f32 %v3816, %v3928
  %v3930 = vpop.f32.mrb[0].mxu0
  %v3931 = vadd.f32 %v3818, %v3930
  %3932 = vmatprep.mubr.bf16.mxu0 %v874
  %3933 = vmatmul.mubr.bf16.gmra.mrb[0].mxu0 %v873
  %v3934 = vpop.f32.mrb[0].mxu0
  %v3935 = vadd.f32 %v3822, %v3934
  %v3936 = vpop.f32.mrb[0].mxu0
  %v3937 = vadd.f32 %v3824, %v3936
  %v3938 = vpop.f32.mrb[0].mxu0
  %v3939 = vadd.f32 %v3826, %v3938
  %v3940 = vpop.f32.mrb[0].mxu0
  %v3941 = vadd.f32 %v3828, %v3940
  %3942 = vmatprep.mubr.bf16.mxu0 %v882
  %3943 = vmatmul.mubr.bf16.gmra.mrb[0].mxu0 %v881
  %v3944 = vpop.f32.mrb[0].mxu0
  %v3945 = vadd.f32 %v3832, %v3944
  %v3946 = vpop.f32.mrb[0].mxu0
  %v3947 = vadd.f32 %v3834, %v3946
  %v3948 = vpop.f32.mrb[0].mxu0
  %v3949 = vadd.f32 %v3836, %v3948
  %v3950 = vpop.f32.mrb[0].mxu0
  %v3951 = vadd.f32 %v3838, %v3950
  %3952 = vmatprep.mubr.bf16.mxu0 %v890
  %3953 = vmatmul.mubr.bf16.gmra.mrb[0].mxu0 %v889
  %v3954 = vpop.f32.mrb[0].mxu0
  %v3955 = vadd.f32 %v3842, %v3954
  %v3956 = vpop.f32.mrb[0].mxu0
  %v3957 = vadd.f32 %v3844, %v3956
  %v3958 = vpop.f32.mrb[0].mxu0
  %v3959 = vadd.f32 %v3846, %v3958
  %v3960 = vpop.f32.mrb[0].mxu0
  %v3961 = vadd.f32 %v3848, %v3960
  %3962 = vmatprep.mubr.bf16.mxu0 %v898
  %3963 = vmatmul.mubr.bf16.gmra.mrb[0].mxu0 %v897
  %v3964 = vpop.f32.mrb[0].mxu0
  %v3965 = vadd.f32 %v3852, %v3964
  %v3966 = vpop.f32.mrb[0].mxu0
  %v3967 = vadd.f32 %v3854, %v3966
  %v3968 = vpop.f32.mrb[0].mxu0
  %v3969 = vadd.f32 %v3856, %v3968
  %v3970 = vpop.f32.mrb[0].mxu0
  %v3971 = vadd.f32 %v3858, %v3970
  %3972 = vmatprep.mubr.bf16.mxu0 %v906
  %3973 = vmatmul.mubr.bf16.gmra.mrb[0].mxu0 %v905
  %v3974 = vpop.f32.mrb[0].mxu0
  %v3975 = vadd.f32 %v3862, %v3974
  %v3976 = vpop.f32.mrb[0].mxu0
  %v3977 = vadd.f32 %v3864, %v3976
  %v3978 = vpop.f32.mrb[0].mxu0
  %v3979 = vadd.f32 %v3866, %v3978
  %v3980 = vpop.f32.mrb[0].mxu0
  %v3981 = vadd.f32 %v3868, %v3980
  %3982 = vdwg.mxu0
  %3983 = vmatprep.subr.bf16.mxu0 %v2510
  %3984 = vmatpush1.bf16.msra.mxu0 %v2509
  %3985 = vmatprep.subr.bf16.mxu0 %v2518
  %3986 = vmatpush1.bf16.msra.mxu0 %v2517
  %3987 = vmatprep.subr.bf16.mxu0 %v2526
  %3988 = vmatpush1.bf16.msra.mxu0 %v2525
  %3989 = vmatprep.subr.bf16.mxu0 %v2534
  %3990 = vmatpush1.bf16.msra.mxu0 %v2533
  %3991 = vmatprep.subr.bf16.mxu0 %v2542
  %3992 = vmatpush1.bf16.msra.mxu0 %v2541
  %3993 = vmatprep.subr.bf16.mxu0 %v2550
  %3994 = vmatpush1.bf16.msra.mxu0 %v2549
  %3995 = vmatprep.subr.bf16.mxu0 %v2558
  %3996 = vmatpush1.bf16.msra.mxu0 %v2557
  %3997 = vmatprep.subr.bf16.mxu0 %v2566
  %3998 = vmatpush1.bf16.msra.mxu0 %v2565
  %3999 = vmatprep.subr.bf16.mxu0 %v2574
  %4000 = vmatpush1.bf16.msra.mxu0 %v2573
  %4001 = vmatprep.subr.bf16.mxu0 %v2582
  %4002 = vmatpush1.bf16.msra.mxu0 %v2581
  %4003 = vmatprep.subr.bf16.mxu0 %v2590
  %4004 = vmatpush1.bf16.msra.mxu0 %v2589
  %4005 = vmatprep.subr.bf16.mxu0 %v2598
  %4006 = vmatpush1.bf16.msra.mxu0 %v2597
  %4007 = vmatprep.subr.bf16.mxu0 %v2606
  %4008 = vmatpush1.bf16.msra.mxu0 %v2605
  %4009 = vmatprep.subr.bf16.mxu0 %v2614
  %4010 = vmatpush1.bf16.msra.mxu0 %v2613
  %4011 = vmatprep.subr.bf16.mxu0 %v2622
  %4012 = vmatpush1.bf16.msra.mxu0 %v2621
  %4013 = vmatprep.subr.bf16.mxu0 %v2630
  %4014 = vmatpush1.bf16.msra.mxu0 %v2629
  %4015 = vmatprep.mubr.bf16.mxu0 %v844
  %4016 = vmatmul.mubr.bf16.gmra.mrb[0].mxu0 %v843
  %v4017 = vpop.f32.mrb[0].mxu0
  %v4018 = vadd.f32 %v622, %v4017
  %v4019 = vpop.f32.mrb[0].mxu0
  %v4020 = vadd.f32 %v626, %v4019
  %v4021 = vpop.f32.mrb[0].mxu0
  %v4022 = vadd.f32 %v622, %v4021
  %v4023 = vpop.f32.mrb[0].mxu0
  %v4024 = vadd.f32 %v626, %v4023
  %4025 = vmatprep.mubr.bf16.mxu0 %v852
  %4026 = vmatmul.mubr.bf16.gmra.mrb[0].mxu0 %v851
  %v4027 = vpop.f32.mrb[0].mxu0
  %v4028 = vadd.f32 %v622, %v4027
  %v4029 = vpop.f32.mrb[0].mxu0
  %v4030 = vadd.f32 %v626, %v4029
  %v4031 = vpop.f32.mrb[0].mxu0
  %v4032 = vadd.f32 %v622, %v4031
  %v4033 = vpop.f32.mrb[0].mxu0
  %v4034 = vadd.f32 %v626, %v4033
  %4035 = vmatprep.mubr.bf16.mxu0 %v860
  %4036 = vmatmul.mubr.bf16.gmra.mrb[0].mxu0 %v859
  %v4037 = vpop.f32.mrb[0].mxu0
  %v4038 = vadd.f32 %v622, %v4037
  %v4039 = vpop.f32.mrb[0].mxu0
  %v4040 = vadd.f32 %v626, %v4039
  %v4041 = vpop.f32.mrb[0].mxu0
  %v4042 = vadd.f32 %v622, %v4041
  %v4043 = vpop.f32.mrb[0].mxu0
  %v4044 = vadd.f32 %v626, %v4043
  %4045 = vmatprep.mubr.bf16.mxu0 %v868
  %4046 = vmatmul.mubr.bf16.gmra.mrb[0].mxu0 %v867
  %v4047 = vpop.f32.mrb[0].mxu0
  %v4048 = vadd.f32 %v622, %v4047
  %v4049 = vpop.f32.mrb[0].mxu0
  %v4050 = vadd.f32 %v626, %v4049
  %v4051 = vpop.f32.mrb[0].mxu0
  %v4052 = vadd.f32 %v622, %v4051
  %v4053 = vpop.f32.mrb[0].mxu0
  %v4054 = vadd.f32 %v626, %v4053
  %4055 = vmatprep.mubr.bf16.mxu0 %v876
  %4056 = vmatmul.mubr.bf16.gmra.mrb[0].mxu0 %v875
  %v4057 = vpop.f32.mrb[0].mxu0
  %v4058 = vadd.f32 %v622, %v4057
  %v4059 = vpop.f32.mrb[0].mxu0
  %v4060 = vadd.f32 %v626, %v4059
  %v4061 = vpop.f32.mrb[0].mxu0
  %v4062 = vadd.f32 %v622, %v4061
  %v4063 = vpop.f32.mrb[0].mxu0
  %v4064 = vadd.f32 %v626, %v4063
  %4065 = vmatprep.mubr.bf16.mxu0 %v884
  %4066 = vmatmul.mubr.bf16.gmra.mrb[0].mxu0 %v883
  %v4067 = vpop.f32.mrb[0].mxu0
  %v4068 = vadd.f32 %v622, %v4067
  %v4069 = vpop.f32.mrb[0].mxu0
  %v4070 = vadd.f32 %v626, %v4069
  %v4071 = vpop.f32.mrb[0].mxu0
  %v4072 = vadd.f32 %v622, %v4071
  %v4073 = vpop.f32.mrb[0].mxu0
  %v4074 = vadd.f32 %v626, %v4073
  %4075 = vmatprep.mubr.bf16.mxu0 %v892
  %4076 = vmatmul.mubr.bf16.gmra.mrb[0].mxu0 %v891
  %v4077 = vpop.f32.mrb[0].mxu0
  %v4078 = vadd.f32 %v622, %v4077
  %v4079 = vpop.f32.mrb[0].mxu0
  %v4080 = vadd.f32 %v626, %v4079
  %v4081 = vpop.f32.mrb[0].mxu0
  %v4082 = vadd.f32 %v622, %v4081
  %v4083 = vpop.f32.mrb[0].mxu0
  %v4084 = vadd.f32 %v626, %v4083
  %4085 = vmatprep.mubr.bf16.mxu0 %v900
  %4086 = vmatmul.mubr.bf16.gmra.mrb[0].mxu0 %v899
  %v4087 = vpop.f32.mrb[0].mxu0
  %v4088 = vadd.f32 %v622, %v4087
  %v4089 = vpop.f32.mrb[0].mxu0
  %v4090 = vadd.f32 %v626, %v4089
  %v4091 = vpop.f32.mrb[0].mxu0
  %v4092 = vadd.f32 %v622, %v4091
  %v4093 = vpop.f32.mrb[0].mxu0
  %v4094 = vadd.f32 %v626, %v4093
  %4095 = vdwg.mxu0
  %4096 = vmatprep.subr.bf16.mxu0 %v2638
  %4097 = vmatpush1.bf16.msra.mxu0 %v2637
  %4098 = vmatprep.subr.bf16.mxu0 %v2646
  %4099 = vmatpush1.bf16.msra.mxu0 %v2645
  %4100 = vmatprep.subr.bf16.mxu0 %v2654
  %4101 = vmatpush1.bf16.msra.mxu0 %v2653
  %4102 = vmatprep.subr.bf16.mxu0 %v2662
  %4103 = vmatpush1.bf16.msra.mxu0 %v2661
  %4104 = vmatprep.subr.bf16.mxu0 %v2670
  %4105 = vmatpush1.bf16.msra.mxu0 %v2669
  %4106 = vmatprep.subr.bf16.mxu0 %v2678
  %4107 = vmatpush1.bf16.msra.mxu0 %v2677
  %4108 = vmatprep.subr.bf16.mxu0 %v2686
  %4109 = vmatpush1.bf16.msra.mxu0 %v2685
  %4110 = vmatprep.subr.bf16.mxu0 %v2694
  %4111 = vmatpush1.bf16.msra.mxu0 %v2693
  %4112 = vmatprep.subr.bf16.mxu0 %v2702
  %4113 = vmatpush1.bf16.msra.mxu0 %v2701
  %4114 = vmatprep.subr.bf16.mxu0 %v2710
  %4115 = vmatpush1.bf16.msra.mxu0 %v2709
  %4116 = vmatprep.subr.bf16.mxu0 %v2718
  %4117 = vmatpush1.bf16.msra.mxu0 %v2717
  %4118 = vmatprep.subr.bf16.mxu0 %v2726
  %4119 = vmatpush1.bf16.msra.mxu0 %v2725
  %4120 = vmatprep.subr.bf16.mxu0 %v2734
  %4121 = vmatpush1.bf16.msra.mxu0 %v2733
  %4122 = vmatprep.subr.bf16.mxu0 %v2742
  %4123 = vmatpush1.bf16.msra.mxu0 %v2741
  %4124 = vmatprep.subr.bf16.mxu0 %v2750
  %4125 = vmatpush1.bf16.msra.mxu0 %v2749
  %4126 = vmatprep.subr.bf16.mxu0 %v2758
  %4127 = vmatpush1.bf16.msra.mxu0 %v2757
  %4128 = vmatprep.mubr.bf16.mxu0 %v846
  %4129 = vmatmul.mubr.bf16.gmra.mrb[0].mxu0 %v845
  %v4130 = vpop.f32.mrb[0].mxu0
  %v4131 = vadd.f32 %v4018, %v4130
  %v4132 = vpop.f32.mrb[0].mxu0
  %v4133 = vadd.f32 %v4020, %v4132
  %v4134 = vpop.f32.mrb[0].mxu0
  %v4135 = vadd.f32 %v4022, %v4134
  %v4136 = vpop.f32.mrb[0].mxu0
  %v4137 = vadd.f32 %v4024, %v4136
  %4138 = vmatprep.mubr.bf16.mxu0 %v854
  %4139 = vmatmul.mubr.bf16.gmra.mrb[0].mxu0 %v853
  %v4140 = vpop.f32.mrb[0].mxu0
  %v4141 = vadd.f32 %v4028, %v4140
  %v4142 = vpop.f32.mrb[0].mxu0
  %v4143 = vadd.f32 %v4030, %v4142
  %v4144 = vpop.f32.mrb[0].mxu0
  %v4145 = vadd.f32 %v4032, %v4144
  %v4146 = vpop.f32.mrb[0].mxu0
  %v4147 = vadd.f32 %v4034, %v4146
  %4148 = vmatprep.mubr.bf16.mxu0 %v862
  %4149 = vmatmul.mubr.bf16.gmra.mrb[0].mxu0 %v861
  %v4150 = vpop.f32.mrb[0].mxu0
  %v4151 = vadd.f32 %v4038, %v4150
  %v4152 = vpop.f32.mrb[0].mxu0
  %v4153 = vadd.f32 %v4040, %v4152
  %v4154 = vpop.f32.mrb[0].mxu0
  %v4155 = vadd.f32 %v4042, %v4154
  %v4156 = vpop.f32.mrb[0].mxu0
  %v4157 = vadd.f32 %v4044, %v4156
  %4158 = vmatprep.mubr.bf16.mxu0 %v870
  %4159 = vmatmul.mubr.bf16.gmra.mrb[0].mxu0 %v869
  %v4160 = vpop.f32.mrb[0].mxu0
  %v4161 = vadd.f32 %v4048, %v4160
  %v4162 = vpop.f32.mrb[0].mxu0
  %v4163 = vadd.f32 %v4050, %v4162
  %v4164 = vpop.f32.mrb[0].mxu0
  %v4165 = vadd.f32 %v4052, %v4164
  %v4166 = vpop.f32.mrb[0].mxu0
  %v4167 = vadd.f32 %v4054, %v4166
  %4168 = vmatprep.mubr.bf16.mxu0 %v878
  %4169 = vmatmul.mubr.bf16.gmra.mrb[0].mxu0 %v877
  %v4170 = vpop.f32.mrb[0].mxu0
  %v4171 = vadd.f32 %v4058, %v4170
  %v4172 = vpop.f32.mrb[0].mxu0
  %v4173 = vadd.f32 %v4060, %v4172
  %v4174 = vpop.f32.mrb[0].mxu0
  %v4175 = vadd.f32 %v4062, %v4174
  %v4176 = vpop.f32.mrb[0].mxu0
  %v4177 = vadd.f32 %v4064, %v4176
  %4178 = vmatprep.mubr.bf16.mxu0 %v886
  %4179 = vmatmul.mubr.bf16.gmra.mrb[0].mxu0 %v885
  %v4180 = vpop.f32.mrb[0].mxu0
  %v4181 = vadd.f32 %v4068, %v4180
  %v4182 = vpop.f32.mrb[0].mxu0
  %v4183 = vadd.f32 %v4070, %v4182
  %v4184 = vpop.f32.mrb[0].mxu0
  %v4185 = vadd.f32 %v4072, %v4184
  %v4186 = vpop.f32.mrb[0].mxu0
  %v4187 = vadd.f32 %v4074, %v4186
  %4188 = vmatprep.mubr.bf16.mxu0 %v894
  %4189 = vmatmul.mubr.bf16.gmra.mrb[0].mxu0 %v893
  %v4190 = vpop.f32.mrb[0].mxu0
  %v4191 = vadd.f32 %v4078, %v4190
  %v4192 = vpop.f32.mrb[0].mxu0
  %v4193 = vadd.f32 %v4080, %v4192
  %v4194 = vpop.f32.mrb[0].mxu0
  %v4195 = vadd.f32 %v4082, %v4194
  %v4196 = vpop.f32.mrb[0].mxu0
  %v4197 = vadd.f32 %v4084, %v4196
  %4198 = vmatprep.mubr.bf16.mxu0 %v902
  %4199 = vmatmul.mubr.bf16.gmra.mrb[0].mxu0 %v901
  %v4200 = vpop.f32.mrb[0].mxu0
  %v4201 = vadd.f32 %v4088, %v4200
  %v4202 = vpop.f32.mrb[0].mxu0
  %v4203 = vadd.f32 %v4090, %v4202
  %v4204 = vpop.f32.mrb[0].mxu0
  %v4205 = vadd.f32 %v4092, %v4204
  %v4206 = vpop.f32.mrb[0].mxu0
  %v4207 = vadd.f32 %v4094, %v4206
  %4208 = vdwg.mxu0
  %4209 = vmatprep.subr.bf16.mxu0 %v2766
  %4210 = vmatpush1.bf16.msra.mxu0 %v2765
  %4211 = vmatprep.subr.bf16.mxu0 %v2774
  %4212 = vmatpush1.bf16.msra.mxu0 %v2773
  %4213 = vmatprep.subr.bf16.mxu0 %v2782
  %4214 = vmatpush1.bf16.msra.mxu0 %v2781
  %4215 = vmatprep.subr.bf16.mxu0 %v2790
  %4216 = vmatpush1.bf16.msra.mxu0 %v2789
  %4217 = vmatprep.subr.bf16.mxu0 %v2798
  %4218 = vmatpush1.bf16.msra.mxu0 %v2797
  %4219 = vmatprep.subr.bf16.mxu0 %v2806
  %4220 = vmatpush1.bf16.msra.mxu0 %v2805
  %4221 = vmatprep.subr.bf16.mxu0 %v2814
  %4222 = vmatpush1.bf16.msra.mxu0 %v2813
  %4223 = vmatprep.subr.bf16.mxu0 %v2822
  %4224 = vmatpush1.bf16.msra.mxu0 %v2821
  %4225 = vmatprep.subr.bf16.mxu0 %v2830
  %4226 = vmatpush1.bf16.msra.mxu0 %v2829
  %4227 = vmatprep.subr.bf16.mxu0 %v2838
  %4228 = vmatpush1.bf16.msra.mxu0 %v2837
  %4229 = vmatprep.subr.bf16.mxu0 %v2846
  %4230 = vmatpush1.bf16.msra.mxu0 %v2845
  %4231 = vmatprep.subr.bf16.mxu0 %v2854
  %4232 = vmatpush1.bf16.msra.mxu0 %v2853
  %4233 = vmatprep.subr.bf16.mxu0 %v2862
  %4234 = vmatpush1.bf16.msra.mxu0 %v2861
  %4235 = vmatprep.subr.bf16.mxu0 %v2870
  %4236 = vmatpush1.bf16.msra.mxu0 %v2869
  %4237 = vmatprep.subr.bf16.mxu0 %v2878
  %4238 = vmatpush1.bf16.msra.mxu0 %v2877
  %4239 = vmatprep.subr.bf16.mxu0 %v2886
  %4240 = vmatpush1.bf16.msra.mxu0 %v2885
  %4241 = vmatprep.mubr.bf16.mxu0 %v848
  %4242 = vmatmul.mubr.bf16.gmra.mrb[0].mxu0 %v847
  %v4243 = vpop.f32.mrb[0].mxu0
  %v4244 = vadd.f32 %v4131, %v4243
  %v4245 = vpop.f32.mrb[0].mxu0
  %v4246 = vadd.f32 %v4133, %v4245
  %v4247 = vpop.f32.mrb[0].mxu0
  %v4248 = vadd.f32 %v4135, %v4247
  %v4249 = vpop.f32.mrb[0].mxu0
  %v4250 = vadd.f32 %v4137, %v4249
  %4251 = vmatprep.mubr.bf16.mxu0 %v856
  %4252 = vmatmul.mubr.bf16.gmra.mrb[0].mxu0 %v855
  %v4253 = vpop.f32.mrb[0].mxu0
  %v4254 = vadd.f32 %v4141, %v4253
  %v4255 = vpop.f32.mrb[0].mxu0
  %v4256 = vadd.f32 %v4143, %v4255
  %v4257 = vpop.f32.mrb[0].mxu0
  %v4258 = vadd.f32 %v4145, %v4257
  %v4259 = vpop.f32.mrb[0].mxu0
  %v4260 = vadd.f32 %v4147, %v4259
  %4261 = vmatprep.mubr.bf16.mxu0 %v864
  %4262 = vmatmul.mubr.bf16.gmra.mrb[0].mxu0 %v863
  %v4263 = vpop.f32.mrb[0].mxu0
  %v4264 = vadd.f32 %v4151, %v4263
  %v4265 = vpop.f32.mrb[0].mxu0
  %v4266 = vadd.f32 %v4153, %v4265
  %v4267 = vpop.f32.mrb[0].mxu0
  %v4268 = vadd.f32 %v4155, %v4267
  %v4269 = vpop.f32.mrb[0].mxu0
  %v4270 = vadd.f32 %v4157, %v4269
  %4271 = vmatprep.mubr.bf16.mxu0 %v872
  %4272 = vmatmul.mubr.bf16.gmra.mrb[0].mxu0 %v871
  %v4273 = vpop.f32.mrb[0].mxu0
  %v4274 = vadd.f32 %v4161, %v4273
  %v4275 = vpop.f32.mrb[0].mxu0
  %v4276 = vadd.f32 %v4163, %v4275
  %v4277 = vpop.f32.mrb[0].mxu0
  %v4278 = vadd.f32 %v4165, %v4277
  %v4279 = vpop.f32.mrb[0].mxu0
  %v4280 = vadd.f32 %v4167, %v4279
  %4281 = vmatprep.mubr.bf16.mxu0 %v880
  %4282 = vmatmul.mubr.bf16.gmra.mrb[0].mxu0 %v879
  %v4283 = vpop.f32.mrb[0].mxu0
  %v4284 = vadd.f32 %v4171, %v4283
  %v4285 = vpop.f32.mrb[0].mxu0
  %v4286 = vadd.f32 %v4173, %v4285
  %v4287 = vpop.f32.mrb[0].mxu0
  %v4288 = vadd.f32 %v4175, %v4287
  %v4289 = vpop.f32.mrb[0].mxu0
  %v4290 = vadd.f32 %v4177, %v4289
  %4291 = vmatprep.mubr.bf16.mxu0 %v888
  %4292 = vmatmul.mubr.bf16.gmra.mrb[0].mxu0 %v887
  %v4293 = vpop.f32.mrb[0].mxu0
  %v4294 = vadd.f32 %v4181, %v4293
  %v4295 = vpop.f32.mrb[0].mxu0
  %v4296 = vadd.f32 %v4183, %v4295
  %v4297 = vpop.f32.mrb[0].mxu0
  %v4298 = vadd.f32 %v4185, %v4297
  %v4299 = vpop.f32.mrb[0].mxu0
  %v4300 = vadd.f32 %v4187, %v4299
  %4301 = vmatprep.mubr.bf16.mxu0 %v896
  %4302 = vmatmul.mubr.bf16.gmra.mrb[0].mxu0 %v895
  %v4303 = vpop.f32.mrb[0].mxu0
  %v4304 = vadd.f32 %v4191, %v4303
  %v4305 = vpop.f32.mrb[0].mxu0
  %v4306 = vadd.f32 %v4193, %v4305
  %v4307 = vpop.f32.mrb[0].mxu0
  %v4308 = vadd.f32 %v4195, %v4307
  %v4309 = vpop.f32.mrb[0].mxu0
  %v4310 = vadd.f32 %v4197, %v4309
  %4311 = vmatprep.mubr.bf16.mxu0 %v904
  %4312 = vmatmul.mubr.bf16.gmra.mrb[0].mxu0 %v903
  %v4313 = vpop.f32.mrb[0].mxu0
  %v4314 = vadd.f32 %v4201, %v4313
  %v4315 = vpop.f32.mrb[0].mxu0
  %v4316 = vadd.f32 %v4203, %v4315
  %v4317 = vpop.f32.mrb[0].mxu0
  %v4318 = vadd.f32 %v4205, %v4317
  %v4319 = vpop.f32.mrb[0].mxu0
  %v4320 = vadd.f32 %v4207, %v4319
  %4321 = vdwg.mxu0
  %4322 = vmatprep.subr.bf16.mxu0 %v2894
  %4323 = vmatpush1.bf16.msra.mxu0 %v2893
  %4324 = vmatprep.subr.bf16.mxu0 %v2902
  %4325 = vmatpush1.bf16.msra.mxu0 %v2901
  %4326 = vmatprep.subr.bf16.mxu0 %v2910
  %4327 = vmatpush1.bf16.msra.mxu0 %v2909
  %4328 = vmatprep.subr.bf16.mxu0 %v2918
  %4329 = vmatpush1.bf16.msra.mxu0 %v2917
  %4330 = vmatprep.subr.bf16.mxu0 %v2926
  %4331 = vmatpush1.bf16.msra.mxu0 %v2925
  %4332 = vmatprep.subr.bf16.mxu0 %v2934
  %4333 = vmatpush1.bf16.msra.mxu0 %v2933
  %4334 = vmatprep.subr.bf16.mxu0 %v2942
  %4335 = vmatpush1.bf16.msra.mxu0 %v2941
  %4336 = vmatprep.subr.bf16.mxu0 %v2950
  %4337 = vmatpush1.bf16.msra.mxu0 %v2949
  %4338 = vmatprep.subr.bf16.mxu0 %v2958
  %4339 = vmatpush1.bf16.msra.mxu0 %v2957
  %4340 = vmatprep.subr.bf16.mxu0 %v2966
  %4341 = vmatpush1.bf16.msra.mxu0 %v2965
  %4342 = vmatprep.subr.bf16.mxu0 %v2974
  %4343 = vmatpush1.bf16.msra.mxu0 %v2973
  %4344 = vmatprep.subr.bf16.mxu0 %v2982
  %4345 = vmatpush1.bf16.msra.mxu0 %v2981
  %4346 = vmatprep.subr.bf16.mxu0 %v2990
  %4347 = vmatpush1.bf16.msra.mxu0 %v2989
  %4348 = vmatprep.subr.bf16.mxu0 %v2998
  %4349 = vmatpush1.bf16.msra.mxu0 %v2997
  %4350 = vmatprep.subr.bf16.mxu0 %v3006
  %4351 = vmatpush1.bf16.msra.mxu0 %v3005
  %4352 = vmatprep.subr.bf16.mxu0 %v3014
  %4353 = vmatpush1.bf16.msra.mxu0 %v3013
  %4354 = vmatprep.mubr.bf16.mxu0 %v850
  %4355 = vmatmul.mubr.bf16.gmra.mrb[0].mxu0 %v849
  %v4356 = vpop.f32.mrb[0].mxu0
  %v4357 = vadd.f32 %v4244, %v4356
  %v4358 = vpop.f32.mrb[0].mxu0
  %v4359 = vadd.f32 %v4246, %v4358
  %v4360 = vpop.f32.mrb[0].mxu0
  %v4361 = vadd.f32 %v4248, %v4360
  %v4362 = vpop.f32.mrb[0].mxu0
  %v4363 = vadd.f32 %v4250, %v4362
  %4364 = vmatprep.mubr.bf16.mxu0 %v858
  %4365 = vmatmul.mubr.bf16.gmra.mrb[0].mxu0 %v857
  %v4366 = vpop.f32.mrb[0].mxu0
  %v4367 = vadd.f32 %v4254, %v4366
  %v4368 = vpop.f32.mrb[0].mxu0
  %v4369 = vadd.f32 %v4256, %v4368
  %v4370 = vpop.f32.mrb[0].mxu0
  %v4371 = vadd.f32 %v4258, %v4370
  %v4372 = vpop.f32.mrb[0].mxu0
  %v4373 = vadd.f32 %v4260, %v4372
  %4374 = vmatprep.mubr.bf16.mxu0 %v866
  %4375 = vmatmul.mubr.bf16.gmra.mrb[0].mxu0 %v865
  %v4376 = vpop.f32.mrb[0].mxu0
  %v4377 = vadd.f32 %v4264, %v4376
  %v4378 = vpop.f32.mrb[0].mxu0
  %v4379 = vadd.f32 %v4266, %v4378
  %v4380 = vpop.f32.mrb[0].mxu0
  %v4381 = vadd.f32 %v4268, %v4380
  %v4382 = vpop.f32.mrb[0].mxu0
  %v4383 = vadd.f32 %v4270, %v4382
  %4384 = vmatprep.mubr.bf16.mxu0 %v874
  %4385 = vmatmul.mubr.bf16.gmra.mrb[0].mxu0 %v873
  %v4386 = vpop.f32.mrb[0].mxu0
  %v4387 = vadd.f32 %v4274, %v4386
  %v4388 = vpop.f32.mrb[0].mxu0
  %v4389 = vadd.f32 %v4276, %v4388
  %v4390 = vpop.f32.mrb[0].mxu0
  %v4391 = vadd.f32 %v4278, %v4390
  %v4392 = vpop.f32.mrb[0].mxu0
  %v4393 = vadd.f32 %v4280, %v4392
  %4394 = vmatprep.mubr.bf16.mxu0 %v882
  %4395 = vmatmul.mubr.bf16.gmra.mrb[0].mxu0 %v881
  %v4396 = vpop.f32.mrb[0].mxu0
  %v4397 = vadd.f32 %v4284, %v4396
  %v4398 = vpop.f32.mrb[0].mxu0
  %v4399 = vadd.f32 %v4286, %v4398
  %v4400 = vpop.f32.mrb[0].mxu0
  %v4401 = vadd.f32 %v4288, %v4400
  %v4402 = vpop.f32.mrb[0].mxu0
  %v4403 = vadd.f32 %v4290, %v4402
  %4404 = vmatprep.mubr.bf16.mxu0 %v890
  %4405 = vmatmul.mubr.bf16.gmra.mrb[0].mxu0 %v889
  %v4406 = vpop.f32.mrb[0].mxu0
  %v4407 = vadd.f32 %v4294, %v4406
  %v4408 = vpop.f32.mrb[0].mxu0
  %v4409 = vadd.f32 %v4296, %v4408
  %v4410 = vpop.f32.mrb[0].mxu0
  %v4411 = vadd.f32 %v4298, %v4410
  %v4412 = vpop.f32.mrb[0].mxu0
  %v4413 = vadd.f32 %v4300, %v4412
  %4414 = vmatprep.mubr.bf16.mxu0 %v898
  %4415 = vmatmul.mubr.bf16.gmra.mrb[0].mxu0 %v897
  %v4416 = vpop.f32.mrb[0].mxu0
  %v4417 = vadd.f32 %v4304, %v4416
  %v4418 = vpop.f32.mrb[0].mxu0
  %v4419 = vadd.f32 %v4306, %v4418
  %v4420 = vpop.f32.mrb[0].mxu0
  %v4421 = vadd.f32 %v4308, %v4420
  %v4422 = vpop.f32.mrb[0].mxu0
  %v4423 = vadd.f32 %v4310, %v4422
  %4424 = vmatprep.mubr.bf16.mxu0 %v906
  %4425 = vmatmul.mubr.bf16.gmra.mrb[0].mxu0 %v905
  %v4426 = vpop.f32.mrb[0].mxu0
  %v4427 = vadd.f32 %v4314, %v4426
  %v4428 = vpop.f32.mrb[0].mxu0
  %v4429 = vadd.f32 %v4316, %v4428
  %v4430 = vpop.f32.mrb[0].mxu0
  %v4431 = vadd.f32 %v4318, %v4430
  %v4432 = vpop.f32.mrb[0].mxu0
  %v4433 = vadd.f32 %v4320, %v4432
  %4434 = vdwg.mxu0
  %4435 = vmatprep.subr.bf16.mxu0 %v2512
  %4436 = vmatpush1.bf16.msra.mxu0 %v2511
  %4437 = vmatprep.subr.bf16.mxu0 %v2520
  %4438 = vmatpush1.bf16.msra.mxu0 %v2519
  %4439 = vmatprep.subr.bf16.mxu0 %v2528
  %4440 = vmatpush1.bf16.msra.mxu0 %v2527
  %4441 = vmatprep.subr.bf16.mxu0 %v2536
  %4442 = vmatpush1.bf16.msra.mxu0 %v2535
  %4443 = vmatprep.subr.bf16.mxu0 %v2544
  %4444 = vmatpush1.bf16.msra.mxu0 %v2543
  %4445 = vmatprep.subr.bf16.mxu0 %v2552
  %4446 = vmatpush1.bf16.msra.mxu0 %v2551
  %4447 = vmatprep.subr.bf16.mxu0 %v2560
  %4448 = vmatpush1.bf16.msra.mxu0 %v2559
  %4449 = vmatprep.subr.bf16.mxu0 %v2568
  %4450 = vmatpush1.bf16.msra.mxu0 %v2567
  %4451 = vmatprep.subr.bf16.mxu0 %v2576
  %4452 = vmatpush1.bf16.msra.mxu0 %v2575
  %4453 = vmatprep.subr.bf16.mxu0 %v2584
  %4454 = vmatpush1.bf16.msra.mxu0 %v2583
  %4455 = vmatprep.subr.bf16.mxu0 %v2592
  %4456 = vmatpush1.bf16.msra.mxu0 %v2591
  %4457 = vmatprep.subr.bf16.mxu0 %v2600
  %4458 = vmatpush1.bf16.msra.mxu0 %v2599
  %4459 = vmatprep.subr.bf16.mxu0 %v2608
  %4460 = vmatpush1.bf16.msra.mxu0 %v2607
  %4461 = vmatprep.subr.bf16.mxu0 %v2616
  %4462 = vmatpush1.bf16.msra.mxu0 %v2615
  %4463 = vmatprep.subr.bf16.mxu0 %v2624
  %4464 = vmatpush1.bf16.msra.mxu0 %v2623
  %4465 = vmatprep.subr.bf16.mxu0 %v2632
  %4466 = vmatpush1.bf16.msra.mxu0 %v2631
  %4467 = vmatprep.mubr.bf16.mxu0 %v844
  %4468 = vmatmul.mubr.bf16.gmra.mrb[0].mxu0 %v843
  %v4469 = vpop.f32.mrb[0].mxu0
  %v4470 = vadd.f32 %v630, %v4469
  %v4471 = vpop.f32.mrb[0].mxu0
  %v4472 = vadd.f32 %v634, %v4471
  %v4473 = vpop.f32.mrb[0].mxu0
  %v4474 = vadd.f32 %v630, %v4473
  %v4475 = vpop.f32.mrb[0].mxu0
  %v4476 = vadd.f32 %v634, %v4475
  %4477 = vmatprep.mubr.bf16.mxu0 %v852
  %4478 = vmatmul.mubr.bf16.gmra.mrb[0].mxu0 %v851
  %v4479 = vpop.f32.mrb[0].mxu0
  %v4480 = vadd.f32 %v630, %v4479
  %v4481 = vpop.f32.mrb[0].mxu0
  %v4482 = vadd.f32 %v634, %v4481
  %v4483 = vpop.f32.mrb[0].mxu0
  %v4484 = vadd.f32 %v630, %v4483
  %v4485 = vpop.f32.mrb[0].mxu0
  %v4486 = vadd.f32 %v634, %v4485
  %4487 = vmatprep.mubr.bf16.mxu0 %v860
  %4488 = vmatmul.mubr.bf16.gmra.mrb[0].mxu0 %v859
  %v4489 = vpop.f32.mrb[0].mxu0
  %v4490 = vadd.f32 %v630, %v4489
  %v4491 = vpop.f32.mrb[0].mxu0
  %v4492 = vadd.f32 %v634, %v4491
  %v4493 = vpop.f32.mrb[0].mxu0
  %v4494 = vadd.f32 %v630, %v4493
  %v4495 = vpop.f32.mrb[0].mxu0
  %v4496 = vadd.f32 %v634, %v4495
  %4497 = vmatprep.mubr.bf16.mxu0 %v868
  %4498 = vmatmul.mubr.bf16.gmra.mrb[0].mxu0 %v867
  %v4499 = vpop.f32.mrb[0].mxu0
  %v4500 = vadd.f32 %v630, %v4499
  %v4501 = vpop.f32.mrb[0].mxu0
  %v4502 = vadd.f32 %v634, %v4501
  %v4503 = vpop.f32.mrb[0].mxu0
  %v4504 = vadd.f32 %v630, %v4503
  %v4505 = vpop.f32.mrb[0].mxu0
  %v4506 = vadd.f32 %v634, %v4505
  %4507 = vmatprep.mubr.bf16.mxu0 %v876
  %4508 = vmatmul.mubr.bf16.gmra.mrb[0].mxu0 %v875
  %v4509 = vpop.f32.mrb[0].mxu0
  %v4510 = vadd.f32 %v630, %v4509
  %v4511 = vpop.f32.mrb[0].mxu0
  %v4512 = vadd.f32 %v634, %v4511
  %v4513 = vpop.f32.mrb[0].mxu0
  %v4514 = vadd.f32 %v630, %v4513
  %v4515 = vpop.f32.mrb[0].mxu0
  %v4516 = vadd.f32 %v634, %v4515
  %4517 = vmatprep.mubr.bf16.mxu0 %v884
  %4518 = vmatmul.mubr.bf16.gmra.mrb[0].mxu0 %v883
  %v4519 = vpop.f32.mrb[0].mxu0
  %v4520 = vadd.f32 %v630, %v4519
  %v4521 = vpop.f32.mrb[0].mxu0
  %v4522 = vadd.f32 %v634, %v4521
  %v4523 = vpop.f32.mrb[0].mxu0
  %v4524 = vadd.f32 %v630, %v4523
  %v4525 = vpop.f32.mrb[0].mxu0
  %v4526 = vadd.f32 %v634, %v4525
  %4527 = vmatprep.mubr.bf16.mxu0 %v892
  %4528 = vmatmul.mubr.bf16.gmra.mrb[0].mxu0 %v891
  %v4529 = vpop.f32.mrb[0].mxu0
  %v4530 = vadd.f32 %v630, %v4529
  %v4531 = vpop.f32.mrb[0].mxu0
  %v4532 = vadd.f32 %v634, %v4531
  %v4533 = vpop.f32.mrb[0].mxu0
  %v4534 = vadd.f32 %v630, %v4533
  %v4535 = vpop.f32.mrb[0].mxu0
  %v4536 = vadd.f32 %v634, %v4535
  %4537 = vmatprep.mubr.bf16.mxu0 %v900
  %4538 = vmatmul.mubr.bf16.gmra.mrb[0].mxu0 %v899
  %v4539 = vpop.f32.mrb[0].mxu0
  %v4540 = vadd.f32 %v630, %v4539
  %v4541 = vpop.f32.mrb[0].mxu0
  %v4542 = vadd.f32 %v634, %v4541
  %v4543 = vpop.f32.mrb[0].mxu0
  %v4544 = vadd.f32 %v630, %v4543
  %v4545 = vpop.f32.mrb[0].mxu0
  %v4546 = vadd.f32 %v634, %v4545
  %4547 = vdwg.mxu0
  %4548 = vmatprep.subr.bf16.mxu0 %v2640
  %4549 = vmatpush1.bf16.msra.mxu0 %v2639
  %4550 = vmatprep.subr.bf16.mxu0 %v2648
  %4551 = vmatpush1.bf16.msra.mxu0 %v2647
  %4552 = vmatprep.subr.bf16.mxu0 %v2656
  %4553 = vmatpush1.bf16.msra.mxu0 %v2655
  %4554 = vmatprep.subr.bf16.mxu0 %v2664
  %4555 = vmatpush1.bf16.msra.mxu0 %v2663
  %4556 = vmatprep.subr.bf16.mxu0 %v2672
  %4557 = vmatpush1.bf16.msra.mxu0 %v2671
  %4558 = vmatprep.subr.bf16.mxu0 %v2680
  %4559 = vmatpush1.bf16.msra.mxu0 %v2679
  %4560 = vmatprep.subr.bf16.mxu0 %v2688
  %4561 = vmatpush1.bf16.msra.mxu0 %v2687
  %4562 = vmatprep.subr.bf16.mxu0 %v2696
  %4563 = vmatpush1.bf16.msra.mxu0 %v2695
  %4564 = vmatprep.subr.bf16.mxu0 %v2704
  %4565 = vmatpush1.bf16.msra.mxu0 %v2703
  %4566 = vmatprep.subr.bf16.mxu0 %v2712
  %4567 = vmatpush1.bf16.msra.mxu0 %v2711
  %4568 = vmatprep.subr.bf16.mxu0 %v2720
  %4569 = vmatpush1.bf16.msra.mxu0 %v2719
  %4570 = vmatprep.subr.bf16.mxu0 %v2728
  %4571 = vmatpush1.bf16.msra.mxu0 %v2727
  %4572 = vmatprep.subr.bf16.mxu0 %v2736
  %4573 = vmatpush1.bf16.msra.mxu0 %v2735
  %4574 = vmatprep.subr.bf16.mxu0 %v2744
  %4575 = vmatpush1.bf16.msra.mxu0 %v2743
  %4576 = vmatprep.subr.bf16.mxu0 %v2752
  %4577 = vmatpush1.bf16.msra.mxu0 %v2751
  %4578 = vmatprep.subr.bf16.mxu0 %v2760
  %4579 = vmatpush1.bf16.msra.mxu0 %v2759
  %4580 = vmatprep.mubr.bf16.mxu0 %v846
  %4581 = vmatmul.mubr.bf16.gmra.mrb[0].mxu0 %v845
  %v4582 = vpop.f32.mrb[0].mxu0
  %v4583 = vadd.f32 %v4470, %v4582
  %v4584 = vpop.f32.mrb[0].mxu0
  %v4585 = vadd.f32 %v4472, %v4584
  %v4586 = vpop.f32.mrb[0].mxu0
  %v4587 = vadd.f32 %v4474, %v4586
  %v4588 = vpop.f32.mrb[0].mxu0
  %v4589 = vadd.f32 %v4476, %v4588
  %4590 = vmatprep.mubr.bf16.mxu0 %v854
  %4591 = vmatmul.mubr.bf16.gmra.mrb[0].mxu0 %v853
  %v4592 = vpop.f32.mrb[0].mxu0
  %v4593 = vadd.f32 %v4480, %v4592
  %v4594 = vpop.f32.mrb[0].mxu0
  %v4595 = vadd.f32 %v4482, %v4594
  %v4596 = vpop.f32.mrb[0].mxu0
  %v4597 = vadd.f32 %v4484, %v4596
  %v4598 = vpop.f32.mrb[0].mxu0
  %v4599 = vadd.f32 %v4486, %v4598
  %4600 = vmatprep.mubr.bf16.mxu0 %v862
  %4601 = vmatmul.mubr.bf16.gmra.mrb[0].mxu0 %v861
  %v4602 = vpop.f32.mrb[0].mxu0
  %v4603 = vadd.f32 %v4490, %v4602
  %v4604 = vpop.f32.mrb[0].mxu0
  %v4605 = vadd.f32 %v4492, %v4604
  %v4606 = vpop.f32.mrb[0].mxu0
  %v4607 = vadd.f32 %v4494, %v4606
  %v4608 = vpop.f32.mrb[0].mxu0
  %v4609 = vadd.f32 %v4496, %v4608
  %4610 = vmatprep.mubr.bf16.mxu0 %v870
  %4611 = vmatmul.mubr.bf16.gmra.mrb[0].mxu0 %v869
  %v4612 = vpop.f32.mrb[0].mxu0
  %v4613 = vadd.f32 %v4500, %v4612
  %v4614 = vpop.f32.mrb[0].mxu0
  %v4615 = vadd.f32 %v4502, %v4614
  %v4616 = vpop.f32.mrb[0].mxu0
  %v4617 = vadd.f32 %v4504, %v4616
  %v4618 = vpop.f32.mrb[0].mxu0
  %v4619 = vadd.f32 %v4506, %v4618
  %4620 = vmatprep.mubr.bf16.mxu0 %v878
  %4621 = vmatmul.mubr.bf16.gmra.mrb[0].mxu0 %v877
  %v4622 = vpop.f32.mrb[0].mxu0
  %v4623 = vadd.f32 %v4510, %v4622
  %v4624 = vpop.f32.mrb[0].mxu0
  %v4625 = vadd.f32 %v4512, %v4624
  %v4626 = vpop.f32.mrb[0].mxu0
  %v4627 = vadd.f32 %v4514, %v4626
  %v4628 = vpop.f32.mrb[0].mxu0
  %v4629 = vadd.f32 %v4516, %v4628
  %4630 = vmatprep.mubr.bf16.mxu0 %v886
  %4631 = vmatmul.mubr.bf16.gmra.mrb[0].mxu0 %v885
  %v4632 = vpop.f32.mrb[0].mxu0
  %v4633 = vadd.f32 %v4520, %v4632
  %v4634 = vpop.f32.mrb[0].mxu0
  %v4635 = vadd.f32 %v4522, %v4634
  %v4636 = vpop.f32.mrb[0].mxu0
  %v4637 = vadd.f32 %v4524, %v4636
  %v4638 = vpop.f32.mrb[0].mxu0
  %v4639 = vadd.f32 %v4526, %v4638
  %4640 = vmatprep.mubr.bf16.mxu0 %v894
  %4641 = vmatmul.mubr.bf16.gmra.mrb[0].mxu0 %v893
  %v4642 = vpop.f32.mrb[0].mxu0
  %v4643 = vadd.f32 %v4530, %v4642
  %v4644 = vpop.f32.mrb[0].mxu0
  %v4645 = vadd.f32 %v4532, %v4644
  %v4646 = vpop.f32.mrb[0].mxu0
  %v4647 = vadd.f32 %v4534, %v4646
  %v4648 = vpop.f32.mrb[0].mxu0
  %v4649 = vadd.f32 %v4536, %v4648
  %4650 = vmatprep.mubr.bf16.mxu0 %v902
  %4651 = vmatmul.mubr.bf16.gmra.mrb[0].mxu0 %v901
  %v4652 = vpop.f32.mrb[0].mxu0
  %v4653 = vadd.f32 %v4540, %v4652
  %v4654 = vpop.f32.mrb[0].mxu0
  %v4655 = vadd.f32 %v4542, %v4654
  %v4656 = vpop.f32.mrb[0].mxu0
  %v4657 = vadd.f32 %v4544, %v4656
  %v4658 = vpop.f32.mrb[0].mxu0
  %v4659 = vadd.f32 %v4546, %v4658
  %4660 = vdwg.mxu0
  %4661 = vmatprep.subr.bf16.mxu0 %v2768
  %4662 = vmatpush1.bf16.msra.mxu0 %v2767
  %4663 = vmatprep.subr.bf16.mxu0 %v2776
  %4664 = vmatpush1.bf16.msra.mxu0 %v2775
  %4665 = vmatprep.subr.bf16.mxu0 %v2784
  %4666 = vmatpush1.bf16.msra.mxu0 %v2783
  %4667 = vmatprep.subr.bf16.mxu0 %v2792
  %4668 = vmatpush1.bf16.msra.mxu0 %v2791
  %4669 = vmatprep.subr.bf16.mxu0 %v2800
  %4670 = vmatpush1.bf16.msra.mxu0 %v2799
  %4671 = vmatprep.subr.bf16.mxu0 %v2808
  %4672 = vmatpush1.bf16.msra.mxu0 %v2807
  %4673 = vmatprep.subr.bf16.mxu0 %v2816
  %4674 = vmatpush1.bf16.msra.mxu0 %v2815
  %4675 = vmatprep.subr.bf16.mxu0 %v2824
  %4676 = vmatpush1.bf16.msra.mxu0 %v2823
  %4677 = vmatprep.subr.bf16.mxu0 %v2832
  %4678 = vmatpush1.bf16.msra.mxu0 %v2831
  %4679 = vmatprep.subr.bf16.mxu0 %v2840
  %4680 = vmatpush1.bf16.msra.mxu0 %v2839
  %4681 = vmatprep.subr.bf16.mxu0 %v2848
  %4682 = vmatpush1.bf16.msra.mxu0 %v2847
  %4683 = vmatprep.subr.bf16.mxu0 %v2856
  %4684 = vmatpush1.bf16.msra.mxu0 %v2855
  %4685 = vmatprep.subr.bf16.mxu0 %v2864
  %4686 = vmatpush1.bf16.msra.mxu0 %v2863
  %4687 = vmatprep.subr.bf16.mxu0 %v2872
  %4688 = vmatpush1.bf16.msra.mxu0 %v2871
  %4689 = vmatprep.subr.bf16.mxu0 %v2880
  %4690 = vmatpush1.bf16.msra.mxu0 %v2879
  %4691 = vmatprep.subr.bf16.mxu0 %v2888
  %4692 = vmatpush1.bf16.msra.mxu0 %v2887
  %4693 = vmatprep.mubr.bf16.mxu0 %v848
  %4694 = vmatmul.mubr.bf16.gmra.mrb[0].mxu0 %v847
  %v4695 = vpop.f32.mrb[0].mxu0
  %v4696 = vadd.f32 %v4583, %v4695
  %v4697 = vpop.f32.mrb[0].mxu0
  %v4698 = vadd.f32 %v4585, %v4697
  %v4699 = vpop.f32.mrb[0].mxu0
  %v4700 = vadd.f32 %v4587, %v4699
  %v4701 = vpop.f32.mrb[0].mxu0
  %v4702 = vadd.f32 %v4589, %v4701
  %4703 = vmatprep.mubr.bf16.mxu0 %v856
  %4704 = vmatmul.mubr.bf16.gmra.mrb[0].mxu0 %v855
  %v4705 = vpop.f32.mrb[0].mxu0
  %v4706 = vadd.f32 %v4593, %v4705
  %v4707 = vpop.f32.mrb[0].mxu0
  %v4708 = vadd.f32 %v4595, %v4707
  %v4709 = vpop.f32.mrb[0].mxu0
  %v4710 = vadd.f32 %v4597, %v4709
  %v4711 = vpop.f32.mrb[0].mxu0
  %v4712 = vadd.f32 %v4599, %v4711
  %4713 = vmatprep.mubr.bf16.mxu0 %v864
  %4714 = vmatmul.mubr.bf16.gmra.mrb[0].mxu0 %v863
  %v4715 = vpop.f32.mrb[0].mxu0
  %v4716 = vadd.f32 %v4603, %v4715
  %v4717 = vpop.f32.mrb[0].mxu0
  %v4718 = vadd.f32 %v4605, %v4717
  %v4719 = vpop.f32.mrb[0].mxu0
  %v4720 = vadd.f32 %v4607, %v4719
  %v4721 = vpop.f32.mrb[0].mxu0
  %v4722 = vadd.f32 %v4609, %v4721
  %4723 = vmatprep.mubr.bf16.mxu0 %v872
  %4724 = vmatmul.mubr.bf16.gmra.mrb[0].mxu0 %v871
  %v4725 = vpop.f32.mrb[0].mxu0
  %v4726 = vadd.f32 %v4613, %v4725
  %v4727 = vpop.f32.mrb[0].mxu0
  %v4728 = vadd.f32 %v4615, %v4727
  %v4729 = vpop.f32.mrb[0].mxu0
  %v4730 = vadd.f32 %v4617, %v4729
  %v4731 = vpop.f32.mrb[0].mxu0
  %v4732 = vadd.f32 %v4619, %v4731
  %4733 = vmatprep.mubr.bf16.mxu0 %v880
  %4734 = vmatmul.mubr.bf16.gmra.mrb[0].mxu0 %v879
  %v4735 = vpop.f32.mrb[0].mxu0
  %v4736 = vadd.f32 %v4623, %v4735
  %v4737 = vpop.f32.mrb[0].mxu0
  %v4738 = vadd.f32 %v4625, %v4737
  %v4739 = vpop.f32.mrb[0].mxu0
  %v4740 = vadd.f32 %v4627, %v4739
  %v4741 = vpop.f32.mrb[0].mxu0
  %v4742 = vadd.f32 %v4629, %v4741
  %4743 = vmatprep.mubr.bf16.mxu0 %v888
  %4744 = vmatmul.mubr.bf16.gmra.mrb[0].mxu0 %v887
  %v4745 = vpop.f32.mrb[0].mxu0
  %v4746 = vadd.f32 %v4633, %v4745
  %v4747 = vpop.f32.mrb[0].mxu0
  %v4748 = vadd.f32 %v4635, %v4747
  %v4749 = vpop.f32.mrb[0].mxu0
  %v4750 = vadd.f32 %v4637, %v4749
  %v4751 = vpop.f32.mrb[0].mxu0
  %v4752 = vadd.f32 %v4639, %v4751
  %4753 = vmatprep.mubr.bf16.mxu0 %v896
  %4754 = vmatmul.mubr.bf16.gmra.mrb[0].mxu0 %v895
  %v4755 = vpop.f32.mrb[0].mxu0
  %v4756 = vadd.f32 %v4643, %v4755
  %v4757 = vpop.f32.mrb[0].mxu0
  %v4758 = vadd.f32 %v4645, %v4757
  %v4759 = vpop.f32.mrb[0].mxu0
  %v4760 = vadd.f32 %v4647, %v4759
  %v4761 = vpop.f32.mrb[0].mxu0
  %v4762 = vadd.f32 %v4649, %v4761
  %4763 = vmatprep.mubr.bf16.mxu0 %v904
  %4764 = vmatmul.mubr.bf16.gmra.mrb[0].mxu0 %v903
  %v4765 = vpop.f32.mrb[0].mxu0
  %v4766 = vadd.f32 %v4653, %v4765
  %v4767 = vpop.f32.mrb[0].mxu0
  %v4768 = vadd.f32 %v4655, %v4767
  %v4769 = vpop.f32.mrb[0].mxu0
  %v4770 = vadd.f32 %v4657, %v4769
  %v4771 = vpop.f32.mrb[0].mxu0
  %v4772 = vadd.f32 %v4659, %v4771
  %4773 = vdwg.mxu0
  %4774 = vmatprep.subr.bf16.mxu0 %v2896
  %4775 = vmatpush1.bf16.msra.mxu0 %v2895
  %4776 = vmatprep.subr.bf16.mxu0 %v2904
  %4777 = vmatpush1.bf16.msra.mxu0 %v2903
  %4778 = vmatprep.subr.bf16.mxu0 %v2912
  %4779 = vmatpush1.bf16.msra.mxu0 %v2911
  %4780 = vmatprep.subr.bf16.mxu0 %v2920
  %4781 = vmatpush1.bf16.msra.mxu0 %v2919
  %4782 = vmatprep.subr.bf16.mxu0 %v2928
  %4783 = vmatpush1.bf16.msra.mxu0 %v2927
  %4784 = vmatprep.subr.bf16.mxu0 %v2936
  %4785 = vmatpush1.bf16.msra.mxu0 %v2935
  %4786 = vmatprep.subr.bf16.mxu0 %v2944
  %4787 = vmatpush1.bf16.msra.mxu0 %v2943
  %4788 = vmatprep.subr.bf16.mxu0 %v2952
  %4789 = vmatpush1.bf16.msra.mxu0 %v2951
  %4790 = vmatprep.subr.bf16.mxu0 %v2960
  %4791 = vmatpush1.bf16.msra.mxu0 %v2959
  %4792 = vmatprep.subr.bf16.mxu0 %v2968
  %4793 = vmatpush1.bf16.msra.mxu0 %v2967
  %4794 = vmatprep.subr.bf16.mxu0 %v2976
  %4795 = vmatpush1.bf16.msra.mxu0 %v2975
  %4796 = vmatprep.subr.bf16.mxu0 %v2984
  %4797 = vmatpush1.bf16.msra.mxu0 %v2983
  %4798 = vmatprep.subr.bf16.mxu0 %v2992
  %4799 = vmatpush1.bf16.msra.mxu0 %v2991
  %4800 = vmatprep.subr.bf16.mxu0 %v3000
  %4801 = vmatpush1.bf16.msra.mxu0 %v2999
  %4802 = vmatprep.subr.bf16.mxu0 %v3008
  %4803 = vmatpush1.bf16.msra.mxu0 %v3007
  %4804 = vmatprep.subr.bf16.mxu0 %v3016
  %4805 = vmatpush1.bf16.msra.mxu0 %v3015
  %4806 = vmatprep.mubr.bf16.mxu0 %v850
  %4807 = vmatmul.mubr.bf16.gmra.mrb[0].mxu0 %v849
  %v4808 = vpop.f32.mrb[0].mxu0
  %v4809 = vadd.f32 %v4696, %v4808
  %v4810 = vpop.f32.mrb[0].mxu0
  %v4811 = vadd.f32 %v4698, %v4810
  %v4812 = vpop.f32.mrb[0].mxu0
  %v4813 = vadd.f32 %v4700, %v4812
  %v4814 = vpop.f32.mrb[0].mxu0
  %v4815 = vadd.f32 %v4702, %v4814
  %4816 = vmatprep.mubr.bf16.mxu0 %v858
  %4817 = vmatmul.mubr.bf16.gmra.mrb[0].mxu0 %v857
  %v4818 = vpop.f32.mrb[0].mxu0
  %v4819 = vadd.f32 %v4706, %v4818
  %v4820 = vpop.f32.mrb[0].mxu0
  %v4821 = vadd.f32 %v4708, %v4820
  %v4822 = vpop.f32.mrb[0].mxu0
  %v4823 = vadd.f32 %v4710, %v4822
  %v4824 = vpop.f32.mrb[0].mxu0
  %v4825 = vadd.f32 %v4712, %v4824
  %4826 = vmatprep.mubr.bf16.mxu0 %v866
  %4827 = vmatmul.mubr.bf16.gmra.mrb[0].mxu0 %v865
  %v4828 = vpop.f32.mrb[0].mxu0
  %v4829 = vadd.f32 %v4716, %v4828
  %v4830 = vpop.f32.mrb[0].mxu0
  %v4831 = vadd.f32 %v4718, %v4830
  %v4832 = vpop.f32.mrb[0].mxu0
  %v4833 = vadd.f32 %v4720, %v4832
  %v4834 = vpop.f32.mrb[0].mxu0
  %v4835 = vadd.f32 %v4722, %v4834
  %4836 = vmatprep.mubr.bf16.mxu0 %v874
  %4837 = vmatmul.mubr.bf16.gmra.mrb[0].mxu0 %v873
  %v4838 = vpop.f32.mrb[0].mxu0
  %v4839 = vadd.f32 %v4726, %v4838
  %v4840 = vpop.f32.mrb[0].mxu0
  %v4841 = vadd.f32 %v4728, %v4840
  %v4842 = vpop.f32.mrb[0].mxu0
  %v4843 = vadd.f32 %v4730, %v4842
  %v4844 = vpop.f32.mrb[0].mxu0
  %v4845 = vadd.f32 %v4732, %v4844
  %4846 = vmatprep.mubr.bf16.mxu0 %v882
  %4847 = vmatmul.mubr.bf16.gmra.mrb[0].mxu0 %v881
  %v4848 = vpop.f32.mrb[0].mxu0
  %v4849 = vadd.f32 %v4736, %v4848
  %v4850 = vpop.f32.mrb[0].mxu0
  %v4851 = vadd.f32 %v4738, %v4850
  %v4852 = vpop.f32.mrb[0].mxu0
  %v4853 = vadd.f32 %v4740, %v4852
  %v4854 = vpop.f32.mrb[0].mxu0
  %v4855 = vadd.f32 %v4742, %v4854
  %4856 = vmatprep.mubr.bf16.mxu0 %v890
  %4857 = vmatmul.mubr.bf16.gmra.mrb[0].mxu0 %v889
  %v4858 = vpop.f32.mrb[0].mxu0
  %v4859 = vadd.f32 %v4746, %v4858
  %v4860 = vpop.f32.mrb[0].mxu0
  %v4861 = vadd.f32 %v4748, %v4860
  %v4862 = vpop.f32.mrb[0].mxu0
  %v4863 = vadd.f32 %v4750, %v4862
  %v4864 = vpop.f32.mrb[0].mxu0
  %v4865 = vadd.f32 %v4752, %v4864
  %4866 = vmatprep.mubr.bf16.mxu0 %v898
  %4867 = vmatmul.mubr.bf16.gmra.mrb[0].mxu0 %v897
  %v4868 = vpop.f32.mrb[0].mxu0
  %v4869 = vadd.f32 %v4756, %v4868
  %v4870 = vpop.f32.mrb[0].mxu0
  %v4871 = vadd.f32 %v4758, %v4870
  %v4872 = vpop.f32.mrb[0].mxu0
  %v4873 = vadd.f32 %v4760, %v4872
  %v4874 = vpop.f32.mrb[0].mxu0
  %v4875 = vadd.f32 %v4762, %v4874
  %4876 = vmatprep.mubr.bf16.mxu0 %v906
  %4877 = vmatmul.mubr.bf16.gmra.mrb[0].mxu0 %v905
  %v4878 = vpop.f32.mrb[0].mxu0
  %v4879 = vadd.f32 %v4766, %v4878
  %v4880 = vpop.f32.mrb[0].mxu0
  %v4881 = vadd.f32 %v4768, %v4880
  %v4882 = vpop.f32.mrb[0].mxu0
  %v4883 = vadd.f32 %v4770, %v4882
  %v4884 = vpop.f32.mrb[0].mxu0
  %v4885 = vadd.f32 %v4772, %v4884
  %4886 = vdwg.mxu0
  %4887 = vmatprep.subr.bf16.mxu0 %v2514
  %4888 = vmatpush1.bf16.msra.mxu0 %v2513
  %4889 = vmatprep.subr.bf16.mxu0 %v2522
  %4890 = vmatpush1.bf16.msra.mxu0 %v2521
  %4891 = vmatprep.subr.bf16.mxu0 %v2530
  %4892 = vmatpush1.bf16.msra.mxu0 %v2529
  %4893 = vmatprep.subr.bf16.mxu0 %v2538
  %4894 = vmatpush1.bf16.msra.mxu0 %v2537
  %4895 = vmatprep.subr.bf16.mxu0 %v2546
  %4896 = vmatpush1.bf16.msra.mxu0 %v2545
  %4897 = vmatprep.subr.bf16.mxu0 %v2554
  %4898 = vmatpush1.bf16.msra.mxu0 %v2553
  %4899 = vmatprep.subr.bf16.mxu0 %v2562
  %4900 = vmatpush1.bf16.msra.mxu0 %v2561
  %4901 = vmatprep.subr.bf16.mxu0 %v2570
  %4902 = vmatpush1.bf16.msra.mxu0 %v2569
  %4903 = vmatprep.subr.bf16.mxu0 %v2578
  %4904 = vmatpush1.bf16.msra.mxu0 %v2577
  %4905 = vmatprep.subr.bf16.mxu0 %v2586
  %4906 = vmatpush1.bf16.msra.mxu0 %v2585
  %4907 = vmatprep.subr.bf16.mxu0 %v2594
  %4908 = vmatpush1.bf16.msra.mxu0 %v2593
  %4909 = vmatprep.subr.bf16.mxu0 %v2602
  %4910 = vmatpush1.bf16.msra.mxu0 %v2601
  %4911 = vmatprep.subr.bf16.mxu0 %v2610
  %4912 = vmatpush1.bf16.msra.mxu0 %v2609
  %4913 = vmatprep.subr.bf16.mxu0 %v2618
  %4914 = vmatpush1.bf16.msra.mxu0 %v2617
  %4915 = vmatprep.subr.bf16.mxu0 %v2626
  %4916 = vmatpush1.bf16.msra.mxu0 %v2625
  %4917 = vmatprep.subr.bf16.mxu0 %v2634
  %4918 = vmatpush1.bf16.msra.mxu0 %v2633
  %4919 = vmatprep.mubr.bf16.mxu0 %v844
  %4920 = vmatmul.mubr.bf16.gmra.mrb[0].mxu0 %v843
  %v4921 = vpop.f32.mrb[0].mxu0
  %v4922 = vadd.f32 %v638, %v4921
  %v4923 = vpop.f32.mrb[0].mxu0
  %v4924 = vadd.f32 %v642, %v4923
  %v4925 = vpop.f32.mrb[0].mxu0
  %v4926 = vadd.f32 %v638, %v4925
  %v4927 = vpop.f32.mrb[0].mxu0
  %v4928 = vadd.f32 %v642, %v4927
  %4929 = vmatprep.mubr.bf16.mxu0 %v852
  %4930 = vmatmul.mubr.bf16.gmra.mrb[0].mxu0 %v851
  %v4931 = vpop.f32.mrb[0].mxu0
  %v4932 = vadd.f32 %v638, %v4931
  %v4933 = vpop.f32.mrb[0].mxu0
  %v4934 = vadd.f32 %v642, %v4933
  %v4935 = vpop.f32.mrb[0].mxu0
  %v4936 = vadd.f32 %v638, %v4935
  %v4937 = vpop.f32.mrb[0].mxu0
  %v4938 = vadd.f32 %v642, %v4937
  %4939 = vmatprep.mubr.bf16.mxu0 %v860
  %4940 = vmatmul.mubr.bf16.gmra.mrb[0].mxu0 %v859
  %v4941 = vpop.f32.mrb[0].mxu0
  %v4942 = vadd.f32 %v638, %v4941
  %v4943 = vpop.f32.mrb[0].mxu0
  %v4944 = vadd.f32 %v642, %v4943
  %v4945 = vpop.f32.mrb[0].mxu0
  %v4946 = vadd.f32 %v638, %v4945
  %v4947 = vpop.f32.mrb[0].mxu0
  %v4948 = vadd.f32 %v642, %v4947
  %4949 = vmatprep.mubr.bf16.mxu0 %v868
  %4950 = vmatmul.mubr.bf16.gmra.mrb[0].mxu0 %v867
  %v4951 = vpop.f32.mrb[0].mxu0
  %v4952 = vadd.f32 %v638, %v4951
  %v4953 = vpop.f32.mrb[0].mxu0
  %v4954 = vadd.f32 %v642, %v4953
  %v4955 = vpop.f32.mrb[0].mxu0
  %v4956 = vadd.f32 %v638, %v4955
  %v4957 = vpop.f32.mrb[0].mxu0
  %v4958 = vadd.f32 %v642, %v4957
  %4959 = vmatprep.mubr.bf16.mxu0 %v876
  %4960 = vmatmul.mubr.bf16.gmra.mrb[0].mxu0 %v875
  %v4961 = vpop.f32.mrb[0].mxu0
  %v4962 = vadd.f32 %v638, %v4961
  %v4963 = vpop.f32.mrb[0].mxu0
  %v4964 = vadd.f32 %v642, %v4963
  %v4965 = vpop.f32.mrb[0].mxu0
  %v4966 = vadd.f32 %v638, %v4965
  %v4967 = vpop.f32.mrb[0].mxu0
  %v4968 = vadd.f32 %v642, %v4967
  %4969 = vmatprep.mubr.bf16.mxu0 %v884
  %4970 = vmatmul.mubr.bf16.gmra.mrb[0].mxu0 %v883
  %v4971 = vpop.f32.mrb[0].mxu0
  %v4972 = vadd.f32 %v638, %v4971
  %v4973 = vpop.f32.mrb[0].mxu0
  %v4974 = vadd.f32 %v642, %v4973
  %v4975 = vpop.f32.mrb[0].mxu0
  %v4976 = vadd.f32 %v638, %v4975
  %v4977 = vpop.f32.mrb[0].mxu0
  %v4978 = vadd.f32 %v642, %v4977
  %4979 = vmatprep.mubr.bf16.mxu0 %v892
  %4980 = vmatmul.mubr.bf16.gmra.mrb[0].mxu0 %v891
  %v4981 = vpop.f32.mrb[0].mxu0
  %v4982 = vadd.f32 %v638, %v4981
  %v4983 = vpop.f32.mrb[0].mxu0
  %v4984 = vadd.f32 %v642, %v4983
  %v4985 = vpop.f32.mrb[0].mxu0
  %v4986 = vadd.f32 %v638, %v4985
  %v4987 = vpop.f32.mrb[0].mxu0
  %v4988 = vadd.f32 %v642, %v4987
  %4989 = vmatprep.mubr.bf16.mxu0 %v900
  %4990 = vmatmul.mubr.bf16.gmra.mrb[0].mxu0 %v899
  %v4991 = vpop.f32.mrb[0].mxu0
  %v4992 = vadd.f32 %v638, %v4991
  %v4993 = vpop.f32.mrb[0].mxu0
  %v4994 = vadd.f32 %v642, %v4993
  %v4995 = vpop.f32.mrb[0].mxu0
  %v4996 = vadd.f32 %v638, %v4995
  %v4997 = vpop.f32.mrb[0].mxu0
  %v4998 = vadd.f32 %v642, %v4997
  %4999 = vdwg.mxu0
  %5000 = vmatprep.subr.bf16.mxu0 %v2642
  %5001 = vmatpush1.bf16.msra.mxu0 %v2641
  %5002 = vmatprep.subr.bf16.mxu0 %v2650
  %5003 = vmatpush1.bf16.msra.mxu0 %v2649
  %5004 = vmatprep.subr.bf16.mxu0 %v2658
  %5005 = vmatpush1.bf16.msra.mxu0 %v2657
  %5006 = vmatprep.subr.bf16.mxu0 %v2666
  %5007 = vmatpush1.bf16.msra.mxu0 %v2665
  %5008 = vmatprep.subr.bf16.mxu0 %v2674
  %5009 = vmatpush1.bf16.msra.mxu0 %v2673
  %5010 = vmatprep.subr.bf16.mxu0 %v2682
  %5011 = vmatpush1.bf16.msra.mxu0 %v2681
  %5012 = vmatprep.subr.bf16.mxu0 %v2690
  %5013 = vmatpush1.bf16.msra.mxu0 %v2689
  %5014 = vmatprep.subr.bf16.mxu0 %v2698
  %5015 = vmatpush1.bf16.msra.mxu0 %v2697
  %5016 = vmatprep.subr.bf16.mxu0 %v2706
  %5017 = vmatpush1.bf16.msra.mxu0 %v2705
  %5018 = vmatprep.subr.bf16.mxu0 %v2714
  %5019 = vmatpush1.bf16.msra.mxu0 %v2713
  %5020 = vmatprep.subr.bf16.mxu0 %v2722
  %5021 = vmatpush1.bf16.msra.mxu0 %v2721
  %5022 = vmatprep.subr.bf16.mxu0 %v2730
  %5023 = vmatpush1.bf16.msra.mxu0 %v2729
  %5024 = vmatprep.subr.bf16.mxu0 %v2738
  %5025 = vmatpush1.bf16.msra.mxu0 %v2737
  %5026 = vmatprep.subr.bf16.mxu0 %v2746
  %5027 = vmatpush1.bf16.msra.mxu0 %v2745
  %5028 = vmatprep.subr.bf16.mxu0 %v2754
  %5029 = vmatpush1.bf16.msra.mxu0 %v2753
  %5030 = vmatprep.subr.bf16.mxu0 %v2762
  %5031 = vmatpush1.bf16.msra.mxu0 %v2761
  %5032 = vmatprep.mubr.bf16.mxu0 %v846
  %5033 = vmatmul.mubr.bf16.gmra.mrb[0].mxu0 %v845
  %v5034 = vpop.f32.mrb[0].mxu0
  %v5035 = vadd.f32 %v4922, %v5034
  %v5036 = vpop.f32.mrb[0].mxu0
  %v5037 = vadd.f32 %v4924, %v5036
  %v5038 = vpop.f32.mrb[0].mxu0
  %v5039 = vadd.f32 %v4926, %v5038
  %v5040 = vpop.f32.mrb[0].mxu0
  %v5041 = vadd.f32 %v4928, %v5040
  %5042 = vmatprep.mubr.bf16.mxu0 %v854
  %5043 = vmatmul.mubr.bf16.gmra.mrb[0].mxu0 %v853
  %v5044 = vpop.f32.mrb[0].mxu0
  %v5045 = vadd.f32 %v4932, %v5044
  %v5046 = vpop.f32.mrb[0].mxu0
  %v5047 = vadd.f32 %v4934, %v5046
  %v5048 = vpop.f32.mrb[0].mxu0
  %v5049 = vadd.f32 %v4936, %v5048
  %v5050 = vpop.f32.mrb[0].mxu0
  %v5051 = vadd.f32 %v4938, %v5050
  %5052 = vmatprep.mubr.bf16.mxu0 %v862
  %5053 = vmatmul.mubr.bf16.gmra.mrb[0].mxu0 %v861
  %v5054 = vpop.f32.mrb[0].mxu0
  %v5055 = vadd.f32 %v4942, %v5054
  %v5056 = vpop.f32.mrb[0].mxu0
  %v5057 = vadd.f32 %v4944, %v5056
  %v5058 = vpop.f32.mrb[0].mxu0
  %v5059 = vadd.f32 %v4946, %v5058
  %v5060 = vpop.f32.mrb[0].mxu0
  %v5061 = vadd.f32 %v4948, %v5060
  %5062 = vmatprep.mubr.bf16.mxu0 %v870
  %5063 = vmatmul.mubr.bf16.gmra.mrb[0].mxu0 %v869
  %v5064 = vpop.f32.mrb[0].mxu0
  %v5065 = vadd.f32 %v4952, %v5064
  %v5066 = vpop.f32.mrb[0].mxu0
  %v5067 = vadd.f32 %v4954, %v5066
  %v5068 = vpop.f32.mrb[0].mxu0
  %v5069 = vadd.f32 %v4956, %v5068
  %v5070 = vpop.f32.mrb[0].mxu0
  %v5071 = vadd.f32 %v4958, %v5070
  %5072 = vmatprep.mubr.bf16.mxu0 %v878
  %5073 = vmatmul.mubr.bf16.gmra.mrb[0].mxu0 %v877
  %v5074 = vpop.f32.mrb[0].mxu0
  %v5075 = vadd.f32 %v4962, %v5074
  %v5076 = vpop.f32.mrb[0].mxu0
  %v5077 = vadd.f32 %v4964, %v5076
  %v5078 = vpop.f32.mrb[0].mxu0
  %v5079 = vadd.f32 %v4966, %v5078
  %v5080 = vpop.f32.mrb[0].mxu0
  %v5081 = vadd.f32 %v4968, %v5080
  %5082 = vmatprep.mubr.bf16.mxu0 %v886
  %5083 = vmatmul.mubr.bf16.gmra.mrb[0].mxu0 %v885
  %v5084 = vpop.f32.mrb[0].mxu0
  %v5085 = vadd.f32 %v4972, %v5084
  %v5086 = vpop.f32.mrb[0].mxu0
  %v5087 = vadd.f32 %v4974, %v5086
  %v5088 = vpop.f32.mrb[0].mxu0
  %v5089 = vadd.f32 %v4976, %v5088
  %v5090 = vpop.f32.mrb[0].mxu0
  %v5091 = vadd.f32 %v4978, %v5090
  %5092 = vmatprep.mubr.bf16.mxu0 %v894
  %5093 = vmatmul.mubr.bf16.gmra.mrb[0].mxu0 %v893
  %v5094 = vpop.f32.mrb[0].mxu0
  %v5095 = vadd.f32 %v4982, %v5094
  %v5096 = vpop.f32.mrb[0].mxu0
  %v5097 = vadd.f32 %v4984, %v5096
  %v5098 = vpop.f32.mrb[0].mxu0
  %v5099 = vadd.f32 %v4986, %v5098
  %v5100 = vpop.f32.mrb[0].mxu0
  %v5101 = vadd.f32 %v4988, %v5100
  %5102 = vmatprep.mubr.bf16.mxu0 %v902
  %5103 = vmatmul.mubr.bf16.gmra.mrb[0].mxu0 %v901
  %v5104 = vpop.f32.mrb[0].mxu0
  %v5105 = vadd.f32 %v4992, %v5104
  %v5106 = vpop.f32.mrb[0].mxu0
  %v5107 = vadd.f32 %v4994, %v5106
  %v5108 = vpop.f32.mrb[0].mxu0
  %v5109 = vadd.f32 %v4996, %v5108
  %v5110 = vpop.f32.mrb[0].mxu0
  %v5111 = vadd.f32 %v4998, %v5110
  %5112 = vdwg.mxu0
  %5113 = vmatprep.subr.bf16.mxu0 %v2770
  %5114 = vmatpush1.bf16.msra.mxu0 %v2769
  %5115 = vmatprep.subr.bf16.mxu0 %v2778
  %5116 = vmatpush1.bf16.msra.mxu0 %v2777
  %5117 = vmatprep.subr.bf16.mxu0 %v2786
  %5118 = vmatpush1.bf16.msra.mxu0 %v2785
  %5119 = vmatprep.subr.bf16.mxu0 %v2794
  %5120 = vmatpush1.bf16.msra.mxu0 %v2793
  %5121 = vmatprep.subr.bf16.mxu0 %v2802
  %5122 = vmatpush1.bf16.msra.mxu0 %v2801
  %5123 = vmatprep.subr.bf16.mxu0 %v2810
  %5124 = vmatpush1.bf16.msra.mxu0 %v2809
  %5125 = vmatprep.subr.bf16.mxu0 %v2818
  %5126 = vmatpush1.bf16.msra.mxu0 %v2817
  %5127 = vmatprep.subr.bf16.mxu0 %v2826
  %5128 = vmatpush1.bf16.msra.mxu0 %v2825
  %5129 = vmatprep.subr.bf16.mxu0 %v2834
  %5130 = vmatpush1.bf16.msra.mxu0 %v2833
  %5131 = vmatprep.subr.bf16.mxu0 %v2842
  %5132 = vmatpush1.bf16.msra.mxu0 %v2841
  %5133 = vmatprep.subr.bf16.mxu0 %v2850
  %5134 = vmatpush1.bf16.msra.mxu0 %v2849
  %5135 = vmatprep.subr.bf16.mxu0 %v2858
  %5136 = vmatpush1.bf16.msra.mxu0 %v2857
  %5137 = vmatprep.subr.bf16.mxu0 %v2866
  %5138 = vmatpush1.bf16.msra.mxu0 %v2865
  %5139 = vmatprep.subr.bf16.mxu0 %v2874
  %5140 = vmatpush1.bf16.msra.mxu0 %v2873
  %5141 = vmatprep.subr.bf16.mxu0 %v2882
  %5142 = vmatpush1.bf16.msra.mxu0 %v2881
  %5143 = vmatprep.subr.bf16.mxu0 %v2890
  %5144 = vmatpush1.bf16.msra.mxu0 %v2889
  %5145 = vmatprep.mubr.bf16.mxu0 %v848
  %5146 = vmatmul.mubr.bf16.gmra.mrb[0].mxu0 %v847
  %v5147 = vpop.f32.mrb[0].mxu0
  %v5148 = vadd.f32 %v5035, %v5147
  %v5149 = vpop.f32.mrb[0].mxu0
  %v5150 = vadd.f32 %v5037, %v5149
  %v5151 = vpop.f32.mrb[0].mxu0
  %v5152 = vadd.f32 %v5039, %v5151
  %v5153 = vpop.f32.mrb[0].mxu0
  %v5154 = vadd.f32 %v5041, %v5153
  %5155 = vmatprep.mubr.bf16.mxu0 %v856
  %5156 = vmatmul.mubr.bf16.gmra.mrb[0].mxu0 %v855
  %v5157 = vpop.f32.mrb[0].mxu0
  %v5158 = vadd.f32 %v5045, %v5157
  %v5159 = vpop.f32.mrb[0].mxu0
  %v5160 = vadd.f32 %v5047, %v5159
  %v5161 = vpop.f32.mrb[0].mxu0
  %v5162 = vadd.f32 %v5049, %v5161
  %v5163 = vpop.f32.mrb[0].mxu0
  %v5164 = vadd.f32 %v5051, %v5163
  %5165 = vmatprep.mubr.bf16.mxu0 %v864
  %5166 = vmatmul.mubr.bf16.gmra.mrb[0].mxu0 %v863
  %v5167 = vpop.f32.mrb[0].mxu0
  %v5168 = vadd.f32 %v5055, %v5167
  %v5169 = vpop.f32.mrb[0].mxu0
  %v5170 = vadd.f32 %v5057, %v5169
  %v5171 = vpop.f32.mrb[0].mxu0
  %v5172 = vadd.f32 %v5059, %v5171
  %v5173 = vpop.f32.mrb[0].mxu0
  %v5174 = vadd.f32 %v5061, %v5173
  %5175 = vmatprep.mubr.bf16.mxu0 %v872
  %5176 = vmatmul.mubr.bf16.gmra.mrb[0].mxu0 %v871
  %v5177 = vpop.f32.mrb[0].mxu0
  %v5178 = vadd.f32 %v5065, %v5177
  %v5179 = vpop.f32.mrb[0].mxu0
  %v5180 = vadd.f32 %v5067, %v5179
  %v5181 = vpop.f32.mrb[0].mxu0
  %v5182 = vadd.f32 %v5069, %v5181
  %v5183 = vpop.f32.mrb[0].mxu0
  %v5184 = vadd.f32 %v5071, %v5183
  %5185 = vmatprep.mubr.bf16.mxu0 %v880
  %5186 = vmatmul.mubr.bf16.gmra.mrb[0].mxu0 %v879
  %v5187 = vpop.f32.mrb[0].mxu0
  %v5188 = vadd.f32 %v5075, %v5187
  %v5189 = vpop.f32.mrb[0].mxu0
  %v5190 = vadd.f32 %v5077, %v5189
  %v5191 = vpop.f32.mrb[0].mxu0
  %v5192 = vadd.f32 %v5079, %v5191
  %v5193 = vpop.f32.mrb[0].mxu0
  %v5194 = vadd.f32 %v5081, %v5193
  %5195 = vmatprep.mubr.bf16.mxu0 %v888
  %5196 = vmatmul.mubr.bf16.gmra.mrb[0].mxu0 %v887
  %v5197 = vpop.f32.mrb[0].mxu0
  %v5198 = vadd.f32 %v5085, %v5197
  %v5199 = vpop.f32.mrb[0].mxu0
  %v5200 = vadd.f32 %v5087, %v5199
  %v5201 = vpop.f32.mrb[0].mxu0
  %v5202 = vadd.f32 %v5089, %v5201
  %v5203 = vpop.f32.mrb[0].mxu0
  %v5204 = vadd.f32 %v5091, %v5203
  %5205 = vmatprep.mubr.bf16.mxu0 %v896
  %5206 = vmatmul.mubr.bf16.gmra.mrb[0].mxu0 %v895
  %v5207 = vpop.f32.mrb[0].mxu0
  %v5208 = vadd.f32 %v5095, %v5207
  %v5209 = vpop.f32.mrb[0].mxu0
  %v5210 = vadd.f32 %v5097, %v5209
  %v5211 = vpop.f32.mrb[0].mxu0
  %v5212 = vadd.f32 %v5099, %v5211
  %v5213 = vpop.f32.mrb[0].mxu0
  %v5214 = vadd.f32 %v5101, %v5213
  %5215 = vmatprep.mubr.bf16.mxu0 %v904
  %5216 = vmatmul.mubr.bf16.gmra.mrb[0].mxu0 %v903
  %v5217 = vpop.f32.mrb[0].mxu0
  %v5218 = vadd.f32 %v5105, %v5217
  %v5219 = vpop.f32.mrb[0].mxu0
  %v5220 = vadd.f32 %v5107, %v5219
  %v5221 = vpop.f32.mrb[0].mxu0
  %v5222 = vadd.f32 %v5109, %v5221
  %v5223 = vpop.f32.mrb[0].mxu0
  %v5224 = vadd.f32 %v5111, %v5223
  %5225 = vdwg.mxu0
  %5226 = vmatprep.subr.bf16.mxu0 %v2898
  %5227 = vmatpush1.bf16.msra.mxu0 %v2897
  %5228 = vmatprep.subr.bf16.mxu0 %v2906
  %5229 = vmatpush1.bf16.msra.mxu0 %v2905
  %5230 = vmatprep.subr.bf16.mxu0 %v2914
  %5231 = vmatpush1.bf16.msra.mxu0 %v2913
  %5232 = vmatprep.subr.bf16.mxu0 %v2922
  %5233 = vmatpush1.bf16.msra.mxu0 %v2921
  %5234 = vmatprep.subr.bf16.mxu0 %v2930
  %5235 = vmatpush1.bf16.msra.mxu0 %v2929
  %5236 = vmatprep.subr.bf16.mxu0 %v2938
  %5237 = vmatpush1.bf16.msra.mxu0 %v2937
  %5238 = vmatprep.subr.bf16.mxu0 %v2946
  %5239 = vmatpush1.bf16.msra.mxu0 %v2945
  %5240 = vmatprep.subr.bf16.mxu0 %v2954
  %5241 = vmatpush1.bf16.msra.mxu0 %v2953
  %5242 = vmatprep.subr.bf16.mxu0 %v2962
  %5243 = vmatpush1.bf16.msra.mxu0 %v2961
  %5244 = vmatprep.subr.bf16.mxu0 %v2970
  %5245 = vmatpush1.bf16.msra.mxu0 %v2969
  %5246 = vmatprep.subr.bf16.mxu0 %v2978
  %5247 = vmatpush1.bf16.msra.mxu0 %v2977
  %5248 = vmatprep.subr.bf16.mxu0 %v2986
  %5249 = vmatpush1.bf16.msra.mxu0 %v2985
  %5250 = vmatprep.subr.bf16.mxu0 %v2994
  %5251 = vmatpush1.bf16.msra.mxu0 %v2993
  %5252 = vmatprep.subr.bf16.mxu0 %v3002
  %5253 = vmatpush1.bf16.msra.mxu0 %v3001
  %5254 = vmatprep.subr.bf16.mxu0 %v3010
  %5255 = vmatpush1.bf16.msra.mxu0 %v3009
  %5256 = vmatprep.subr.bf16.mxu0 %v3018
  %5257 = vmatpush1.bf16.msra.mxu0 %v3017
  %5258 = vmatprep.mubr.bf16.mxu0 %v850
  %5259 = vmatmul.mubr.bf16.gmra.mrb[0].mxu0 %v849
  %v5260 = vpop.f32.mrb[0].mxu0
  %v5261 = vadd.f32 %v5148, %v5260
  %v5262 = vpop.f32.mrb[0].mxu0
  %v5263 = vadd.f32 %v5150, %v5262
  %v5264 = vpop.f32.mrb[0].mxu0
  %v5265 = vadd.f32 %v5152, %v5264
  %v5266 = vpop.f32.mrb[0].mxu0
  %v5267 = vadd.f32 %v5154, %v5266
  %5268 = vmatprep.mubr.bf16.mxu0 %v858
  %5269 = vmatmul.mubr.bf16.gmra.mrb[0].mxu0 %v857
  %v5270 = vpop.f32.mrb[0].mxu0
  %v5271 = vadd.f32 %v5158, %v5270
  %v5272 = vpop.f32.mrb[0].mxu0
  %v5273 = vadd.f32 %v5160, %v5272
  %v5274 = vpop.f32.mrb[0].mxu0
  %v5275 = vadd.f32 %v5162, %v5274
  %v5276 = vpop.f32.mrb[0].mxu0
  %v5277 = vadd.f32 %v5164, %v5276
  %5278 = vmatprep.mubr.bf16.mxu0 %v866
  %5279 = vmatmul.mubr.bf16.gmra.mrb[0].mxu0 %v865
  %v5280 = vpop.f32.mrb[0].mxu0
  %v5281 = vadd.f32 %v5168, %v5280
  %v5282 = vpop.f32.mrb[0].mxu0
  %v5283 = vadd.f32 %v5170, %v5282
  %v5284 = vpop.f32.mrb[0].mxu0
  %v5285 = vadd.f32 %v5172, %v5284
  %v5286 = vpop.f32.mrb[0].mxu0
  %v5287 = vadd.f32 %v5174, %v5286
  %5288 = vmatprep.mubr.bf16.mxu0 %v874
  %5289 = vmatmul.mubr.bf16.gmra.mrb[0].mxu0 %v873
  %v5290 = vpop.f32.mrb[0].mxu0
  %v5291 = vadd.f32 %v5178, %v5290
  %v5292 = vpop.f32.mrb[0].mxu0
  %v5293 = vadd.f32 %v5180, %v5292
  %v5294 = vpop.f32.mrb[0].mxu0
  %v5295 = vadd.f32 %v5182, %v5294
  %v5296 = vpop.f32.mrb[0].mxu0
  %v5297 = vadd.f32 %v5184, %v5296
  %5298 = vmatprep.mubr.bf16.mxu0 %v882
  %5299 = vmatmul.mubr.bf16.gmra.mrb[0].mxu0 %v881
  %v5300 = vpop.f32.mrb[0].mxu0
  %v5301 = vadd.f32 %v5188, %v5300
  %v5302 = vpop.f32.mrb[0].mxu0
  %v5303 = vadd.f32 %v5190, %v5302
  %v5304 = vpop.f32.mrb[0].mxu0
  %v5305 = vadd.f32 %v5192, %v5304
  %v5306 = vpop.f32.mrb[0].mxu0
  %v5307 = vadd.f32 %v5194, %v5306
  %5308 = vmatprep.mubr.bf16.mxu0 %v890
  %5309 = vmatmul.mubr.bf16.gmra.mrb[0].mxu0 %v889
  %v5310 = vpop.f32.mrb[0].mxu0
  %v5311 = vadd.f32 %v5198, %v5310
  %v5312 = vpop.f32.mrb[0].mxu0
  %v5313 = vadd.f32 %v5200, %v5312
  %v5314 = vpop.f32.mrb[0].mxu0
  %v5315 = vadd.f32 %v5202, %v5314
  %v5316 = vpop.f32.mrb[0].mxu0
  %v5317 = vadd.f32 %v5204, %v5316
  %5318 = vmatprep.mubr.bf16.mxu0 %v898
  %5319 = vmatmul.mubr.bf16.gmra.mrb[0].mxu0 %v897
  %v5320 = vpop.f32.mrb[0].mxu0
  %v5321 = vadd.f32 %v5208, %v5320
  %v5322 = vpop.f32.mrb[0].mxu0
  %v5323 = vadd.f32 %v5210, %v5322
  %v5324 = vpop.f32.mrb[0].mxu0
  %v5325 = vadd.f32 %v5212, %v5324
  %v5326 = vpop.f32.mrb[0].mxu0
  %v5327 = vadd.f32 %v5214, %v5326
  %5328 = vmatprep.mubr.bf16.mxu0 %v906
  %5329 = vmatmul.mubr.bf16.gmra.mrb[0].mxu0 %v905
  %v5330 = vpop.f32.mrb[0].mxu0
  %v5331 = vadd.f32 %v5218, %v5330
  %v5332 = vpop.f32.mrb[0].mxu0
  %v5333 = vadd.f32 %v5220, %v5332
  %v5334 = vpop.f32.mrb[0].mxu0
  %v5335 = vadd.f32 %v5222, %v5334
  %v5336 = vpop.f32.mrb[0].mxu0
  %v5337 = vadd.f32 %v5224, %v5336
  %5338 = vdwg.mxu0
  %vm5339 = vcmp.gt.f32.partialorder %v3905, 0.0
  %vm5340 = vcmp.gt.f32.partialorder %v3907, 0.0
  %vm5341 = vcmp.gt.f32.partialorder %v4357, 0.0
  %vm5342 = vcmp.gt.f32.partialorder %v4359, 0.0
  %vm5343 = vcmp.gt.f32.partialorder %v4809, 0.0
  %vm5344 = vcmp.gt.f32.partialorder %v4811, 0.0
  %vm5345 = vcmp.gt.f32.partialorder %v5261, 0.0
  %vm5346 = vcmp.gt.f32.partialorder %v5263, 0.0
  %vm5347 = vcmp.gt.f32.partialorder %v3909, 0.0
  %vm5348 = vcmp.gt.f32.partialorder %v3911, 0.0
  %vm5349 = vcmp.gt.f32.partialorder %v4361, 0.0
  %vm5350 = vcmp.gt.f32.partialorder %v4363, 0.0
  %vm5351 = vcmp.gt.f32.partialorder %v4813, 0.0
  %vm5352 = vcmp.gt.f32.partialorder %v4815, 0.0
  %vm5353 = vcmp.gt.f32.partialorder %v5265, 0.0
  %vm5354 = vcmp.gt.f32.partialorder %v5267, 0.0
  %vm5355 = vcmp.gt.f32.partialorder %v3915, 0.0
  %vm5356 = vcmp.gt.f32.partialorder %v3917, 0.0
  %vm5357 = vcmp.gt.f32.partialorder %v4367, 0.0
  %vm5358 = vcmp.gt.f32.partialorder %v4369, 0.0
  %vm5359 = vcmp.gt.f32.partialorder %v4819, 0.0
  %vm5360 = vcmp.gt.f32.partialorder %v4821, 0.0
  %vm5361 = vcmp.gt.f32.partialorder %v5271, 0.0
  %vm5362 = vcmp.gt.f32.partialorder %v5273, 0.0
  %vm5363 = vcmp.gt.f32.partialorder %v3919, 0.0
  %vm5364 = vcmp.gt.f32.partialorder %v3921, 0.0
  %vm5365 = vcmp.gt.f32.partialorder %v4371, 0.0
  %vm5366 = vcmp.gt.f32.partialorder %v4373, 0.0
  %vm5367 = vcmp.gt.f32.partialorder %v4823, 0.0
  %vm5368 = vcmp.gt.f32.partialorder %v4825, 0.0
  %vm5369 = vcmp.gt.f32.partialorder %v5275, 0.0
  %vm5370 = vcmp.gt.f32.partialorder %v5277, 0.0
  %vm5371 = vcmp.gt.f32.partialorder %v3925, 0.0
  %vm5372 = vcmp.gt.f32.partialorder %v3927, 0.0
  %vm5373 = vcmp.gt.f32.partialorder %v4377, 0.0
  %vm5374 = vcmp.gt.f32.partialorder %v4379, 0.0
  %vm5375 = vcmp.gt.f32.partialorder %v4829, 0.0
  %vm5376 = vcmp.gt.f32.partialorder %v4831, 0.0
  %vm5377 = vcmp.gt.f32.partialorder %v5281, 0.0
  %vm5378 = vcmp.gt.f32.partialorder %v5283, 0.0
  %vm5379 = vcmp.gt.f32.partialorder %v3929, 0.0
  %vm5380 = vcmp.gt.f32.partialorder %v3931, 0.0
  %vm5381 = vcmp.gt.f32.partialorder %v4381, 0.0
  %vm5382 = vcmp.gt.f32.partialorder %v4383, 0.0
  %vm5383 = vcmp.gt.f32.partialorder %v4833, 0.0
  %vm5384 = vcmp.gt.f32.partialorder %v4835, 0.0
  %vm5385 = vcmp.gt.f32.partialorder %v5285, 0.0
  %vm5386 = vcmp.gt.f32.partialorder %v5287, 0.0
  %vm5387 = vcmp.gt.f32.partialorder %v3935, 0.0
  %vm5388 = vcmp.gt.f32.partialorder %v3937, 0.0
  %vm5389 = vcmp.gt.f32.partialorder %v4387, 0.0
  %vm5390 = vcmp.gt.f32.partialorder %v4389, 0.0
  %vm5391 = vcmp.gt.f32.partialorder %v4839, 0.0
  %vm5392 = vcmp.gt.f32.partialorder %v4841, 0.0
  %vm5393 = vcmp.gt.f32.partialorder %v5291, 0.0
  %vm5394 = vcmp.gt.f32.partialorder %v5293, 0.0
  %vm5395 = vcmp.gt.f32.partialorder %v3939, 0.0
  %vm5396 = vcmp.gt.f32.partialorder %v3941, 0.0
  %vm5397 = vcmp.gt.f32.partialorder %v4391, 0.0
  %vm5398 = vcmp.gt.f32.partialorder %v4393, 0.0
  %vm5399 = vcmp.gt.f32.partialorder %v4843, 0.0
  %vm5400 = vcmp.gt.f32.partialorder %v4845, 0.0
  %vm5401 = vcmp.gt.f32.partialorder %v5295, 0.0
  %vm5402 = vcmp.gt.f32.partialorder %v5297, 0.0
  %vm5403 = vcmp.gt.f32.partialorder %v3945, 0.0
  %vm5404 = vcmp.gt.f32.partialorder %v3947, 0.0
  %vm5405 = vcmp.gt.f32.partialorder %v4397, 0.0
  %vm5406 = vcmp.gt.f32.partialorder %v4399, 0.0
  %vm5407 = vcmp.gt.f32.partialorder %v4849, 0.0
  %vm5408 = vcmp.gt.f32.partialorder %v4851, 0.0
  %vm5409 = vcmp.gt.f32.partialorder %v5301, 0.0
  %vm5410 = vcmp.gt.f32.partialorder %v5303, 0.0
  %vm5411 = vcmp.gt.f32.partialorder %v3949, 0.0
  %vm5412 = vcmp.gt.f32.partialorder %v3951, 0.0
  %vm5413 = vcmp.gt.f32.partialorder %v4401, 0.0
  %vm5414 = vcmp.gt.f32.partialorder %v4403, 0.0
  %vm5415 = vcmp.gt.f32.partialorder %v4853, 0.0
  %vm5416 = vcmp.gt.f32.partialorder %v4855, 0.0
  %vm5417 = vcmp.gt.f32.partialorder %v5305, 0.0
  %vm5418 = vcmp.gt.f32.partialorder %v5307, 0.0
  %vm5419 = vcmp.gt.f32.partialorder %v3955, 0.0
  %vm5420 = vcmp.gt.f32.partialorder %v3957, 0.0
  %vm5421 = vcmp.gt.f32.partialorder %v4407, 0.0
  %vm5422 = vcmp.gt.f32.partialorder %v4409, 0.0
  %vm5423 = vcmp.gt.f32.partialorder %v4859, 0.0
  %vm5424 = vcmp.gt.f32.partialorder %v4861, 0.0
  %vm5425 = vcmp.gt.f32.partialorder %v5311, 0.0
  %vm5426 = vcmp.gt.f32.partialorder %v5313, 0.0
  %vm5427 = vcmp.gt.f32.partialorder %v3959, 0.0
  %vm5428 = vcmp.gt.f32.partialorder %v3961, 0.0
  %vm5429 = vcmp.gt.f32.partialorder %v4411, 0.0
  %vm5430 = vcmp.gt.f32.partialorder %v4413, 0.0
  %vm5431 = vcmp.gt.f32.partialorder %v4863, 0.0
  %vm5432 = vcmp.gt.f32.partialorder %v4865, 0.0
  %vm5433 = vcmp.gt.f32.partialorder %v5315, 0.0
  %vm5434 = vcmp.gt.f32.partialorder %v5317, 0.0
  %vm5435 = vcmp.gt.f32.partialorder %v3965, 0.0
  %vm5436 = vcmp.gt.f32.partialorder %v3967, 0.0
  %vm5437 = vcmp.gt.f32.partialorder %v4417, 0.0
  %vm5438 = vcmp.gt.f32.partialorder %v4419, 0.0
  %vm5439 = vcmp.gt.f32.partialorder %v4869, 0.0
  %vm5440 = vcmp.gt.f32.partialorder %v4871, 0.0
  %vm5441 = vcmp.gt.f32.partialorder %v5321, 0.0
  %vm5442 = vcmp.gt.f32.partialorder %v5323, 0.0
  %vm5443 = vcmp.gt.f32.partialorder %v3969, 0.0
  %vm5444 = vcmp.gt.f32.partialorder %v3971, 0.0
  %vm5445 = vcmp.gt.f32.partialorder %v4421, 0.0
  %vm5446 = vcmp.gt.f32.partialorder %v4423, 0.0
  %vm5447 = vcmp.gt.f32.partialorder %v4873, 0.0
  %vm5448 = vcmp.gt.f32.partialorder %v4875, 0.0
  %vm5449 = vcmp.gt.f32.partialorder %v5325, 0.0
  %vm5450 = vcmp.gt.f32.partialorder %v5327, 0.0
  %vm5451 = vcmp.gt.f32.partialorder %v3975, 0.0
  %vm5452 = vcmp.gt.f32.partialorder %v3977, 0.0
  %vm5453 = vcmp.gt.f32.partialorder %v4427, 0.0
  %vm5454 = vcmp.gt.f32.partialorder %v4429, 0.0
  %vm5455 = vcmp.gt.f32.partialorder %v4879, 0.0
  %vm5456 = vcmp.gt.f32.partialorder %v4881, 0.0
  %vm5457 = vcmp.gt.f32.partialorder %v5331, 0.0
  %vm5458 = vcmp.gt.f32.partialorder %v5333, 0.0
  %vm5459 = vcmp.gt.f32.partialorder %v3979, 0.0
  %vm5460 = vcmp.gt.f32.partialorder %v3981, 0.0
  %vm5461 = vcmp.gt.f32.partialorder %v4431, 0.0
  %vm5462 = vcmp.gt.f32.partialorder %v4433, 0.0
  %vm5463 = vcmp.gt.f32.partialorder %v4883, 0.0
  %vm5464 = vcmp.gt.f32.partialorder %v4885, 0.0
  %vm5465 = vcmp.gt.f32.partialorder %v5335, 0.0
  %vm5466 = vcmp.gt.f32.partialorder %v5337, 0.0
  %v5467 = vmul.f32 %v3905, 0.2
  %v5468 = vmul.f32 %v3907, 0.2
  %v5469 = vmul.f32 %v4357, 0.2
  %v5470 = vmul.f32 %v4359, 0.2
  %v5471 = vmul.f32 %v4809, 0.2
  %v5472 = vmul.f32 %v4811, 0.2
  %v5473 = vmul.f32 %v5261, 0.2
  %v5474 = vmul.f32 %v5263, 0.2
  %v5475 = vmul.f32 %v3909, 0.2
  %v5476 = vmul.f32 %v3911, 0.2
  %v5477 = vmul.f32 %v4361, 0.2
  %v5478 = vmul.f32 %v4363, 0.2
  %v5479 = vmul.f32 %v4813, 0.2
  %v5480 = vmul.f32 %v4815, 0.2
  %v5481 = vmul.f32 %v5265, 0.2
  %v5482 = vmul.f32 %v5267, 0.2
  %v5483 = vmul.f32 %v3915, 0.2
  %v5484 = vmul.f32 %v3917, 0.2
  %v5485 = vmul.f32 %v4367, 0.2
  %v5486 = vmul.f32 %v4369, 0.2
  %v5487 = vmul.f32 %v4819, 0.2
  %v5488 = vmul.f32 %v4821, 0.2
  %v5489 = vmul.f32 %v5271, 0.2
  %v5490 = vmul.f32 %v5273, 0.2
  %v5491 = vmul.f32 %v3919, 0.2
  %v5492 = vmul.f32 %v3921, 0.2
  %v5493 = vmul.f32 %v4371, 0.2
  %v5494 = vmul.f32 %v4373, 0.2
  %v5495 = vmul.f32 %v4823, 0.2
  %v5496 = vmul.f32 %v4825, 0.2
  %v5497 = vmul.f32 %v5275, 0.2
  %v5498 = vmul.f32 %v5277, 0.2
  %v5499 = vmul.f32 %v3925, 0.2
  %v5500 = vmul.f32 %v3927, 0.2
  %v5501 = vmul.f32 %v4377, 0.2
  %v5502 = vmul.f32 %v4379, 0.2
  %v5503 = vmul.f32 %v4829, 0.2
  %v5504 = vmul.f32 %v4831, 0.2
  %v5505 = vmul.f32 %v5281, 0.2
  %v5506 = vmul.f32 %v5283, 0.2
  %v5507 = vmul.f32 %v3929, 0.2
  %v5508 = vmul.f32 %v3931, 0.2
  %v5509 = vmul.f32 %v4381, 0.2
  %v5510 = vmul.f32 %v4383, 0.2
  %v5511 = vmul.f32 %v4833, 0.2
  %v5512 = vmul.f32 %v4835, 0.2
  %v5513 = vmul.f32 %v5285, 0.2
  %v5514 = vmul.f32 %v5287, 0.2
  %v5515 = vmul.f32 %v3935, 0.2
  %v5516 = vmul.f32 %v3937, 0.2
  %v5517 = vmul.f32 %v4387, 0.2
  %v5518 = vmul.f32 %v4389, 0.2
  %v5519 = vmul.f32 %v4839, 0.2
  %v5520 = vmul.f32 %v4841, 0.2
  %v5521 = vmul.f32 %v5291, 0.2
  %v5522 = vmul.f32 %v5293, 0.2
  %v5523 = vmul.f32 %v3939, 0.2
  %v5524 = vmul.f32 %v3941, 0.2
  %v5525 = vmul.f32 %v4391, 0.2
  %v5526 = vmul.f32 %v4393, 0.2
  %v5527 = vmul.f32 %v4843, 0.2
  %v5528 = vmul.f32 %v4845, 0.2
  %v5529 = vmul.f32 %v5295, 0.2
  %v5530 = vmul.f32 %v5297, 0.2
  %v5531 = vmul.f32 %v3945, 0.2
  %v5532 = vmul.f32 %v3947, 0.2
  %v5533 = vmul.f32 %v4397, 0.2
  %v5534 = vmul.f32 %v4399, 0.2
  %v5535 = vmul.f32 %v4849, 0.2
  %v5536 = vmul.f32 %v4851, 0.2
  %v5537 = vmul.f32 %v5301, 0.2
  %v5538 = vmul.f32 %v5303, 0.2
  %v5539 = vmul.f32 %v3949, 0.2
  %v5540 = vmul.f32 %v3951, 0.2
  %v5541 = vmul.f32 %v4401, 0.2
  %v5542 = vmul.f32 %v4403, 0.2
  %v5543 = vmul.f32 %v4853, 0.2
  %v5544 = vmul.f32 %v4855, 0.2
  %v5545 = vmul.f32 %v5305, 0.2
  %v5546 = vmul.f32 %v5307, 0.2
  %v5547 = vmul.f32 %v3955, 0.2
  %v5548 = vmul.f32 %v3957, 0.2
  %v5549 = vmul.f32 %v4407, 0.2
  %v5550 = vmul.f32 %v4409, 0.2
  %v5551 = vmul.f32 %v4859, 0.2
  %v5552 = vmul.f32 %v4861, 0.2
  %v5553 = vmul.f32 %v5311, 0.2
  %v5554 = vmul.f32 %v5313, 0.2
  %v5555 = vmul.f32 %v3959, 0.2
  %v5556 = vmul.f32 %v3961, 0.2
  %v5557 = vmul.f32 %v4411, 0.2
  %v5558 = vmul.f32 %v4413, 0.2
  %v5559 = vmul.f32 %v4863, 0.2
  %v5560 = vmul.f32 %v4865, 0.2
  %v5561 = vmul.f32 %v5315, 0.2
  %v5562 = vmul.f32 %v5317, 0.2
  %v5563 = vmul.f32 %v3965, 0.2
  %v5564 = vmul.f32 %v3967, 0.2
  %v5565 = vmul.f32 %v4417, 0.2
  %v5566 = vmul.f32 %v4419, 0.2
  %v5567 = vmul.f32 %v4869, 0.2
  %v5568 = vmul.f32 %v4871, 0.2
  %v5569 = vmul.f32 %v5321, 0.2
  %v5570 = vmul.f32 %v5323, 0.2
  %v5571 = vmul.f32 %v3969, 0.2
  %v5572 = vmul.f32 %v3971, 0.2
  %v5573 = vmul.f32 %v4421, 0.2
  %v5574 = vmul.f32 %v4423, 0.2
  %v5575 = vmul.f32 %v4873, 0.2
  %v5576 = vmul.f32 %v4875, 0.2
  %v5577 = vmul.f32 %v5325, 0.2
  %v5578 = vmul.f32 %v5327, 0.2
  %v5579 = vmul.f32 %v3975, 0.2
  %v5580 = vmul.f32 %v3977, 0.2
  %v5581 = vmul.f32 %v4427, 0.2
  %v5582 = vmul.f32 %v4429, 0.2
  %v5583 = vmul.f32 %v4879, 0.2
  %v5584 = vmul.f32 %v4881, 0.2
  %v5585 = vmul.f32 %v5331, 0.2
  %v5586 = vmul.f32 %v5333, 0.2
  %v5587 = vmul.f32 %v3979, 0.2
  %v5588 = vmul.f32 %v3981, 0.2
  %v5589 = vmul.f32 %v4431, 0.2
  %v5590 = vmul.f32 %v4433, 0.2
  %v5591 = vmul.f32 %v4883, 0.2
  %v5592 = vmul.f32 %v4885, 0.2
  %v5593 = vmul.f32 %v5335, 0.2
  %v5594 = vmul.f32 %v5337, 0.2
  %v5595 = vsel %vm5339, %v3905, %v5467
  %v5596 = vsel %vm5340, %v3907, %v5468
  %v5597 = vsel %vm5341, %v4357, %v5469
  %v5598 = vsel %vm5342, %v4359, %v5470
  %v5599 = vsel %vm5343, %v4809, %v5471
  %v5600 = vsel %vm5344, %v4811, %v5472
  %v5601 = vsel %vm5345, %v5261, %v5473
  %v5602 = vsel %vm5346, %v5263, %v5474
  %v5603 = vsel %vm5347, %v3909, %v5475
  %v5604 = vsel %vm5348, %v3911, %v5476
  %v5605 = vsel %vm5349, %v4361, %v5477
  %v5606 = vsel %vm5350, %v4363, %v5478
  %v5607 = vsel %vm5351, %v4813, %v5479
  %v5608 = vsel %vm5352, %v4815, %v5480
  %v5609 = vsel %vm5353, %v5265, %v5481
  %v5610 = vsel %vm5354, %v5267, %v5482
  %v5611 = vsel %vm5355, %v3915, %v5483
  %v5612 = vsel %vm5356, %v3917, %v5484
  %v5613 = vsel %vm5357, %v4367, %v5485
  %v5614 = vsel %vm5358, %v4369, %v5486
  %v5615 = vsel %vm5359, %v4819, %v5487
  %v5616 = vsel %vm5360, %v4821, %v5488
  %v5617 = vsel %vm5361, %v5271, %v5489
  %v5618 = vsel %vm5362, %v5273, %v5490
  %v5619 = vsel %vm5363, %v3919, %v5491
  %v5620 = vsel %vm5364, %v3921, %v5492
  %v5621 = vsel %vm5365, %v4371, %v5493
  %v5622 = vsel %vm5366, %v4373, %v5494
  %v5623 = vsel %vm5367, %v4823, %v5495
  %v5624 = vsel %vm5368, %v4825, %v5496
  %v5625 = vsel %vm5369, %v5275, %v5497
  %v5626 = vsel %vm5370, %v5277, %v5498
  %v5627 = vsel %vm5371, %v3925, %v5499
  %v5628 = vsel %vm5372, %v3927, %v5500
  %v5629 = vsel %vm5373, %v4377, %v5501
  %v5630 = vsel %vm5374, %v4379, %v5502
  %v5631 = vsel %vm5375, %v4829, %v5503
  %v5632 = vsel %vm5376, %v4831, %v5504
  %v5633 = vsel %vm5377, %v5281, %v5505
  %v5634 = vsel %vm5378, %v5283, %v5506
  %v5635 = vsel %vm5379, %v3929, %v5507
  %v5636 = vsel %vm5380, %v3931, %v5508
  %v5637 = vsel %vm5381, %v4381, %v5509
  %v5638 = vsel %vm5382, %v4383, %v5510
  %v5639 = vsel %vm5383, %v4833, %v5511
  %v5640 = vsel %vm5384, %v4835, %v5512
  %v5641 = vsel %vm5385, %v5285, %v5513
  %v5642 = vsel %vm5386, %v5287, %v5514
  %v5643 = vsel %vm5387, %v3935, %v5515
  %v5644 = vsel %vm5388, %v3937, %v5516
  %v5645 = vsel %vm5389, %v4387, %v5517
  %v5646 = vsel %vm5390, %v4389, %v5518
  %v5647 = vsel %vm5391, %v4839, %v5519
  %v5648 = vsel %vm5392, %v4841, %v5520
  %v5649 = vsel %vm5393, %v5291, %v5521
  %v5650 = vsel %vm5394, %v5293, %v5522
  %v5651 = vsel %vm5395, %v3939, %v5523
  %v5652 = vsel %vm5396, %v3941, %v5524
  %v5653 = vsel %vm5397, %v4391, %v5525
  %v5654 = vsel %vm5398, %v4393, %v5526
  %v5655 = vsel %vm5399, %v4843, %v5527
  %v5656 = vsel %vm5400, %v4845, %v5528
  %v5657 = vsel %vm5401, %v5295, %v5529
  %v5658 = vsel %vm5402, %v5297, %v5530
  %v5659 = vsel %vm5403, %v3945, %v5531
  %v5660 = vsel %vm5404, %v3947, %v5532
  %v5661 = vsel %vm5405, %v4397, %v5533
  %v5662 = vsel %vm5406, %v4399, %v5534
  %v5663 = vsel %vm5407, %v4849, %v5535
  %v5664 = vsel %vm5408, %v4851, %v5536
  %v5665 = vsel %vm5409, %v5301, %v5537
  %v5666 = vsel %vm5410, %v5303, %v5538
  %v5667 = vsel %vm5411, %v3949, %v5539
  %v5668 = vsel %vm5412, %v3951, %v5540
  %v5669 = vsel %vm5413, %v4401, %v5541
  %v5670 = vsel %vm5414, %v4403, %v5542
  %v5671 = vsel %vm5415, %v4853, %v5543
  %v5672 = vsel %vm5416, %v4855, %v5544
  %v5673 = vsel %vm5417, %v5305, %v5545
  %v5674 = vsel %vm5418, %v5307, %v5546
  %v5675 = vsel %vm5419, %v3955, %v5547
  %v5676 = vsel %vm5420, %v3957, %v5548
  %v5677 = vsel %vm5421, %v4407, %v5549
  %v5678 = vsel %vm5422, %v4409, %v5550
  %v5679 = vsel %vm5423, %v4859, %v5551
  %v5680 = vsel %vm5424, %v4861, %v5552
  %v5681 = vsel %vm5425, %v5311, %v5553
  %v5682 = vsel %vm5426, %v5313, %v5554
  %v5683 = vsel %vm5427, %v3959, %v5555
  %v5684 = vsel %vm5428, %v3961, %v5556
  %v5685 = vsel %vm5429, %v4411, %v5557
  %v5686 = vsel %vm5430, %v4413, %v5558
  %v5687 = vsel %vm5431, %v4863, %v5559
  %v5688 = vsel %vm5432, %v4865, %v5560
  %v5689 = vsel %vm5433, %v5315, %v5561
  %v5690 = vsel %vm5434, %v5317, %v5562
  %v5691 = vsel %vm5435, %v3965, %v5563
  %v5692 = vsel %vm5436, %v3967, %v5564
  %v5693 = vsel %vm5437, %v4417, %v5565
  %v5694 = vsel %vm5438, %v4419, %v5566
  %v5695 = vsel %vm5439, %v4869, %v5567
  %v5696 = vsel %vm5440, %v4871, %v5568
  %v5697 = vsel %vm5441, %v5321, %v5569
  %v5698 = vsel %vm5442, %v5323, %v5570
  %v5699 = vsel %vm5443, %v3969, %v5571
  %v5700 = vsel %vm5444, %v3971, %v5572
  %v5701 = vsel %vm5445, %v4421, %v5573
  %v5702 = vsel %vm5446, %v4423, %v5574
  %v5703 = vsel %vm5447, %v4873, %v5575
  %v5704 = vsel %vm5448, %v4875, %v5576
  %v5705 = vsel %vm5449, %v5325, %v5577
  %v5706 = vsel %vm5450, %v5327, %v5578
  %v5707 = vsel %vm5451, %v3975, %v5579
  %v5708 = vsel %vm5452, %v3977, %v5580
  %v5709 = vsel %vm5453, %v4427, %v5581
  %v5710 = vsel %vm5454, %v4429, %v5582
  %v5711 = vsel %vm5455, %v4879, %v5583
  %v5712 = vsel %vm5456, %v4881, %v5584
  %v5713 = vsel %vm5457, %v5331, %v5585
  %v5714 = vsel %vm5458, %v5333, %v5586
  %v5715 = vsel %vm5459, %v3979, %v5587
  %v5716 = vsel %vm5460, %v3981, %v5588
  %v5717 = vsel %vm5461, %v4431, %v5589
  %v5718 = vsel %vm5462, %v4433, %v5590
  %v5719 = vsel %vm5463, %v4883, %v5591
  %v5720 = vsel %vm5464, %v4885, %v5592
  %v5721 = vsel %vm5465, %v5335, %v5593
  %v5722 = vsel %vm5466, %v5337, %v5594
  %v5723 = vpack.c.bf16 %v5603, %v5595
  %v5724 = vpack.c.bf16 %v5604, %v5596
  %v5725 = vpack.c.bf16 %v5605, %v5597
  %v5726 = vpack.c.bf16 %v5606, %v5598
  %v5727 = vpack.c.bf16 %v5607, %v5599
  %v5728 = vpack.c.bf16 %v5608, %v5600
  %v5729 = vpack.c.bf16 %v5609, %v5601
  %v5730 = vpack.c.bf16 %v5610, %v5602
  %v5731 = vpack.c.bf16 %v5619, %v5611
  %v5732 = vpack.c.bf16 %v5620, %v5612
  %v5733 = vpack.c.bf16 %v5621, %v5613
  %v5734 = vpack.c.bf16 %v5622, %v5614
  %v5735 = vpack.c.bf16 %v5623, %v5615
  %v5736 = vpack.c.bf16 %v5624, %v5616
  %v5737 = vpack.c.bf16 %v5625, %v5617
  %v5738 = vpack.c.bf16 %v5626, %v5618
  %v5739 = vpack.c.bf16 %v5635, %v5627
  %v5740 = vpack.c.bf16 %v5636, %v5628
  %v5741 = vpack.c.bf16 %v5637, %v5629
  %v5742 = vpack.c.bf16 %v5638, %v5630
  %v5743 = vpack.c.bf16 %v5639, %v5631
  %v5744 = vpack.c.bf16 %v5640, %v5632
  %v5745 = vpack.c.bf16 %v5641, %v5633
  %v5746 = vpack.c.bf16 %v5642, %v5634
  %v5747 = vpack.c.bf16 %v5651, %v5643
  %v5748 = vpack.c.bf16 %v5652, %v5644
  %v5749 = vpack.c.bf16 %v5653, %v5645
  %v5750 = vpack.c.bf16 %v5654, %v5646
  %v5751 = vpack.c.bf16 %v5655, %v5647
  %v5752 = vpack.c.bf16 %v5656, %v5648
  %v5753 = vpack.c.bf16 %v5657, %v5649
  %v5754 = vpack.c.bf16 %v5658, %v5650
  %v5755 = vpack.c.bf16 %v5667, %v5659
  %v5756 = vpack.c.bf16 %v5668, %v5660
  %v5757 = vpack.c.bf16 %v5669, %v5661
  %v5758 = vpack.c.bf16 %v5670, %v5662
  %v5759 = vpack.c.bf16 %v5671, %v5663
  %v5760 = vpack.c.bf16 %v5672, %v5664
  %v5761 = vpack.c.bf16 %v5673, %v5665
  %v5762 = vpack.c.bf16 %v5674, %v5666
  %v5763 = vpack.c.bf16 %v5683, %v5675
  %v5764 = vpack.c.bf16 %v5684, %v5676
  %v5765 = vpack.c.bf16 %v5685, %v5677
  %v5766 = vpack.c.bf16 %v5686, %v5678
  %v5767 = vpack.c.bf16 %v5687, %v5679
  %v5768 = vpack.c.bf16 %v5688, %v5680
  %v5769 = vpack.c.bf16 %v5689, %v5681
  %v5770 = vpack.c.bf16 %v5690, %v5682
  %v5771 = vpack.c.bf16 %v5699, %v5691
  %v5772 = vpack.c.bf16 %v5700, %v5692
  %v5773 = vpack.c.bf16 %v5701, %v5693
  %v5774 = vpack.c.bf16 %v5702, %v5694
  %v5775 = vpack.c.bf16 %v5703, %v5695
  %v5776 = vpack.c.bf16 %v5704, %v5696
  %v5777 = vpack.c.bf16 %v5705, %v5697
  %v5778 = vpack.c.bf16 %v5706, %v5698
  %v5779 = vpack.c.bf16 %v5715, %v5707
  %v5780 = vpack.c.bf16 %v5716, %v5708
  %v5781 = vpack.c.bf16 %v5717, %v5709
  %v5782 = vpack.c.bf16 %v5718, %v5710
  %v5783 = vpack.c.bf16 %v5719, %v5711
  %v5784 = vpack.c.bf16 %v5720, %v5712
  %v5785 = vpack.c.bf16 %v5721, %v5713
  %v5786 = vpack.c.bf16 %v5722, %v5714
  %v5787 = vld [vmem:[%s3] sm:$0xff]
  %v5788 = vld [vmem:[%s3 + $0x8] sm:$0xff]
  %v5789 = vld [vmem:[%s3 + $0x10] sm:$0xff]
  %v5790 = vld [vmem:[%s3 + $0x18] sm:$0xff]
  %v5791 = vld [vmem:[%s3 + $0x20] sm:$0xff]
  %v5792 = vld [vmem:[%s3 + $0x28] sm:$0xff]
  %v5793 = vld [vmem:[%s3 + $0x30] sm:$0xff]
  %v5794 = vld [vmem:[%s3 + $0x38] sm:$0xff]
  %v5795 = vld [vmem:[%s3 + $0x40] sm:$0xff]
  %v5796 = vld [vmem:[%s3 + $0x48] sm:$0xff]
  %v5797 = vld [vmem:[%s3 + $0x50] sm:$0xff]
  %v5798 = vld [vmem:[%s3 + $0x58] sm:$0xff]
  %v5799 = vld [vmem:[%s3 + $0x60] sm:$0xff]
  %v5800 = vld [vmem:[%s3 + $0x68] sm:$0xff]
  %v5801 = vld [vmem:[%s3 + $0x70] sm:$0xff]
  %v5802 = vld [vmem:[%s3 + $0x78] sm:$0xff]
  %v5803 = vld [vmem:[%s3 + $0x80] sm:$0xff]
  %v5804 = vld [vmem:[%s3 + $0x88] sm:$0xff]
  %v5805 = vld [vmem:[%s3 + $0x90] sm:$0xff]
  %v5806 = vld [vmem:[%s3 + $0x98] sm:$0xff]
  %v5807 = vld [vmem:[%s3 + $0xa0] sm:$0xff]
  %v5808 = vld [vmem:[%s3 + $0xa8] sm:$0xff]
  %v5809 = vld [vmem:[%s3 + $0xb0] sm:$0xff]
  %v5810 = vld [vmem:[%s3 + $0xb8] sm:$0xff]
  %v5811 = vld [vmem:[%s3 + $0xc0] sm:$0xff]
  %v5812 = vld [vmem:[%s3 + $0xc8] sm:$0xff]
  %v5813 = vld [vmem:[%s3 + $0xd0] sm:$0xff]
  %v5814 = vld [vmem:[%s3 + $0xd8] sm:$0xff]
  %v5815 = vld [vmem:[%s3 + $0xe0] sm:$0xff]
  %v5816 = vld [vmem:[%s3 + $0xe8] sm:$0xff]
  %v5817 = vld [vmem:[%s3 + $0xf0] sm:$0xff]
  %v5818 = vld [vmem:[%s3 + $0xf8] sm:$0xff]
  %v5819 = vld [vmem:[%s3 + $0x100] sm:$0xff]
  %v5820 = vld [vmem:[%s3 + $0x108] sm:$0xff]
  %v5821 = vld [vmem:[%s3 + $0x110] sm:$0xff]
  %v5822 = vld [vmem:[%s3 + $0x118] sm:$0xff]
  %v5823 = vld [vmem:[%s3 + $0x120] sm:$0xff]
  %v5824 = vld [vmem:[%s3 + $0x128] sm:$0xff]
  %v5825 = vld [vmem:[%s3 + $0x130] sm:$0xff]
  %v5826 = vld [vmem:[%s3 + $0x138] sm:$0xff]
  %v5827 = vld [vmem:[%s3 + $0x140] sm:$0xff]
  %v5828 = vld [vmem:[%s3 + $0x148] sm:$0xff]
  %v5829 = vld [vmem:[%s3 + $0x150] sm:$0xff]
  %v5830 = vld [vmem:[%s3 + $0x158] sm:$0xff]
  %v5831 = vld [vmem:[%s3 + $0x160] sm:$0xff]
  %v5832 = vld [vmem:[%s3 + $0x168] sm:$0xff]
  %v5833 = vld [vmem:[%s3 + $0x170] sm:$0xff]
  %v5834 = vld [vmem:[%s3 + $0x178] sm:$0xff]
  %v5835 = vld [vmem:[%s3 + $0x180] sm:$0xff]
  %v5836 = vld [vmem:[%s3 + $0x188] sm:$0xff]
  %v5837 = vld [vmem:[%s3 + $0x190] sm:$0xff]
  %v5838 = vld [vmem:[%s3 + $0x198] sm:$0xff]
  %v5839 = vld [vmem:[%s3 + $0x1a0] sm:$0xff]
  %v5840 = vld [vmem:[%s3 + $0x1a8] sm:$0xff]
  %v5841 = vld [vmem:[%s3 + $0x1b0] sm:$0xff]
  %v5842 = vld [vmem:[%s3 + $0x1b8] sm:$0xff]
  %v5843 = vld [vmem:[%s3 + $0x1c0] sm:$0xff]
  %v5844 = vld [vmem:[%s3 + $0x1c8] sm:$0xff]
  %v5845 = vld [vmem:[%s3 + $0x1d0] sm:$0xff]
  %v5846 = vld [vmem:[%s3 + $0x1d8] sm:$0xff]
  %v5847 = vld [vmem:[%s3 + $0x1e0] sm:$0xff]
  %v5848 = vld [vmem:[%s3 + $0x1e8] sm:$0xff]
  %v5849 = vld [vmem:[%s3 + $0x1f0] sm:$0xff]
  %v5850 = vld [vmem:[%s3 + $0x1f8] sm:$0xff]
  %v5851 = vld [vmem:[%s3 + $0x200] sm:$0xff]
  %v5852 = vld [vmem:[%s3 + $0x208] sm:$0xff]
  %v5853 = vld [vmem:[%s3 + $0x210] sm:$0xff]
  %v5854 = vld [vmem:[%s3 + $0x218] sm:$0xff]
  %v5855 = vld [vmem:[%s3 + $0x220] sm:$0xff]
  %v5856 = vld [vmem:[%s3 + $0x228] sm:$0xff]
  %v5857 = vld [vmem:[%s3 + $0x230] sm:$0xff]
  %v5858 = vld [vmem:[%s3 + $0x238] sm:$0xff]
  %v5859 = vld [vmem:[%s3 + $0x240] sm:$0xff]
  %v5860 = vld [vmem:[%s3 + $0x248] sm:$0xff]
  %v5861 = vld [vmem:[%s3 + $0x250] sm:$0xff]
  %v5862 = vld [vmem:[%s3 + $0x258] sm:$0xff]
  %v5863 = vld [vmem:[%s3 + $0x260] sm:$0xff]
  %v5864 = vld [vmem:[%s3 + $0x268] sm:$0xff]
  %v5865 = vld [vmem:[%s3 + $0x270] sm:$0xff]
  %v5866 = vld [vmem:[%s3 + $0x278] sm:$0xff]
  %v5867 = vld [vmem:[%s3 + $0x280] sm:$0xff]
  %v5868 = vld [vmem:[%s3 + $0x288] sm:$0xff]
  %v5869 = vld [vmem:[%s3 + $0x290] sm:$0xff]
  %v5870 = vld [vmem:[%s3 + $0x298] sm:$0xff]
  %v5871 = vld [vmem:[%s3 + $0x2a0] sm:$0xff]
  %v5872 = vld [vmem:[%s3 + $0x2a8] sm:$0xff]
  %v5873 = vld [vmem:[%s3 + $0x2b0] sm:$0xff]
  %v5874 = vld [vmem:[%s3 + $0x2b8] sm:$0xff]
  %v5875 = vld [vmem:[%s3 + $0x2c0] sm:$0xff]
  %v5876 = vld [vmem:[%s3 + $0x2c8] sm:$0xff]
  %v5877 = vld [vmem:[%s3 + $0x2d0] sm:$0xff]
  %v5878 = vld [vmem:[%s3 + $0x2d8] sm:$0xff]
  %v5879 = vld [vmem:[%s3 + $0x2e0] sm:$0xff]
  %v5880 = vld [vmem:[%s3 + $0x2e8] sm:$0xff]
  %v5881 = vld [vmem:[%s3 + $0x2f0] sm:$0xff]
  %v5882 = vld [vmem:[%s3 + $0x2f8] sm:$0xff]
  %v5883 = vld [vmem:[%s3 + $0x300] sm:$0xff]
  %v5884 = vld [vmem:[%s3 + $0x308] sm:$0xff]
  %v5885 = vld [vmem:[%s3 + $0x310] sm:$0xff]
  %v5886 = vld [vmem:[%s3 + $0x318] sm:$0xff]
  %v5887 = vld [vmem:[%s3 + $0x320] sm:$0xff]
  %v5888 = vld [vmem:[%s3 + $0x328] sm:$0xff]
  %v5889 = vld [vmem:[%s3 + $0x330] sm:$0xff]
  %v5890 = vld [vmem:[%s3 + $0x338] sm:$0xff]
  %v5891 = vld [vmem:[%s3 + $0x340] sm:$0xff]
  %v5892 = vld [vmem:[%s3 + $0x348] sm:$0xff]
  %v5893 = vld [vmem:[%s3 + $0x350] sm:$0xff]
  %v5894 = vld [vmem:[%s3 + $0x358] sm:$0xff]
  %v5895 = vld [vmem:[%s3 + $0x360] sm:$0xff]
  %v5896 = vld [vmem:[%s3 + $0x368] sm:$0xff]
  %v5897 = vld [vmem:[%s3 + $0x370] sm:$0xff]
  %v5898 = vld [vmem:[%s3 + $0x378] sm:$0xff]
  %v5899 = vld [vmem:[%s3 + $0x380] sm:$0xff]
  %v5900 = vld [vmem:[%s3 + $0x388] sm:$0xff]
  %v5901 = vld [vmem:[%s3 + $0x390] sm:$0xff]
  %v5902 = vld [vmem:[%s3 + $0x398] sm:$0xff]
  %v5903 = vld [vmem:[%s3 + $0x3a0] sm:$0xff]
  %v5904 = vld [vmem:[%s3 + $0x3a8] sm:$0xff]
  %v5905 = vld [vmem:[%s3 + $0x3b0] sm:$0xff]
  %v5906 = vld [vmem:[%s3 + $0x3b8] sm:$0xff]
  %v5907 = vld [vmem:[%s3 + $0x3c0] sm:$0xff]
  %v5908 = vld [vmem:[%s3 + $0x3c8] sm:$0xff]
  %v5909 = vld [vmem:[%s3 + $0x3d0] sm:$0xff]
  %v5910 = vld [vmem:[%s3 + $0x3d8] sm:$0xff]
  %v5911 = vld [vmem:[%s3 + $0x3e0] sm:$0xff]
  %v5912 = vld [vmem:[%s3 + $0x3e8] sm:$0xff]
  %v5913 = vld [vmem:[%s3 + $0x3f0] sm:$0xff]
  %v5914 = vld [vmem:[%s3 + $0x3f8] sm:$0xff]
  %v5915 = vld [vmem:[%s3 + $0x400] sm:$0xff]
  %v5916 = vld [vmem:[%s3 + $0x408] sm:$0xff]
  %v5917 = vld [vmem:[%s3 + $0x410] sm:$0xff]
  %v5918 = vld [vmem:[%s3 + $0x418] sm:$0xff]
  %v5919 = vld [vmem:[%s3 + $0x420] sm:$0xff]
  %v5920 = vld [vmem:[%s3 + $0x428] sm:$0xff]
  %v5921 = vld [vmem:[%s3 + $0x430] sm:$0xff]
  %v5922 = vld [vmem:[%s3 + $0x438] sm:$0xff]
  %v5923 = vld [vmem:[%s3 + $0x440] sm:$0xff]
  %v5924 = vld [vmem:[%s3 + $0x448] sm:$0xff]
  %v5925 = vld [vmem:[%s3 + $0x450] sm:$0xff]
  %v5926 = vld [vmem:[%s3 + $0x458] sm:$0xff]
  %v5927 = vld [vmem:[%s3 + $0x460] sm:$0xff]
  %v5928 = vld [vmem:[%s3 + $0x468] sm:$0xff]
  %v5929 = vld [vmem:[%s3 + $0x470] sm:$0xff]
  %v5930 = vld [vmem:[%s3 + $0x478] sm:$0xff]
  %v5931 = vld [vmem:[%s3 + $0x480] sm:$0xff]
  %v5932 = vld [vmem:[%s3 + $0x488] sm:$0xff]
  %v5933 = vld [vmem:[%s3 + $0x490] sm:$0xff]
  %v5934 = vld [vmem:[%s3 + $0x498] sm:$0xff]
  %v5935 = vld [vmem:[%s3 + $0x4a0] sm:$0xff]
  %v5936 = vld [vmem:[%s3 + $0x4a8] sm:$0xff]
  %v5937 = vld [vmem:[%s3 + $0x4b0] sm:$0xff]
  %v5938 = vld [vmem:[%s3 + $0x4b8] sm:$0xff]
  %v5939 = vld [vmem:[%s3 + $0x4c0] sm:$0xff]
  %v5940 = vld [vmem:[%s3 + $0x4c8] sm:$0xff]
  %v5941 = vld [vmem:[%s3 + $0x4d0] sm:$0xff]
  %v5942 = vld [vmem:[%s3 + $0x4d8] sm:$0xff]
  %v5943 = vld [vmem:[%s3 + $0x4e0] sm:$0xff]
  %v5944 = vld [vmem:[%s3 + $0x4e8] sm:$0xff]
  %v5945 = vld [vmem:[%s3 + $0x4f0] sm:$0xff]
  %v5946 = vld [vmem:[%s3 + $0x4f8] sm:$0xff]
  %v5947 = vld [vmem:[%s3 + $0x500] sm:$0xff]
  %v5948 = vld [vmem:[%s3 + $0x508] sm:$0xff]
  %v5949 = vld [vmem:[%s3 + $0x510] sm:$0xff]
  %v5950 = vld [vmem:[%s3 + $0x518] sm:$0xff]
  %v5951 = vld [vmem:[%s3 + $0x520] sm:$0xff]
  %v5952 = vld [vmem:[%s3 + $0x528] sm:$0xff]
  %v5953 = vld [vmem:[%s3 + $0x530] sm:$0xff]
  %v5954 = vld [vmem:[%s3 + $0x538] sm:$0xff]
  %v5955 = vld [vmem:[%s3 + $0x540] sm:$0xff]
  %v5956 = vld [vmem:[%s3 + $0x548] sm:$0xff]
  %v5957 = vld [vmem:[%s3 + $0x550] sm:$0xff]
  %v5958 = vld [vmem:[%s3 + $0x558] sm:$0xff]
  %v5959 = vld [vmem:[%s3 + $0x560] sm:$0xff]
  %v5960 = vld [vmem:[%s3 + $0x568] sm:$0xff]
  %v5961 = vld [vmem:[%s3 + $0x570] sm:$0xff]
  %v5962 = vld [vmem:[%s3 + $0x578] sm:$0xff]
  %v5963 = vld [vmem:[%s3 + $0x580] sm:$0xff]
  %v5964 = vld [vmem:[%s3 + $0x588] sm:$0xff]
  %v5965 = vld [vmem:[%s3 + $0x590] sm:$0xff]
  %v5966 = vld [vmem:[%s3 + $0x598] sm:$0xff]
  %v5967 = vld [vmem:[%s3 + $0x5a0] sm:$0xff]
  %v5968 = vld [vmem:[%s3 + $0x5a8] sm:$0xff]
  %v5969 = vld [vmem:[%s3 + $0x5b0] sm:$0xff]
  %v5970 = vld [vmem:[%s3 + $0x5b8] sm:$0xff]
  %v5971 = vld [vmem:[%s3 + $0x5c0] sm:$0xff]
  %v5972 = vld [vmem:[%s3 + $0x5c8] sm:$0xff]
  %v5973 = vld [vmem:[%s3 + $0x5d0] sm:$0xff]
  %v5974 = vld [vmem:[%s3 + $0x5d8] sm:$0xff]
  %v5975 = vld [vmem:[%s3 + $0x5e0] sm:$0xff]
  %v5976 = vld [vmem:[%s3 + $0x5e8] sm:$0xff]
  %v5977 = vld [vmem:[%s3 + $0x5f0] sm:$0xff]
  %v5978 = vld [vmem:[%s3 + $0x5f8] sm:$0xff]
  %v5979 = vld [vmem:[%s3 + $0x600] sm:$0xff]
  %v5980 = vld [vmem:[%s3 + $0x608] sm:$0xff]
  %v5981 = vld [vmem:[%s3 + $0x610] sm:$0xff]
  %v5982 = vld [vmem:[%s3 + $0x618] sm:$0xff]
  %v5983 = vld [vmem:[%s3 + $0x620] sm:$0xff]
  %v5984 = vld [vmem:[%s3 + $0x628] sm:$0xff]
  %v5985 = vld [vmem:[%s3 + $0x630] sm:$0xff]
  %v5986 = vld [vmem:[%s3 + $0x638] sm:$0xff]
  %v5987 = vld [vmem:[%s3 + $0x640] sm:$0xff]
  %v5988 = vld [vmem:[%s3 + $0x648] sm:$0xff]
  %v5989 = vld [vmem:[%s3 + $0x650] sm:$0xff]
  %v5990 = vld [vmem:[%s3 + $0x658] sm:$0xff]
  %v5991 = vld [vmem:[%s3 + $0x660] sm:$0xff]
  %v5992 = vld [vmem:[%s3 + $0x668] sm:$0xff]
  %v5993 = vld [vmem:[%s3 + $0x670] sm:$0xff]
  %v5994 = vld [vmem:[%s3 + $0x678] sm:$0xff]
  %v5995 = vld [vmem:[%s3 + $0x680] sm:$0xff]
  %v5996 = vld [vmem:[%s3 + $0x688] sm:$0xff]
  %v5997 = vld [vmem:[%s3 + $0x690] sm:$0xff]
  %v5998 = vld [vmem:[%s3 + $0x698] sm:$0xff]
  %v5999 = vld [vmem:[%s3 + $0x6a0] sm:$0xff]
  %v6000 = vld [vmem:[%s3 + $0x6a8] sm:$0xff]
  %v6001 = vld [vmem:[%s3 + $0x6b0] sm:$0xff]
  %v6002 = vld [vmem:[%s3 + $0x6b8] sm:$0xff]
  %v6003 = vld [vmem:[%s3 + $0x6c0] sm:$0xff]
  %v6004 = vld [vmem:[%s3 + $0x6c8] sm:$0xff]
  %v6005 = vld [vmem:[%s3 + $0x6d0] sm:$0xff]
  %v6006 = vld [vmem:[%s3 + $0x6d8] sm:$0xff]
  %v6007 = vld [vmem:[%s3 + $0x6e0] sm:$0xff]
  %v6008 = vld [vmem:[%s3 + $0x6e8] sm:$0xff]
  %v6009 = vld [vmem:[%s3 + $0x6f0] sm:$0xff]
  %v6010 = vld [vmem:[%s3 + $0x6f8] sm:$0xff]
  %v6011 = vld [vmem:[%s3 + $0x700] sm:$0xff]
  %v6012 = vld [vmem:[%s3 + $0x708] sm:$0xff]
  %v6013 = vld [vmem:[%s3 + $0x710] sm:$0xff]
  %v6014 = vld [vmem:[%s3 + $0x718] sm:$0xff]
  %v6015 = vld [vmem:[%s3 + $0x720] sm:$0xff]
  %v6016 = vld [vmem:[%s3 + $0x728] sm:$0xff]
  %v6017 = vld [vmem:[%s3 + $0x730] sm:$0xff]
  %v6018 = vld [vmem:[%s3 + $0x738] sm:$0xff]
  %v6019 = vld [vmem:[%s3 + $0x740] sm:$0xff]
  %v6020 = vld [vmem:[%s3 + $0x748] sm:$0xff]
  %v6021 = vld [vmem:[%s3 + $0x750] sm:$0xff]
  %v6022 = vld [vmem:[%s3 + $0x758] sm:$0xff]
  %v6023 = vld [vmem:[%s3 + $0x760] sm:$0xff]
  %v6024 = vld [vmem:[%s3 + $0x768] sm:$0xff]
  %v6025 = vld [vmem:[%s3 + $0x770] sm:$0xff]
  %v6026 = vld [vmem:[%s3 + $0x778] sm:$0xff]
  %v6027 = vld [vmem:[%s3 + $0x780] sm:$0xff]
  %v6028 = vld [vmem:[%s3 + $0x788] sm:$0xff]
  %v6029 = vld [vmem:[%s3 + $0x790] sm:$0xff]
  %v6030 = vld [vmem:[%s3 + $0x798] sm:$0xff]
  %v6031 = vld [vmem:[%s3 + $0x7a0] sm:$0xff]
  %v6032 = vld [vmem:[%s3 + $0x7a8] sm:$0xff]
  %v6033 = vld [vmem:[%s3 + $0x7b0] sm:$0xff]
  %v6034 = vld [vmem:[%s3 + $0x7b8] sm:$0xff]
  %v6035 = vld [vmem:[%s3 + $0x7c0] sm:$0xff]
  %v6036 = vld [vmem:[%s3 + $0x7c8] sm:$0xff]
  %v6037 = vld [vmem:[%s3 + $0x7d0] sm:$0xff]
  %v6038 = vld [vmem:[%s3 + $0x7d8] sm:$0xff]
  %v6039 = vld [vmem:[%s3 + $0x7e0] sm:$0xff]
  %v6040 = vld [vmem:[%s3 + $0x7e8] sm:$0xff]
  %v6041 = vld [vmem:[%s3 + $0x7f0] sm:$0xff]
  %v6042 = vld [vmem:[%s3 + $0x7f8] sm:$0xff]
  %v6043 = vld [vmem:[%s4] sm:$0xf]
  %v6045 = vlaneseq
  %v6046 = vshrl.u32 %v6045, 7
  %v6047 = vsub.s32 0, %v6046
  %v6048 = vrot.slane %v6043, %v6047
  %v6049 = vlaneseq
  %v6050 = vshrl.u32 %v6049, 7
  %v6051 = vsub.s32 1, %v6050
  %v6052 = vrot.slane %v6043, %v6051
  %v6053 = vlaneseq
  %v6054 = vshrl.u32 %v6053, 7
  %v6055 = vsub.s32 2, %v6054
  %v6056 = vrot.slane %v6043, %v6055
  %v6057 = vlaneseq
  %v6058 = vshrl.u32 %v6057, 7
  %v6059 = vsub.s32 3, %v6058
  %v6060 = vrot.slane %v6043, %v6059
  %v6321 = vunpack.c.l.b16 %v5787
  %v6322 = vunpack.c.h.b16 %v5787
  %v6323 = vunpack.c.l.b16 %v5788
  %v6324 = vunpack.c.h.b16 %v5788
  %v6325 = vunpack.c.l.b16 %v5789
  %v6326 = vunpack.c.h.b16 %v5789
  %v6327 = vunpack.c.l.b16 %v5790
  %v6328 = vunpack.c.h.b16 %v5790
  %v6329 = vunpack.c.l.b16 %v5791
  %v6330 = vunpack.c.h.b16 %v5791
  %v6331 = vunpack.c.l.b16 %v5792
  %v6332 = vunpack.c.h.b16 %v5792
  %v6333 = vunpack.c.l.b16 %v5793
  %v6334 = vunpack.c.h.b16 %v5793
  %v6335 = vunpack.c.l.b16 %v5794
  %v6336 = vunpack.c.h.b16 %v5794
  %v6337 = vunpack.c.l.b16 %v5795
  %v6338 = vunpack.c.h.b16 %v5795
  %v6339 = vunpack.c.l.b16 %v5796
  %v6340 = vunpack.c.h.b16 %v5796
  %v6341 = vunpack.c.l.b16 %v5797
  %v6342 = vunpack.c.h.b16 %v5797
  %v6343 = vunpack.c.l.b16 %v5798
  %v6344 = vunpack.c.h.b16 %v5798
  %v6345 = vunpack.c.l.b16 %v5799
  %v6346 = vunpack.c.h.b16 %v5799
  %v6347 = vunpack.c.l.b16 %v5800
  %v6348 = vunpack.c.h.b16 %v5800
  %v6349 = vunpack.c.l.b16 %v5801
  %v6350 = vunpack.c.h.b16 %v5801
  %v6351 = vunpack.c.l.b16 %v5802
  %v6352 = vunpack.c.h.b16 %v5802
  %v6353 = vunpack.c.l.b16 %v5803
  %v6354 = vunpack.c.h.b16 %v5803
  %v6355 = vunpack.c.l.b16 %v5804
  %v6356 = vunpack.c.h.b16 %v5804
  %v6357 = vunpack.c.l.b16 %v5805
  %v6358 = vunpack.c.h.b16 %v5805
  %v6359 = vunpack.c.l.b16 %v5806
  %v6360 = vunpack.c.h.b16 %v5806
  %v6361 = vunpack.c.l.b16 %v5807
  %v6362 = vunpack.c.h.b16 %v5807
  %v6363 = vunpack.c.l.b16 %v5808
  %v6364 = vunpack.c.h.b16 %v5808
  %v6365 = vunpack.c.l.b16 %v5809
  %v6366 = vunpack.c.h.b16 %v5809
  %v6367 = vunpack.c.l.b16 %v5810
  %v6368 = vunpack.c.h.b16 %v5810
  %v6369 = vunpack.c.l.b16 %v5811
  %v6370 = vunpack.c.h.b16 %v5811
  %v6371 = vunpack.c.l.b16 %v5812
  %v6372 = vunpack.c.h.b16 %v5812
  %v6373 = vunpack.c.l.b16 %v5813
  %v6374 = vunpack.c.h.b16 %v5813
  %v6375 = vunpack.c.l.b16 %v5814
  %v6376 = vunpack.c.h.b16 %v5814
  %v6377 = vunpack.c.l.b16 %v5815
  %v6378 = vunpack.c.h.b16 %v5815
  %v6379 = vunpack.c.l.b16 %v5816
  %v6380 = vunpack.c.h.b16 %v5816
  %v6381 = vunpack.c.l.b16 %v5817
  %v6382 = vunpack.c.h.b16 %v5817
  %v6383 = vunpack.c.l.b16 %v5818
  %v6384 = vunpack.c.h.b16 %v5818
  %v6385 = vunpack.c.l.b16 %v5819
  %v6386 = vunpack.c.h.b16 %v5819
  %v6387 = vunpack.c.l.b16 %v5820
  %v6388 = vunpack.c.h.b16 %v5820
  %v6389 = vunpack.c.l.b16 %v5821
  %v6390 = vunpack.c.h.b16 %v5821
  %v6391 = vunpack.c.l.b16 %v5822
  %v6392 = vunpack.c.h.b16 %v5822
  %v6393 = vunpack.c.l.b16 %v5823
  %v6394 = vunpack.c.h.b16 %v5823
  %v6395 = vunpack.c.l.b16 %v5824
  %v6396 = vunpack.c.h.b16 %v5824
  %v6397 = vunpack.c.l.b16 %v5825
  %v6398 = vunpack.c.h.b16 %v5825
  %v6399 = vunpack.c.l.b16 %v5826
  %v6400 = vunpack.c.h.b16 %v5826
  %v6401 = vunpack.c.l.b16 %v5827
  %v6402 = vunpack.c.h.b16 %v5827
  %v6403 = vunpack.c.l.b16 %v5828
  %v6404 = vunpack.c.h.b16 %v5828
  %v6405 = vunpack.c.l.b16 %v5829
  %v6406 = vunpack.c.h.b16 %v5829
  %v6407 = vunpack.c.l.b16 %v5830
  %v6408 = vunpack.c.h.b16 %v5830
  %v6409 = vunpack.c.l.b16 %v5831
  %v6410 = vunpack.c.h.b16 %v5831
  %v6411 = vunpack.c.l.b16 %v5832
  %v6412 = vunpack.c.h.b16 %v5832
  %v6413 = vunpack.c.l.b16 %v5833
  %v6414 = vunpack.c.h.b16 %v5833
  %v6415 = vunpack.c.l.b16 %v5834
  %v6416 = vunpack.c.h.b16 %v5834
  %v6417 = vunpack.c.l.b16 %v5835
  %v6418 = vunpack.c.h.b16 %v5835
  %v6419 = vunpack.c.l.b16 %v5836
  %v6420 = vunpack.c.h.b16 %v5836
  %v6421 = vunpack.c.l.b16 %v5837
  %v6422 = vunpack.c.h.b16 %v5837
  %v6423 = vunpack.c.l.b16 %v5838
  %v6424 = vunpack.c.h.b16 %v5838
  %v6425 = vunpack.c.l.b16 %v5839
  %v6426 = vunpack.c.h.b16 %v5839
  %v6427 = vunpack.c.l.b16 %v5840
  %v6428 = vunpack.c.h.b16 %v5840
  %v6429 = vunpack.c.l.b16 %v5841
  %v6430 = vunpack.c.h.b16 %v5841
  %v6431 = vunpack.c.l.b16 %v5842
  %v6432 = vunpack.c.h.b16 %v5842
  %v6433 = vunpack.c.l.b16 %v5843
  %v6434 = vunpack.c.h.b16 %v5843
  %v6435 = vunpack.c.l.b16 %v5844
  %v6436 = vunpack.c.h.b16 %v5844
  %v6437 = vunpack.c.l.b16 %v5845
  %v6438 = vunpack.c.h.b16 %v5845
  %v6439 = vunpack.c.l.b16 %v5846
  %v6440 = vunpack.c.h.b16 %v5846
  %v6441 = vunpack.c.l.b16 %v5847
  %v6442 = vunpack.c.h.b16 %v5847
  %v6443 = vunpack.c.l.b16 %v5848
  %v6444 = vunpack.c.h.b16 %v5848
  %v6445 = vunpack.c.l.b16 %v5849
  %v6446 = vunpack.c.h.b16 %v5849
  %v6447 = vunpack.c.l.b16 %v5850
  %v6448 = vunpack.c.h.b16 %v5850
  %v6449 = vunpack.c.l.b16 %v5851
  %v6450 = vunpack.c.h.b16 %v5851
  %v6451 = vunpack.c.l.b16 %v5852
  %v6452 = vunpack.c.h.b16 %v5852
  %v6453 = vunpack.c.l.b16 %v5853
  %v6454 = vunpack.c.h.b16 %v5853
  %v6455 = vunpack.c.l.b16 %v5854
  %v6456 = vunpack.c.h.b16 %v5854
  %v6457 = vunpack.c.l.b16 %v5855
  %v6458 = vunpack.c.h.b16 %v5855
  %v6459 = vunpack.c.l.b16 %v5856
  %v6460 = vunpack.c.h.b16 %v5856
  %v6461 = vunpack.c.l.b16 %v5857
  %v6462 = vunpack.c.h.b16 %v5857
  %v6463 = vunpack.c.l.b16 %v5858
  %v6464 = vunpack.c.h.b16 %v5858
  %v6465 = vunpack.c.l.b16 %v5859
  %v6466 = vunpack.c.h.b16 %v5859
  %v6467 = vunpack.c.l.b16 %v5860
  %v6468 = vunpack.c.h.b16 %v5860
  %v6469 = vunpack.c.l.b16 %v5861
  %v6470 = vunpack.c.h.b16 %v5861
  %v6471 = vunpack.c.l.b16 %v5862
  %v6472 = vunpack.c.h.b16 %v5862
  %v6473 = vunpack.c.l.b16 %v5863
  %v6474 = vunpack.c.h.b16 %v5863
  %v6475 = vunpack.c.l.b16 %v5864
  %v6476 = vunpack.c.h.b16 %v5864
  %v6477 = vunpack.c.l.b16 %v5865
  %v6478 = vunpack.c.h.b16 %v5865
  %v6479 = vunpack.c.l.b16 %v5866
  %v6480 = vunpack.c.h.b16 %v5866
  %v6481 = vunpack.c.l.b16 %v5867
  %v6482 = vunpack.c.h.b16 %v5867
  %v6483 = vunpack.c.l.b16 %v5868
  %v6484 = vunpack.c.h.b16 %v5868
  %v6485 = vunpack.c.l.b16 %v5869
  %v6486 = vunpack.c.h.b16 %v5869
  %v6487 = vunpack.c.l.b16 %v5870
  %v6488 = vunpack.c.h.b16 %v5870
  %v6489 = vunpack.c.l.b16 %v5871
  %v6490 = vunpack.c.h.b16 %v5871
  %v6491 = vunpack.c.l.b16 %v5872
  %v6492 = vunpack.c.h.b16 %v5872
  %v6493 = vunpack.c.l.b16 %v5873
  %v6494 = vunpack.c.h.b16 %v5873
  %v6495 = vunpack.c.l.b16 %v5874
  %v6496 = vunpack.c.h.b16 %v5874
  %v6497 = vunpack.c.l.b16 %v5875
  %v6498 = vunpack.c.h.b16 %v5875
  %v6499 = vunpack.c.l.b16 %v5876
  %v6500 = vunpack.c.h.b16 %v5876
  %v6501 = vunpack.c.l.b16 %v5877
  %v6502 = vunpack.c.h.b16 %v5877
  %v6503 = vunpack.c.l.b16 %v5878
  %v6504 = vunpack.c.h.b16 %v5878
  %v6505 = vunpack.c.l.b16 %v5879
  %v6506 = vunpack.c.h.b16 %v5879
  %v6507 = vunpack.c.l.b16 %v5880
  %v6508 = vunpack.c.h.b16 %v5880
  %v6509 = vunpack.c.l.b16 %v5881
  %v6510 = vunpack.c.h.b16 %v5881
  %v6511 = vunpack.c.l.b16 %v5882
  %v6512 = vunpack.c.h.b16 %v5882
  %v6513 = vunpack.c.l.b16 %v5883
  %v6514 = vunpack.c.h.b16 %v5883
  %v6515 = vunpack.c.l.b16 %v5884
  %v6516 = vunpack.c.h.b16 %v5884
  %v6517 = vunpack.c.l.b16 %v5885
  %v6518 = vunpack.c.h.b16 %v5885
  %v6519 = vunpack.c.l.b16 %v5886
  %v6520 = vunpack.c.h.b16 %v5886
  %v6521 = vunpack.c.l.b16 %v5887
  %v6522 = vunpack.c.h.b16 %v5887
  %v6523 = vunpack.c.l.b16 %v5888
  %v6524 = vunpack.c.h.b16 %v5888
  %v6525 = vunpack.c.l.b16 %v5889
  %v6526 = vunpack.c.h.b16 %v5889
  %v6527 = vunpack.c.l.b16 %v5890
  %v6528 = vunpack.c.h.b16 %v5890
  %v6529 = vunpack.c.l.b16 %v5891
  %v6530 = vunpack.c.h.b16 %v5891
  %v6531 = vunpack.c.l.b16 %v5892
  %v6532 = vunpack.c.h.b16 %v5892
  %v6533 = vunpack.c.l.b16 %v5893
  %v6534 = vunpack.c.h.b16 %v5893
  %v6535 = vunpack.c.l.b16 %v5894
  %v6536 = vunpack.c.h.b16 %v5894
  %v6537 = vunpack.c.l.b16 %v5895
  %v6538 = vunpack.c.h.b16 %v5895
  %v6539 = vunpack.c.l.b16 %v5896
  %v6540 = vunpack.c.h.b16 %v5896
  %v6541 = vunpack.c.l.b16 %v5897
  %v6542 = vunpack.c.h.b16 %v5897
  %v6543 = vunpack.c.l.b16 %v5898
  %v6544 = vunpack.c.h.b16 %v5898
  %v6545 = vunpack.c.l.b16 %v5899
  %v6546 = vunpack.c.h.b16 %v5899
  %v6547 = vunpack.c.l.b16 %v5900
  %v6548 = vunpack.c.h.b16 %v5900
  %v6549 = vunpack.c.l.b16 %v5901
  %v6550 = vunpack.c.h.b16 %v5901
  %v6551 = vunpack.c.l.b16 %v5902
  %v6552 = vunpack.c.h.b16 %v5902
  %v6553 = vunpack.c.l.b16 %v5903
  %v6554 = vunpack.c.h.b16 %v5903
  %v6555 = vunpack.c.l.b16 %v5904
  %v6556 = vunpack.c.h.b16 %v5904
  %v6557 = vunpack.c.l.b16 %v5905
  %v6558 = vunpack.c.h.b16 %v5905
  %v6559 = vunpack.c.l.b16 %v5906
  %v6560 = vunpack.c.h.b16 %v5906
  %v6561 = vunpack.c.l.b16 %v5907
  %v6562 = vunpack.c.h.b16 %v5907
  %v6563 = vunpack.c.l.b16 %v5908
  %v6564 = vunpack.c.h.b16 %v5908
  %v6565 = vunpack.c.l.b16 %v5909
  %v6566 = vunpack.c.h.b16 %v5909
  %v6567 = vunpack.c.l.b16 %v5910
  %v6568 = vunpack.c.h.b16 %v5910
  %v6569 = vunpack.c.l.b16 %v5911
  %v6570 = vunpack.c.h.b16 %v5911
  %v6571 = vunpack.c.l.b16 %v5912
  %v6572 = vunpack.c.h.b16 %v5912
  %v6573 = vunpack.c.l.b16 %v5913
  %v6574 = vunpack.c.h.b16 %v5913
  %v6575 = vunpack.c.l.b16 %v5914
  %v6576 = vunpack.c.h.b16 %v5914
  %v6577 = vunpack.c.l.b16 %v5915
  %v6578 = vunpack.c.h.b16 %v5915
  %v6579 = vunpack.c.l.b16 %v5916
  %v6580 = vunpack.c.h.b16 %v5916
  %v6581 = vunpack.c.l.b16 %v5917
  %v6582 = vunpack.c.h.b16 %v5917
  %v6583 = vunpack.c.l.b16 %v5918
  %v6584 = vunpack.c.h.b16 %v5918
  %v6585 = vunpack.c.l.b16 %v5919
  %v6586 = vunpack.c.h.b16 %v5919
  %v6587 = vunpack.c.l.b16 %v5920
  %v6588 = vunpack.c.h.b16 %v5920
  %v6589 = vunpack.c.l.b16 %v5921
  %v6590 = vunpack.c.h.b16 %v5921
  %v6591 = vunpack.c.l.b16 %v5922
  %v6592 = vunpack.c.h.b16 %v5922
  %v6593 = vunpack.c.l.b16 %v5923
  %v6594 = vunpack.c.h.b16 %v5923
  %v6595 = vunpack.c.l.b16 %v5924
  %v6596 = vunpack.c.h.b16 %v5924
  %v6597 = vunpack.c.l.b16 %v5925
  %v6598 = vunpack.c.h.b16 %v5925
  %v6599 = vunpack.c.l.b16 %v5926
  %v6600 = vunpack.c.h.b16 %v5926
  %v6601 = vunpack.c.l.b16 %v5927
  %v6602 = vunpack.c.h.b16 %v5927
  %v6603 = vunpack.c.l.b16 %v5928
  %v6604 = vunpack.c.h.b16 %v5928
  %v6605 = vunpack.c.l.b16 %v5929
  %v6606 = vunpack.c.h.b16 %v5929
  %v6607 = vunpack.c.l.b16 %v5930
  %v6608 = vunpack.c.h.b16 %v5930
  %v6609 = vunpack.c.l.b16 %v5931
  %v6610 = vunpack.c.h.b16 %v5931
  %v6611 = vunpack.c.l.b16 %v5932
  %v6612 = vunpack.c.h.b16 %v5932
  %v6613 = vunpack.c.l.b16 %v5933
  %v6614 = vunpack.c.h.b16 %v5933
  %v6615 = vunpack.c.l.b16 %v5934
  %v6616 = vunpack.c.h.b16 %v5934
  %v6617 = vunpack.c.l.b16 %v5935
  %v6618 = vunpack.c.h.b16 %v5935
  %v6619 = vunpack.c.l.b16 %v5936
  %v6620 = vunpack.c.h.b16 %v5936
  %v6621 = vunpack.c.l.b16 %v5937
  %v6622 = vunpack.c.h.b16 %v5937
  %v6623 = vunpack.c.l.b16 %v5938
  %v6624 = vunpack.c.h.b16 %v5938
  %v6625 = vunpack.c.l.b16 %v5939
  %v6626 = vunpack.c.h.b16 %v5939
  %v6627 = vunpack.c.l.b16 %v5940
  %v6628 = vunpack.c.h.b16 %v5940
  %v6629 = vunpack.c.l.b16 %v5941
  %v6630 = vunpack.c.h.b16 %v5941
  %v6631 = vunpack.c.l.b16 %v5942
  %v6632 = vunpack.c.h.b16 %v5942
  %v6633 = vunpack.c.l.b16 %v5943
  %v6634 = vunpack.c.h.b16 %v5943
  %v6635 = vunpack.c.l.b16 %v5944
  %v6636 = vunpack.c.h.b16 %v5944
  %v6637 = vunpack.c.l.b16 %v5945
  %v6638 = vunpack.c.h.b16 %v5945
  %v6639 = vunpack.c.l.b16 %v5946
  %v6640 = vunpack.c.h.b16 %v5946
  %v6641 = vunpack.c.l.b16 %v5947
  %v6642 = vunpack.c.h.b16 %v5947
  %v6643 = vunpack.c.l.b16 %v5948
  %v6644 = vunpack.c.h.b16 %v5948
  %v6645 = vunpack.c.l.b16 %v5949
  %v6646 = vunpack.c.h.b16 %v5949
  %v6647 = vunpack.c.l.b16 %v5950
  %v6648 = vunpack.c.h.b16 %v5950
  %v6649 = vunpack.c.l.b16 %v5951
  %v6650 = vunpack.c.h.b16 %v5951
  %v6651 = vunpack.c.l.b16 %v5952
  %v6652 = vunpack.c.h.b16 %v5952
  %v6653 = vunpack.c.l.b16 %v5953
  %v6654 = vunpack.c.h.b16 %v5953
  %v6655 = vunpack.c.l.b16 %v5954
  %v6656 = vunpack.c.h.b16 %v5954
  %v6657 = vunpack.c.l.b16 %v5955
  %v6658 = vunpack.c.h.b16 %v5955
  %v6659 = vunpack.c.l.b16 %v5956
  %v6660 = vunpack.c.h.b16 %v5956
  %v6661 = vunpack.c.l.b16 %v5957
  %v6662 = vunpack.c.h.b16 %v5957
  %v6663 = vunpack.c.l.b16 %v5958
  %v6664 = vunpack.c.h.b16 %v5958
  %v6665 = vunpack.c.l.b16 %v5959
  %v6666 = vunpack.c.h.b16 %v5959
  %v6667 = vunpack.c.l.b16 %v5960
  %v6668 = vunpack.c.h.b16 %v5960
  %v6669 = vunpack.c.l.b16 %v5961
  %v6670 = vunpack.c.h.b16 %v5961
  %v6671 = vunpack.c.l.b16 %v5962
  %v6672 = vunpack.c.h.b16 %v5962
  %v6673 = vunpack.c.l.b16 %v5963
  %v6674 = vunpack.c.h.b16 %v5963
  %v6675 = vunpack.c.l.b16 %v5964
  %v6676 = vunpack.c.h.b16 %v5964
  %v6677 = vunpack.c.l.b16 %v5965
  %v6678 = vunpack.c.h.b16 %v5965
  %v6679 = vunpack.c.l.b16 %v5966
  %v6680 = vunpack.c.h.b16 %v5966
  %v6681 = vunpack.c.l.b16 %v5967
  %v6682 = vunpack.c.h.b16 %v5967
  %v6683 = vunpack.c.l.b16 %v5968
  %v6684 = vunpack.c.h.b16 %v5968
  %v6685 = vunpack.c.l.b16 %v5969
  %v6686 = vunpack.c.h.b16 %v5969
  %v6687 = vunpack.c.l.b16 %v5970
  %v6688 = vunpack.c.h.b16 %v5970
  %v6689 = vunpack.c.l.b16 %v5971
  %v6690 = vunpack.c.h.b16 %v5971
  %v6691 = vunpack.c.l.b16 %v5972
  %v6692 = vunpack.c.h.b16 %v5972
  %v6693 = vunpack.c.l.b16 %v5973
  %v6694 = vunpack.c.h.b16 %v5973
  %v6695 = vunpack.c.l.b16 %v5974
  %v6696 = vunpack.c.h.b16 %v5974
  %v6697 = vunpack.c.l.b16 %v5975
  %v6698 = vunpack.c.h.b16 %v5975
  %v6699 = vunpack.c.l.b16 %v5976
  %v6700 = vunpack.c.h.b16 %v5976
  %v6701 = vunpack.c.l.b16 %v5977
  %v6702 = vunpack.c.h.b16 %v5977
  %v6703 = vunpack.c.l.b16 %v5978
  %v6704 = vunpack.c.h.b16 %v5978
  %v6705 = vunpack.c.l.b16 %v5979
  %v6706 = vunpack.c.h.b16 %v5979
  %v6707 = vunpack.c.l.b16 %v5980
  %v6708 = vunpack.c.h.b16 %v5980
  %v6709 = vunpack.c.l.b16 %v5981
  %v6710 = vunpack.c.h.b16 %v5981
  %v6711 = vunpack.c.l.b16 %v5982
  %v6712 = vunpack.c.h.b16 %v5982
  %v6713 = vunpack.c.l.b16 %v5983
  %v6714 = vunpack.c.h.b16 %v5983
  %v6715 = vunpack.c.l.b16 %v5984
  %v6716 = vunpack.c.h.b16 %v5984
  %v6717 = vunpack.c.l.b16 %v5985
  %v6718 = vunpack.c.h.b16 %v5985
  %v6719 = vunpack.c.l.b16 %v5986
  %v6720 = vunpack.c.h.b16 %v5986
  %v6721 = vunpack.c.l.b16 %v5987
  %v6722 = vunpack.c.h.b16 %v5987
  %v6723 = vunpack.c.l.b16 %v5988
  %v6724 = vunpack.c.h.b16 %v5988
  %v6725 = vunpack.c.l.b16 %v5989
  %v6726 = vunpack.c.h.b16 %v5989
  %v6727 = vunpack.c.l.b16 %v5990
  %v6728 = vunpack.c.h.b16 %v5990
  %v6729 = vunpack.c.l.b16 %v5991
  %v6730 = vunpack.c.h.b16 %v5991
  %v6731 = vunpack.c.l.b16 %v5992
  %v6732 = vunpack.c.h.b16 %v5992
  %v6733 = vunpack.c.l.b16 %v5993
  %v6734 = vunpack.c.h.b16 %v5993
  %v6735 = vunpack.c.l.b16 %v5994
  %v6736 = vunpack.c.h.b16 %v5994
  %v6737 = vunpack.c.l.b16 %v5995
  %v6738 = vunpack.c.h.b16 %v5995
  %v6739 = vunpack.c.l.b16 %v5996
  %v6740 = vunpack.c.h.b16 %v5996
  %v6741 = vunpack.c.l.b16 %v5997
  %v6742 = vunpack.c.h.b16 %v5997
  %v6743 = vunpack.c.l.b16 %v5998
  %v6744 = vunpack.c.h.b16 %v5998
  %v6745 = vunpack.c.l.b16 %v5999
  %v6746 = vunpack.c.h.b16 %v5999
  %v6747 = vunpack.c.l.b16 %v6000
  %v6748 = vunpack.c.h.b16 %v6000
  %v6749 = vunpack.c.l.b16 %v6001
  %v6750 = vunpack.c.h.b16 %v6001
  %v6751 = vunpack.c.l.b16 %v6002
  %v6752 = vunpack.c.h.b16 %v6002
  %v6753 = vunpack.c.l.b16 %v6003
  %v6754 = vunpack.c.h.b16 %v6003
  %v6755 = vunpack.c.l.b16 %v6004
  %v6756 = vunpack.c.h.b16 %v6004
  %v6757 = vunpack.c.l.b16 %v6005
  %v6758 = vunpack.c.h.b16 %v6005
  %v6759 = vunpack.c.l.b16 %v6006
  %v6760 = vunpack.c.h.b16 %v6006
  %v6761 = vunpack.c.l.b16 %v6007
  %v6762 = vunpack.c.h.b16 %v6007
  %v6763 = vunpack.c.l.b16 %v6008
  %v6764 = vunpack.c.h.b16 %v6008
  %v6765 = vunpack.c.l.b16 %v6009
  %v6766 = vunpack.c.h.b16 %v6009
  %v6767 = vunpack.c.l.b16 %v6010
  %v6768 = vunpack.c.h.b16 %v6010
  %v6769 = vunpack.c.l.b16 %v6011
  %v6770 = vunpack.c.h.b16 %v6011
  %v6771 = vunpack.c.l.b16 %v6012
  %v6772 = vunpack.c.h.b16 %v6012
  %v6773 = vunpack.c.l.b16 %v6013
  %v6774 = vunpack.c.h.b16 %v6013
  %v6775 = vunpack.c.l.b16 %v6014
  %v6776 = vunpack.c.h.b16 %v6014
  %v6777 = vunpack.c.l.b16 %v6015
  %v6778 = vunpack.c.h.b16 %v6015
  %v6779 = vunpack.c.l.b16 %v6016
  %v6780 = vunpack.c.h.b16 %v6016
  %v6781 = vunpack.c.l.b16 %v6017
  %v6782 = vunpack.c.h.b16 %v6017
  %v6783 = vunpack.c.l.b16 %v6018
  %v6784 = vunpack.c.h.b16 %v6018
  %v6785 = vunpack.c.l.b16 %v6019
  %v6786 = vunpack.c.h.b16 %v6019
  %v6787 = vunpack.c.l.b16 %v6020
  %v6788 = vunpack.c.h.b16 %v6020
  %v6789 = vunpack.c.l.b16 %v6021
  %v6790 = vunpack.c.h.b16 %v6021
  %v6791 = vunpack.c.l.b16 %v6022
  %v6792 = vunpack.c.h.b16 %v6022
  %v6793 = vunpack.c.l.b16 %v6023
  %v6794 = vunpack.c.h.b16 %v6023
  %v6795 = vunpack.c.l.b16 %v6024
  %v6796 = vunpack.c.h.b16 %v6024
  %v6797 = vunpack.c.l.b16 %v6025
  %v6798 = vunpack.c.h.b16 %v6025
  %v6799 = vunpack.c.l.b16 %v6026
  %v6800 = vunpack.c.h.b16 %v6026
  %v6801 = vunpack.c.l.b16 %v6027
  %v6802 = vunpack.c.h.b16 %v6027
  %v6803 = vunpack.c.l.b16 %v6028
  %v6804 = vunpack.c.h.b16 %v6028
  %v6805 = vunpack.c.l.b16 %v6029
  %v6806 = vunpack.c.h.b16 %v6029
  %v6807 = vunpack.c.l.b16 %v6030
  %v6808 = vunpack.c.h.b16 %v6030
  %v6809 = vunpack.c.l.b16 %v6031
  %v6810 = vunpack.c.h.b16 %v6031
  %v6811 = vunpack.c.l.b16 %v6032
  %v6812 = vunpack.c.h.b16 %v6032
  %v6813 = vunpack.c.l.b16 %v6033
  %v6814 = vunpack.c.h.b16 %v6033
  %v6815 = vunpack.c.l.b16 %v6034
  %v6816 = vunpack.c.h.b16 %v6034
  %v6817 = vunpack.c.l.b16 %v6035
  %v6818 = vunpack.c.h.b16 %v6035
  %v6819 = vunpack.c.l.b16 %v6036
  %v6820 = vunpack.c.h.b16 %v6036
  %v6821 = vunpack.c.l.b16 %v6037
  %v6822 = vunpack.c.h.b16 %v6037
  %v6823 = vunpack.c.l.b16 %v6038
  %v6824 = vunpack.c.h.b16 %v6038
  %v6825 = vunpack.c.l.b16 %v6039
  %v6826 = vunpack.c.h.b16 %v6039
  %v6827 = vunpack.c.l.b16 %v6040
  %v6828 = vunpack.c.h.b16 %v6040
  %v6829 = vunpack.c.l.b16 %v6041
  %v6830 = vunpack.c.h.b16 %v6041
  %v6831 = vunpack.c.l.b16 %v6042
  %v6832 = vunpack.c.h.b16 %v6042
  %v6833 = vpack.c.b16 %v6325, %v6321
  %v6834 = vpack.c.b16 %v6326, %v6322
  %v6835 = vpack.c.b16 %v6327, %v6323
  %v6836 = vpack.c.b16 %v6328, %v6324
  %v6837 = vpack.c.b16 %v6333, %v6329
  %v6838 = vpack.c.b16 %v6334, %v6330
  %v6839 = vpack.c.b16 %v6335, %v6331
  %v6840 = vpack.c.b16 %v6336, %v6332
  %v6841 = vpack.c.b16 %v6341, %v6337
  %v6842 = vpack.c.b16 %v6342, %v6338
  %v6843 = vpack.c.b16 %v6343, %v6339
  %v6844 = vpack.c.b16 %v6344, %v6340
  %v6845 = vpack.c.b16 %v6349, %v6345
  %v6846 = vpack.c.b16 %v6350, %v6346
  %v6847 = vpack.c.b16 %v6351, %v6347
  %v6848 = vpack.c.b16 %v6352, %v6348
  %v6849 = vpack.c.b16 %v6357, %v6353
  %v6850 = vpack.c.b16 %v6358, %v6354
  %v6851 = vpack.c.b16 %v6359, %v6355
  %v6852 = vpack.c.b16 %v6360, %v6356
  %v6853 = vpack.c.b16 %v6365, %v6361
  %v6854 = vpack.c.b16 %v6366, %v6362
  %v6855 = vpack.c.b16 %v6367, %v6363
  %v6856 = vpack.c.b16 %v6368, %v6364
  %v6857 = vpack.c.b16 %v6373, %v6369
  %v6858 = vpack.c.b16 %v6374, %v6370
  %v6859 = vpack.c.b16 %v6375, %v6371
  %v6860 = vpack.c.b16 %v6376, %v6372
  %v6861 = vpack.c.b16 %v6381, %v6377
  %v6862 = vpack.c.b16 %v6382, %v6378
  %v6863 = vpack.c.b16 %v6383, %v6379
  %v6864 = vpack.c.b16 %v6384, %v6380
  %v6865 = vpack.c.b16 %v6389, %v6385
  %v6866 = vpack.c.b16 %v6390, %v6386
  %v6867 = vpack.c.b16 %v6391, %v6387
  %v6868 = vpack.c.b16 %v6392, %v6388
  %v6869 = vpack.c.b16 %v6397, %v6393
  %v6870 = vpack.c.b16 %v6398, %v6394
  %v6871 = vpack.c.b16 %v6399, %v6395
  %v6872 = vpack.c.b16 %v6400, %v6396
  %v6873 = vpack.c.b16 %v6405, %v6401
  %v6874 = vpack.c.b16 %v6406, %v6402
  %v6875 = vpack.c.b16 %v6407, %v6403
  %v6876 = vpack.c.b16 %v6408, %v6404
  %v6877 = vpack.c.b16 %v6413, %v6409
  %v6878 = vpack.c.b16 %v6414, %v6410
  %v6879 = vpack.c.b16 %v6415, %v6411
  %v6880 = vpack.c.b16 %v6416, %v6412
  %v6881 = vpack.c.b16 %v6421, %v6417
  %v6882 = vpack.c.b16 %v6422, %v6418
  %v6883 = vpack.c.b16 %v6423, %v6419
  %v6884 = vpack.c.b16 %v6424, %v6420
  %v6885 = vpack.c.b16 %v6429, %v6425
  %v6886 = vpack.c.b16 %v6430, %v6426
  %v6887 = vpack.c.b16 %v6431, %v6427
  %v6888 = vpack.c.b16 %v6432, %v6428
  %v6889 = vpack.c.b16 %v6437, %v6433
  %v6890 = vpack.c.b16 %v6438, %v6434
  %v6891 = vpack.c.b16 %v6439, %v6435
  %v6892 = vpack.c.b16 %v6440, %v6436
  %v6893 = vpack.c.b16 %v6445, %v6441
  %v6894 = vpack.c.b16 %v6446, %v6442
  %v6895 = vpack.c.b16 %v6447, %v6443
  %v6896 = vpack.c.b16 %v6448, %v6444
  %v6897 = vpack.c.b16 %v6453, %v6449
  %v6898 = vpack.c.b16 %v6454, %v6450
  %v6899 = vpack.c.b16 %v6455, %v6451
  %v6900 = vpack.c.b16 %v6456, %v6452
  %v6901 = vpack.c.b16 %v6461, %v6457
  %v6902 = vpack.c.b16 %v6462, %v6458
  %v6903 = vpack.c.b16 %v6463, %v6459
  %v6904 = vpack.c.b16 %v6464, %v6460
  %v6905 = vpack.c.b16 %v6469, %v6465
  %v6906 = vpack.c.b16 %v6470, %v6466
  %v6907 = vpack.c.b16 %v6471, %v6467
  %v6908 = vpack.c.b16 %v6472, %v6468
  %v6909 = vpack.c.b16 %v6477, %v6473
  %v6910 = vpack.c.b16 %v6478, %v6474
  %v6911 = vpack.c.b16 %v6479, %v6475
  %v6912 = vpack.c.b16 %v6480, %v6476
  %v6913 = vpack.c.b16 %v6485, %v6481
  %v6914 = vpack.c.b16 %v6486, %v6482
  %v6915 = vpack.c.b16 %v6487, %v6483
  %v6916 = vpack.c.b16 %v6488, %v6484
  %v6917 = vpack.c.b16 %v6493, %v6489
  %v6918 = vpack.c.b16 %v6494, %v6490
  %v6919 = vpack.c.b16 %v6495, %v6491
  %v6920 = vpack.c.b16 %v6496, %v6492
  %v6921 = vpack.c.b16 %v6501, %v6497
  %v6922 = vpack.c.b16 %v6502, %v6498
  %v6923 = vpack.c.b16 %v6503, %v6499
  %v6924 = vpack.c.b16 %v6504, %v6500
  %v6925 = vpack.c.b16 %v6509, %v6505
  %v6926 = vpack.c.b16 %v6510, %v6506
  %v6927 = vpack.c.b16 %v6511, %v6507
  %v6928 = vpack.c.b16 %v6512, %v6508
  %v6929 = vpack.c.b16 %v6517, %v6513
  %v6930 = vpack.c.b16 %v6518, %v6514
  %v6931 = vpack.c.b16 %v6519, %v6515
  %v6932 = vpack.c.b16 %v6520, %v6516
  %v6933 = vpack.c.b16 %v6525, %v6521
  %v6934 = vpack.c.b16 %v6526, %v6522
  %v6935 = vpack.c.b16 %v6527, %v6523
  %v6936 = vpack.c.b16 %v6528, %v6524
  %v6937 = vpack.c.b16 %v6533, %v6529
  %v6938 = vpack.c.b16 %v6534, %v6530
  %v6939 = vpack.c.b16 %v6535, %v6531
  %v6940 = vpack.c.b16 %v6536, %v6532
  %v6941 = vpack.c.b16 %v6541, %v6537
  %v6942 = vpack.c.b16 %v6542, %v6538
  %v6943 = vpack.c.b16 %v6543, %v6539
  %v6944 = vpack.c.b16 %v6544, %v6540
  %v6945 = vpack.c.b16 %v6549, %v6545
  %v6946 = vpack.c.b16 %v6550, %v6546
  %v6947 = vpack.c.b16 %v6551, %v6547
  %v6948 = vpack.c.b16 %v6552, %v6548
  %v6949 = vpack.c.b16 %v6557, %v6553
  %v6950 = vpack.c.b16 %v6558, %v6554
  %v6951 = vpack.c.b16 %v6559, %v6555
  %v6952 = vpack.c.b16 %v6560, %v6556
  %v6953 = vpack.c.b16 %v6565, %v6561
  %v6954 = vpack.c.b16 %v6566, %v6562
  %v6955 = vpack.c.b16 %v6567, %v6563
  %v6956 = vpack.c.b16 %v6568, %v6564
  %v6957 = vpack.c.b16 %v6573, %v6569
  %v6958 = vpack.c.b16 %v6574, %v6570
  %v6959 = vpack.c.b16 %v6575, %v6571
  %v6960 = vpack.c.b16 %v6576, %v6572
  %v6961 = vpack.c.b16 %v6581, %v6577
  %v6962 = vpack.c.b16 %v6582, %v6578
  %v6963 = vpack.c.b16 %v6583, %v6579
  %v6964 = vpack.c.b16 %v6584, %v6580
  %v6965 = vpack.c.b16 %v6589, %v6585
  %v6966 = vpack.c.b16 %v6590, %v6586
  %v6967 = vpack.c.b16 %v6591, %v6587
  %v6968 = vpack.c.b16 %v6592, %v6588
  %v6969 = vpack.c.b16 %v6597, %v6593
  %v6970 = vpack.c.b16 %v6598, %v6594
  %v6971 = vpack.c.b16 %v6599, %v6595
  %v6972 = vpack.c.b16 %v6600, %v6596
  %v6973 = vpack.c.b16 %v6605, %v6601
  %v6974 = vpack.c.b16 %v6606, %v6602
  %v6975 = vpack.c.b16 %v6607, %v6603
  %v6976 = vpack.c.b16 %v6608, %v6604
  %v6977 = vpack.c.b16 %v6613, %v6609
  %v6978 = vpack.c.b16 %v6614, %v6610
  %v6979 = vpack.c.b16 %v6615, %v6611
  %v6980 = vpack.c.b16 %v6616, %v6612
  %v6981 = vpack.c.b16 %v6621, %v6617
  %v6982 = vpack.c.b16 %v6622, %v6618
  %v6983 = vpack.c.b16 %v6623, %v6619
  %v6984 = vpack.c.b16 %v6624, %v6620
  %v6985 = vpack.c.b16 %v6629, %v6625
  %v6986 = vpack.c.b16 %v6630, %v6626
  %v6987 = vpack.c.b16 %v6631, %v6627
  %v6988 = vpack.c.b16 %v6632, %v6628
  %v6989 = vpack.c.b16 %v6637, %v6633
  %v6990 = vpack.c.b16 %v6638, %v6634
  %v6991 = vpack.c.b16 %v6639, %v6635
  %v6992 = vpack.c.b16 %v6640, %v6636
  %v6993 = vpack.c.b16 %v6645, %v6641
  %v6994 = vpack.c.b16 %v6646, %v6642
  %v6995 = vpack.c.b16 %v6647, %v6643
  %v6996 = vpack.c.b16 %v6648, %v6644
  %v6997 = vpack.c.b16 %v6653, %v6649
  %v6998 = vpack.c.b16 %v6654, %v6650
  %v6999 = vpack.c.b16 %v6655, %v6651
  %v7000 = vpack.c.b16 %v6656, %v6652
  %v7001 = vpack.c.b16 %v6661, %v6657
  %v7002 = vpack.c.b16 %v6662, %v6658
  %v7003 = vpack.c.b16 %v6663, %v6659
  %v7004 = vpack.c.b16 %v6664, %v6660
  %v7005 = vpack.c.b16 %v6669, %v6665
  %v7006 = vpack.c.b16 %v6670, %v6666
  %v7007 = vpack.c.b16 %v6671, %v6667
  %v7008 = vpack.c.b16 %v6672, %v6668
  %v7009 = vpack.c.b16 %v6677, %v6673
  %v7010 = vpack.c.b16 %v6678, %v6674
  %v7011 = vpack.c.b16 %v6679, %v6675
  %v7012 = vpack.c.b16 %v6680, %v6676
  %v7013 = vpack.c.b16 %v6685, %v6681
  %v7014 = vpack.c.b16 %v6686, %v6682
  %v7015 = vpack.c.b16 %v6687, %v6683
  %v7016 = vpack.c.b16 %v6688, %v6684
  %v7017 = vpack.c.b16 %v6693, %v6689
  %v7018 = vpack.c.b16 %v6694, %v6690
  %v7019 = vpack.c.b16 %v6695, %v6691
  %v7020 = vpack.c.b16 %v6696, %v6692
  %v7021 = vpack.c.b16 %v6701, %v6697
  %v7022 = vpack.c.b16 %v6702, %v6698
  %v7023 = vpack.c.b16 %v6703, %v6699
  %v7024 = vpack.c.b16 %v6704, %v6700
  %v7025 = vpack.c.b16 %v6709, %v6705
  %v7026 = vpack.c.b16 %v6710, %v6706
  %v7027 = vpack.c.b16 %v6711, %v6707
  %v7028 = vpack.c.b16 %v6712, %v6708
  %v7029 = vpack.c.b16 %v6717, %v6713
  %v7030 = vpack.c.b16 %v6718, %v6714
  %v7031 = vpack.c.b16 %v6719, %v6715
  %v7032 = vpack.c.b16 %v6720, %v6716
  %v7033 = vpack.c.b16 %v6725, %v6721
  %v7034 = vpack.c.b16 %v6726, %v6722
  %v7035 = vpack.c.b16 %v6727, %v6723
  %v7036 = vpack.c.b16 %v6728, %v6724
  %v7037 = vpack.c.b16 %v6733, %v6729
  %v7038 = vpack.c.b16 %v6734, %v6730
  %v7039 = vpack.c.b16 %v6735, %v6731
  %v7040 = vpack.c.b16 %v6736, %v6732
  %v7041 = vpack.c.b16 %v6741, %v6737
  %v7042 = vpack.c.b16 %v6742, %v6738
  %v7043 = vpack.c.b16 %v6743, %v6739
  %v7044 = vpack.c.b16 %v6744, %v6740
  %v7045 = vpack.c.b16 %v6749, %v6745
  %v7046 = vpack.c.b16 %v6750, %v6746
  %v7047 = vpack.c.b16 %v6751, %v6747
  %v7048 = vpack.c.b16 %v6752, %v6748
  %v7049 = vpack.c.b16 %v6757, %v6753
  %v7050 = vpack.c.b16 %v6758, %v6754
  %v7051 = vpack.c.b16 %v6759, %v6755
  %v7052 = vpack.c.b16 %v6760, %v6756
  %v7053 = vpack.c.b16 %v6765, %v6761
  %v7054 = vpack.c.b16 %v6766, %v6762
  %v7055 = vpack.c.b16 %v6767, %v6763
  %v7056 = vpack.c.b16 %v6768, %v6764
  %v7057 = vpack.c.b16 %v6773, %v6769
  %v7058 = vpack.c.b16 %v6774, %v6770
  %v7059 = vpack.c.b16 %v6775, %v6771
  %v7060 = vpack.c.b16 %v6776, %v6772
  %v7061 = vpack.c.b16 %v6781, %v6777
  %v7062 = vpack.c.b16 %v6782, %v6778
  %v7063 = vpack.c.b16 %v6783, %v6779
  %v7064 = vpack.c.b16 %v6784, %v6780
  %v7065 = vpack.c.b16 %v6789, %v6785
  %v7066 = vpack.c.b16 %v6790, %v6786
  %v7067 = vpack.c.b16 %v6791, %v6787
  %v7068 = vpack.c.b16 %v6792, %v6788
  %v7069 = vpack.c.b16 %v6797, %v6793
  %v7070 = vpack.c.b16 %v6798, %v6794
  %v7071 = vpack.c.b16 %v6799, %v6795
  %v7072 = vpack.c.b16 %v6800, %v6796
  %v7073 = vpack.c.b16 %v6805, %v6801
  %v7074 = vpack.c.b16 %v6806, %v6802
  %v7075 = vpack.c.b16 %v6807, %v6803
  %v7076 = vpack.c.b16 %v6808, %v6804
  %v7077 = vpack.c.b16 %v6813, %v6809
  %v7078 = vpack.c.b16 %v6814, %v6810
  %v7079 = vpack.c.b16 %v6815, %v6811
  %v7080 = vpack.c.b16 %v6816, %v6812
  %v7081 = vpack.c.b16 %v6821, %v6817
  %v7082 = vpack.c.b16 %v6822, %v6818
  %v7083 = vpack.c.b16 %v6823, %v6819
  %v7084 = vpack.c.b16 %v6824, %v6820
  %v7085 = vpack.c.b16 %v6829, %v6825
  %v7086 = vpack.c.b16 %v6830, %v6826
  %v7087 = vpack.c.b16 %v6831, %v6827
  %v7088 = vpack.c.b16 %v6832, %v6828
  %7345 = vmatprep.subr.bf16.mxu0 %v6834
  %7346 = vmatpush1.bf16.msra.mxu0 %v6833
  %7347 = vmatprep.subr.bf16.mxu0 %v6838
  %7348 = vmatpush1.bf16.msra.mxu0 %v6837
  %7349 = vmatprep.subr.bf16.mxu0 %v6842
  %7350 = vmatpush1.bf16.msra.mxu0 %v6841
  %7351 = vmatprep.subr.bf16.mxu0 %v6846
  %7352 = vmatpush1.bf16.msra.mxu0 %v6845
  %7353 = vmatprep.subr.bf16.mxu0 %v6850
  %7354 = vmatpush1.bf16.msra.mxu0 %v6849
  %7355 = vmatprep.subr.bf16.mxu0 %v6854
  %7356 = vmatpush1.bf16.msra.mxu0 %v6853
  %7357 = vmatprep.subr.bf16.mxu0 %v6858
  %7358 = vmatpush1.bf16.msra.mxu0 %v6857
  %7359 = vmatprep.subr.bf16.mxu0 %v6862
  %7360 = vmatpush1.bf16.msra.mxu0 %v6861
  %7361 = vmatprep.subr.bf16.mxu0 %v6866
  %7362 = vmatpush1.bf16.msra.mxu0 %v6865
  %7363 = vmatprep.subr.bf16.mxu0 %v6870
  %7364 = vmatpush1.bf16.msra.mxu0 %v6869
  %7365 = vmatprep.subr.bf16.mxu0 %v6874
  %7366 = vmatpush1.bf16.msra.mxu0 %v6873
  %7367 = vmatprep.subr.bf16.mxu0 %v6878
  %7368 = vmatpush1.bf16.msra.mxu0 %v6877
  %7369 = vmatprep.subr.bf16.mxu0 %v6882
  %7370 = vmatpush1.bf16.msra.mxu0 %v6881
  %7371 = vmatprep.subr.bf16.mxu0 %v6886
  %7372 = vmatpush1.bf16.msra.mxu0 %v6885
  %7373 = vmatprep.subr.bf16.mxu0 %v6890
  %7374 = vmatpush1.bf16.msra.mxu0 %v6889
  %7375 = vmatprep.subr.bf16.mxu0 %v6894
  %7376 = vmatpush1.bf16.msra.mxu0 %v6893
  %7377 = vmatprep.mubr.bf16.mxu0 %v5724
  %7378 = vmatmul.mubr.bf16.gmra.mrb[0].mxu0 %v5723
  %v7379 = vpop.f32.mrb[0].mxu0
  %v7380 = vadd.f32 %v6048, %v7379
  %v7381 = vpop.f32.mrb[0].mxu0
  %v7382 = vadd.f32 %v6052, %v7381
  %v7383 = vpop.f32.mrb[0].mxu0
  %v7384 = vadd.f32 %v6048, %v7383
  %v7385 = vpop.f32.mrb[0].mxu0
  %v7386 = vadd.f32 %v6052, %v7385
  %7387 = vmatprep.mubr.bf16.mxu0 %v5732
  %7388 = vmatmul.mubr.bf16.gmra.mrb[0].mxu0 %v5731
  %v7389 = vpop.f32.mrb[0].mxu0
  %v7390 = vadd.f32 %v6048, %v7389
  %v7391 = vpop.f32.mrb[0].mxu0
  %v7392 = vadd.f32 %v6052, %v7391
  %v7393 = vpop.f32.mrb[0].mxu0
  %v7394 = vadd.f32 %v6048, %v7393
  %v7395 = vpop.f32.mrb[0].mxu0
  %v7396 = vadd.f32 %v6052, %v7395
  %7397 = vmatprep.mubr.bf16.mxu0 %v5740
  %7398 = vmatmul.mubr.bf16.gmra.mrb[0].mxu0 %v5739
  %v7399 = vpop.f32.mrb[0].mxu0
  %v7400 = vadd.f32 %v6048, %v7399
  %v7401 = vpop.f32.mrb[0].mxu0
  %v7402 = vadd.f32 %v6052, %v7401
  %v7403 = vpop.f32.mrb[0].mxu0
  %v7404 = vadd.f32 %v6048, %v7403
  %v7405 = vpop.f32.mrb[0].mxu0
  %v7406 = vadd.f32 %v6052, %v7405
  %7407 = vmatprep.mubr.bf16.mxu0 %v5748
  %7408 = vmatmul.mubr.bf16.gmra.mrb[0].mxu0 %v5747
  %v7409 = vpop.f32.mrb[0].mxu0
  %v7410 = vadd.f32 %v6048, %v7409
  %v7411 = vpop.f32.mrb[0].mxu0
  %v7412 = vadd.f32 %v6052, %v7411
  %v7413 = vpop.f32.mrb[0].mxu0
  %v7414 = vadd.f32 %v6048, %v7413
  %v7415 = vpop.f32.mrb[0].mxu0
  %v7416 = vadd.f32 %v6052, %v7415
  %7417 = vmatprep.mubr.bf16.mxu0 %v5756
  %7418 = vmatmul.mubr.bf16.gmra.mrb[0].mxu0 %v5755
  %v7419 = vpop.f32.mrb[0].mxu0
  %v7420 = vadd.f32 %v6048, %v7419
  %v7421 = vpop.f32.mrb[0].mxu0
  %v7422 = vadd.f32 %v6052, %v7421
  %v7423 = vpop.f32.mrb[0].mxu0
  %v7424 = vadd.f32 %v6048, %v7423
  %v7425 = vpop.f32.mrb[0].mxu0
  %v7426 = vadd.f32 %v6052, %v7425
  %7427 = vmatprep.mubr.bf16.mxu0 %v5764
  %7428 = vmatmul.mubr.bf16.gmra.mrb[0].mxu0 %v5763
  %v7429 = vpop.f32.mrb[0].mxu0
  %v7430 = vadd.f32 %v6048, %v7429
  %v7431 = vpop.f32.mrb[0].mxu0
  %v7432 = vadd.f32 %v6052, %v7431
  %v7433 = vpop.f32.mrb[0].mxu0
  %v7434 = vadd.f32 %v6048, %v7433
  %v7435 = vpop.f32.mrb[0].mxu0
  %v7436 = vadd.f32 %v6052, %v7435
  %7437 = vmatprep.mubr.bf16.mxu0 %v5772
  %7438 = vmatmul.mubr.bf16.gmra.mrb[0].mxu0 %v5771
  %v7439 = vpop.f32.mrb[0].mxu0
  %v7440 = vadd.f32 %v6048, %v7439
  %v7441 = vpop.f32.mrb[0].mxu0
  %v7442 = vadd.f32 %v6052, %v7441
  %v7443 = vpop.f32.mrb[0].mxu0
  %v7444 = vadd.f32 %v6048, %v7443
  %v7445 = vpop.f32.mrb[0].mxu0
  %v7446 = vadd.f32 %v6052, %v7445
  %7447 = vmatprep.mubr.bf16.mxu0 %v5780
  %7448 = vmatmul.mubr.bf16.gmra.mrb[0].mxu0 %v5779
  %v7449 = vpop.f32.mrb[0].mxu0
  %v7450 = vadd.f32 %v6048, %v7449
  %v7451 = vpop.f32.mrb[0].mxu0
  %v7452 = vadd.f32 %v6052, %v7451
  %v7453 = vpop.f32.mrb[0].mxu0
  %v7454 = vadd.f32 %v6048, %v7453
  %v7455 = vpop.f32.mrb[0].mxu0
  %v7456 = vadd.f32 %v6052, %v7455
  %7457 = vdwg.mxu0
  %7458 = vmatprep.subr.bf16.mxu0 %v6898
  %7459 = vmatpush1.bf16.msra.mxu0 %v6897
  %7460 = vmatprep.subr.bf16.mxu0 %v6902
  %7461 = vmatpush1.bf16.msra.mxu0 %v6901
  %7462 = vmatprep.subr.bf16.mxu0 %v6906
  %7463 = vmatpush1.bf16.msra.mxu0 %v6905
  %7464 = vmatprep.subr.bf16.mxu0 %v6910
  %7465 = vmatpush1.bf16.msra.mxu0 %v6909
  %7466 = vmatprep.subr.bf16.mxu0 %v6914
  %7467 = vmatpush1.bf16.msra.mxu0 %v6913
  %7468 = vmatprep.subr.bf16.mxu0 %v6918
  %7469 = vmatpush1.bf16.msra.mxu0 %v6917
  %7470 = vmatprep.subr.bf16.mxu0 %v6922
  %7471 = vmatpush1.bf16.msra.mxu0 %v6921
  %7472 = vmatprep.subr.bf16.mxu0 %v6926
  %7473 = vmatpush1.bf16.msra.mxu0 %v6925
  %7474 = vmatprep.subr.bf16.mxu0 %v6930
  %7475 = vmatpush1.bf16.msra.mxu0 %v6929
  %7476 = vmatprep.subr.bf16.mxu0 %v6934
  %7477 = vmatpush1.bf16.msra.mxu0 %v6933
  %7478 = vmatprep.subr.bf16.mxu0 %v6938
  %7479 = vmatpush1.bf16.msra.mxu0 %v6937
  %7480 = vmatprep.subr.bf16.mxu0 %v6942
  %7481 = vmatpush1.bf16.msra.mxu0 %v6941
  %7482 = vmatprep.subr.bf16.mxu0 %v6946
  %7483 = vmatpush1.bf16.msra.mxu0 %v6945
  %7484 = vmatprep.subr.bf16.mxu0 %v6950
  %7485 = vmatpush1.bf16.msra.mxu0 %v6949
  %7486 = vmatprep.subr.bf16.mxu0 %v6954
  %7487 = vmatpush1.bf16.msra.mxu0 %v6953
  %7488 = vmatprep.subr.bf16.mxu0 %v6958
  %7489 = vmatpush1.bf16.msra.mxu0 %v6957
  %7490 = vmatprep.mubr.bf16.mxu0 %v5726
  %7491 = vmatmul.mubr.bf16.gmra.mrb[0].mxu0 %v5725
  %v7492 = vpop.f32.mrb[0].mxu0
  %v7493 = vadd.f32 %v7380, %v7492
  %v7494 = vpop.f32.mrb[0].mxu0
  %v7495 = vadd.f32 %v7382, %v7494
  %v7496 = vpop.f32.mrb[0].mxu0
  %v7497 = vadd.f32 %v7384, %v7496
  %v7498 = vpop.f32.mrb[0].mxu0
  %v7499 = vadd.f32 %v7386, %v7498
  %7500 = vmatprep.mubr.bf16.mxu0 %v5734
  %7501 = vmatmul.mubr.bf16.gmra.mrb[0].mxu0 %v5733
  %v7502 = vpop.f32.mrb[0].mxu0
  %v7503 = vadd.f32 %v7390, %v7502
  %v7504 = vpop.f32.mrb[0].mxu0
  %v7505 = vadd.f32 %v7392, %v7504
  %v7506 = vpop.f32.mrb[0].mxu0
  %v7507 = vadd.f32 %v7394, %v7506
  %v7508 = vpop.f32.mrb[0].mxu0
  %v7509 = vadd.f32 %v7396, %v7508
  %7510 = vmatprep.mubr.bf16.mxu0 %v5742
  %7511 = vmatmul.mubr.bf16.gmra.mrb[0].mxu0 %v5741
  %v7512 = vpop.f32.mrb[0].mxu0
  %v7513 = vadd.f32 %v7400, %v7512
  %v7514 = vpop.f32.mrb[0].mxu0
  %v7515 = vadd.f32 %v7402, %v7514
  %v7516 = vpop.f32.mrb[0].mxu0
  %v7517 = vadd.f32 %v7404, %v7516
  %v7518 = vpop.f32.mrb[0].mxu0
  %v7519 = vadd.f32 %v7406, %v7518
  %7520 = vmatprep.mubr.bf16.mxu0 %v5750
  %7521 = vmatmul.mubr.bf16.gmra.mrb[0].mxu0 %v5749
  %v7522 = vpop.f32.mrb[0].mxu0
  %v7523 = vadd.f32 %v7410, %v7522
  %v7524 = vpop.f32.mrb[0].mxu0
  %v7525 = vadd.f32 %v7412, %v7524
  %v7526 = vpop.f32.mrb[0].mxu0
  %v7527 = vadd.f32 %v7414, %v7526
  %v7528 = vpop.f32.mrb[0].mxu0
  %v7529 = vadd.f32 %v7416, %v7528
  %7530 = vmatprep.mubr.bf16.mxu0 %v5758
  %7531 = vmatmul.mubr.bf16.gmra.mrb[0].mxu0 %v5757
  %v7532 = vpop.f32.mrb[0].mxu0
  %v7533 = vadd.f32 %v7420, %v7532
  %v7534 = vpop.f32.mrb[0].mxu0
  %v7535 = vadd.f32 %v7422, %v7534
  %v7536 = vpop.f32.mrb[0].mxu0
  %v7537 = vadd.f32 %v7424, %v7536
  %v7538 = vpop.f32.mrb[0].mxu0
  %v7539 = vadd.f32 %v7426, %v7538
  %7540 = vmatprep.mubr.bf16.mxu0 %v5766
  %7541 = vmatmul.mubr.bf16.gmra.mrb[0].mxu0 %v5765
  %v7542 = vpop.f32.mrb[0].mxu0
  %v7543 = vadd.f32 %v7430, %v7542
  %v7544 = vpop.f32.mrb[0].mxu0
  %v7545 = vadd.f32 %v7432, %v7544
  %v7546 = vpop.f32.mrb[0].mxu0
  %v7547 = vadd.f32 %v7434, %v7546
  %v7548 = vpop.f32.mrb[0].mxu0
  %v7549 = vadd.f32 %v7436, %v7548
  %7550 = vmatprep.mubr.bf16.mxu0 %v5774
  %7551 = vmatmul.mubr.bf16.gmra.mrb[0].mxu0 %v5773
  %v7552 = vpop.f32.mrb[0].mxu0
  %v7553 = vadd.f32 %v7440, %v7552
  %v7554 = vpop.f32.mrb[0].mxu0
  %v7555 = vadd.f32 %v7442, %v7554
  %v7556 = vpop.f32.mrb[0].mxu0
  %v7557 = vadd.f32 %v7444, %v7556
  %v7558 = vpop.f32.mrb[0].mxu0
  %v7559 = vadd.f32 %v7446, %v7558
  %7560 = vmatprep.mubr.bf16.mxu0 %v5782
  %7561 = vmatmul.mubr.bf16.gmra.mrb[0].mxu0 %v5781
  %v7562 = vpop.f32.mrb[0].mxu0
  %v7563 = vadd.f32 %v7450, %v7562
  %v7564 = vpop.f32.mrb[0].mxu0
  %v7565 = vadd.f32 %v7452, %v7564
  %v7566 = vpop.f32.mrb[0].mxu0
  %v7567 = vadd.f32 %v7454, %v7566
  %v7568 = vpop.f32.mrb[0].mxu0
  %v7569 = vadd.f32 %v7456, %v7568
  %7570 = vdwg.mxu0
  %7571 = vmatprep.subr.bf16.mxu0 %v6962
  %7572 = vmatpush1.bf16.msra.mxu0 %v6961
  %7573 = vmatprep.subr.bf16.mxu0 %v6966
  %7574 = vmatpush1.bf16.msra.mxu0 %v6965
  %7575 = vmatprep.subr.bf16.mxu0 %v6970
  %7576 = vmatpush1.bf16.msra.mxu0 %v6969
  %7577 = vmatprep.subr.bf16.mxu0 %v6974
  %7578 = vmatpush1.bf16.msra.mxu0 %v6973
  %7579 = vmatprep.subr.bf16.mxu0 %v6978
  %7580 = vmatpush1.bf16.msra.mxu0 %v6977
  %7581 = vmatprep.subr.bf16.mxu0 %v6982
  %7582 = vmatpush1.bf16.msra.mxu0 %v6981
  %7583 = vmatprep.subr.bf16.mxu0 %v6986
  %7584 = vmatpush1.bf16.msra.mxu0 %v6985
  %7585 = vmatprep.subr.bf16.mxu0 %v6990
  %7586 = vmatpush1.bf16.msra.mxu0 %v6989
  %7587 = vmatprep.subr.bf16.mxu0 %v6994
  %7588 = vmatpush1.bf16.msra.mxu0 %v6993
  %7589 = vmatprep.subr.bf16.mxu0 %v6998
  %7590 = vmatpush1.bf16.msra.mxu0 %v6997
  %7591 = vmatprep.subr.bf16.mxu0 %v7002
  %7592 = vmatpush1.bf16.msra.mxu0 %v7001
  %7593 = vmatprep.subr.bf16.mxu0 %v7006
  %7594 = vmatpush1.bf16.msra.mxu0 %v7005
  %7595 = vmatprep.subr.bf16.mxu0 %v7010
  %7596 = vmatpush1.bf16.msra.mxu0 %v7009
  %7597 = vmatprep.subr.bf16.mxu0 %v7014
  %7598 = vmatpush1.bf16.msra.mxu0 %v7013
  %7599 = vmatprep.subr.bf16.mxu0 %v7018
  %7600 = vmatpush1.bf16.msra.mxu0 %v7017
  %7601 = vmatprep.subr.bf16.mxu0 %v7022
  %7602 = vmatpush1.bf16.msra.mxu0 %v7021
  %7603 = vmatprep.mubr.bf16.mxu0 %v5728
  %7604 = vmatmul.mubr.bf16.gmra.mrb[0].mxu0 %v5727
  %v7605 = vpop.f32.mrb[0].mxu0
  %v7606 = vadd.f32 %v7493, %v7605
  %v7607 = vpop.f32.mrb[0].mxu0
  %v7608 = vadd.f32 %v7495, %v7607
  %v7609 = vpop.f32.mrb[0].mxu0
  %v7610 = vadd.f32 %v7497, %v7609
  %v7611 = vpop.f32.mrb[0].mxu0
  %v7612 = vadd.f32 %v7499, %v7611
  %7613 = vmatprep.mubr.bf16.mxu0 %v5736
  %7614 = vmatmul.mubr.bf16.gmra.mrb[0].mxu0 %v5735
  %v7615 = vpop.f32.mrb[0].mxu0
  %v7616 = vadd.f32 %v7503, %v7615
  %v7617 = vpop.f32.mrb[0].mxu0
  %v7618 = vadd.f32 %v7505, %v7617
  %v7619 = vpop.f32.mrb[0].mxu0
  %v7620 = vadd.f32 %v7507, %v7619
  %v7621 = vpop.f32.mrb[0].mxu0
  %v7622 = vadd.f32 %v7509, %v7621
  %7623 = vmatprep.mubr.bf16.mxu0 %v5744
  %7624 = vmatmul.mubr.bf16.gmra.mrb[0].mxu0 %v5743
  %v7625 = vpop.f32.mrb[0].mxu0
  %v7626 = vadd.f32 %v7513, %v7625
  %v7627 = vpop.f32.mrb[0].mxu0
  %v7628 = vadd.f32 %v7515, %v7627
  %v7629 = vpop.f32.mrb[0].mxu0
  %v7630 = vadd.f32 %v7517, %v7629
  %v7631 = vpop.f32.mrb[0].mxu0
  %v7632 = vadd.f32 %v7519, %v7631
  %7633 = vmatprep.mubr.bf16.mxu0 %v5752
  %7634 = vmatmul.mubr.bf16.gmra.mrb[0].mxu0 %v5751
  %v7635 = vpop.f32.mrb[0].mxu0
  %v7636 = vadd.f32 %v7523, %v7635
  %v7637 = vpop.f32.mrb[0].mxu0
  %v7638 = vadd.f32 %v7525, %v7637
  %v7639 = vpop.f32.mrb[0].mxu0
  %v7640 = vadd.f32 %v7527, %v7639
  %v7641 = vpop.f32.mrb[0].mxu0
  %v7642 = vadd.f32 %v7529, %v7641
  %7643 = vmatprep.mubr.bf16.mxu0 %v5760
  %7644 = vmatmul.mubr.bf16.gmra.mrb[0].mxu0 %v5759
  %v7645 = vpop.f32.mrb[0].mxu0
  %v7646 = vadd.f32 %v7533, %v7645
  %v7647 = vpop.f32.mrb[0].mxu0
  %v7648 = vadd.f32 %v7535, %v7647
  %v7649 = vpop.f32.mrb[0].mxu0
  %v7650 = vadd.f32 %v7537, %v7649
  %v7651 = vpop.f32.mrb[0].mxu0
  %v7652 = vadd.f32 %v7539, %v7651
  %7653 = vmatprep.mubr.bf16.mxu0 %v5768
  %7654 = vmatmul.mubr.bf16.gmra.mrb[0].mxu0 %v5767
  %v7655 = vpop.f32.mrb[0].mxu0
  %v7656 = vadd.f32 %v7543, %v7655
  %v7657 = vpop.f32.mrb[0].mxu0
  %v7658 = vadd.f32 %v7545, %v7657
  %v7659 = vpop.f32.mrb[0].mxu0
  %v7660 = vadd.f32 %v7547, %v7659
  %v7661 = vpop.f32.mrb[0].mxu0
  %v7662 = vadd.f32 %v7549, %v7661
  %7663 = vmatprep.mubr.bf16.mxu0 %v5776
  %7664 = vmatmul.mubr.bf16.gmra.mrb[0].mxu0 %v5775
  %v7665 = vpop.f32.mrb[0].mxu0
  %v7666 = vadd.f32 %v7553, %v7665
  %v7667 = vpop.f32.mrb[0].mxu0
  %v7668 = vadd.f32 %v7555, %v7667
  %v7669 = vpop.f32.mrb[0].mxu0
  %v7670 = vadd.f32 %v7557, %v7669
  %v7671 = vpop.f32.mrb[0].mxu0
  %v7672 = vadd.f32 %v7559, %v7671
  %7673 = vmatprep.mubr.bf16.mxu0 %v5784
  %7674 = vmatmul.mubr.bf16.gmra.mrb[0].mxu0 %v5783
  %v7675 = vpop.f32.mrb[0].mxu0
  %v7676 = vadd.f32 %v7563, %v7675
  %v7677 = vpop.f32.mrb[0].mxu0
  %v7678 = vadd.f32 %v7565, %v7677
  %v7679 = vpop.f32.mrb[0].mxu0
  %v7680 = vadd.f32 %v7567, %v7679
  %v7681 = vpop.f32.mrb[0].mxu0
  %v7682 = vadd.f32 %v7569, %v7681
  %7683 = vdwg.mxu0
  %7684 = vmatprep.subr.bf16.mxu0 %v7026
  %7685 = vmatpush1.bf16.msra.mxu0 %v7025
  %7686 = vmatprep.subr.bf16.mxu0 %v7030
  %7687 = vmatpush1.bf16.msra.mxu0 %v7029
  %7688 = vmatprep.subr.bf16.mxu0 %v7034
  %7689 = vmatpush1.bf16.msra.mxu0 %v7033
  %7690 = vmatprep.subr.bf16.mxu0 %v7038
  %7691 = vmatpush1.bf16.msra.mxu0 %v7037
  %7692 = vmatprep.subr.bf16.mxu0 %v7042
  %7693 = vmatpush1.bf16.msra.mxu0 %v7041
  %7694 = vmatprep.subr.bf16.mxu0 %v7046
  %7695 = vmatpush1.bf16.msra.mxu0 %v7045
  %7696 = vmatprep.subr.bf16.mxu0 %v7050
  %7697 = vmatpush1.bf16.msra.mxu0 %v7049
  %7698 = vmatprep.subr.bf16.mxu0 %v7054
  %7699 = vmatpush1.bf16.msra.mxu0 %v7053
  %7700 = vmatprep.subr.bf16.mxu0 %v7058
  %7701 = vmatpush1.bf16.msra.mxu0 %v7057
  %7702 = vmatprep.subr.bf16.mxu0 %v7062
  %7703 = vmatpush1.bf16.msra.mxu0 %v7061
  %7704 = vmatprep.subr.bf16.mxu0 %v7066
  %7705 = vmatpush1.bf16.msra.mxu0 %v7065
  %7706 = vmatprep.subr.bf16.mxu0 %v7070
  %7707 = vmatpush1.bf16.msra.mxu0 %v7069
  %7708 = vmatprep.subr.bf16.mxu0 %v7074
  %7709 = vmatpush1.bf16.msra.mxu0 %v7073
  %7710 = vmatprep.subr.bf16.mxu0 %v7078
  %7711 = vmatpush1.bf16.msra.mxu0 %v7077
  %7712 = vmatprep.subr.bf16.mxu0 %v7082
  %7713 = vmatpush1.bf16.msra.mxu0 %v7081
  %7714 = vmatprep.subr.bf16.mxu0 %v7086
  %7715 = vmatpush1.bf16.msra.mxu0 %v7085
  %7716 = vmatprep.mubr.bf16.mxu0 %v5730
  %7717 = vmatmul.mubr.bf16.gmra.mrb[0].mxu0 %v5729
  %v7718 = vpop.f32.mrb[0].mxu0
  %v7719 = vadd.f32 %v7606, %v7718
  %v7720 = vpop.f32.mrb[0].mxu0
  %v7721 = vadd.f32 %v7608, %v7720
  %v7722 = vpop.f32.mrb[0].mxu0
  %v7723 = vadd.f32 %v7610, %v7722
  %v7724 = vpop.f32.mrb[0].mxu0
  %v7725 = vadd.f32 %v7612, %v7724
  %7726 = vmatprep.mubr.bf16.mxu0 %v5738
  %7727 = vmatmul.mubr.bf16.gmra.mrb[0].mxu0 %v5737
  %v7728 = vpop.f32.mrb[0].mxu0
  %v7729 = vadd.f32 %v7616, %v7728
  %v7730 = vpop.f32.mrb[0].mxu0
  %v7731 = vadd.f32 %v7618, %v7730
  %v7732 = vpop.f32.mrb[0].mxu0
  %v7733 = vadd.f32 %v7620, %v7732
  %v7734 = vpop.f32.mrb[0].mxu0
  %v7735 = vadd.f32 %v7622, %v7734
  %7736 = vmatprep.mubr.bf16.mxu0 %v5746
  %7737 = vmatmul.mubr.bf16.gmra.mrb[0].mxu0 %v5745
  %v7738 = vpop.f32.mrb[0].mxu0
  %v7739 = vadd.f32 %v7626, %v7738
  %v7740 = vpop.f32.mrb[0].mxu0
  %v7741 = vadd.f32 %v7628, %v7740
  %v7742 = vpop.f32.mrb[0].mxu0
  %v7743 = vadd.f32 %v7630, %v7742
  %v7744 = vpop.f32.mrb[0].mxu0
  %v7745 = vadd.f32 %v7632, %v7744
  %7746 = vmatprep.mubr.bf16.mxu0 %v5754
  %7747 = vmatmul.mubr.bf16.gmra.mrb[0].mxu0 %v5753
  %v7748 = vpop.f32.mrb[0].mxu0
  %v7749 = vadd.f32 %v7636, %v7748
  %v7750 = vpop.f32.mrb[0].mxu0
  %v7751 = vadd.f32 %v7638, %v7750
  %v7752 = vpop.f32.mrb[0].mxu0
  %v7753 = vadd.f32 %v7640, %v7752
  %v7754 = vpop.f32.mrb[0].mxu0
  %v7755 = vadd.f32 %v7642, %v7754
  %7756 = vmatprep.mubr.bf16.mxu0 %v5762
  %7757 = vmatmul.mubr.bf16.gmra.mrb[0].mxu0 %v5761
  %v7758 = vpop.f32.mrb[0].mxu0
  %v7759 = vadd.f32 %v7646, %v7758
  %v7760 = vpop.f32.mrb[0].mxu0
  %v7761 = vadd.f32 %v7648, %v7760
  %v7762 = vpop.f32.mrb[0].mxu0
  %v7763 = vadd.f32 %v7650, %v7762
  %v7764 = vpop.f32.mrb[0].mxu0
  %v7765 = vadd.f32 %v7652, %v7764
  %7766 = vmatprep.mubr.bf16.mxu0 %v5770
  %7767 = vmatmul.mubr.bf16.gmra.mrb[0].mxu0 %v5769
  %v7768 = vpop.f32.mrb[0].mxu0
  %v7769 = vadd.f32 %v7656, %v7768
  %v7770 = vpop.f32.mrb[0].mxu0
  %v7771 = vadd.f32 %v7658, %v7770
  %v7772 = vpop.f32.mrb[0].mxu0
  %v7773 = vadd.f32 %v7660, %v7772
  %v7774 = vpop.f32.mrb[0].mxu0
  %v7775 = vadd.f32 %v7662, %v7774
  %7776 = vmatprep.mubr.bf16.mxu0 %v5778
  %7777 = vmatmul.mubr.bf16.gmra.mrb[0].mxu0 %v5777
  %v7778 = vpop.f32.mrb[0].mxu0
  %v7779 = vadd.f32 %v7666, %v7778
  %v7780 = vpop.f32.mrb[0].mxu0
  %v7781 = vadd.f32 %v7668, %v7780
  %v7782 = vpop.f32.mrb[0].mxu0
  %v7783 = vadd.f32 %v7670, %v7782
  %v7784 = vpop.f32.mrb[0].mxu0
  %v7785 = vadd.f32 %v7672, %v7784
  %7786 = vmatprep.mubr.bf16.mxu0 %v5786
  %7787 = vmatmul.mubr.bf16.gmra.mrb[0].mxu0 %v5785
  %v7788 = vpop.f32.mrb[0].mxu0
  %v7789 = vadd.f32 %v7676, %v7788
  %v7790 = vpop.f32.mrb[0].mxu0
  %v7791 = vadd.f32 %v7678, %v7790
  %v7792 = vpop.f32.mrb[0].mxu0
  %v7793 = vadd.f32 %v7680, %v7792
  %v7794 = vpop.f32.mrb[0].mxu0
  %v7795 = vadd.f32 %v7682, %v7794
  %7796 = vdwg.mxu0
  %7797 = vmatprep.subr.bf16.mxu0 %v6836
  %7798 = vmatpush1.bf16.msra.mxu0 %v6835
  %7799 = vmatprep.subr.bf16.mxu0 %v6840
  %7800 = vmatpush1.bf16.msra.mxu0 %v6839
  %7801 = vmatprep.subr.bf16.mxu0 %v6844
  %7802 = vmatpush1.bf16.msra.mxu0 %v6843
  %7803 = vmatprep.subr.bf16.mxu0 %v6848
  %7804 = vmatpush1.bf16.msra.mxu0 %v6847
  %7805 = vmatprep.subr.bf16.mxu0 %v6852
  %7806 = vmatpush1.bf16.msra.mxu0 %v6851
  %7807 = vmatprep.subr.bf16.mxu0 %v6856
  %7808 = vmatpush1.bf16.msra.mxu0 %v6855
  %7809 = vmatprep.subr.bf16.mxu0 %v6860
  %7810 = vmatpush1.bf16.msra.mxu0 %v6859
  %7811 = vmatprep.subr.bf16.mxu0 %v6864
  %7812 = vmatpush1.bf16.msra.mxu0 %v6863
  %7813 = vmatprep.subr.bf16.mxu0 %v6868
  %7814 = vmatpush1.bf16.msra.mxu0 %v6867
  %7815 = vmatprep.subr.bf16.mxu0 %v6872
  %7816 = vmatpush1.bf16.msra.mxu0 %v6871
  %7817 = vmatprep.subr.bf16.mxu0 %v6876
  %7818 = vmatpush1.bf16.msra.mxu0 %v6875
  %7819 = vmatprep.subr.bf16.mxu0 %v6880
  %7820 = vmatpush1.bf16.msra.mxu0 %v6879
  %7821 = vmatprep.subr.bf16.mxu0 %v6884
  %7822 = vmatpush1.bf16.msra.mxu0 %v6883
  %7823 = vmatprep.subr.bf16.mxu0 %v6888
  %7824 = vmatpush1.bf16.msra.mxu0 %v6887
  %7825 = vmatprep.subr.bf16.mxu0 %v6892
  %7826 = vmatpush1.bf16.msra.mxu0 %v6891
  %7827 = vmatprep.subr.bf16.mxu0 %v6896
  %7828 = vmatpush1.bf16.msra.mxu0 %v6895
  %7829 = vmatprep.mubr.bf16.mxu0 %v5724
  %7830 = vmatmul.mubr.bf16.gmra.mrb[0].mxu0 %v5723
  %v7831 = vpop.f32.mrb[0].mxu0
  %v7832 = vadd.f32 %v6056, %v7831
  %v7833 = vpop.f32.mrb[0].mxu0
  %v7834 = vadd.f32 %v6060, %v7833
  %v7835 = vpop.f32.mrb[0].mxu0
  %v7836 = vadd.f32 %v6056, %v7835
  %v7837 = vpop.f32.mrb[0].mxu0
  %v7838 = vadd.f32 %v6060, %v7837
  %7839 = vmatprep.mubr.bf16.mxu0 %v5732
  %7840 = vmatmul.mubr.bf16.gmra.mrb[0].mxu0 %v5731
  %v7841 = vpop.f32.mrb[0].mxu0
  %v7842 = vadd.f32 %v6056, %v7841
  %v7843 = vpop.f32.mrb[0].mxu0
  %v7844 = vadd.f32 %v6060, %v7843
  %v7845 = vpop.f32.mrb[0].mxu0
  %v7846 = vadd.f32 %v6056, %v7845
  %v7847 = vpop.f32.mrb[0].mxu0
  %v7848 = vadd.f32 %v6060, %v7847
  %7849 = vmatprep.mubr.bf16.mxu0 %v5740
  %7850 = vmatmul.mubr.bf16.gmra.mrb[0].mxu0 %v5739
  %v7851 = vpop.f32.mrb[0].mxu0
  %v7852 = vadd.f32 %v6056, %v7851
  %v7853 = vpop.f32.mrb[0].mxu0
  %v7854 = vadd.f32 %v6060, %v7853
  %v7855 = vpop.f32.mrb[0].mxu0
  %v7856 = vadd.f32 %v6056, %v7855
  %v7857 = vpop.f32.mrb[0].mxu0
  %v7858 = vadd.f32 %v6060, %v7857
  %7859 = vmatprep.mubr.bf16.mxu0 %v5748
  %7860 = vmatmul.mubr.bf16.gmra.mrb[0].mxu0 %v5747
  %v7861 = vpop.f32.mrb[0].mxu0
  %v7862 = vadd.f32 %v6056, %v7861
  %v7863 = vpop.f32.mrb[0].mxu0
  %v7864 = vadd.f32 %v6060, %v7863
  %v7865 = vpop.f32.mrb[0].mxu0
  %v7866 = vadd.f32 %v6056, %v7865
  %v7867 = vpop.f32.mrb[0].mxu0
  %v7868 = vadd.f32 %v6060, %v7867
  %7869 = vmatprep.mubr.bf16.mxu0 %v5756
  %7870 = vmatmul.mubr.bf16.gmra.mrb[0].mxu0 %v5755
  %v7871 = vpop.f32.mrb[0].mxu0
  %v7872 = vadd.f32 %v6056, %v7871
  %v7873 = vpop.f32.mrb[0].mxu0
  %v7874 = vadd.f32 %v6060, %v7873
  %v7875 = vpop.f32.mrb[0].mxu0
  %v7876 = vadd.f32 %v6056, %v7875
  %v7877 = vpop.f32.mrb[0].mxu0
  %v7878 = vadd.f32 %v6060, %v7877
  %7879 = vmatprep.mubr.bf16.mxu0 %v5764
  %7880 = vmatmul.mubr.bf16.gmra.mrb[0].mxu0 %v5763
  %v7881 = vpop.f32.mrb[0].mxu0
  %v7882 = vadd.f32 %v6056, %v7881
  %v7883 = vpop.f32.mrb[0].mxu0
  %v7884 = vadd.f32 %v6060, %v7883
  %v7885 = vpop.f32.mrb[0].mxu0
  %v7886 = vadd.f32 %v6056, %v7885
  %v7887 = vpop.f32.mrb[0].mxu0
  %v7888 = vadd.f32 %v6060, %v7887
  %7889 = vmatprep.mubr.bf16.mxu0 %v5772
  %7890 = vmatmul.mubr.bf16.gmra.mrb[0].mxu0 %v5771
  %v7891 = vpop.f32.mrb[0].mxu0
  %v7892 = vadd.f32 %v6056, %v7891
  %v7893 = vpop.f32.mrb[0].mxu0
  %v7894 = vadd.f32 %v6060, %v7893
  %v7895 = vpop.f32.mrb[0].mxu0
  %v7896 = vadd.f32 %v6056, %v7895
  %v7897 = vpop.f32.mrb[0].mxu0
  %v7898 = vadd.f32 %v6060, %v7897
  %7899 = vmatprep.mubr.bf16.mxu0 %v5780
  %7900 = vmatmul.mubr.bf16.gmra.mrb[0].mxu0 %v5779
  %v7901 = vpop.f32.mrb[0].mxu0
  %v7902 = vadd.f32 %v6056, %v7901
  %v7903 = vpop.f32.mrb[0].mxu0
  %v7904 = vadd.f32 %v6060, %v7903
  %v7905 = vpop.f32.mrb[0].mxu0
  %v7906 = vadd.f32 %v6056, %v7905
  %v7907 = vpop.f32.mrb[0].mxu0
  %v7908 = vadd.f32 %v6060, %v7907
  %7909 = vdwg.mxu0
  %7910 = vmatprep.subr.bf16.mxu0 %v6900
  %7911 = vmatpush1.bf16.msra.mxu0 %v6899
  %7912 = vmatprep.subr.bf16.mxu0 %v6904
  %7913 = vmatpush1.bf16.msra.mxu0 %v6903
  %7914 = vmatprep.subr.bf16.mxu0 %v6908
  %7915 = vmatpush1.bf16.msra.mxu0 %v6907
  %7916 = vmatprep.subr.bf16.mxu0 %v6912
  %7917 = vmatpush1.bf16.msra.mxu0 %v6911
  %7918 = vmatprep.subr.bf16.mxu0 %v6916
  %7919 = vmatpush1.bf16.msra.mxu0 %v6915
  %7920 = vmatprep.subr.bf16.mxu0 %v6920
  %7921 = vmatpush1.bf16.msra.mxu0 %v6919
  %7922 = vmatprep.subr.bf16.mxu0 %v6924
  %7923 = vmatpush1.bf16.msra.mxu0 %v6923
  %7924 = vmatprep.subr.bf16.mxu0 %v6928
  %7925 = vmatpush1.bf16.msra.mxu0 %v6927
  %7926 = vmatprep.subr.bf16.mxu0 %v6932
  %7927 = vmatpush1.bf16.msra.mxu0 %v6931
  %7928 = vmatprep.subr.bf16.mxu0 %v6936
  %7929 = vmatpush1.bf16.msra.mxu0 %v6935
  %7930 = vmatprep.subr.bf16.mxu0 %v6940
  %7931 = vmatpush1.bf16.msra.mxu0 %v6939
  %7932 = vmatprep.subr.bf16.mxu0 %v6944
  %7933 = vmatpush1.bf16.msra.mxu0 %v6943
  %7934 = vmatprep.subr.bf16.mxu0 %v6948
  %7935 = vmatpush1.bf16.msra.mxu0 %v6947
  %7936 = vmatprep.subr.bf16.mxu0 %v6952
  %7937 = vmatpush1.bf16.msra.mxu0 %v6951
  %7938 = vmatprep.subr.bf16.mxu0 %v6956
  %7939 = vmatpush1.bf16.msra.mxu0 %v6955
  %7940 = vmatprep.subr.bf16.mxu0 %v6960
  %7941 = vmatpush1.bf16.msra.mxu0 %v6959
  %7942 = vmatprep.mubr.bf16.mxu0 %v5726
  %7943 = vmatmul.mubr.bf16.gmra.mrb[0].mxu0 %v5725
  %v7944 = vpop.f32.mrb[0].mxu0
  %v7945 = vadd.f32 %v7832, %v7944
  %v7946 = vpop.f32.mrb[0].mxu0
  %v7947 = vadd.f32 %v7834, %v7946
  %v7948 = vpop.f32.mrb[0].mxu0
  %v7949 = vadd.f32 %v7836, %v7948
  %v7950 = vpop.f32.mrb[0].mxu0
  %v7951 = vadd.f32 %v7838, %v7950
  %7952 = vmatprep.mubr.bf16.mxu0 %v5734
  %7953 = vmatmul.mubr.bf16.gmra.mrb[0].mxu0 %v5733
  %v7954 = vpop.f32.mrb[0].mxu0
  %v7955 = vadd.f32 %v7842, %v7954
  %v7956 = vpop.f32.mrb[0].mxu0
  %v7957 = vadd.f32 %v7844, %v7956
  %v7958 = vpop.f32.mrb[0].mxu0
  %v7959 = vadd.f32 %v7846, %v7958
  %v7960 = vpop.f32.mrb[0].mxu0
  %v7961 = vadd.f32 %v7848, %v7960
  %7962 = vmatprep.mubr.bf16.mxu0 %v5742
  %7963 = vmatmul.mubr.bf16.gmra.mrb[0].mxu0 %v5741
  %v7964 = vpop.f32.mrb[0].mxu0
  %v7965 = vadd.f32 %v7852, %v7964
  %v7966 = vpop.f32.mrb[0].mxu0
  %v7967 = vadd.f32 %v7854, %v7966
  %v7968 = vpop.f32.mrb[0].mxu0
  %v7969 = vadd.f32 %v7856, %v7968
  %v7970 = vpop.f32.mrb[0].mxu0
  %v7971 = vadd.f32 %v7858, %v7970
  %7972 = vmatprep.mubr.bf16.mxu0 %v5750
  %7973 = vmatmul.mubr.bf16.gmra.mrb[0].mxu0 %v5749
  %v7974 = vpop.f32.mrb[0].mxu0
  %v7975 = vadd.f32 %v7862, %v7974
  %v7976 = vpop.f32.mrb[0].mxu0
  %v7977 = vadd.f32 %v7864, %v7976
  %v7978 = vpop.f32.mrb[0].mxu0
  %v7979 = vadd.f32 %v7866, %v7978
  %v7980 = vpop.f32.mrb[0].mxu0
  %v7981 = vadd.f32 %v7868, %v7980
  %7982 = vmatprep.mubr.bf16.mxu0 %v5758
  %7983 = vmatmul.mubr.bf16.gmra.mrb[0].mxu0 %v5757
  %v7984 = vpop.f32.mrb[0].mxu0
  %v7985 = vadd.f32 %v7872, %v7984
  %v7986 = vpop.f32.mrb[0].mxu0
  %v7987 = vadd.f32 %v7874, %v7986
  %v7988 = vpop.f32.mrb[0].mxu0
  %v7989 = vadd.f32 %v7876, %v7988
  %v7990 = vpop.f32.mrb[0].mxu0
  %v7991 = vadd.f32 %v7878, %v7990
  %7992 = vmatprep.mubr.bf16.mxu0 %v5766
  %7993 = vmatmul.mubr.bf16.gmra.mrb[0].mxu0 %v5765
  %v7994 = vpop.f32.mrb[0].mxu0
  %v7995 = vadd.f32 %v7882, %v7994
  %v7996 = vpop.f32.mrb[0].mxu0
  %v7997 = vadd.f32 %v7884, %v7996
  %v7998 = vpop.f32.mrb[0].mxu0
  %v7999 = vadd.f32 %v7886, %v7998
  %v8000 = vpop.f32.mrb[0].mxu0
  %v8001 = vadd.f32 %v7888, %v8000
  %8002 = vmatprep.mubr.bf16.mxu0 %v5774
  %8003 = vmatmul.mubr.bf16.gmra.mrb[0].mxu0 %v5773
  %v8004 = vpop.f32.mrb[0].mxu0
  %v8005 = vadd.f32 %v7892, %v8004
  %v8006 = vpop.f32.mrb[0].mxu0
  %v8007 = vadd.f32 %v7894, %v8006
  %v8008 = vpop.f32.mrb[0].mxu0
  %v8009 = vadd.f32 %v7896, %v8008
  %v8010 = vpop.f32.mrb[0].mxu0
  %v8011 = vadd.f32 %v7898, %v8010
  %8012 = vmatprep.mubr.bf16.mxu0 %v5782
  %8013 = vmatmul.mubr.bf16.gmra.mrb[0].mxu0 %v5781
  %v8014 = vpop.f32.mrb[0].mxu0
  %v8015 = vadd.f32 %v7902, %v8014
  %v8016 = vpop.f32.mrb[0].mxu0
  %v8017 = vadd.f32 %v7904, %v8016
  %v8018 = vpop.f32.mrb[0].mxu0
  %v8019 = vadd.f32 %v7906, %v8018
  %v8020 = vpop.f32.mrb[0].mxu0
  %v8021 = vadd.f32 %v7908, %v8020
  %8022 = vdwg.mxu0
  %8023 = vmatprep.subr.bf16.mxu0 %v6964
  %8024 = vmatpush1.bf16.msra.mxu0 %v6963
  %8025 = vmatprep.subr.bf16.mxu0 %v6968
  %8026 = vmatpush1.bf16.msra.mxu0 %v6967
  %8027 = vmatprep.subr.bf16.mxu0 %v6972
  %8028 = vmatpush1.bf16.msra.mxu0 %v6971
  %8029 = vmatprep.subr.bf16.mxu0 %v6976
  %8030 = vmatpush1.bf16.msra.mxu0 %v6975
  %8031 = vmatprep.subr.bf16.mxu0 %v6980
  %8032 = vmatpush1.bf16.msra.mxu0 %v6979
  %8033 = vmatprep.subr.bf16.mxu0 %v6984
  %8034 = vmatpush1.bf16.msra.mxu0 %v6983
  %8035 = vmatprep.subr.bf16.mxu0 %v6988
  %8036 = vmatpush1.bf16.msra.mxu0 %v6987
  %8037 = vmatprep.subr.bf16.mxu0 %v6992
  %8038 = vmatpush1.bf16.msra.mxu0 %v6991
  %8039 = vmatprep.subr.bf16.mxu0 %v6996
  %8040 = vmatpush1.bf16.msra.mxu0 %v6995
  %8041 = vmatprep.subr.bf16.mxu0 %v7000
  %8042 = vmatpush1.bf16.msra.mxu0 %v6999
  %8043 = vmatprep.subr.bf16.mxu0 %v7004
  %8044 = vmatpush1.bf16.msra.mxu0 %v7003
  %8045 = vmatprep.subr.bf16.mxu0 %v7008
  %8046 = vmatpush1.bf16.msra.mxu0 %v7007
  %8047 = vmatprep.subr.bf16.mxu0 %v7012
  %8048 = vmatpush1.bf16.msra.mxu0 %v7011
  %8049 = vmatprep.subr.bf16.mxu0 %v7016
  %8050 = vmatpush1.bf16.msra.mxu0 %v7015
  %8051 = vmatprep.subr.bf16.mxu0 %v7020
  %8052 = vmatpush1.bf16.msra.mxu0 %v7019
  %8053 = vmatprep.subr.bf16.mxu0 %v7024
  %8054 = vmatpush1.bf16.msra.mxu0 %v7023
  %8055 = vmatprep.mubr.bf16.mxu0 %v5728
  %8056 = vmatmul.mubr.bf16.gmra.mrb[0].mxu0 %v5727
  %v8057 = vpop.f32.mrb[0].mxu0
  %v8058 = vadd.f32 %v7945, %v8057
  %v8059 = vpop.f32.mrb[0].mxu0
  %v8060 = vadd.f32 %v7947, %v8059
  %v8061 = vpop.f32.mrb[0].mxu0
  %v8062 = vadd.f32 %v7949, %v8061
  %v8063 = vpop.f32.mrb[0].mxu0
  %v8064 = vadd.f32 %v7951, %v8063
  %8065 = vmatprep.mubr.bf16.mxu0 %v5736
  %8066 = vmatmul.mubr.bf16.gmra.mrb[0].mxu0 %v5735
  %v8067 = vpop.f32.mrb[0].mxu0
  %v8068 = vadd.f32 %v7955, %v8067
  %v8069 = vpop.f32.mrb[0].mxu0
  %v8070 = vadd.f32 %v7957, %v8069
  %v8071 = vpop.f32.mrb[0].mxu0
  %v8072 = vadd.f32 %v7959, %v8071
  %v8073 = vpop.f32.mrb[0].mxu0
  %v8074 = vadd.f32 %v7961, %v8073
  %8075 = vmatprep.mubr.bf16.mxu0 %v5744
  %8076 = vmatmul.mubr.bf16.gmra.mrb[0].mxu0 %v5743
  %v8077 = vpop.f32.mrb[0].mxu0
  %v8078 = vadd.f32 %v7965, %v8077
  %v8079 = vpop.f32.mrb[0].mxu0
  %v8080 = vadd.f32 %v7967, %v8079
  %v8081 = vpop.f32.mrb[0].mxu0
  %v8082 = vadd.f32 %v7969, %v8081
  %v8083 = vpop.f32.mrb[0].mxu0
  %v8084 = vadd.f32 %v7971, %v8083
  %8085 = vmatprep.mubr.bf16.mxu0 %v5752
  %8086 = vmatmul.mubr.bf16.gmra.mrb[0].mxu0 %v5751
  %v8087 = vpop.f32.mrb[0].mxu0
  %v8088 = vadd.f32 %v7975, %v8087
  %v8089 = vpop.f32.mrb[0].mxu0
  %v8090 = vadd.f32 %v7977, %v8089
  %v8091 = vpop.f32.mrb[0].mxu0
  %v8092 = vadd.f32 %v7979, %v8091
  %v8093 = vpop.f32.mrb[0].mxu0
  %v8094 = vadd.f32 %v7981, %v8093
  %8095 = vmatprep.mubr.bf16.mxu0 %v5760
  %8096 = vmatmul.mubr.bf16.gmra.mrb[0].mxu0 %v5759
  %v8097 = vpop.f32.mrb[0].mxu0
  %v8098 = vadd.f32 %v7985, %v8097
  %v8099 = vpop.f32.mrb[0].mxu0
  %v8100 = vadd.f32 %v7987, %v8099
  %v8101 = vpop.f32.mrb[0].mxu0
  %v8102 = vadd.f32 %v7989, %v8101
  %v8103 = vpop.f32.mrb[0].mxu0
  %v8104 = vadd.f32 %v7991, %v8103
  %8105 = vmatprep.mubr.bf16.mxu0 %v5768
  %8106 = vmatmul.mubr.bf16.gmra.mrb[0].mxu0 %v5767
  %v8107 = vpop.f32.mrb[0].mxu0
  %v8108 = vadd.f32 %v7995, %v8107
  %v8109 = vpop.f32.mrb[0].mxu0
  %v8110 = vadd.f32 %v7997, %v8109
  %v8111 = vpop.f32.mrb[0].mxu0
  %v8112 = vadd.f32 %v7999, %v8111
  %v8113 = vpop.f32.mrb[0].mxu0
  %v8114 = vadd.f32 %v8001, %v8113
  %8115 = vmatprep.mubr.bf16.mxu0 %v5776
  %8116 = vmatmul.mubr.bf16.gmra.mrb[0].mxu0 %v5775
  %v8117 = vpop.f32.mrb[0].mxu0
  %v8118 = vadd.f32 %v8005, %v8117
  %v8119 = vpop.f32.mrb[0].mxu0
  %v8120 = vadd.f32 %v8007, %v8119
  %v8121 = vpop.f32.mrb[0].mxu0
  %v8122 = vadd.f32 %v8009, %v8121
  %v8123 = vpop.f32.mrb[0].mxu0
  %v8124 = vadd.f32 %v8011, %v8123
  %8125 = vmatprep.mubr.bf16.mxu0 %v5784
  %8126 = vmatmul.mubr.bf16.gmra.mrb[0].mxu0 %v5783
  %v8127 = vpop.f32.mrb[0].mxu0
  %v8128 = vadd.f32 %v8015, %v8127
  %v8129 = vpop.f32.mrb[0].mxu0
  %v8130 = vadd.f32 %v8017, %v8129
  %v8131 = vpop.f32.mrb[0].mxu0
  %v8132 = vadd.f32 %v8019, %v8131
  %v8133 = vpop.f32.mrb[0].mxu0
  %v8134 = vadd.f32 %v8021, %v8133
  %8135 = vdwg.mxu0
  %8136 = vmatprep.subr.bf16.mxu0 %v7028
  %8137 = vmatpush1.bf16.msra.mxu0 %v7027
  %8138 = vmatprep.subr.bf16.mxu0 %v7032
  %8139 = vmatpush1.bf16.msra.mxu0 %v7031
  %8140 = vmatprep.subr.bf16.mxu0 %v7036
  %8141 = vmatpush1.bf16.msra.mxu0 %v7035
  %8142 = vmatprep.subr.bf16.mxu0 %v7040
  %8143 = vmatpush1.bf16.msra.mxu0 %v7039
  %8144 = vmatprep.subr.bf16.mxu0 %v7044
  %8145 = vmatpush1.bf16.msra.mxu0 %v7043
  %8146 = vmatprep.subr.bf16.mxu0 %v7048
  %8147 = vmatpush1.bf16.msra.mxu0 %v7047
  %8148 = vmatprep.subr.bf16.mxu0 %v7052
  %8149 = vmatpush1.bf16.msra.mxu0 %v7051
  %8150 = vmatprep.subr.bf16.mxu0 %v7056
  %8151 = vmatpush1.bf16.msra.mxu0 %v7055
  %8152 = vmatprep.subr.bf16.mxu0 %v7060
  %8153 = vmatpush1.bf16.msra.mxu0 %v7059
  %8154 = vmatprep.subr.bf16.mxu0 %v7064
  %8155 = vmatpush1.bf16.msra.mxu0 %v7063
  %8156 = vmatprep.subr.bf16.mxu0 %v7068
  %8157 = vmatpush1.bf16.msra.mxu0 %v7067
  %8158 = vmatprep.subr.bf16.mxu0 %v7072
  %8159 = vmatpush1.bf16.msra.mxu0 %v7071
  %8160 = vmatprep.subr.bf16.mxu0 %v7076
  %8161 = vmatpush1.bf16.msra.mxu0 %v7075
  %8162 = vmatprep.subr.bf16.mxu0 %v7080
  %8163 = vmatpush1.bf16.msra.mxu0 %v7079
  %8164 = vmatprep.subr.bf16.mxu0 %v7084
  %8165 = vmatpush1.bf16.msra.mxu0 %v7083
  %8166 = vmatprep.subr.bf16.mxu0 %v7088
  %8167 = vmatpush1.bf16.msra.mxu0 %v7087
  %8168 = vmatprep.mubr.bf16.mxu0 %v5730
  %8169 = vmatmul.mubr.bf16.gmra.mrb[0].mxu0 %v5729
  %v8170 = vpop.f32.mrb[0].mxu0
  %v8171 = vadd.f32 %v8058, %v8170
  %v8172 = vpop.f32.mrb[0].mxu0
  %v8173 = vadd.f32 %v8060, %v8172
  %v8174 = vpop.f32.mrb[0].mxu0
  %v8175 = vadd.f32 %v8062, %v8174
  %v8176 = vpop.f32.mrb[0].mxu0
  %v8177 = vadd.f32 %v8064, %v8176
  %8178 = vmatprep.mubr.bf16.mxu0 %v5738
  %8179 = vmatmul.mubr.bf16.gmra.mrb[0].mxu0 %v5737
  %v8180 = vpop.f32.mrb[0].mxu0
  %v8181 = vadd.f32 %v8068, %v8180
  %v8182 = vpop.f32.mrb[0].mxu0
  %v8183 = vadd.f32 %v8070, %v8182
  %v8184 = vpop.f32.mrb[0].mxu0
  %v8185 = vadd.f32 %v8072, %v8184
  %v8186 = vpop.f32.mrb[0].mxu0
  %v8187 = vadd.f32 %v8074, %v8186
  %8188 = vmatprep.mubr.bf16.mxu0 %v5746
  %8189 = vmatmul.mubr.bf16.gmra.mrb[0].mxu0 %v5745
  %v8190 = vpop.f32.mrb[0].mxu0
  %v8191 = vadd.f32 %v8078, %v8190
  %v8192 = vpop.f32.mrb[0].mxu0
  %v8193 = vadd.f32 %v8080, %v8192
  %v8194 = vpop.f32.mrb[0].mxu0
  %v8195 = vadd.f32 %v8082, %v8194
  %v8196 = vpop.f32.mrb[0].mxu0
  %v8197 = vadd.f32 %v8084, %v8196
  %8198 = vmatprep.mubr.bf16.mxu0 %v5754
  %8199 = vmatmul.mubr.bf16.gmra.mrb[0].mxu0 %v5753
  %v8200 = vpop.f32.mrb[0].mxu0
  %v8201 = vadd.f32 %v8088, %v8200
  %v8202 = vpop.f32.mrb[0].mxu0
  %v8203 = vadd.f32 %v8090, %v8202
  %v8204 = vpop.f32.mrb[0].mxu0
  %v8205 = vadd.f32 %v8092, %v8204
  %v8206 = vpop.f32.mrb[0].mxu0
  %v8207 = vadd.f32 %v8094, %v8206
  %8208 = vmatprep.mubr.bf16.mxu0 %v5762
  %8209 = vmatmul.mubr.bf16.gmra.mrb[0].mxu0 %v5761
  %v8210 = vpop.f32.mrb[0].mxu0
  %v8211 = vadd.f32 %v8098, %v8210
  %v8212 = vpop.f32.mrb[0].mxu0
  %v8213 = vadd.f32 %v8100, %v8212
  %v8214 = vpop.f32.mrb[0].mxu0
  %v8215 = vadd.f32 %v8102, %v8214
  %v8216 = vpop.f32.mrb[0].mxu0
  %v8217 = vadd.f32 %v8104, %v8216
  %8218 = vmatprep.mubr.bf16.mxu0 %v5770
  %8219 = vmatmul.mubr.bf16.gmra.mrb[0].mxu0 %v5769
  %v8220 = vpop.f32.mrb[0].mxu0
  %v8221 = vadd.f32 %v8108, %v8220
  %v8222 = vpop.f32.mrb[0].mxu0
  %v8223 = vadd.f32 %v8110, %v8222
  %v8224 = vpop.f32.mrb[0].mxu0
  %v8225 = vadd.f32 %v8112, %v8224
  %v8226 = vpop.f32.mrb[0].mxu0
  %v8227 = vadd.f32 %v8114, %v8226
  %8228 = vmatprep.mubr.bf16.mxu0 %v5778
  %8229 = vmatmul.mubr.bf16.gmra.mrb[0].mxu0 %v5777
  %v8230 = vpop.f32.mrb[0].mxu0
  %v8231 = vadd.f32 %v8118, %v8230
  %v8232 = vpop.f32.mrb[0].mxu0
  %v8233 = vadd.f32 %v8120, %v8232
  %v8234 = vpop.f32.mrb[0].mxu0
  %v8235 = vadd.f32 %v8122, %v8234
  %v8236 = vpop.f32.mrb[0].mxu0
  %v8237 = vadd.f32 %v8124, %v8236
  %8238 = vmatprep.mubr.bf16.mxu0 %v5786
  %8239 = vmatmul.mubr.bf16.gmra.mrb[0].mxu0 %v5785
  %v8240 = vpop.f32.mrb[0].mxu0
  %v8241 = vadd.f32 %v8128, %v8240
  %v8242 = vpop.f32.mrb[0].mxu0
  %v8243 = vadd.f32 %v8130, %v8242
  %v8244 = vpop.f32.mrb[0].mxu0
  %v8245 = vadd.f32 %v8132, %v8244
  %v8246 = vpop.f32.mrb[0].mxu0
  %v8247 = vadd.f32 %v8134, %v8246
  %8248 = vdwg.mxu0
  %vm8249 = vcmp.gt.f32.partialorder %v7719, 0.0
  %vm8250 = vcmp.gt.f32.partialorder %v7721, 0.0
  %vm8251 = vcmp.gt.f32.partialorder %v8171, 0.0
  %vm8252 = vcmp.gt.f32.partialorder %v8173, 0.0
  %vm8253 = vcmp.gt.f32.partialorder %v7723, 0.0
  %vm8254 = vcmp.gt.f32.partialorder %v7725, 0.0
  %vm8255 = vcmp.gt.f32.partialorder %v8175, 0.0
  %vm8256 = vcmp.gt.f32.partialorder %v8177, 0.0
  %vm8257 = vcmp.gt.f32.partialorder %v7729, 0.0
  %vm8258 = vcmp.gt.f32.partialorder %v7731, 0.0
  %vm8259 = vcmp.gt.f32.partialorder %v8181, 0.0
  %vm8260 = vcmp.gt.f32.partialorder %v8183, 0.0
  %vm8261 = vcmp.gt.f32.partialorder %v7733, 0.0
  %vm8262 = vcmp.gt.f32.partialorder %v7735, 0.0
  %vm8263 = vcmp.gt.f32.partialorder %v8185, 0.0
  %vm8264 = vcmp.gt.f32.partialorder %v8187, 0.0
  %vm8265 = vcmp.gt.f32.partialorder %v7739, 0.0
  %vm8266 = vcmp.gt.f32.partialorder %v7741, 0.0
  %vm8267 = vcmp.gt.f32.partialorder %v8191, 0.0
  %vm8268 = vcmp.gt.f32.partialorder %v8193, 0.0
  %vm8269 = vcmp.gt.f32.partialorder %v7743, 0.0
  %vm8270 = vcmp.gt.f32.partialorder %v7745, 0.0
  %vm8271 = vcmp.gt.f32.partialorder %v8195, 0.0
  %vm8272 = vcmp.gt.f32.partialorder %v8197, 0.0
  %vm8273 = vcmp.gt.f32.partialorder %v7749, 0.0
  %vm8274 = vcmp.gt.f32.partialorder %v7751, 0.0
  %vm8275 = vcmp.gt.f32.partialorder %v8201, 0.0
  %vm8276 = vcmp.gt.f32.partialorder %v8203, 0.0
  %vm8277 = vcmp.gt.f32.partialorder %v7753, 0.0
  %vm8278 = vcmp.gt.f32.partialorder %v7755, 0.0
  %vm8279 = vcmp.gt.f32.partialorder %v8205, 0.0
  %vm8280 = vcmp.gt.f32.partialorder %v8207, 0.0
  %vm8281 = vcmp.gt.f32.partialorder %v7759, 0.0
  %vm8282 = vcmp.gt.f32.partialorder %v7761, 0.0
  %vm8283 = vcmp.gt.f32.partialorder %v8211, 0.0
  %vm8284 = vcmp.gt.f32.partialorder %v8213, 0.0
  %vm8285 = vcmp.gt.f32.partialorder %v7763, 0.0
  %vm8286 = vcmp.gt.f32.partialorder %v7765, 0.0
  %vm8287 = vcmp.gt.f32.partialorder %v8215, 0.0
  %vm8288 = vcmp.gt.f32.partialorder %v8217, 0.0
  %vm8289 = vcmp.gt.f32.partialorder %v7769, 0.0
  %vm8290 = vcmp.gt.f32.partialorder %v7771, 0.0
  %vm8291 = vcmp.gt.f32.partialorder %v8221, 0.0
  %vm8292 = vcmp.gt.f32.partialorder %v8223, 0.0
  %vm8293 = vcmp.gt.f32.partialorder %v7773, 0.0
  %vm8294 = vcmp.gt.f32.partialorder %v7775, 0.0
  %vm8295 = vcmp.gt.f32.partialorder %v8225, 0.0
  %vm8296 = vcmp.gt.f32.partialorder %v8227, 0.0
  %vm8297 = vcmp.gt.f32.partialorder %v7779, 0.0
  %vm8298 = vcmp.gt.f32.partialorder %v7781, 0.0
  %vm8299 = vcmp.gt.f32.partialorder %v8231, 0.0
  %vm8300 = vcmp.gt.f32.partialorder %v8233, 0.0
  %vm8301 = vcmp.gt.f32.partialorder %v7783, 0.0
  %vm8302 = vcmp.gt.f32.partialorder %v7785, 0.0
  %vm8303 = vcmp.gt.f32.partialorder %v8235, 0.0
  %vm8304 = vcmp.gt.f32.partialorder %v8237, 0.0
  %vm8305 = vcmp.gt.f32.partialorder %v7789, 0.0
  %vm8306 = vcmp.gt.f32.partialorder %v7791, 0.0
  %vm8307 = vcmp.gt.f32.partialorder %v8241, 0.0
  %vm8308 = vcmp.gt.f32.partialorder %v8243, 0.0
  %vm8309 = vcmp.gt.f32.partialorder %v7793, 0.0
  %vm8310 = vcmp.gt.f32.partialorder %v7795, 0.0
  %vm8311 = vcmp.gt.f32.partialorder %v8245, 0.0
  %vm8312 = vcmp.gt.f32.partialorder %v8247, 0.0
  %v8313 = vmul.f32 %v7719, 0.2
  %v8314 = vmul.f32 %v7721, 0.2
  %v8315 = vmul.f32 %v8171, 0.2
  %v8316 = vmul.f32 %v8173, 0.2
  %v8317 = vmul.f32 %v7723, 0.2
  %v8318 = vmul.f32 %v7725, 0.2
  %v8319 = vmul.f32 %v8175, 0.2
  %v8320 = vmul.f32 %v8177, 0.2
  %v8321 = vmul.f32 %v7729, 0.2
  %v8322 = vmul.f32 %v7731, 0.2
  %v8323 = vmul.f32 %v8181, 0.2
  %v8324 = vmul.f32 %v8183, 0.2
  %v8325 = vmul.f32 %v7733, 0.2
  %v8326 = vmul.f32 %v7735, 0.2
  %v8327 = vmul.f32 %v8185, 0.2
  %v8328 = vmul.f32 %v8187, 0.2
  %v8329 = vmul.f32 %v7739, 0.2
  %v8330 = vmul.f32 %v7741, 0.2
  %v8331 = vmul.f32 %v8191, 0.2
  %v8332 = vmul.f32 %v8193, 0.2
  %v8333 = vmul.f32 %v7743, 0.2
  %v8334 = vmul.f32 %v7745, 0.2
  %v8335 = vmul.f32 %v8195, 0.2
  %v8336 = vmul.f32 %v8197, 0.2
  %v8337 = vmul.f32 %v7749, 0.2
  %v8338 = vmul.f32 %v7751, 0.2
  %v8339 = vmul.f32 %v8201, 0.2
  %v8340 = vmul.f32 %v8203, 0.2
  %v8341 = vmul.f32 %v7753, 0.2
  %v8342 = vmul.f32 %v7755, 0.2
  %v8343 = vmul.f32 %v8205, 0.2
  %v8344 = vmul.f32 %v8207, 0.2
  %v8345 = vmul.f32 %v7759, 0.2
  %v8346 = vmul.f32 %v7761, 0.2
  %v8347 = vmul.f32 %v8211, 0.2
  %v8348 = vmul.f32 %v8213, 0.2
  %v8349 = vmul.f32 %v7763, 0.2
  %v8350 = vmul.f32 %v7765, 0.2
  %v8351 = vmul.f32 %v8215, 0.2
  %v8352 = vmul.f32 %v8217, 0.2
  %v8353 = vmul.f32 %v7769, 0.2
  %v8354 = vmul.f32 %v7771, 0.2
  %v8355 = vmul.f32 %v8221, 0.2
  %v8356 = vmul.f32 %v8223, 0.2
  %v8357 = vmul.f32 %v7773, 0.2
  %v8358 = vmul.f32 %v7775, 0.2
  %v8359 = vmul.f32 %v8225, 0.2
  %v8360 = vmul.f32 %v8227, 0.2
  %v8361 = vmul.f32 %v7779, 0.2
  %v8362 = vmul.f32 %v7781, 0.2
  %v8363 = vmul.f32 %v8231, 0.2
  %v8364 = vmul.f32 %v8233, 0.2
  %v8365 = vmul.f32 %v7783, 0.2
  %v8366 = vmul.f32 %v7785, 0.2
  %v8367 = vmul.f32 %v8235, 0.2
  %v8368 = vmul.f32 %v8237, 0.2
  %v8369 = vmul.f32 %v7789, 0.2
  %v8370 = vmul.f32 %v7791, 0.2
  %v8371 = vmul.f32 %v8241, 0.2
  %v8372 = vmul.f32 %v8243, 0.2
  %v8373 = vmul.f32 %v7793, 0.2
  %v8374 = vmul.f32 %v7795, 0.2
  %v8375 = vmul.f32 %v8245, 0.2
  %v8376 = vmul.f32 %v8247, 0.2
  %v8377 = vsel %vm8249, %v7719, %v8313
  %v8378 = vsel %vm8250, %v7721, %v8314
  %v8379 = vsel %vm8251, %v8171, %v8315
  %v8380 = vsel %vm8252, %v8173, %v8316
  %v8381 = vsel %vm8253, %v7723, %v8317
  %v8382 = vsel %vm8254, %v7725, %v8318
  %v8383 = vsel %vm8255, %v8175, %v8319
  %v8384 = vsel %vm8256, %v8177, %v8320
  %v8385 = vsel %vm8257, %v7729, %v8321
  %v8386 = vsel %vm8258, %v7731, %v8322
  %v8387 = vsel %vm8259, %v8181, %v8323
  %v8388 = vsel %vm8260, %v8183, %v8324
  %v8389 = vsel %vm8261, %v7733, %v8325
  %v8390 = vsel %vm8262, %v7735, %v8326
  %v8391 = vsel %vm8263, %v8185, %v8327
  %v8392 = vsel %vm8264, %v8187, %v8328
  %v8393 = vsel %vm8265, %v7739, %v8329
  %v8394 = vsel %vm8266, %v7741, %v8330
  %v8395 = vsel %vm8267, %v8191, %v8331
  %v8396 = vsel %vm8268, %v8193, %v8332
  %v8397 = vsel %vm8269, %v7743, %v8333
  %v8398 = vsel %vm8270, %v7745, %v8334
  %v8399 = vsel %vm8271, %v8195, %v8335
  %v8400 = vsel %vm8272, %v8197, %v8336
  %v8401 = vsel %vm8273, %v7749, %v8337
  %v8402 = vsel %vm8274, %v7751, %v8338
  %v8403 = vsel %vm8275, %v8201, %v8339
  %v8404 = vsel %vm8276, %v8203, %v8340
  %v8405 = vsel %vm8277, %v7753, %v8341
  %v8406 = vsel %vm8278, %v7755, %v8342
  %v8407 = vsel %vm8279, %v8205, %v8343
  %v8408 = vsel %vm8280, %v8207, %v8344
  %v8409 = vsel %vm8281, %v7759, %v8345
  %v8410 = vsel %vm8282, %v7761, %v8346
  %v8411 = vsel %vm8283, %v8211, %v8347
  %v8412 = vsel %vm8284, %v8213, %v8348
  %v8413 = vsel %vm8285, %v7763, %v8349
  %v8414 = vsel %vm8286, %v7765, %v8350
  %v8415 = vsel %vm8287, %v8215, %v8351
  %v8416 = vsel %vm8288, %v8217, %v8352
  %v8417 = vsel %vm8289, %v7769, %v8353
  %v8418 = vsel %vm8290, %v7771, %v8354
  %v8419 = vsel %vm8291, %v8221, %v8355
  %v8420 = vsel %vm8292, %v8223, %v8356
  %v8421 = vsel %vm8293, %v7773, %v8357
  %v8422 = vsel %vm8294, %v7775, %v8358
  %v8423 = vsel %vm8295, %v8225, %v8359
  %v8424 = vsel %vm8296, %v8227, %v8360
  %v8425 = vsel %vm8297, %v7779, %v8361
  %v8426 = vsel %vm8298, %v7781, %v8362
  %v8427 = vsel %vm8299, %v8231, %v8363
  %v8428 = vsel %vm8300, %v8233, %v8364
  %v8429 = vsel %vm8301, %v7783, %v8365
  %v8430 = vsel %vm8302, %v7785, %v8366
  %v8431 = vsel %vm8303, %v8235, %v8367
  %v8432 = vsel %vm8304, %v8237, %v8368
  %v8433 = vsel %vm8305, %v7789, %v8369
  %v8434 = vsel %vm8306, %v7791, %v8370
  %v8435 = vsel %vm8307, %v8241, %v8371
  %v8436 = vsel %vm8308, %v8243, %v8372
  %v8437 = vsel %vm8309, %v7793, %v8373
  %v8438 = vsel %vm8310, %v7795, %v8374
  %v8439 = vsel %vm8311, %v8245, %v8375
  %v8440 = vsel %vm8312, %v8247, %v8376
  %v8441 = vpack.c.bf16 %v8381, %v8377
  %v8442 = vpack.c.bf16 %v8382, %v8378
  %v8443 = vpack.c.bf16 %v8383, %v8379
  %v8444 = vpack.c.bf16 %v8384, %v8380
  %v8445 = vpack.c.bf16 %v8389, %v8385
  %v8446 = vpack.c.bf16 %v8390, %v8386
  %v8447 = vpack.c.bf16 %v8391, %v8387
  %v8448 = vpack.c.bf16 %v8392, %v8388
  %v8449 = vpack.c.bf16 %v8397, %v8393
  %v8450 = vpack.c.bf16 %v8398, %v8394
  %v8451 = vpack.c.bf16 %v8399, %v8395
  %v8452 = vpack.c.bf16 %v8400, %v8396
  %v8453 = vpack.c.bf16 %v8405, %v8401
  %v8454 = vpack.c.bf16 %v8406, %v8402
  %v8455 = vpack.c.bf16 %v8407, %v8403
  %v8456 = vpack.c.bf16 %v8408, %v8404
  %v8457 = vpack.c.bf16 %v8413, %v8409
  %v8458 = vpack.c.bf16 %v8414, %v8410
  %v8459 = vpack.c.bf16 %v8415, %v8411
  %v8460 = vpack.c.bf16 %v8416, %v8412
  %v8461 = vpack.c.bf16 %v8421, %v8417
  %v8462 = vpack.c.bf16 %v8422, %v8418
  %v8463 = vpack.c.bf16 %v8423, %v8419
  %v8464 = vpack.c.bf16 %v8424, %v8420
  %v8465 = vpack.c.bf16 %v8429, %v8425
  %v8466 = vpack.c.bf16 %v8430, %v8426
  %v8467 = vpack.c.bf16 %v8431, %v8427
  %v8468 = vpack.c.bf16 %v8432, %v8428
  %v8469 = vpack.c.bf16 %v8437, %v8433
  %v8470 = vpack.c.bf16 %v8438, %v8434
  %v8471 = vpack.c.bf16 %v8439, %v8435
  %v8472 = vpack.c.bf16 %v8440, %v8436
  %v8473 = vld [vmem:[%s5] sm:$0xff]
  %v8474 = vld [vmem:[%s5 + $0x8] sm:$0xff]
  %v8475 = vld [vmem:[%s5 + $0x10] sm:$0xff]
  %v8476 = vld [vmem:[%s5 + $0x18] sm:$0xff]
  %v8477 = vld [vmem:[%s5 + $0x20] sm:$0xff]
  %v8478 = vld [vmem:[%s5 + $0x28] sm:$0xff]
  %v8479 = vld [vmem:[%s5 + $0x30] sm:$0xff]
  %v8480 = vld [vmem:[%s5 + $0x38] sm:$0xff]
  %v8481 = vld [vmem:[%s5 + $0x40] sm:$0xff]
  %v8482 = vld [vmem:[%s5 + $0x48] sm:$0xff]
  %v8483 = vld [vmem:[%s5 + $0x50] sm:$0xff]
  %v8484 = vld [vmem:[%s5 + $0x58] sm:$0xff]
  %v8485 = vld [vmem:[%s5 + $0x60] sm:$0xff]
  %v8486 = vld [vmem:[%s5 + $0x68] sm:$0xff]
  %v8487 = vld [vmem:[%s5 + $0x70] sm:$0xff]
  %v8488 = vld [vmem:[%s5 + $0x78] sm:$0xff]
  %v8489 = vld [vmem:[%s5 + $0x80] sm:$0xff]
  %v8490 = vld [vmem:[%s5 + $0x88] sm:$0xff]
  %v8491 = vld [vmem:[%s5 + $0x90] sm:$0xff]
  %v8492 = vld [vmem:[%s5 + $0x98] sm:$0xff]
  %v8493 = vld [vmem:[%s5 + $0xa0] sm:$0xff]
  %v8494 = vld [vmem:[%s5 + $0xa8] sm:$0xff]
  %v8495 = vld [vmem:[%s5 + $0xb0] sm:$0xff]
  %v8496 = vld [vmem:[%s5 + $0xb8] sm:$0xff]
  %v8497 = vld [vmem:[%s5 + $0xc0] sm:$0xff]
  %v8498 = vld [vmem:[%s5 + $0xc8] sm:$0xff]
  %v8499 = vld [vmem:[%s5 + $0xd0] sm:$0xff]
  %v8500 = vld [vmem:[%s5 + $0xd8] sm:$0xff]
  %v8501 = vld [vmem:[%s5 + $0xe0] sm:$0xff]
  %v8502 = vld [vmem:[%s5 + $0xe8] sm:$0xff]
  %v8503 = vld [vmem:[%s5 + $0xf0] sm:$0xff]
  %v8504 = vld [vmem:[%s5 + $0xf8] sm:$0xff]
  %v8505 = vld [vmem:[%s5 + $0x100] sm:$0xff]
  %v8506 = vld [vmem:[%s5 + $0x108] sm:$0xff]
  %v8507 = vld [vmem:[%s5 + $0x110] sm:$0xff]
  %v8508 = vld [vmem:[%s5 + $0x118] sm:$0xff]
  %v8509 = vld [vmem:[%s5 + $0x120] sm:$0xff]
  %v8510 = vld [vmem:[%s5 + $0x128] sm:$0xff]
  %v8511 = vld [vmem:[%s5 + $0x130] sm:$0xff]
  %v8512 = vld [vmem:[%s5 + $0x138] sm:$0xff]
  %v8513 = vld [vmem:[%s5 + $0x140] sm:$0xff]
  %v8514 = vld [vmem:[%s5 + $0x148] sm:$0xff]
  %v8515 = vld [vmem:[%s5 + $0x150] sm:$0xff]
  %v8516 = vld [vmem:[%s5 + $0x158] sm:$0xff]
  %v8517 = vld [vmem:[%s5 + $0x160] sm:$0xff]
  %v8518 = vld [vmem:[%s5 + $0x168] sm:$0xff]
  %v8519 = vld [vmem:[%s5 + $0x170] sm:$0xff]
  %v8520 = vld [vmem:[%s5 + $0x178] sm:$0xff]
  %v8521 = vld [vmem:[%s5 + $0x180] sm:$0xff]
  %v8522 = vld [vmem:[%s5 + $0x188] sm:$0xff]
  %v8523 = vld [vmem:[%s5 + $0x190] sm:$0xff]
  %v8524 = vld [vmem:[%s5 + $0x198] sm:$0xff]
  %v8525 = vld [vmem:[%s5 + $0x1a0] sm:$0xff]
  %v8526 = vld [vmem:[%s5 + $0x1a8] sm:$0xff]
  %v8527 = vld [vmem:[%s5 + $0x1b0] sm:$0xff]
  %v8528 = vld [vmem:[%s5 + $0x1b8] sm:$0xff]
  %v8529 = vld [vmem:[%s5 + $0x1c0] sm:$0xff]
  %v8530 = vld [vmem:[%s5 + $0x1c8] sm:$0xff]
  %v8531 = vld [vmem:[%s5 + $0x1d0] sm:$0xff]
  %v8532 = vld [vmem:[%s5 + $0x1d8] sm:$0xff]
  %v8533 = vld [vmem:[%s5 + $0x1e0] sm:$0xff]
  %v8534 = vld [vmem:[%s5 + $0x1e8] sm:$0xff]
  %v8535 = vld [vmem:[%s5 + $0x1f0] sm:$0xff]
  %v8536 = vld [vmem:[%s5 + $0x1f8] sm:$0xff]
  %v8537 = vld [vmem:[%s6] sm:$0x3]
  %v8539 = vlaneseq
  %v8540 = vshrl.u32 %v8539, 7
  %v8541 = vsub.s32 0, %v8540
  %v8542 = vrot.slane %v8537, %v8541
  %v8543 = vlaneseq
  %v8544 = vshrl.u32 %v8543, 7
  %v8545 = vsub.s32 1, %v8544
  %v8546 = vrot.slane %v8537, %v8545
  %v8613 = vunpack.c.l.b16 %v8473
  %v8614 = vunpack.c.h.b16 %v8473
  %v8615 = vunpack.c.l.b16 %v8474
  %v8616 = vunpack.c.h.b16 %v8474
  %v8617 = vunpack.c.l.b16 %v8475
  %v8618 = vunpack.c.h.b16 %v8475
  %v8619 = vunpack.c.l.b16 %v8476
  %v8620 = vunpack.c.h.b16 %v8476
  %v8621 = vunpack.c.l.b16 %v8477
  %v8622 = vunpack.c.h.b16 %v8477
  %v8623 = vunpack.c.l.b16 %v8478
  %v8624 = vunpack.c.h.b16 %v8478
  %v8625 = vunpack.c.l.b16 %v8479
  %v8626 = vunpack.c.h.b16 %v8479
  %v8627 = vunpack.c.l.b16 %v8480
  %v8628 = vunpack.c.h.b16 %v8480
  %v8629 = vunpack.c.l.b16 %v8481
  %v8630 = vunpack.c.h.b16 %v8481
  %v8631 = vunpack.c.l.b16 %v8482
  %v8632 = vunpack.c.h.b16 %v8482
  %v8633 = vunpack.c.l.b16 %v8483
  %v8634 = vunpack.c.h.b16 %v8483
  %v8635 = vunpack.c.l.b16 %v8484
  %v8636 = vunpack.c.h.b16 %v8484
  %v8637 = vunpack.c.l.b16 %v8485
  %v8638 = vunpack.c.h.b16 %v8485
  %v8639 = vunpack.c.l.b16 %v8486
  %v8640 = vunpack.c.h.b16 %v8486
  %v8641 = vunpack.c.l.b16 %v8487
  %v8642 = vunpack.c.h.b16 %v8487
  %v8643 = vunpack.c.l.b16 %v8488
  %v8644 = vunpack.c.h.b16 %v8488
  %v8645 = vunpack.c.l.b16 %v8489
  %v8646 = vunpack.c.h.b16 %v8489
  %v8647 = vunpack.c.l.b16 %v8490
  %v8648 = vunpack.c.h.b16 %v8490
  %v8649 = vunpack.c.l.b16 %v8491
  %v8650 = vunpack.c.h.b16 %v8491
  %v8651 = vunpack.c.l.b16 %v8492
  %v8652 = vunpack.c.h.b16 %v8492
  %v8653 = vunpack.c.l.b16 %v8493
  %v8654 = vunpack.c.h.b16 %v8493
  %v8655 = vunpack.c.l.b16 %v8494
  %v8656 = vunpack.c.h.b16 %v8494
  %v8657 = vunpack.c.l.b16 %v8495
  %v8658 = vunpack.c.h.b16 %v8495
  %v8659 = vunpack.c.l.b16 %v8496
  %v8660 = vunpack.c.h.b16 %v8496
  %v8661 = vunpack.c.l.b16 %v8497
  %v8662 = vunpack.c.h.b16 %v8497
  %v8663 = vunpack.c.l.b16 %v8498
  %v8664 = vunpack.c.h.b16 %v8498
  %v8665 = vunpack.c.l.b16 %v8499
  %v8666 = vunpack.c.h.b16 %v8499
  %v8667 = vunpack.c.l.b16 %v8500
  %v8668 = vunpack.c.h.b16 %v8500
  %v8669 = vunpack.c.l.b16 %v8501
  %v8670 = vunpack.c.h.b16 %v8501
  %v8671 = vunpack.c.l.b16 %v8502
  %v8672 = vunpack.c.h.b16 %v8502
  %v8673 = vunpack.c.l.b16 %v8503
  %v8674 = vunpack.c.h.b16 %v8503
  %v8675 = vunpack.c.l.b16 %v8504
  %v8676 = vunpack.c.h.b16 %v8504
  %v8677 = vunpack.c.l.b16 %v8505
  %v8678 = vunpack.c.h.b16 %v8505
  %v8679 = vunpack.c.l.b16 %v8506
  %v8680 = vunpack.c.h.b16 %v8506
  %v8681 = vunpack.c.l.b16 %v8507
  %v8682 = vunpack.c.h.b16 %v8507
  %v8683 = vunpack.c.l.b16 %v8508
  %v8684 = vunpack.c.h.b16 %v8508
  %v8685 = vunpack.c.l.b16 %v8509
  %v8686 = vunpack.c.h.b16 %v8509
  %v8687 = vunpack.c.l.b16 %v8510
  %v8688 = vunpack.c.h.b16 %v8510
  %v8689 = vunpack.c.l.b16 %v8511
  %v8690 = vunpack.c.h.b16 %v8511
  %v8691 = vunpack.c.l.b16 %v8512
  %v8692 = vunpack.c.h.b16 %v8512
  %v8693 = vunpack.c.l.b16 %v8513
  %v8694 = vunpack.c.h.b16 %v8513
  %v8695 = vunpack.c.l.b16 %v8514
  %v8696 = vunpack.c.h.b16 %v8514
  %v8697 = vunpack.c.l.b16 %v8515
  %v8698 = vunpack.c.h.b16 %v8515
  %v8699 = vunpack.c.l.b16 %v8516
  %v8700 = vunpack.c.h.b16 %v8516
  %v8701 = vunpack.c.l.b16 %v8517
  %v8702 = vunpack.c.h.b16 %v8517
  %v8703 = vunpack.c.l.b16 %v8518
  %v8704 = vunpack.c.h.b16 %v8518
  %v8705 = vunpack.c.l.b16 %v8519
  %v8706 = vunpack.c.h.b16 %v8519
  %v8707 = vunpack.c.l.b16 %v8520
  %v8708 = vunpack.c.h.b16 %v8520
  %v8709 = vunpack.c.l.b16 %v8521
  %v8710 = vunpack.c.h.b16 %v8521
  %v8711 = vunpack.c.l.b16 %v8522
  %v8712 = vunpack.c.h.b16 %v8522
  %v8713 = vunpack.c.l.b16 %v8523
  %v8714 = vunpack.c.h.b16 %v8523
  %v8715 = vunpack.c.l.b16 %v8524
  %v8716 = vunpack.c.h.b16 %v8524
  %v8717 = vunpack.c.l.b16 %v8525
  %v8718 = vunpack.c.h.b16 %v8525
  %v8719 = vunpack.c.l.b16 %v8526
  %v8720 = vunpack.c.h.b16 %v8526
  %v8721 = vunpack.c.l.b16 %v8527
  %v8722 = vunpack.c.h.b16 %v8527
  %v8723 = vunpack.c.l.b16 %v8528
  %v8724 = vunpack.c.h.b16 %v8528
  %v8725 = vunpack.c.l.b16 %v8529
  %v8726 = vunpack.c.h.b16 %v8529
  %v8727 = vunpack.c.l.b16 %v8530
  %v8728 = vunpack.c.h.b16 %v8530
  %v8729 = vunpack.c.l.b16 %v8531
  %v8730 = vunpack.c.h.b16 %v8531
  %v8731 = vunpack.c.l.b16 %v8532
  %v8732 = vunpack.c.h.b16 %v8532
  %v8733 = vunpack.c.l.b16 %v8533
  %v8734 = vunpack.c.h.b16 %v8533
  %v8735 = vunpack.c.l.b16 %v8534
  %v8736 = vunpack.c.h.b16 %v8534
  %v8737 = vunpack.c.l.b16 %v8535
  %v8738 = vunpack.c.h.b16 %v8535
  %v8739 = vunpack.c.l.b16 %v8536
  %v8740 = vunpack.c.h.b16 %v8536
  %v8741 = vpack.c.b16 %v8615, %v8613
  %v8742 = vpack.c.b16 %v8616, %v8614
  %v8743 = vpack.c.b16 %v8619, %v8617
  %v8744 = vpack.c.b16 %v8620, %v8618
  %v8745 = vpack.c.b16 %v8623, %v8621
  %v8746 = vpack.c.b16 %v8624, %v8622
  %v8747 = vpack.c.b16 %v8627, %v8625
  %v8748 = vpack.c.b16 %v8628, %v8626
  %v8749 = vpack.c.b16 %v8631, %v8629
  %v8750 = vpack.c.b16 %v8632, %v8630
  %v8751 = vpack.c.b16 %v8635, %v8633
  %v8752 = vpack.c.b16 %v8636, %v8634
  %v8753 = vpack.c.b16 %v8639, %v8637
  %v8754 = vpack.c.b16 %v8640, %v8638
  %v8755 = vpack.c.b16 %v8643, %v8641
  %v8756 = vpack.c.b16 %v8644, %v8642
  %v8757 = vpack.c.b16 %v8647, %v8645
  %v8758 = vpack.c.b16 %v8648, %v8646
  %v8759 = vpack.c.b16 %v8651, %v8649
  %v8760 = vpack.c.b16 %v8652, %v8650
  %v8761 = vpack.c.b16 %v8655, %v8653
  %v8762 = vpack.c.b16 %v8656, %v8654
  %v8763 = vpack.c.b16 %v8659, %v8657
  %v8764 = vpack.c.b16 %v8660, %v8658
  %v8765 = vpack.c.b16 %v8663, %v8661
  %v8766 = vpack.c.b16 %v8664, %v8662
  %v8767 = vpack.c.b16 %v8667, %v8665
  %v8768 = vpack.c.b16 %v8668, %v8666
  %v8769 = vpack.c.b16 %v8671, %v8669
  %v8770 = vpack.c.b16 %v8672, %v8670
  %v8771 = vpack.c.b16 %v8675, %v8673
  %v8772 = vpack.c.b16 %v8676, %v8674
  %v8773 = vpack.c.b16 %v8679, %v8677
  %v8774 = vpack.c.b16 %v8680, %v8678
  %v8775 = vpack.c.b16 %v8683, %v8681
  %v8776 = vpack.c.b16 %v8684, %v8682
  %v8777 = vpack.c.b16 %v8687, %v8685
  %v8778 = vpack.c.b16 %v8688, %v8686
  %v8779 = vpack.c.b16 %v8691, %v8689
  %v8780 = vpack.c.b16 %v8692, %v8690
  %v8781 = vpack.c.b16 %v8695, %v8693
  %v8782 = vpack.c.b16 %v8696, %v8694
  %v8783 = vpack.c.b16 %v8699, %v8697
  %v8784 = vpack.c.b16 %v8700, %v8698
  %v8785 = vpack.c.b16 %v8703, %v8701
  %v8786 = vpack.c.b16 %v8704, %v8702
  %v8787 = vpack.c.b16 %v8707, %v8705
  %v8788 = vpack.c.b16 %v8708, %v8706
  %v8789 = vpack.c.b16 %v8711, %v8709
  %v8790 = vpack.c.b16 %v8712, %v8710
  %v8791 = vpack.c.b16 %v8715, %v8713
  %v8792 = vpack.c.b16 %v8716, %v8714
  %v8793 = vpack.c.b16 %v8719, %v8717
  %v8794 = vpack.c.b16 %v8720, %v8718
  %v8795 = vpack.c.b16 %v8723, %v8721
  %v8796 = vpack.c.b16 %v8724, %v8722
  %v8797 = vpack.c.b16 %v8727, %v8725
  %v8798 = vpack.c.b16 %v8728, %v8726
  %v8799 = vpack.c.b16 %v8731, %v8729
  %v8800 = vpack.c.b16 %v8732, %v8730
  %v8801 = vpack.c.b16 %v8735, %v8733
  %v8802 = vpack.c.b16 %v8736, %v8734
  %v8803 = vpack.c.b16 %v8739, %v8737
  %v8804 = vpack.c.b16 %v8740, %v8738
  %8869 = vmatprep.subr.bf16.mxu0 %v8742
  %8870 = vmatpush1.bf16.msra.mxu0 %v8741
  %8871 = vmatprep.subr.bf16.mxu0 %v8744
  %8872 = vmatpush1.bf16.msra.mxu0 %v8743
  %8873 = vmatprep.subr.bf16.mxu0 %v8746
  %8874 = vmatpush1.bf16.msra.mxu0 %v8745
  %8875 = vmatprep.subr.bf16.mxu0 %v8748
  %8876 = vmatpush1.bf16.msra.mxu0 %v8747
  %8877 = vmatprep.subr.bf16.mxu0 %v8750
  %8878 = vmatpush1.bf16.msra.mxu0 %v8749
  %8879 = vmatprep.subr.bf16.mxu0 %v8752
  %8880 = vmatpush1.bf16.msra.mxu0 %v8751
  %8881 = vmatprep.subr.bf16.mxu0 %v8754
  %8882 = vmatpush1.bf16.msra.mxu0 %v8753
  %8883 = vmatprep.subr.bf16.mxu0 %v8756
  %8884 = vmatpush1.bf16.msra.mxu0 %v8755
  %8885 = vmatprep.subr.bf16.mxu0 %v8758
  %8886 = vmatpush1.bf16.msra.mxu0 %v8757
  %8887 = vmatprep.subr.bf16.mxu0 %v8760
  %8888 = vmatpush1.bf16.msra.mxu0 %v8759
  %8889 = vmatprep.subr.bf16.mxu0 %v8762
  %8890 = vmatpush1.bf16.msra.mxu0 %v8761
  %8891 = vmatprep.subr.bf16.mxu0 %v8764
  %8892 = vmatpush1.bf16.msra.mxu0 %v8763
  %8893 = vmatprep.subr.bf16.mxu0 %v8766
  %8894 = vmatpush1.bf16.msra.mxu0 %v8765
  %8895 = vmatprep.subr.bf16.mxu0 %v8768
  %8896 = vmatpush1.bf16.msra.mxu0 %v8767
  %8897 = vmatprep.subr.bf16.mxu0 %v8770
  %8898 = vmatpush1.bf16.msra.mxu0 %v8769
  %8899 = vmatprep.subr.bf16.mxu0 %v8772
  %8900 = vmatpush1.bf16.msra.mxu0 %v8771
  %8901 = vmatprep.mubr.bf16.mxu0 %v8442
  %8902 = vmatmul.mubr.bf16.gmra.mrb[0].mxu0 %v8441
  %v8903 = vpop.f32.mrb[0].mxu0
  %v8904 = vadd.f32 %v8542, %v8903
  %v8905 = vpop.f32.mrb[0].mxu0
  %v8906 = vadd.f32 %v8546, %v8905
  %v8907 = vpop.f32.mrb[0].mxu0
  %v8908 = vadd.f32 %v8542, %v8907
  %v8909 = vpop.f32.mrb[0].mxu0
  %v8910 = vadd.f32 %v8546, %v8909
  %8911 = vmatprep.mubr.bf16.mxu0 %v8446
  %8912 = vmatmul.mubr.bf16.gmra.mrb[0].mxu0 %v8445
  %v8913 = vpop.f32.mrb[0].mxu0
  %v8914 = vadd.f32 %v8542, %v8913
  %v8915 = vpop.f32.mrb[0].mxu0
  %v8916 = vadd.f32 %v8546, %v8915
  %v8917 = vpop.f32.mrb[0].mxu0
  %v8918 = vadd.f32 %v8542, %v8917
  %v8919 = vpop.f32.mrb[0].mxu0
  %v8920 = vadd.f32 %v8546, %v8919
  %8921 = vmatprep.mubr.bf16.mxu0 %v8450
  %8922 = vmatmul.mubr.bf16.gmra.mrb[0].mxu0 %v8449
  %v8923 = vpop.f32.mrb[0].mxu0
  %v8924 = vadd.f32 %v8542, %v8923
  %v8925 = vpop.f32.mrb[0].mxu0
  %v8926 = vadd.f32 %v8546, %v8925
  %v8927 = vpop.f32.mrb[0].mxu0
  %v8928 = vadd.f32 %v8542, %v8927
  %v8929 = vpop.f32.mrb[0].mxu0
  %v8930 = vadd.f32 %v8546, %v8929
  %8931 = vmatprep.mubr.bf16.mxu0 %v8454
  %8932 = vmatmul.mubr.bf16.gmra.mrb[0].mxu0 %v8453
  %v8933 = vpop.f32.mrb[0].mxu0
  %v8934 = vadd.f32 %v8542, %v8933
  %v8935 = vpop.f32.mrb[0].mxu0
  %v8936 = vadd.f32 %v8546, %v8935
  %v8937 = vpop.f32.mrb[0].mxu0
  %v8938 = vadd.f32 %v8542, %v8937
  %v8939 = vpop.f32.mrb[0].mxu0
  %v8940 = vadd.f32 %v8546, %v8939
  %8941 = vmatprep.mubr.bf16.mxu0 %v8458
  %8942 = vmatmul.mubr.bf16.gmra.mrb[0].mxu0 %v8457
  %v8943 = vpop.f32.mrb[0].mxu0
  %v8944 = vadd.f32 %v8542, %v8943
  %v8945 = vpop.f32.mrb[0].mxu0
  %v8946 = vadd.f32 %v8546, %v8945
  %v8947 = vpop.f32.mrb[0].mxu0
  %v8948 = vadd.f32 %v8542, %v8947
  %v8949 = vpop.f32.mrb[0].mxu0
  %v8950 = vadd.f32 %v8546, %v8949
  %8951 = vmatprep.mubr.bf16.mxu0 %v8462
  %8952 = vmatmul.mubr.bf16.gmra.mrb[0].mxu0 %v8461
  %v8953 = vpop.f32.mrb[0].mxu0
  %v8954 = vadd.f32 %v8542, %v8953
  %v8955 = vpop.f32.mrb[0].mxu0
  %v8956 = vadd.f32 %v8546, %v8955
  %v8957 = vpop.f32.mrb[0].mxu0
  %v8958 = vadd.f32 %v8542, %v8957
  %v8959 = vpop.f32.mrb[0].mxu0
  %v8960 = vadd.f32 %v8546, %v8959
  %8961 = vmatprep.mubr.bf16.mxu0 %v8466
  %8962 = vmatmul.mubr.bf16.gmra.mrb[0].mxu0 %v8465
  %v8963 = vpop.f32.mrb[0].mxu0
  %v8964 = vadd.f32 %v8542, %v8963
  %v8965 = vpop.f32.mrb[0].mxu0
  %v8966 = vadd.f32 %v8546, %v8965
  %v8967 = vpop.f32.mrb[0].mxu0
  %v8968 = vadd.f32 %v8542, %v8967
  %v8969 = vpop.f32.mrb[0].mxu0
  %v8970 = vadd.f32 %v8546, %v8969
  %8971 = vmatprep.mubr.bf16.mxu0 %v8470
  %8972 = vmatmul.mubr.bf16.gmra.mrb[0].mxu0 %v8469
  %v8973 = vpop.f32.mrb[0].mxu0
  %v8974 = vadd.f32 %v8542, %v8973
  %v8975 = vpop.f32.mrb[0].mxu0
  %v8976 = vadd.f32 %v8546, %v8975
  %v8977 = vpop.f32.mrb[0].mxu0
  %v8978 = vadd.f32 %v8542, %v8977
  %v8979 = vpop.f32.mrb[0].mxu0
  %v8980 = vadd.f32 %v8546, %v8979
  %8981 = vdwg.mxu0
  %8982 = vmatprep.subr.bf16.mxu0 %v8774
  %8983 = vmatpush1.bf16.msra.mxu0 %v8773
  %8984 = vmatprep.subr.bf16.mxu0 %v8776
  %8985 = vmatpush1.bf16.msra.mxu0 %v8775
  %8986 = vmatprep.subr.bf16.mxu0 %v8778
  %8987 = vmatpush1.bf16.msra.mxu0 %v8777
  %8988 = vmatprep.subr.bf16.mxu0 %v8780
  %8989 = vmatpush1.bf16.msra.mxu0 %v8779
  %8990 = vmatprep.subr.bf16.mxu0 %v8782
  %8991 = vmatpush1.bf16.msra.mxu0 %v8781
  %8992 = vmatprep.subr.bf16.mxu0 %v8784
  %8993 = vmatpush1.bf16.msra.mxu0 %v8783
  %8994 = vmatprep.subr.bf16.mxu0 %v8786
  %8995 = vmatpush1.bf16.msra.mxu0 %v8785
  %8996 = vmatprep.subr.bf16.mxu0 %v8788
  %8997 = vmatpush1.bf16.msra.mxu0 %v8787
  %8998 = vmatprep.subr.bf16.mxu0 %v8790
  %8999 = vmatpush1.bf16.msra.mxu0 %v8789
  %9000 = vmatprep.subr.bf16.mxu0 %v8792
  %9001 = vmatpush1.bf16.msra.mxu0 %v8791
  %9002 = vmatprep.subr.bf16.mxu0 %v8794
  %9003 = vmatpush1.bf16.msra.mxu0 %v8793
  %9004 = vmatprep.subr.bf16.mxu0 %v8796
  %9005 = vmatpush1.bf16.msra.mxu0 %v8795
  %9006 = vmatprep.subr.bf16.mxu0 %v8798
  %9007 = vmatpush1.bf16.msra.mxu0 %v8797
  %9008 = vmatprep.subr.bf16.mxu0 %v8800
  %9009 = vmatpush1.bf16.msra.mxu0 %v8799
  %9010 = vmatprep.subr.bf16.mxu0 %v8802
  %9011 = vmatpush1.bf16.msra.mxu0 %v8801
  %9012 = vmatprep.subr.bf16.mxu0 %v8804
  %9013 = vmatpush1.bf16.msra.mxu0 %v8803
  %9014 = vmatprep.mubr.bf16.mxu0 %v8444
  %9015 = vmatmul.mubr.bf16.gmra.mrb[0].mxu0 %v8443
  %v9016 = vpop.f32.mrb[0].mxu0
  %v9017 = vadd.f32 %v8904, %v9016
  %v9018 = vpop.f32.mrb[0].mxu0
  %v9019 = vadd.f32 %v8906, %v9018
  %v9020 = vpop.f32.mrb[0].mxu0
  %v9021 = vadd.f32 %v8908, %v9020
  %v9022 = vpop.f32.mrb[0].mxu0
  %v9023 = vadd.f32 %v8910, %v9022
  %9024 = vmatprep.mubr.bf16.mxu0 %v8448
  %9025 = vmatmul.mubr.bf16.gmra.mrb[0].mxu0 %v8447
  %v9026 = vpop.f32.mrb[0].mxu0
  %v9027 = vadd.f32 %v8914, %v9026
  %v9028 = vpop.f32.mrb[0].mxu0
  %v9029 = vadd.f32 %v8916, %v9028
  %v9030 = vpop.f32.mrb[0].mxu0
  %v9031 = vadd.f32 %v8918, %v9030
  %v9032 = vpop.f32.mrb[0].mxu0
  %v9033 = vadd.f32 %v8920, %v9032
  %9034 = vmatprep.mubr.bf16.mxu0 %v8452
  %9035 = vmatmul.mubr.bf16.gmra.mrb[0].mxu0 %v8451
  %v9036 = vpop.f32.mrb[0].mxu0
  %v9037 = vadd.f32 %v8924, %v9036
  %v9038 = vpop.f32.mrb[0].mxu0
  %v9039 = vadd.f32 %v8926, %v9038
  %v9040 = vpop.f32.mrb[0].mxu0
  %v9041 = vadd.f32 %v8928, %v9040
  %v9042 = vpop.f32.mrb[0].mxu0
  %v9043 = vadd.f32 %v8930, %v9042
  %9044 = vmatprep.mubr.bf16.mxu0 %v8456
  %9045 = vmatmul.mubr.bf16.gmra.mrb[0].mxu0 %v8455
  %v9046 = vpop.f32.mrb[0].mxu0
  %v9047 = vadd.f32 %v8934, %v9046
  %v9048 = vpop.f32.mrb[0].mxu0
  %v9049 = vadd.f32 %v8936, %v9048
  %v9050 = vpop.f32.mrb[0].mxu0
  %v9051 = vadd.f32 %v8938, %v9050
  %v9052 = vpop.f32.mrb[0].mxu0
  %v9053 = vadd.f32 %v8940, %v9052
  %9054 = vmatprep.mubr.bf16.mxu0 %v8460
  %9055 = vmatmul.mubr.bf16.gmra.mrb[0].mxu0 %v8459
  %v9056 = vpop.f32.mrb[0].mxu0
  %v9057 = vadd.f32 %v8944, %v9056
  %v9058 = vpop.f32.mrb[0].mxu0
  %v9059 = vadd.f32 %v8946, %v9058
  %v9060 = vpop.f32.mrb[0].mxu0
  %v9061 = vadd.f32 %v8948, %v9060
  %v9062 = vpop.f32.mrb[0].mxu0
  %v9063 = vadd.f32 %v8950, %v9062
  %9064 = vmatprep.mubr.bf16.mxu0 %v8464
  %9065 = vmatmul.mubr.bf16.gmra.mrb[0].mxu0 %v8463
  %v9066 = vpop.f32.mrb[0].mxu0
  %v9067 = vadd.f32 %v8954, %v9066
  %v9068 = vpop.f32.mrb[0].mxu0
  %v9069 = vadd.f32 %v8956, %v9068
  %v9070 = vpop.f32.mrb[0].mxu0
  %v9071 = vadd.f32 %v8958, %v9070
  %v9072 = vpop.f32.mrb[0].mxu0
  %v9073 = vadd.f32 %v8960, %v9072
  %9074 = vmatprep.mubr.bf16.mxu0 %v8468
  %9075 = vmatmul.mubr.bf16.gmra.mrb[0].mxu0 %v8467
  %v9076 = vpop.f32.mrb[0].mxu0
  %v9077 = vadd.f32 %v8964, %v9076
  %v9078 = vpop.f32.mrb[0].mxu0
  %v9079 = vadd.f32 %v8966, %v9078
  %v9080 = vpop.f32.mrb[0].mxu0
  %v9081 = vadd.f32 %v8968, %v9080
  %v9082 = vpop.f32.mrb[0].mxu0
  %v9083 = vadd.f32 %v8970, %v9082
  %9084 = vmatprep.mubr.bf16.mxu0 %v8472
  %9085 = vmatmul.mubr.bf16.gmra.mrb[0].mxu0 %v8471
  %v9086 = vpop.f32.mrb[0].mxu0
  %v9087 = vadd.f32 %v8974, %v9086
  %v9088 = vpop.f32.mrb[0].mxu0
  %v9089 = vadd.f32 %v8976, %v9088
  %v9090 = vpop.f32.mrb[0].mxu0
  %v9091 = vadd.f32 %v8978, %v9090
  %v9092 = vpop.f32.mrb[0].mxu0
  %v9093 = vadd.f32 %v8980, %v9092
  %9094 = vdwg.mxu0
  %vm9095 = vcmp.gt.f32.partialorder %v9017, 0.0
  %vm9096 = vcmp.gt.f32.partialorder %v9019, 0.0
  %vm9097 = vcmp.gt.f32.partialorder %v9021, 0.0
  %vm9098 = vcmp.gt.f32.partialorder %v9023, 0.0
  %vm9099 = vcmp.gt.f32.partialorder %v9027, 0.0
  %vm9100 = vcmp.gt.f32.partialorder %v9029, 0.0
  %vm9101 = vcmp.gt.f32.partialorder %v9031, 0.0
  %vm9102 = vcmp.gt.f32.partialorder %v9033, 0.0
  %vm9103 = vcmp.gt.f32.partialorder %v9037, 0.0
  %vm9104 = vcmp.gt.f32.partialorder %v9039, 0.0
  %vm9105 = vcmp.gt.f32.partialorder %v9041, 0.0
  %vm9106 = vcmp.gt.f32.partialorder %v9043, 0.0
  %vm9107 = vcmp.gt.f32.partialorder %v9047, 0.0
  %vm9108 = vcmp.gt.f32.partialorder %v9049, 0.0
  %vm9109 = vcmp.gt.f32.partialorder %v9051, 0.0
  %vm9110 = vcmp.gt.f32.partialorder %v9053, 0.0
  %vm9111 = vcmp.gt.f32.partialorder %v9057, 0.0
  %vm9112 = vcmp.gt.f32.partialorder %v9059, 0.0
  %vm9113 = vcmp.gt.f32.partialorder %v9061, 0.0
  %vm9114 = vcmp.gt.f32.partialorder %v9063, 0.0
  %vm9115 = vcmp.gt.f32.partialorder %v9067, 0.0
  %vm9116 = vcmp.gt.f32.partialorder %v9069, 0.0
  %vm9117 = vcmp.gt.f32.partialorder %v9071, 0.0
  %vm9118 = vcmp.gt.f32.partialorder %v9073, 0.0
  %vm9119 = vcmp.gt.f32.partialorder %v9077, 0.0
  %vm9120 = vcmp.gt.f32.partialorder %v9079, 0.0
  %vm9121 = vcmp.gt.f32.partialorder %v9081, 0.0
  %vm9122 = vcmp.gt.f32.partialorder %v9083, 0.0
  %vm9123 = vcmp.gt.f32.partialorder %v9087, 0.0
  %vm9124 = vcmp.gt.f32.partialorder %v9089, 0.0
  %vm9125 = vcmp.gt.f32.partialorder %v9091, 0.0
  %vm9126 = vcmp.gt.f32.partialorder %v9093, 0.0
  %v9127 = vmul.f32 %v9017, 0.2
  %v9128 = vmul.f32 %v9019, 0.2
  %v9129 = vmul.f32 %v9021, 0.2
  %v9130 = vmul.f32 %v9023, 0.2
  %v9131 = vmul.f32 %v9027, 0.2
  %v9132 = vmul.f32 %v9029, 0.2
  %v9133 = vmul.f32 %v9031, 0.2
  %v9134 = vmul.f32 %v9033, 0.2
  %v9135 = vmul.f32 %v9037, 0.2
  %v9136 = vmul.f32 %v9039, 0.2
  %v9137 = vmul.f32 %v9041, 0.2
  %v9138 = vmul.f32 %v9043, 0.2
  %v9139 = vmul.f32 %v9047, 0.2
  %v9140 = vmul.f32 %v9049, 0.2
  %v9141 = vmul.f32 %v9051, 0.2
  %v9142 = vmul.f32 %v9053, 0.2
  %v9143 = vmul.f32 %v9057, 0.2
  %v9144 = vmul.f32 %v9059, 0.2
  %v9145 = vmul.f32 %v9061, 0.2
  %v9146 = vmul.f32 %v9063, 0.2
  %v9147 = vmul.f32 %v9067, 0.2
  %v9148 = vmul.f32 %v9069, 0.2
  %v9149 = vmul.f32 %v9071, 0.2
  %v9150 = vmul.f32 %v9073, 0.2
  %v9151 = vmul.f32 %v9077, 0.2
  %v9152 = vmul.f32 %v9079, 0.2
  %v9153 = vmul.f32 %v9081, 0.2
  %v9154 = vmul.f32 %v9083, 0.2
  %v9155 = vmul.f32 %v9087, 0.2
  %v9156 = vmul.f32 %v9089, 0.2
  %v9157 = vmul.f32 %v9091, 0.2
  %v9158 = vmul.f32 %v9093, 0.2
  %v9159 = vsel %vm9095, %v9017, %v9127
  %v9160 = vsel %vm9096, %v9019, %v9128
  %v9161 = vsel %vm9097, %v9021, %v9129
  %v9162 = vsel %vm9098, %v9023, %v9130
  %v9163 = vsel %vm9099, %v9027, %v9131
  %v9164 = vsel %vm9100, %v9029, %v9132
  %v9165 = vsel %vm9101, %v9031, %v9133
  %v9166 = vsel %vm9102, %v9033, %v9134
  %v9167 = vsel %vm9103, %v9037, %v9135
  %v9168 = vsel %vm9104, %v9039, %v9136
  %v9169 = vsel %vm9105, %v9041, %v9137
  %v9170 = vsel %vm9106, %v9043, %v9138
  %v9171 = vsel %vm9107, %v9047, %v9139
  %v9172 = vsel %vm9108, %v9049, %v9140
  %v9173 = vsel %vm9109, %v9051, %v9141
  %v9174 = vsel %vm9110, %v9053, %v9142
  %v9175 = vsel %vm9111, %v9057, %v9143
  %v9176 = vsel %vm9112, %v9059, %v9144
  %v9177 = vsel %vm9113, %v9061, %v9145
  %v9178 = vsel %vm9114, %v9063, %v9146
  %v9179 = vsel %vm9115, %v9067, %v9147
  %v9180 = vsel %vm9116, %v9069, %v9148
  %v9181 = vsel %vm9117, %v9071, %v9149
  %v9182 = vsel %vm9118, %v9073, %v9150
  %v9183 = vsel %vm9119, %v9077, %v9151
  %v9184 = vsel %vm9120, %v9079, %v9152
  %v9185 = vsel %vm9121, %v9081, %v9153
  %v9186 = vsel %vm9122, %v9083, %v9154
  %v9187 = vsel %vm9123, %v9087, %v9155
  %v9188 = vsel %vm9124, %v9089, %v9156
  %v9189 = vsel %vm9125, %v9091, %v9157
  %v9190 = vsel %vm9126, %v9093, %v9158
  %v9191 = vpack.c.bf16 %v9161, %v9159
  %v9192 = vpack.c.bf16 %v9162, %v9160
  %v9193 = vpack.c.bf16 %v9165, %v9163
  %v9194 = vpack.c.bf16 %v9166, %v9164
  %v9195 = vpack.c.bf16 %v9169, %v9167
  %v9196 = vpack.c.bf16 %v9170, %v9168
  %v9197 = vpack.c.bf16 %v9173, %v9171
  %v9198 = vpack.c.bf16 %v9174, %v9172
  %v9199 = vpack.c.bf16 %v9177, %v9175
  %v9200 = vpack.c.bf16 %v9178, %v9176
  %v9201 = vpack.c.bf16 %v9181, %v9179
  %v9202 = vpack.c.bf16 %v9182, %v9180
  %v9203 = vpack.c.bf16 %v9185, %v9183
  %v9204 = vpack.c.bf16 %v9186, %v9184
  %v9205 = vpack.c.bf16 %v9189, %v9187
  %v9206 = vpack.c.bf16 %v9190, %v9188
  %v9207 = vld [vmem:[%s7] sm:$0xf]
  %v9208 = vld [vmem:[%s7 + $0x4] sm:$0xf]
  %v9209 = vld [vmem:[%s7 + $0x8] sm:$0xf]
  %v9210 = vld [vmem:[%s7 + $0xc] sm:$0xf]
  %v9211 = vld [vmem:[%s7 + $0x10] sm:$0xf]
  %v9212 = vld [vmem:[%s7 + $0x14] sm:$0xf]
  %v9213 = vld [vmem:[%s7 + $0x18] sm:$0xf]
  %v9214 = vld [vmem:[%s7 + $0x1c] sm:$0xf]
  %v9215 = vld [vmem:[%s7 + $0x20] sm:$0xf]
  %v9216 = vld [vmem:[%s7 + $0x24] sm:$0xf]
  %v9217 = vld [vmem:[%s7 + $0x28] sm:$0xf]
  %v9218 = vld [vmem:[%s7 + $0x2c] sm:$0xf]
  %v9219 = vld [vmem:[%s7 + $0x30] sm:$0xf]
  %v9220 = vld [vmem:[%s7 + $0x34] sm:$0xf]
  %v9221 = vld [vmem:[%s7 + $0x38] sm:$0xf]
  %v9222 = vld [vmem:[%s7 + $0x3c] sm:$0xf]
  %v9223 = vld [vmem:[%s7 + $0x40] sm:$0xf]
  %v9224 = vld [vmem:[%s7 + $0x44] sm:$0xf]
  %v9225 = vld [vmem:[%s7 + $0x48] sm:$0xf]
  %v9226 = vld [vmem:[%s7 + $0x4c] sm:$0xf]
  %v9227 = vld [vmem:[%s7 + $0x50] sm:$0xf]
  %v9228 = vld [vmem:[%s7 + $0x54] sm:$0xf]
  %v9229 = vld [vmem:[%s7 + $0x58] sm:$0xf]
  %v9230 = vld [vmem:[%s7 + $0x5c] sm:$0xf]
  %v9231 = vld [vmem:[%s7 + $0x60] sm:$0xf]
  %v9232 = vld [vmem:[%s7 + $0x64] sm:$0xf]
  %v9233 = vld [vmem:[%s7 + $0x68] sm:$0xf]
  %v9234 = vld [vmem:[%s7 + $0x6c] sm:$0xf]
  %v9235 = vld [vmem:[%s7 + $0x70] sm:$0xf]
  %v9236 = vld [vmem:[%s7 + $0x74] sm:$0xf]
  %v9237 = vld [vmem:[%s7 + $0x78] sm:$0xf]
  %v9238 = vld [vmem:[%s7 + $0x7c] sm:$0xf]
  %v9239 = vld [vmem:[%s8] sm:$0x1]
  %v9241 = vlaneseq
  %v9242 = vshrl.u32 %v9241, 7
  %v9243 = vsub.s32 0, %v9242
  %v9244 = vrot.slane %v9239, %v9243
  %v9278 = vunpack.c.l.b16 %v9207
  %v9279 = vunpack.c.l.b16 %v9208
  %v9280 = vunpack.c.l.b16 %v9209
  %v9281 = vunpack.c.l.b16 %v9210
  %v9282 = vunpack.c.l.b16 %v9211
  %v9283 = vunpack.c.l.b16 %v9212
  %v9284 = vunpack.c.l.b16 %v9213
  %v9285 = vunpack.c.l.b16 %v9214
  %v9286 = vunpack.c.l.b16 %v9215
  %v9287 = vunpack.c.l.b16 %v9216
  %v9288 = vunpack.c.l.b16 %v9217
  %v9289 = vunpack.c.l.b16 %v9218
  %v9290 = vunpack.c.l.b16 %v9219
  %v9291 = vunpack.c.l.b16 %v9220
  %v9292 = vunpack.c.l.b16 %v9221
  %v9293 = vunpack.c.l.b16 %v9222
  %v9294 = vunpack.c.l.b16 %v9223
  %v9295 = vunpack.c.l.b16 %v9224
  %v9296 = vunpack.c.l.b16 %v9225
  %v9297 = vunpack.c.l.b16 %v9226
  %v9298 = vunpack.c.l.b16 %v9227
  %v9299 = vunpack.c.l.b16 %v9228
  %v9300 = vunpack.c.l.b16 %v9229
  %v9301 = vunpack.c.l.b16 %v9230
  %v9302 = vunpack.c.l.b16 %v9231
  %v9303 = vunpack.c.l.b16 %v9232
  %v9304 = vunpack.c.l.b16 %v9233
  %v9305 = vunpack.c.l.b16 %v9234
  %v9306 = vunpack.c.l.b16 %v9235
  %v9307 = vunpack.c.l.b16 %v9236
  %v9308 = vunpack.c.l.b16 %v9237
  %v9309 = vunpack.c.l.b16 %v9238
  %v9310 = vpack.c.b16 %v9279, %v9278
  %v9311 = vpack.c.b16 %v9281, %v9280
  %v9312 = vpack.c.b16 %v9283, %v9282
  %v9313 = vpack.c.b16 %v9285, %v9284
  %v9314 = vpack.c.b16 %v9287, %v9286
  %v9315 = vpack.c.b16 %v9289, %v9288
  %v9316 = vpack.c.b16 %v9291, %v9290
  %v9317 = vpack.c.b16 %v9293, %v9292
  %v9318 = vpack.c.b16 %v9295, %v9294
  %v9319 = vpack.c.b16 %v9297, %v9296
  %v9320 = vpack.c.b16 %v9299, %v9298
  %v9321 = vpack.c.b16 %v9301, %v9300
  %v9322 = vpack.c.b16 %v9303, %v9302
  %v9323 = vpack.c.b16 %v9305, %v9304
  %v9324 = vpack.c.b16 %v9307, %v9306
  %v9325 = vpack.c.b16 %v9309, %v9308
  %9342 = vmatprep.subr.bf16.mxu0 0
  %9343 = vmatpush1.bf16.msra.mxu0 %v9310
  %9344 = vmatprep.subr.bf16.mxu0 0
  %9345 = vmatpush1.bf16.msra.mxu0 %v9311
  %9346 = vmatprep.subr.bf16.mxu0 0
  %9347 = vmatpush1.bf16.msra.mxu0 %v9312
  %9348 = vmatprep.subr.bf16.mxu0 0
  %9349 = vmatpush1.bf16.msra.mxu0 %v9313
  %9350 = vmatprep.subr.bf16.mxu0 0
  %9351 = vmatpush1.bf16.msra.mxu0 %v9314
  %9352 = vmatprep.subr.bf16.mxu0 0
  %9353 = vmatpush1.bf16.msra.mxu0 %v9315
  %9354 = vmatprep.subr.bf16.mxu0 0
  %9355 = vmatpush1.bf16.msra.mxu0 %v9316
  %9356 = vmatprep.subr.bf16.mxu0 0
  %9357 = vmatpush1.bf16.msra.mxu0 %v9317
  %9358 = vmatprep.subr.bf16.mxu0 0
  %9359 = vmatpush1.bf16.msra.mxu0 %v9318
  %9360 = vmatprep.subr.bf16.mxu0 0
  %9361 = vmatpush1.bf16.msra.mxu0 %v9319
  %9362 = vmatprep.subr.bf16.mxu0 0
  %9363 = vmatpush1.bf16.msra.mxu0 %v9320
  %9364 = vmatprep.subr.bf16.mxu0 0
  %9365 = vmatpush1.bf16.msra.mxu0 %v9321
  %9366 = vmatprep.subr.bf16.mxu0 0
  %9367 = vmatpush1.bf16.msra.mxu0 %v9322
  %9368 = vmatprep.subr.bf16.mxu0 0
  %9369 = vmatpush1.bf16.msra.mxu0 %v9323
  %9370 = vmatprep.subr.bf16.mxu0 0
  %9371 = vmatpush1.bf16.msra.mxu0 %v9324
  %9372 = vmatprep.subr.bf16.mxu0 0
  %9373 = vmatpush1.bf16.msra.mxu0 %v9325
  %9374 = vmatprep.mubr.bf16.mxu0 %v9192
  %9375 = vmatmul.mubr.bf16.gmra.mrb[0].mxu0 %v9191
  %v9376 = vpop.f32.mrb[0].mxu0
  %v9377 = vadd.f32 %v9244, %v9376
  %v9378 = vpop.f32.mrb[0].mxu0
  %v9379 = vpop.f32.mrb[0].mxu0
  %v9380 = vadd.f32 %v9244, %v9379
  %v9381 = vpop.f32.mrb[0].mxu0
  %9382 = vmatprep.mubr.bf16.mxu0 %v9194
  %9383 = vmatmul.mubr.bf16.gmra.mrb[0].mxu0 %v9193
  %v9384 = vpop.f32.mrb[0].mxu0
  %v9385 = vadd.f32 %v9244, %v9384
  %v9386 = vpop.f32.mrb[0].mxu0
  %v9387 = vpop.f32.mrb[0].mxu0
  %v9388 = vadd.f32 %v9244, %v9387
  %v9389 = vpop.f32.mrb[0].mxu0
  %9390 = vmatprep.mubr.bf16.mxu0 %v9196
  %9391 = vmatmul.mubr.bf16.gmra.mrb[0].mxu0 %v9195
  %v9392 = vpop.f32.mrb[0].mxu0
  %v9393 = vadd.f32 %v9244, %v9392
  %v9394 = vpop.f32.mrb[0].mxu0
  %v9395 = vpop.f32.mrb[0].mxu0
  %v9396 = vadd.f32 %v9244, %v9395
  %v9397 = vpop.f32.mrb[0].mxu0
  %9398 = vmatprep.mubr.bf16.mxu0 %v9198
  %9399 = vmatmul.mubr.bf16.gmra.mrb[0].mxu0 %v9197
  %v9400 = vpop.f32.mrb[0].mxu0
  %v9401 = vadd.f32 %v9244, %v9400
  %v9402 = vpop.f32.mrb[0].mxu0
  %v9403 = vpop.f32.mrb[0].mxu0
  %v9404 = vadd.f32 %v9244, %v9403
  %v9405 = vpop.f32.mrb[0].mxu0
  %9406 = vmatprep.mubr.bf16.mxu0 %v9200
  %9407 = vmatmul.mubr.bf16.gmra.mrb[0].mxu0 %v9199
  %v9408 = vpop.f32.mrb[0].mxu0
  %v9409 = vadd.f32 %v9244, %v9408
  %v9410 = vpop.f32.mrb[0].mxu0
  %v9411 = vpop.f32.mrb[0].mxu0
  %v9412 = vadd.f32 %v9244, %v9411
  %v9413 = vpop.f32.mrb[0].mxu0
  %9414 = vmatprep.mubr.bf16.mxu0 %v9202
  %9415 = vmatmul.mubr.bf16.gmra.mrb[0].mxu0 %v9201
  %v9416 = vpop.f32.mrb[0].mxu0
  %v9417 = vadd.f32 %v9244, %v9416
  %v9418 = vpop.f32.mrb[0].mxu0
  %v9419 = vpop.f32.mrb[0].mxu0
  %v9420 = vadd.f32 %v9244, %v9419
  %v9421 = vpop.f32.mrb[0].mxu0
  %9422 = vmatprep.mubr.bf16.mxu0 %v9204
  %9423 = vmatmul.mubr.bf16.gmra.mrb[0].mxu0 %v9203
  %v9424 = vpop.f32.mrb[0].mxu0
  %v9425 = vadd.f32 %v9244, %v9424
  %v9426 = vpop.f32.mrb[0].mxu0
  %v9427 = vpop.f32.mrb[0].mxu0
  %v9428 = vadd.f32 %v9244, %v9427
  %v9429 = vpop.f32.mrb[0].mxu0
  %9430 = vmatprep.mubr.bf16.mxu0 %v9206
  %9431 = vmatmul.mubr.bf16.gmra.mrb[0].mxu0 %v9205
  %v9432 = vpop.f32.mrb[0].mxu0
  %v9433 = vadd.f32 %v9244, %v9432
  %v9434 = vpop.f32.mrb[0].mxu0
  %v9435 = vpop.f32.mrb[0].mxu0
  %v9436 = vadd.f32 %v9244, %v9435
  %v9437 = vpop.f32.mrb[0].mxu0
  %9438 = vdwg.mxu0
  %v9439 = vsub.f32 0.0, %v9377
  %v9440 = vsub.f32 0.0, %v9380
  %v9441 = vsub.f32 0.0, %v9385
  %v9442 = vsub.f32 0.0, %v9388
  %v9443 = vsub.f32 0.0, %v9393
  %v9444 = vsub.f32 0.0, %v9396
  %v9445 = vsub.f32 0.0, %v9401
  %v9446 = vsub.f32 0.0, %v9404
  %v9447 = vsub.f32 0.0, %v9409
  %v9448 = vsub.f32 0.0, %v9412
  %v9449 = vsub.f32 0.0, %v9417
  %v9450 = vsub.f32 0.0, %v9420
  %v9451 = vsub.f32 0.0, %v9425
  %v9452 = vsub.f32 0.0, %v9428
  %v9453 = vsub.f32 0.0, %v9433
  %v9454 = vsub.f32 0.0, %v9436
  %v9455 = vmul.f32 %v9439, 1.442695
  %v9456 = vpow.pop %v9455
  %v9457 = vmul.f32 %v9440, 1.442695
  %v9458 = vpow.pop %v9457
  %v9459 = vmul.f32 %v9441, 1.442695
  %v9460 = vpow.pop %v9459
  %v9461 = vmul.f32 %v9442, 1.442695
  %v9462 = vpow.pop %v9461
  %v9463 = vmul.f32 %v9443, 1.442695
  %v9464 = vpow.pop %v9463
  %v9465 = vmul.f32 %v9444, 1.442695
  %v9466 = vpow.pop %v9465
  %v9467 = vmul.f32 %v9445, 1.442695
  %v9468 = vpow.pop %v9467
  %v9469 = vmul.f32 %v9446, 1.442695
  %v9470 = vpow.pop %v9469
  %v9471 = vmul.f32 %v9447, 1.442695
  %v9472 = vpow.pop %v9471
  %v9473 = vmul.f32 %v9448, 1.442695
  %v9474 = vpow.pop %v9473
  %v9475 = vmul.f32 %v9449, 1.442695
  %v9476 = vpow.pop %v9475
  %v9477 = vmul.f32 %v9450, 1.442695
  %v9478 = vpow.pop %v9477
  %v9479 = vmul.f32 %v9451, 1.442695
  %v9480 = vpow.pop %v9479
  %v9481 = vmul.f32 %v9452, 1.442695
  %v9482 = vpow.pop %v9481
  %v9483 = vmul.f32 %v9453, 1.442695
  %v9484 = vpow.pop %v9483
  %v9485 = vmul.f32 %v9454, 1.442695
  %v9486 = vpow.pop %v9485
  %v9487 = vadd.f32 %v9456, 1.0
  %v9488 = vadd.f32 %v9458, 1.0
  %v9489 = vadd.f32 %v9460, 1.0
  %v9490 = vadd.f32 %v9462, 1.0
  %v9491 = vadd.f32 %v9464, 1.0
  %v9492 = vadd.f32 %v9466, 1.0
  %v9493 = vadd.f32 %v9468, 1.0
  %v9494 = vadd.f32 %v9470, 1.0
  %v9495 = vadd.f32 %v9472, 1.0
  %v9496 = vadd.f32 %v9474, 1.0
  %v9497 = vadd.f32 %v9476, 1.0
  %v9498 = vadd.f32 %v9478, 1.0
  %v9499 = vadd.f32 %v9480, 1.0
  %v9500 = vadd.f32 %v9482, 1.0
  %v9501 = vadd.f32 %v9484, 1.0
  %v9502 = vadd.f32 %v9486, 1.0
  %v9503 = vrcp.pop %v9487
  %v9504 = vrcp.pop %v9488
  %v9505 = vrcp.pop %v9489
  %v9506 = vrcp.pop %v9490
  %v9507 = vrcp.pop %v9491
  %v9508 = vrcp.pop %v9492
  %v9509 = vrcp.pop %v9493
  %v9510 = vrcp.pop %v9494
  %v9511 = vrcp.pop %v9495
  %v9512 = vrcp.pop %v9496
  %v9513 = vrcp.pop %v9497
  %v9514 = vrcp.pop %v9498
  %v9515 = vrcp.pop %v9499
  %v9516 = vrcp.pop %v9500
  %v9517 = vrcp.pop %v9501
  %v9518 = vrcp.pop %v9502
  %9519 = vst [vmem:[%s9] sm:$0xff] %v9503
  %9520 = vst [vmem:[%s9 + $0x8] sm:$0xff] %v9504
  %9521 = vst [vmem:[%s9 + $0x10] sm:$0xff] %v9505
  %9522 = vst [vmem:[%s9 + $0x18] sm:$0xff] %v9506
  %9523 = vst [vmem:[%s9 + $0x20] sm:$0xff] %v9507
  %9524 = vst [vmem:[%s9 + $0x28] sm:$0xff] %v9508
  %9525 = vst [vmem:[%s9 + $0x30] sm:$0xff] %v9509
  %9526 = vst [vmem:[%s9 + $0x38] sm:$0xff] %v9510
  %9527 = vst [vmem:[%s9 + $0x40] sm:$0xff] %v9511
  %9528 = vst [vmem:[%s9 + $0x48] sm:$0xff] %v9512
  %9529 = vst [vmem:[%s9 + $0x50] sm:$0xff] %v9513
  %9530 = vst [vmem:[%s9 + $0x58] sm:$0xff] %v9514
  %9531 = vst [vmem:[%s9 + $0x60] sm:$0xff] %v9515
  %9532 = vst [vmem:[%s9 + $0x68] sm:$0xff] %v9516
  %9533 = vst [vmem:[%s9 + $0x70] sm:$0xff] %v9517
  %9534 = vst [vmem:[%s9 + $0x78] sm:$0xff] %v9518
  // Predicated region
  $region38: #{discriminator_forward.1} parent=0 // pred_check
    _
  $region39: #{discriminator_forward.1} parent=0 // pred_check_branch
    %9536 = sbr.rel (0) target = $region41
  $region40: #{discriminator_forward.1} parent=0 // pred_region
    _
  $region41: #{discriminator_forward.1} parent=0 // pred_fallthru
    _
  // Predicated region
  $region42: #{discriminator_forward.1} parent=0 // pred_check
    _
  $region43: #{discriminator_forward.1} parent=0 // pred_check_branch
    %9538 = sbr.rel (0) target = $region45
  $region44: #{discriminator_forward.1} parent=0 // pred_region
    _
  $region45: #{discriminator_forward.1} parent=0 // pred_fallthru
    _

</llo_original>
